<compile_context>
chip_gen: v7x
topology: tpu7x:2x2x1
jax: 0.10.0
libtpu: 0.0.40
codegen_flags: <defaults>
</compile_context>

<pallas_src>
import jax
import jax.numpy as jnp
import numpy as np
from jax.experimental import pallas as pl
from jax.experimental.pallas import tpu as pltpu

# Make the XLA-side reference / one-time prep matmuls full f32 precision so the
# correctness check against the (full-precision) Pallas kernel is meaningful.
jax.config.update("jax_default_matmul_precision", "highest")

# ----------------------------- config ---------------------------------------
HIDDEN_SIZE = 32
EMB_SIZE = 32
OUTPUT_SIZE = 16       # vocab size (embedding rows == linear output features)
N_LAYERS = 2           # kernel wavefront is specialized to 2 LSTM layers
BATCH = 2
SEQ = 8
DROPOUT = 0.1          # inference mode -> identity
# TODO(synk): training-mode dropout (Bernoulli masks via pltpu.prng_*) not
# implemented; forward matches PyTorch eval() semantics.
# TODO(synk): kernel is specialized to n_layers == 2 (the configured instance);
# generalizing the wavefront to arbitrary depth is not implemented.


# ---------------------- fused decoder kernel (single call) -------------------
def decoder_kernel(tok_ref, table0_ref, wstack_ref, b1_ref, wout_ref, bout_ref,
                   hin_ref, cin_ref, out_ref, hn_ref, cn_ref, g0_scr, h1_scr):
    TB = tok_ref.shape[0]
    _, B, H = hin_ref.shape
    T = TB // B
    V = table0_ref.shape[0]
    H3, H4 = 3 * H, 4 * H

    # ---- embedding gather + layer-0 input projection + bias, all at once ----
    # table0 = emb @ Wih0^T + b0 was precomputed (V,4H); a one-hot matmul gathers
    # and projects every timestep's token in a single MXU push.
    iota = jax.lax.broadcasted_iota(jnp.int32, (TB, V), 1)
    onehot = (tok_ref[...] == iota).astype(jnp.float32)              # (TB, V)
    g0_scr[...] = jnp.dot(onehot, table0_ref[...],
                          preferred_element_type=jnp.float32)        # (TB, 4H)
    # dropout on embeddings / between layers: eval mode -> identity

    wstack = wstack_ref[...]          # (2H, 8H): [[Whh0 | Wih1], [0 | Whh1]]
    b1 = b1_ref[...]                  # (1, 4H)

    def cell_update(gates, c_prev):
        # Gate order (permuted in wrapper): i | f | o | g.  The sigmoid columns
        # (first 3H) were pre-scaled by 0.5, so ONE tanh covers all four gates:
        # sigma(x) = 0.5 * tanh(x/2) + 0.5.
        t = jnp.tanh(gates)
        i_g = 0.5 * t[:, :H] + 0.5
        f_g = 0.5 * t[:, H:2 * H] + 0.5
        o_g = 0.5 * t[:, 2 * H:H3] + 0.5
        g_g = t[:, H3:]
        c_new = f_g * c_prev + i_g * g_g
        h_new = o_g * jnp.tanh(c_new)
        return h_new, c_new

    h0 = hin_ref[0, :, :]
    c0 = cin_ref[0, :, :]
    h1 = hin_ref[1, :, :]
    c1 = cin_ref[1, :, :]

    # ---- wavefront over the two layers -------------------------------------
    # Step s computes layer-0 @ t=s and layer-1 @ t=s-1 with ONE stacked
    # (B,2H)@(2H,8H) matmul; static unroll => only static slices in the loop.
    for s in range(T + 1):
        lhs = jnp.concatenate([h0, h1], axis=1)                       # (B, 2H)
        both = jnp.dot(lhs, wstack,
                       preferred_element_type=jnp.float32)            # (B, 8H)
        if s < T:                                     # layer 0, timestep s
            gates0 = both[:, :H4] + g0_scr[s * B:(s + 1) * B, :]
            h0, c0 = cell_update(gates0, c0)
        if s >= 1:                                    # layer 1, timestep s-1
            gates1 = both[:, H4:] + b1
            h1, c1 = cell_update(gates1, c1)
            h1_scr[(s - 1) * B:s * B, :] = h1

    hn_ref[0, :, :] = h0
    cn_ref[0, :, :] = c0
    hn_ref[1, :, :] = h1
    cn_ref[1, :, :] = c1

    # ---- output Linear: one matmul over all timesteps, single HBM store ----
    out_ref[...] = jnp.dot(h1_scr[...], wout_ref[...],
                           preferred_element_type=jnp.float32) + bout_ref[...]


# --------------------- one-time parameter preparation ------------------------
def prepare_params(params):
    """Transpose / permute / pre-scale / fuse weights once (outside the jitted
    forward): gate order i|f|g|o -> i|f|o|g, bias fusion b_ih+b_hh, 0.5 pre-scale
    of the sigmoid columns, embedding-folded layer-0 table, stacked 2-layer W."""
    assert N_LAYERS == 2
    H = HIDDEN_SIZE
    perm = np.concatenate([np.arange(0, 2 * H),
                           np.arange(3 * H, 4 * H),
                           np.arange(2 * H, 3 * H)])
    col_scale = np.concatenate([np.full(3 * H, 0.5, np.float32),
                                np.ones(H, np.float32)])

    def gate_w(w):                         # (4H, in) -> (in, 4H), perm + scale
        return (w.T[:, perm] * col_scale[None, :]).astype(jnp.float32)

    def gate_b(b_ih, b_hh):
        return ((b_ih + b_hh)[perm] * col_scale).astype(jnp.float32)

    w0 = gate_w(params["w_ih_0"])
    b0 = gate_b(params["b_ih_0"], params["b_hh_0"])
    table0 = jnp.dot(params["embedding"], w0) + b0[None, :]          # (V, 4H)

    whh0 = gate_w(params["w_hh_0"])                                   # (H, 4H)
    wih1 = gate_w(params["w_ih_1"])                                   # (H, 4H)
    whh1 = gate_w(params["w_hh_1"])                                   # (H, 4H)
    b1 = gate_b(params["b_ih_1"], params["b_hh_1"]).reshape(1, 4 * H)

    top = jnp.concatenate([whh0, wih1], axis=1)                       # (H, 8H)
    bot = jnp.concatenate([jnp.zeros_like(whh1), whh1], axis=1)       # (H, 8H)
    w_stack = jnp.concatenate([top, bot], axis=0)                     # (2H, 8H)

    return {
        "table0": table0,
        "w_stack": w_stack,
        "b1": b1,
        "w_out": params["w_out"].T.astype(jnp.float32),               # (H, V)
        "b_out": params["b_out"].reshape(1, -1).astype(jnp.float32),  # (1, V)
    }


# ------------------------------ full Decoder ---------------------------------
@jax.jit
def decoder_forward(tokens, hidden, cell, prep):
    """tokens: (B, T) int32, hidden/cell: (n_layers, B, H), prep: prepared params.
    Returns (output (B, T, V), hidden (L, B, H), cell (L, B, H))."""
    B, T = tokens.shape
    H = HIDDEN_SIZE
    V = OUTPUT_SIZE

    # time-major flattening: row n = t*B + b (per-step rows contiguous)
    tok_tm = tokens.T.reshape(T * B, 1).astype(jnp.int32)

    vmem = pl.BlockSpec(memory_space=pltpu.MemorySpace.VMEM)
    out_flat, h_n, c_n = pl.pallas_call(
        decoder_kernel,
        out_shape=(
            jax.ShapeDtypeStruct((T * B, V), jnp.float32),
            jax.ShapeDtypeStruct((N_LAYERS, B, H), jnp.float32),
            jax.ShapeDtypeStruct((N_LAYERS, B, H), jnp.float32),
        ),
        in_specs=[vmem] * 8,
        out_specs=(vmem, vmem, vmem),
        scratch_shapes=[
            pltpu.VMEM((T * B, 4 * H), jnp.float32),   # layer-0 gate prefill
            pltpu.VMEM((T * B, H), jnp.float32),       # layer-1 hidden outputs
        ],
    )(tok_tm, prep["table0"], prep["w_stack"], prep["b1"],
      prep["w_out"], prep["b_out"], hidden, cell)

    output = out_flat.reshape(T, B, V).transpose(1, 0, 2)   # back to (B, T, V)
    return output, h_n, c_n


# --------------------------- pure-JAX reference -------------------------------
def reference_forward(tokens, hidden, cell, params):
    emb = params["embedding"][tokens]              # (B, T, E)
    x = emb
    hs, cs = [], []
    H = HIDDEN_SIZE
    for layer in range(N_LAYERS):
        w_ih = params[f"w_ih_{layer}"]
        w_hh = params[f"w_hh_{layer}"]
        b = params[f"b_ih_{layer}"] + params[f"b_hh_{layer}"]
        h, c = hidden[layer], cell[layer]
        ys = []
        for t in range(x.shape[1]):
            gates = x[:, t] @ w_ih.T + h @ w_hh.T + b
            i = jax.nn.sigmoid(gates[:, :H])
            f = jax.nn.sigmoid(gates[:, H:2 * H])
            g = jnp.tanh(gates[:, 2 * H:3 * H])
            o = jax.nn.sigmoid(gates[:, 3 * H:])
            c = f * c + i * g
            h = o * jnp.tanh(c)
            ys.append(h)
        x = jnp.stack(ys, axis=1)
        hs.append(h)
        cs.append(c)
    out = x @ params["w_out"].T + params["b_out"]
    return out, jnp.stack(hs), jnp.stack(cs)


# --------------------------------- main ---------------------------------------
def init_params(key):
    params = {}
    keys = jax.random.split(key, 4 + 4 * N_LAYERS)
    k = iter(keys)
    scale = 1.0 / np.sqrt(HIDDEN_SIZE)
    params["embedding"] = jax.random.normal(
        next(k), (OUTPUT_SIZE, EMB_SIZE), jnp.float32)
    for layer in range(N_LAYERS):
        in_f = EMB_SIZE if layer == 0 else HIDDEN_SIZE
        params[f"w_ih_{layer}"] = scale * jax.random.normal(
            next(k), (4 * HIDDEN_SIZE, in_f), jnp.float32)
        params[f"w_hh_{layer}"] = scale * jax.random.normal(
            next(k), (4 * HIDDEN_SIZE, HIDDEN_SIZE), jnp.float32)
        params[f"b_ih_{layer}"] = scale * jax.random.normal(
            next(k), (4 * HIDDEN_SIZE,), jnp.float32)
        params[f"b_hh_{layer}"] = scale * jax.random.normal(
            next(k), (4 * HIDDEN_SIZE,), jnp.float32)
    params["w_out"] = scale * jax.random.normal(
        next(k), (OUTPUT_SIZE, HIDDEN_SIZE), jnp.float32)
    params["b_out"] = scale * jax.random.normal(
        next(k), (OUTPUT_SIZE,), jnp.float32)
    return params


if __name__ == "__main__":
    key = jax.random.PRNGKey(0)
    k_tok, k_h, k_c, k_p = jax.random.split(key, 4)

    tokens = jax.random.randint(k_tok, (BATCH, SEQ), 0, OUTPUT_SIZE, jnp.int32)
    hidden = jax.random.normal(k_h, (N_LAYERS, BATCH, HIDDEN_SIZE), jnp.float32)
    cell = jax.random.normal(k_c, (N_LAYERS, BATCH, HIDDEN_SIZE), jnp.float32)
    params = init_params(k_p)

    prepared = prepare_params(params)          # one-time weight prep (cached)

    out, h_n, c_n = decoder_forward(tokens, hidden, cell, prepared)
    jax.block_until_ready((out, h_n, c_n))

    ref_out, ref_h, ref_c = reference_forward(tokens, hidden, cell, params)
    np.testing.assert_allclose(np.asarray(out), np.asarray(ref_out),
                               rtol=1e-4, atol=1e-4)
    np.testing.assert_allclose(np.asarray(h_n), np.asarray(ref_h),
                               rtol=1e-4, atol=1e-4)
    np.testing.assert_allclose(np.asarray(c_n), np.asarray(ref_c),
                               rtol=1e-4, atol=1e-4)

    assert out.shape == (BATCH, SEQ, OUTPUT_SIZE)
    assert h_n.shape == (N_LAYERS, BATCH, HIDDEN_SIZE)
    assert c_n.shape == (N_LAYERS, BATCH, HIDDEN_SIZE)
    print("KERNEL_OK")
</pallas_src>

<mosaic_0001>
module attributes {stable_mosaic.version = 11 : i64} {
  func.func @decoder_kernel(%arg0: memref<16x1xi32, #tpu.memory_space<vmem>>, %arg1: memref<16x128xf32, #tpu.memory_space<vmem>>, %arg2: memref<64x256xf32, #tpu.memory_space<vmem>>, %arg3: memref<1x128xf32, #tpu.memory_space<vmem>>, %arg4: memref<32x16xf32, #tpu.memory_space<vmem>>, %arg5: memref<1x16xf32, #tpu.memory_space<vmem>>, %arg6: memref<2x2x32xf32, #tpu.memory_space<vmem>>, %arg7: memref<2x2x32xf32, #tpu.memory_space<vmem>>, %arg8: memref<16x16xf32, #tpu.memory_space<vmem>>, %arg9: memref<2x2x32xf32, #tpu.memory_space<vmem>>, %arg10: memref<2x2x32xf32, #tpu.memory_space<vmem>>, %arg11: memref<16x128xf32, #tpu.memory_space<vmem>>, %arg12: memref<16x32xf32, #tpu.memory_space<vmem>>) attributes {dimension_semantics = [], scalar_prefetch = 0 : i64, scratch_operands = 2 : i64, tpu.core_type = #tpu.core_type<tc>} {
    %0 = tpu.iota {dimensions = array<i32: 1>} : vector<16x16xi32>
    %c0 = arith.constant 0 : index
    %c0_0 = arith.constant 0 : index
    %1 = vector.load %arg0[%c0, %c0_0] : memref<16x1xi32, #tpu.memory_space<vmem>>, vector<16x1xi32>
    %2 = vector.broadcast %1 : vector<16x1xi32> to vector<16x16xi32>
    %3 = arith.cmpi eq, %2, %0 : vector<16x16xi32>
    %4 = arith.extui %3 : vector<16x16xi1> to vector<16x16xi32>
    %5 = arith.sitofp %4 : vector<16x16xi32> to vector<16x16xf32>
    %c0_1 = arith.constant 0 : index
    %c0_2 = arith.constant 0 : index
    %6 = vector.load %arg1[%c0_1, %c0_2] : memref<16x128xf32, #tpu.memory_space<vmem>>, vector<16x128xf32>
    %cst = arith.constant dense<0.000000e+00> : vector<16x128xf32>
    %7 = tpu.matmul %5, %6, %cst {dimension_numbers = #tpu.dot_dimension_numbers<[1], [0], [0], [1], [0, 0, 1, 1], [], []>, precision = #tpu.contract_precision<fp32>} : vector<16x16xf32>, vector<16x128xf32>, vector<16x128xf32> -> vector<16x128xf32>
    %c0_3 = arith.constant 0 : index
    %c0_4 = arith.constant 0 : index
    %8 = vector.load %arg11[%c0_3, %c0_4] : memref<16x128xf32, #tpu.memory_space<vmem>>, vector<16x128xf32>
    tpu.vector_store %arg11[%c0_3, %c0_4], %7 {strides = array<i32>} : memref<16x128xf32, #tpu.memory_space<vmem>>, vector<16x128xf32>,
    %c0_5 = arith.constant 0 : index
    %c0_6 = arith.constant 0 : index
    %9 = vector.load %arg2[%c0_5, %c0_6] : memref<64x256xf32, #tpu.memory_space<vmem>>, vector<64x256xf32>
    %c0_7 = arith.constant 0 : index
    %c0_8 = arith.constant 0 : index
    %10 = vector.load %arg3[%c0_7, %c0_8] : memref<1x128xf32, #tpu.memory_space<vmem>>, vector<1x128xf32>
    %c0_9 = arith.constant 0 : index
    %c0_10 = arith.constant 0 : index
    %c0_11 = arith.constant 0 : index
    %11 = vector.load %arg6[%c0_9, %c0_10, %c0_11] : memref<2x2x32xf32, #tpu.memory_space<vmem>>, vector<1x2x32xf32>
    %12 = vector.shape_cast %11 : vector<1x2x32xf32> to vector<2x32xf32>
    %c0_12 = arith.constant 0 : index
    %c0_13 = arith.constant 0 : index
    %c0_14 = arith.constant 0 : index
    %13 = vector.load %arg7[%c0_12, %c0_13, %c0_14] : memref<2x2x32xf32, #tpu.memory_space<vmem>>, vector<1x2x32xf32>
    %14 = vector.shape_cast %13 : vector<1x2x32xf32> to vector<2x32xf32>
    %c1 = arith.constant 1 : index
    %c0_15 = arith.constant 0 : index
    %c0_16 = arith.constant 0 : index
    %15 = vector.load %arg6[%c1, %c0_15, %c0_16] : memref<2x2x32xf32, #tpu.memory_space<vmem>>, vector<1x2x32xf32>
    %16 = vector.shape_cast %15 : vector<1x2x32xf32> to vector<2x32xf32>
    %c1_17 = arith.constant 1 : index
    %c0_18 = arith.constant 0 : index
    %c0_19 = arith.constant 0 : index
    %17 = vector.load %arg7[%c1_17, %c0_18, %c0_19] : memref<2x2x32xf32, #tpu.memory_space<vmem>>, vector<1x2x32xf32>
    %18 = vector.shape_cast %17 : vector<1x2x32xf32> to vector<2x32xf32>
    %19 = tpu.concatenate %12, %16 in 1 : vector<2x32xf32>, vector<2x32xf32> -> vector<2x64xf32>
    %cst_20 = arith.constant dense<0.000000e+00> : vector<2x256xf32>
    %20 = tpu.matmul %19, %9, %cst_20 {dimension_numbers = #tpu.dot_dimension_numbers<[1], [0], [0], [1], [0, 0, 1, 1], [], []>, precision = #tpu.contract_precision<fp32>} : vector<2x64xf32>, vector<64x256xf32>, vector<2x256xf32> -> vector<2x256xf32>
    %21 = vector.extract_strided_slice %20 {offsets = [0, 0], sizes = [2, 128], strides = [1, 1]} : vector<2x256xf32> to vector<2x128xf32>
    %c0_21 = arith.constant 0 : index
    %c0_22 = arith.constant 0 : index
    %22 = vector.load %arg11[%c0_21, %c0_22] : memref<16x128xf32, #tpu.memory_space<vmem>>, vector<2x128xf32>
    %23 = arith.addf %21, %22 : vector<2x128xf32>
    %24 = math.tanh %23 : vector<2x128xf32>
    %25 = vector.extract_strided_slice %24 {offsets = [0, 0], sizes = [2, 32], strides = [1, 1]} : vector<2x128xf32> to vector<2x32xf32>
    %cst_23 = arith.constant 5.000000e-01 : f32
    %26 = vector.broadcast %cst_23 : f32 to vector<2x32xf32>
    %27 = arith.mulf %26, %25 : vector<2x32xf32>
    %cst_24 = arith.constant 5.000000e-01 : f32
    %28 = vector.broadcast %cst_24 : f32 to vector<2x32xf32>
    %29 = arith.addf %27, %28 : vector<2x32xf32>
    %30 = vector.extract_strided_slice %24 {offsets = [0, 32], sizes = [2, 32], strides = [1, 1]} : vector<2x128xf32> to vector<2x32xf32>
    %cst_25 = arith.constant 5.000000e-01 : f32
    %31 = vector.broadcast %cst_25 : f32 to vector<2x32xf32>
    %32 = arith.mulf %31, %30 : vector<2x32xf32>
    %cst_26 = arith.constant 5.000000e-01 : f32
    %33 = vector.broadcast %cst_26 : f32 to vector<2x32xf32>
    %34 = arith.addf %32, %33 : vector<2x32xf32>
    %35 = vector.extract_strided_slice %24 {offsets = [0, 64], sizes = [2, 32], strides = [1, 1]} : vector<2x128xf32> to vector<2x32xf32>
    %cst_27 = arith.constant 5.000000e-01 : f32
    %36 = vector.broadcast %cst_27 : f32 to vector<2x32xf32>
    %37 = arith.mulf %36, %35 : vector<2x32xf32>
    %cst_28 = arith.constant 5.000000e-01 : f32
    %38 = vector.broadcast %cst_28 : f32 to vector<2x32xf32>
    %39 = arith.addf %37, %38 : vector<2x32xf32>
    %40 = vector.extract_strided_slice %24 {offsets = [0, 96], sizes = [2, 32], strides = [1, 1]} : vector<2x128xf32> to vector<2x32xf32>
    %41 = arith.mulf %34, %14 : vector<2x32xf32>
    %42 = arith.mulf %29, %40 : vector<2x32xf32>
    %43 = arith.addf %41, %42 : vector<2x32xf32>
    %44 = math.tanh %43 : vector<2x32xf32>
    %45 = arith.mulf %39, %44 : vector<2x32xf32>
    %46 = tpu.concatenate %45, %16 in 1 : vector<2x32xf32>, vector<2x32xf32> -> vector<2x64xf32>
    %cst_29 = arith.constant dense<0.000000e+00> : vector<2x256xf32>
    %47 = tpu.matmul %46, %9, %cst_29 {dimension_numbers = #tpu.dot_dimension_numbers<[1], [0], [0], [1], [0, 0, 1, 1], [], []>, precision = #tpu.contract_precision<fp32>} : vector<2x64xf32>, vector<64x256xf32>, vector<2x256xf32> -> vector<2x256xf32>
    %48 = vector.extract_strided_slice %47 {offsets = [0, 0], sizes = [2, 128], strides = [1, 1]} : vector<2x256xf32> to vector<2x128xf32>
    %c2 = arith.constant 2 : index
    %c0_30 = arith.constant 0 : index
    %49 = vector.load %arg11[%c2, %c0_30] : memref<16x128xf32, #tpu.memory_space<vmem>>, vector<2x128xf32>
    %50 = arith.addf %48, %49 : vector<2x128xf32>
    %51 = math.tanh %50 : vector<2x128xf32>
    %52 = vector.extract_strided_slice %51 {offsets = [0, 0], sizes = [2, 32], strides = [1, 1]} : vector<2x128xf32> to vector<2x32xf32>
    %cst_31 = arith.constant 5.000000e-01 : f32
    %53 = vector.broadcast %cst_31 : f32 to vector<2x32xf32>
    %54 = arith.mulf %53, %52 : vector<2x32xf32>
    %cst_32 = arith.constant 5.000000e-01 : f32
    %55 = vector.broadcast %cst_32 : f32 to vector<2x32xf32>
    %56 = arith.addf %54, %55 : vector<2x32xf32>
    %57 = vector.extract_strided_slice %51 {offsets = [0, 32], sizes = [2, 32], strides = [1, 1]} : vector<2x128xf32> to vector<2x32xf32>
    %cst_33 = arith.constant 5.000000e-01 : f32
    %58 = vector.broadcast %cst_33 : f32 to vector<2x32xf32>
    %59 = arith.mulf %58, %57 : vector<2x32xf32>
    %cst_34 = arith.constant 5.000000e-01 : f32
    %60 = vector.broadcast %cst_34 : f32 to vector<2x32xf32>
    %61 = arith.addf %59, %60 : vector<2x32xf32>
    %62 = vector.extract_strided_slice %51 {offsets = [0, 64], sizes = [2, 32], strides = [1, 1]} : vector<2x128xf32> to vector<2x32xf32>
    %cst_35 = arith.constant 5.000000e-01 : f32
    %63 = vector.broadcast %cst_35 : f32 to vector<2x32xf32>
    %64 = arith.mulf %63, %62 : vector<2x32xf32>
    %cst_36 = arith.constant 5.000000e-01 : f32
    %65 = vector.broadcast %cst_36 : f32 to vector<2x32xf32>
    %66 = arith.addf %64, %65 : vector<2x32xf32>
    %67 = vector.extract_strided_slice %51 {offsets = [0, 96], sizes = [2, 32], strides = [1, 1]} : vector<2x128xf32> to vector<2x32xf32>
    %68 = arith.mulf %61, %43 : vector<2x32xf32>
    %69 = arith.mulf %56, %67 : vector<2x32xf32>
    %70 = arith.addf %68, %69 : vector<2x32xf32>
    %71 = math.tanh %70 : vector<2x32xf32>
    %72 = arith.mulf %66, %71 : vector<2x32xf32>
    %73 = vector.extract_strided_slice %47 {offsets = [0, 128], sizes = [2, 128], strides = [1, 1]} : vector<2x256xf32> to vector<2x128xf32>
    %74 = vector.broadcast %10 : vector<1x128xf32> to vector<2x128xf32>
    %75 = arith.addf %73, %74 : vector<2x128xf32>
    %76 = math.tanh %75 : vector<2x128xf32>
    %77 = vector.extract_strided_slice %76 {offsets = [0, 0], sizes = [2, 32], strides = [1, 1]} : vector<2x128xf32> to vector<2x32xf32>
    %cst_37 = arith.constant 5.000000e-01 : f32
    %78 = vector.broadcast %cst_37 : f32 to vector<2x32xf32>
    %79 = arith.mulf %78, %77 : vector<2x32xf32>
    %cst_38 = arith.constant 5.000000e-01 : f32
    %80 = vector.broadcast %cst_38 : f32 to vector<2x32xf32>
    %81 = arith.addf %79, %80 : vector<2x32xf32>
    %82 = vector.extract_strided_slice %76 {offsets = [0, 32], sizes = [2, 32], strides = [1, 1]} : vector<2x128xf32> to vector<2x32xf32>
    %cst_39 = arith.constant 5.000000e-01 : f32
    %83 = vector.broadcast %cst_39 : f32 to vector<2x32xf32>
    %84 = arith.mulf %83, %82 : vector<2x32xf32>
    %cst_40 = arith.constant 5.000000e-01 : f32
    %85 = vector.broadcast %cst_40 : f32 to vector<2x32xf32>
    %86 = arith.addf %84, %85 : vector<2x32xf32>
    %87 = vector.extract_strided_slice %76 {offsets = [0, 64], sizes = [2, 32], strides = [1, 1]} : vector<2x128xf32> to vector<2x32xf32>
    %cst_41 = arith.constant 5.000000e-01 : f32
    %88 = vector.broadcast %cst_41 : f32 to vector<2x32xf32>
    %89 = arith.mulf %88, %87 : vector<2x32xf32>
    %cst_42 = arith.constant 5.000000e-01 : f32
    %90 = vector.broadcast %cst_42 : f32 to vector<2x32xf32>
    %91 = arith.addf %89, %90 : vector<2x32xf32>
    %92 = vector.extract_strided_slice %76 {offsets = [0, 96], sizes = [2, 32], strides = [1, 1]} : vector<2x128xf32> to vector<2x32xf32>
    %93 = arith.mulf %86, %18 : vector<2x32xf32>
    %94 = arith.mulf %81, %92 : vector<2x32xf32>
    %95 = arith.addf %93, %94 : vector<2x32xf32>
    %96 = math.tanh %95 : vector<2x32xf32>
    %97 = arith.mulf %91, %96 : vector<2x32xf32>
    %c0_43 = arith.constant 0 : index
    %c0_44 = arith.constant 0 : index
    %98 = vector.load %arg12[%c0_43, %c0_44] : memref<16x32xf32, #tpu.memory_space<vmem>>, vector<2x32xf32>
    tpu.vector_store %arg12[%c0_43, %c0_44], %97 {strides = array<i32>} : memref<16x32xf32, #tpu.memory_space<vmem>>, vector<2x32xf32>,
    %99 = tpu.concatenate %72, %97 in 1 : vector<2x32xf32>, vector<2x32xf32> -> vector<2x64xf32>
    %cst_45 = arith.constant dense<0.000000e+00> : vector<2x256xf32>
    %100 = tpu.matmul %99, %9, %cst_45 {dimension_numbers = #tpu.dot_dimension_numbers<[1], [0], [0], [1], [0, 0, 1, 1], [], []>, precision = #tpu.contract_precision<fp32>} : vector<2x64xf32>, vector<64x256xf32>, vector<2x256xf32> -> vector<2x256xf32>
    %101 = vector.extract_strided_slice %100 {offsets = [0, 0], sizes = [2, 128], strides = [1, 1]} : vector<2x256xf32> to vector<2x128xf32>
    %c4 = arith.constant 4 : index
    %c0_46 = arith.constant 0 : index
    %102 = vector.load %arg11[%c4, %c0_46] : memref<16x128xf32, #tpu.memory_space<vmem>>, vector<2x128xf32>
    %103 = arith.addf %101, %102 : vector<2x128xf32>
    %104 = math.tanh %103 : vector<2x128xf32>
    %105 = vector.extract_strided_slice %104 {offsets = [0, 0], sizes = [2, 32], strides = [1, 1]} : vector<2x128xf32> to vector<2x32xf32>
    %cst_47 = arith.constant 5.000000e-01 : f32
    %106 = vector.broadcast %cst_47 : f32 to vector<2x32xf32>
    %107 = arith.mulf %106, %105 : vector<2x32xf32>
    %cst_48 = arith.constant 5.000000e-01 : f32
    %108 = vector.broadcast %cst_48 : f32 to vector<2x32xf32>
    %109 = arith.addf %107, %108 : vector<2x32xf32>
    %110 = vector.extract_strided_slice %104 {offsets = [0, 32], sizes = [2, 32], strides = [1, 1]} : vector<2x128xf32> to vector<2x32xf32>
    %cst_49 = arith.constant 5.000000e-01 : f32
    %111 = vector.broadcast %cst_49 : f32 to vector<2x32xf32>
    %112 = arith.mulf %111, %110 : vector<2x32xf32>
    %cst_50 = arith.constant 5.000000e-01 : f32
    %113 = vector.broadcast %cst_50 : f32 to vector<2x32xf32>
    %114 = arith.addf %112, %113 : vector<2x32xf32>
    %115 = vector.extract_strided_slice %104 {offsets = [0, 64], sizes = [2, 32], strides = [1, 1]} : vector<2x128xf32> to vector<2x32xf32>
    %cst_51 = arith.constant 5.000000e-01 : f32
    %116 = vector.broadcast %cst_51 : f32 to vector<2x32xf32>
    %117 = arith.mulf %116, %115 : vector<2x32xf32>
    %cst_52 = arith.constant 5.000000e-01 : f32
    %118 = vector.broadcast %cst_52 : f32 to vector<2x32xf32>
    %119 = arith.addf %117, %118 : vector<2x32xf32>
    %120 = vector.extract_strided_slice %104 {offsets = [0, 96], sizes = [2, 32], strides = [1, 1]} : vector<2x128xf32> to vector<2x32xf32>
    %121 = arith.mulf %114, %70 : vector<2x32xf32>
    %122 = arith.mulf %109, %120 : vector<2x32xf32>
    %123 = arith.addf %121, %122 : vector<2x32xf32>
    %124 = math.tanh %123 : vector<2x32xf32>
    %125 = arith.mulf %119, %124 : vector<2x32xf32>
    %126 = vector.extract_strided_slice %100 {offsets = [0, 128], sizes = [2, 128], strides = [1, 1]} : vector<2x256xf32> to vector<2x128xf32>
    %127 = vector.broadcast %10 : vector<1x128xf32> to vector<2x128xf32>
    %128 = arith.addf %126, %127 : vector<2x128xf32>
    %129 = math.tanh %128 : vector<2x128xf32>
    %130 = vector.extract_strided_slice %129 {offsets = [0, 0], sizes = [2, 32], strides = [1, 1]} : vector<2x128xf32> to vector<2x32xf32>
    %cst_53 = arith.constant 5.000000e-01 : f32
    %131 = vector.broadcast %cst_53 : f32 to vector<2x32xf32>
    %132 = arith.mulf %131, %130 : vector<2x32xf32>
    %cst_54 = arith.constant 5.000000e-01 : f32
    %133 = vector.broadcast %cst_54 : f32 to vector<2x32xf32>
    %134 = arith.addf %132, %133 : vector<2x32xf32>
    %135 = vector.extract_strided_slice %129 {offsets = [0, 32], sizes = [2, 32], strides = [1, 1]} : vector<2x128xf32> to vector<2x32xf32>
    %cst_55 = arith.constant 5.000000e-01 : f32
    %136 = vector.broadcast %cst_55 : f32 to vector<2x32xf32>
    %137 = arith.mulf %136, %135 : vector<2x32xf32>
    %cst_56 = arith.constant 5.000000e-01 : f32
    %138 = vector.broadcast %cst_56 : f32 to vector<2x32xf32>
    %139 = arith.addf %137, %138 : vector<2x32xf32>
    %140 = vector.extract_strided_slice %129 {offsets = [0, 64], sizes = [2, 32], strides = [1, 1]} : vector<2x128xf32> to vector<2x32xf32>
    %cst_57 = arith.constant 5.000000e-01 : f32
    %141 = vector.broadcast %cst_57 : f32 to vector<2x32xf32>
    %142 = arith.mulf %141, %140 : vector<2x32xf32>
    %cst_58 = arith.constant 5.000000e-01 : f32
    %143 = vector.broadcast %cst_58 : f32 to vector<2x32xf32>
    %144 = arith.addf %142, %143 : vector<2x32xf32>
    %145 = vector.extract_strided_slice %129 {offsets = [0, 96], sizes = [2, 32], strides = [1, 1]} : vector<2x128xf32> to vector<2x32xf32>
    %146 = arith.mulf %139, %95 : vector<2x32xf32>
    %147 = arith.mulf %134, %145 : vector<2x32xf32>
    %148 = arith.addf %146, %147 : vector<2x32xf32>
    %149 = math.tanh %148 : vector<2x32xf32>
    %150 = arith.mulf %144, %149 : vector<2x32xf32>
    %c2_59 = arith.constant 2 : index
    %c0_60 = arith.constant 0 : index
    %151 = vector.load %arg12[%c2_59, %c0_60] : memref<16x32xf32, #tpu.memory_space<vmem>>, vector<2x32xf32>
    tpu.vector_store %arg12[%c2_59, %c0_60], %150 {strides = array<i32>} : memref<16x32xf32, #tpu.memory_space<vmem>>, vector<2x32xf32>,
    %152 = tpu.concatenate %125, %150 in 1 : vector<2x32xf32>, vector<2x32xf32> -> vector<2x64xf32>
    %cst_61 = arith.constant dense<0.000000e+00> : vector<2x256xf32>
    %153 = tpu.matmul %152, %9, %cst_61 {dimension_numbers = #tpu.dot_dimension_numbers<[1], [0], [0], [1], [0, 0, 1, 1], [], []>, precision = #tpu.contract_precision<fp32>} : vector<2x64xf32>, vector<64x256xf32>, vector<2x256xf32> -> vector<2x256xf32>
    %154 = vector.extract_strided_slice %153 {offsets = [0, 0], sizes = [2, 128], strides = [1, 1]} : vector<2x256xf32> to vector<2x128xf32>
    %c6 = arith.constant 6 : index
    %c0_62 = arith.constant 0 : index
    %155 = vector.load %arg11[%c6, %c0_62] : memref<16x128xf32, #tpu.memory_space<vmem>>, vector<2x128xf32>
    %156 = arith.addf %154, %155 : vector<2x128xf32>
    %157 = math.tanh %156 : vector<2x128xf32>
    %158 = vector.extract_strided_slice %157 {offsets = [0, 0], sizes = [2, 32], strides = [1, 1]} : vector<2x128xf32> to vector<2x32xf32>
    %cst_63 = arith.constant 5.000000e-01 : f32
    %159 = vector.broadcast %cst_63 : f32 to vector<2x32xf32>
    %160 = arith.mulf %159, %158 : vector<2x32xf32>
    %cst_64 = arith.constant 5.000000e-01 : f32
    %161 = vector.broadcast %cst_64 : f32 to vector<2x32xf32>
    %162 = arith.addf %160, %161 : vector<2x32xf32>
    %163 = vector.extract_strided_slice %157 {offsets = [0, 32], sizes = [2, 32], strides = [1, 1]} : vector<2x128xf32> to vector<2x32xf32>
    %cst_65 = arith.constant 5.000000e-01 : f32
    %164 = vector.broadcast %cst_65 : f32 to vector<2x32xf32>
    %165 = arith.mulf %164, %163 : vector<2x32xf32>
    %cst_66 = arith.constant 5.000000e-01 : f32
    %166 = vector.broadcast %cst_66 : f32 to vector<2x32xf32>
    %167 = arith.addf %165, %166 : vector<2x32xf32>
    %168 = vector.extract_strided_slice %157 {offsets = [0, 64], sizes = [2, 32], strides = [1, 1]} : vector<2x128xf32> to vector<2x32xf32>
    %cst_67 = arith.constant 5.000000e-01 : f32
    %169 = vector.broadcast %cst_67 : f32 to vector<2x32xf32>
    %170 = arith.mulf %169, %168 : vector<2x32xf32>
    %cst_68 = arith.constant 5.000000e-01 : f32
    %171 = vector.broadcast %cst_68 : f32 to vector<2x32xf32>
    %172 = arith.addf %170, %171 : vector<2x32xf32>
    %173 = vector.extract_strided_slice %157 {offsets = [0, 96], sizes = [2, 32], strides = [1, 1]} : vector<2x128xf32> to vector<2x32xf32>
    %174 = arith.mulf %167, %123 : vector<2x32xf32>
    %175 = arith.mulf %162, %173 : vector<2x32xf32>
    %176 = arith.addf %174, %175 : vector<2x32xf32>
    %177 = math.tanh %176 : vector<2x32xf32>
    %178 = arith.mulf %172, %177 : vector<2x32xf32>
    %179 = vector.extract_strided_slice %153 {offsets = [0, 128], sizes = [2, 128], strides = [1, 1]} : vector<2x256xf32> to vector<2x128xf32>
    %180 = vector.broadcast %10 : vector<1x128xf32> to vector<2x128xf32>
    %181 = arith.addf %179, %180 : vector<2x128xf32>
    %182 = math.tanh %181 : vector<2x128xf32>
    %183 = vector.extract_strided_slice %182 {offsets = [0, 0], sizes = [2, 32], strides = [1, 1]} : vector<2x128xf32> to vector<2x32xf32>
    %cst_69 = arith.constant 5.000000e-01 : f32
    %184 = vector.broadcast %cst_69 : f32 to vector<2x32xf32>
    %185 = arith.mulf %184, %183 : vector<2x32xf32>
    %cst_70 = arith.constant 5.000000e-01 : f32
    %186 = vector.broadcast %cst_70 : f32 to vector<2x32xf32>
    %187 = arith.addf %185, %186 : vector<2x32xf32>
    %188 = vector.extract_strided_slice %182 {offsets = [0, 32], sizes = [2, 32], strides = [1, 1]} : vector<2x128xf32> to vector<2x32xf32>
    %cst_71 = arith.constant 5.000000e-01 : f32
    %189 = vector.broadcast %cst_71 : f32 to vector<2x32xf32>
    %190 = arith.mulf %189, %188 : vector<2x32xf32>
    %cst_72 = arith.constant 5.000000e-01 : f32
    %191 = vector.broadcast %cst_72 : f32 to vector<2x32xf32>
    %192 = arith.addf %190, %191 : vector<2x32xf32>
    %193 = vector.extract_strided_slice %182 {offsets = [0, 64], sizes = [2, 32], strides = [1, 1]} : vector<2x128xf32> to vector<2x32xf32>
    %cst_73 = arith.constant 5.000000e-01 : f32
    %194 = vector.broadcast %cst_73 : f32 to vector<2x32xf32>
    %195 = arith.mulf %194, %193 : vector<2x32xf32>
    %cst_74 = arith.constant 5.000000e-01 : f32
    %196 = vector.broadcast %cst_74 : f32 to vector<2x32xf32>
    %197 = arith.addf %195, %196 : vector<2x32xf32>
    %198 = vector.extract_strided_slice %182 {offsets = [0, 96], sizes = [2, 32], strides = [1, 1]} : vector<2x128xf32> to vector<2x32xf32>
    %199 = arith.mulf %192, %148 : vector<2x32xf32>
    %200 = arith.mulf %187, %198 : vector<2x32xf32>
    %201 = arith.addf %199, %200 : vector<2x32xf32>
    %202 = math.tanh %201 : vector<2x32xf32>
    %203 = arith.mulf %197, %202 : vector<2x32xf32>
    %c4_75 = arith.constant 4 : index
    %c0_76 = arith.constant 0 : index
    %204 = vector.load %arg12[%c4_75, %c0_76] : memref<16x32xf32, #tpu.memory_space<vmem>>, vector<2x32xf32>
    tpu.vector_store %arg12[%c4_75, %c0_76], %203 {strides = array<i32>} : memref<16x32xf32, #tpu.memory_space<vmem>>, vector<2x32xf32>,
    %205 = tpu.concatenate %178, %203 in 1 : vector<2x32xf32>, vector<2x32xf32> -> vector<2x64xf32>
    %cst_77 = arith.constant dense<0.000000e+00> : vector<2x256xf32>
    %206 = tpu.matmul %205, %9, %cst_77 {dimension_numbers = #tpu.dot_dimension_numbers<[1], [0], [0], [1], [0, 0, 1, 1], [], []>, precision = #tpu.contract_precision<fp32>} : vector<2x64xf32>, vector<64x256xf32>, vector<2x256xf32> -> vector<2x256xf32>
    %207 = vector.extract_strided_slice %206 {offsets = [0, 0], sizes = [2, 128], strides = [1, 1]} : vector<2x256xf32> to vector<2x128xf32>
    %c8 = arith.constant 8 : index
    %c0_78 = arith.constant 0 : index
    %208 = vector.load %arg11[%c8, %c0_78] : memref<16x128xf32, #tpu.memory_space<vmem>>, vector<2x128xf32>
    %209 = arith.addf %207, %208 : vector<2x128xf32>
    %210 = math.tanh %209 : vector<2x128xf32>
    %211 = vector.extract_strided_slice %210 {offsets = [0, 0], sizes = [2, 32], strides = [1, 1]} : vector<2x128xf32> to vector<2x32xf32>
    %cst_79 = arith.constant 5.000000e-01 : f32
    %212 = vector.broadcast %cst_79 : f32 to vector<2x32xf32>
    %213 = arith.mulf %212, %211 : vector<2x32xf32>
    %cst_80 = arith.constant 5.000000e-01 : f32
    %214 = vector.broadcast %cst_80 : f32 to vector<2x32xf32>
    %215 = arith.addf %213, %214 : vector<2x32xf32>
    %216 = vector.extract_strided_slice %210 {offsets = [0, 32], sizes = [2, 32], strides = [1, 1]} : vector<2x128xf32> to vector<2x32xf32>
    %cst_81 = arith.constant 5.000000e-01 : f32
    %217 = vector.broadcast %cst_81 : f32 to vector<2x32xf32>
    %218 = arith.mulf %217, %216 : vector<2x32xf32>
    %cst_82 = arith.constant 5.000000e-01 : f32
    %219 = vector.broadcast %cst_82 : f32 to vector<2x32xf32>
    %220 = arith.addf %218, %219 : vector<2x32xf32>
    %221 = vector.extract_strided_slice %210 {offsets = [0, 64], sizes = [2, 32], strides = [1, 1]} : vector<2x128xf32> to vector<2x32xf32>
    %cst_83 = arith.constant 5.000000e-01 : f32
    %222 = vector.broadcast %cst_83 : f32 to vector<2x32xf32>
    %223 = arith.mulf %222, %221 : vector<2x32xf32>
    %cst_84 = arith.constant 5.000000e-01 : f32
    %224 = vector.broadcast %cst_84 : f32 to vector<2x32xf32>
    %225 = arith.addf %223, %224 : vector<2x32xf32>
    %226 = vector.extract_strided_slice %210 {offsets = [0, 96], sizes = [2, 32], strides = [1, 1]} : vector<2x128xf32> to vector<2x32xf32>
    %227 = arith.mulf %220, %176 : vector<2x32xf32>
    %228 = arith.mulf %215, %226 : vector<2x32xf32>
    %229 = arith.addf %227, %228 : vector<2x32xf32>
    %230 = math.tanh %229 : vector<2x32xf32>
    %231 = arith.mulf %225, %230 : vector<2x32xf32>
    %232 = vector.extract_strided_slice %206 {offsets = [0, 128], sizes = [2, 128], strides = [1, 1]} : vector<2x256xf32> to vector<2x128xf32>
    %233 = vector.broadcast %10 : vector<1x128xf32> to vector<2x128xf32>
    %234 = arith.addf %232, %233 : vector<2x128xf32>
    %235 = math.tanh %234 : vector<2x128xf32>
    %236 = vector.extract_strided_slice %235 {offsets = [0, 0], sizes = [2, 32], strides = [1, 1]} : vector<2x128xf32> to vector<2x32xf32>
    %cst_85 = arith.constant 5.000000e-01 : f32
    %237 = vector.broadcast %cst_85 : f32 to vector<2x32xf32>
    %238 = arith.mulf %237, %236 : vector<2x32xf32>
    %cst_86 = arith.constant 5.000000e-01 : f32
    %239 = vector.broadcast %cst_86 : f32 to vector<2x32xf32>
    %240 = arith.addf %238, %239 : vector<2x32xf32>
    %241 = vector.extract_strided_slice %235 {offsets = [0, 32], sizes = [2, 32], strides = [1, 1]} : vector<2x128xf32> to vector<2x32xf32>
    %cst_87 = arith.constant 5.000000e-01 : f32
    %242 = vector.broadcast %cst_87 : f32 to vector<2x32xf32>
    %243 = arith.mulf %242, %241 : vector<2x32xf32>
    %cst_88 = arith.constant 5.000000e-01 : f32
    %244 = vector.broadcast %cst_88 : f32 to vector<2x32xf32>
    %245 = arith.addf %243, %244 : vector<2x32xf32>
    %246 = vector.extract_strided_slice %235 {offsets = [0, 64], sizes = [2, 32], strides = [1, 1]} : vector<2x128xf32> to vector<2x32xf32>
    %cst_89 = arith.constant 5.000000e-01 : f32
    %247 = vector.broadcast %cst_89 : f32 to vector<2x32xf32>
    %248 = arith.mulf %247, %246 : vector<2x32xf32>
    %cst_90 = arith.constant 5.000000e-01 : f32
    %249 = vector.broadcast %cst_90 : f32 to vector<2x32xf32>
    %250 = arith.addf %248, %249 : vector<2x32xf32>
    %251 = vector.extract_strided_slice %235 {offsets = [0, 96], sizes = [2, 32], strides = [1, 1]} : vector<2x128xf32> to vector<2x32xf32>
    %252 = arith.mulf %245, %201 : vector<2x32xf32>
    %253 = arith.mulf %240, %251 : vector<2x32xf32>
    %254 = arith.addf %252, %253 : vector<2x32xf32>
    %255 = math.tanh %254 : vector<2x32xf32>
    %256 = arith.mulf %250, %255 : vector<2x32xf32>
    %c6_91 = arith.constant 6 : index
    %c0_92 = arith.constant 0 : index
    %257 = vector.load %arg12[%c6_91, %c0_92] : memref<16x32xf32, #tpu.memory_space<vmem>>, vector<2x32xf32>
    tpu.vector_store %arg12[%c6_91, %c0_92], %256 {strides = array<i32>} : memref<16x32xf32, #tpu.memory_space<vmem>>, vector<2x32xf32>,
    %258 = tpu.concatenate %231, %256 in 1 : vector<2x32xf32>, vector<2x32xf32> -> vector<2x64xf32>
    %cst_93 = arith.constant dense<0.000000e+00> : vector<2x256xf32>
    %259 = tpu.matmul %258, %9, %cst_93 {dimension_numbers = #tpu.dot_dimension_numbers<[1], [0], [0], [1], [0, 0, 1, 1], [], []>, precision = #tpu.contract_precision<fp32>} : vector<2x64xf32>, vector<64x256xf32>, vector<2x256xf32> -> vector<2x256xf32>
    %260 = vector.extract_strided_slice %259 {offsets = [0, 0], sizes = [2, 128], strides = [1, 1]} : vector<2x256xf32> to vector<2x128xf32>
    %c10 = arith.constant 10 : index
    %c0_94 = arith.constant 0 : index
    %261 = vector.load %arg11[%c10, %c0_94] : memref<16x128xf32, #tpu.memory_space<vmem>>, vector<2x128xf32>
    %262 = arith.addf %260, %261 : vector<2x128xf32>
    %263 = math.tanh %262 : vector<2x128xf32>
    %264 = vector.extract_strided_slice %263 {offsets = [0, 0], sizes = [2, 32], strides = [1, 1]} : vector<2x128xf32> to vector<2x32xf32>
    %cst_95 = arith.constant 5.000000e-01 : f32
    %265 = vector.broadcast %cst_95 : f32 to vector<2x32xf32>
    %266 = arith.mulf %265, %264 : vector<2x32xf32>
    %cst_96 = arith.constant 5.000000e-01 : f32
    %267 = vector.broadcast %cst_96 : f32 to vector<2x32xf32>
    %268 = arith.addf %266, %267 : vector<2x32xf32>
    %269 = vector.extract_strided_slice %263 {offsets = [0, 32], sizes = [2, 32], strides = [1, 1]} : vector<2x128xf32> to vector<2x32xf32>
    %cst_97 = arith.constant 5.000000e-01 : f32
    %270 = vector.broadcast %cst_97 : f32 to vector<2x32xf32>
    %271 = arith.mulf %270, %269 : vector<2x32xf32>
    %cst_98 = arith.constant 5.000000e-01 : f32
    %272 = vector.broadcast %cst_98 : f32 to vector<2x32xf32>
    %273 = arith.addf %271, %272 : vector<2x32xf32>
    %274 = vector.extract_strided_slice %263 {offsets = [0, 64], sizes = [2, 32], strides = [1, 1]} : vector<2x128xf32> to vector<2x32xf32>
    %cst_99 = arith.constant 5.000000e-01 : f32
    %275 = vector.broadcast %cst_99 : f32 to vector<2x32xf32>
    %276 = arith.mulf %275, %274 : vector<2x32xf32>
    %cst_100 = arith.constant 5.000000e-01 : f32
    %277 = vector.broadcast %cst_100 : f32 to vector<2x32xf32>
    %278 = arith.addf %276, %277 : vector<2x32xf32>
    %279 = vector.extract_strided_slice %263 {offsets = [0, 96], sizes = [2, 32], strides = [1, 1]} : vector<2x128xf32> to vector<2x32xf32>
    %280 = arith.mulf %273, %229 : vector<2x32xf32>
    %281 = arith.mulf %268, %279 : vector<2x32xf32>
    %282 = arith.addf %280, %281 : vector<2x32xf32>
    %283 = math.tanh %282 : vector<2x32xf32>
    %284 = arith.mulf %278, %283 : vector<2x32xf32>
    %285 = vector.extract_strided_slice %259 {offsets = [0, 128], sizes = [2, 128], strides = [1, 1]} : vector<2x256xf32> to vector<2x128xf32>
    %286 = vector.broadcast %10 : vector<1x128xf32> to vector<2x128xf32>
    %287 = arith.addf %285, %286 : vector<2x128xf32>
    %288 = math.tanh %287 : vector<2x128xf32>
    %289 = vector.extract_strided_slice %288 {offsets = [0, 0], sizes = [2, 32], strides = [1, 1]} : vector<2x128xf32> to vector<2x32xf32>
    %cst_101 = arith.constant 5.000000e-01 : f32
    %290 = vector.broadcast %cst_101 : f32 to vector<2x32xf32>
    %291 = arith.mulf %290, %289 : vector<2x32xf32>
    %cst_102 = arith.constant 5.000000e-01 : f32
    %292 = vector.broadcast %cst_102 : f32 to vector<2x32xf32>
    %293 = arith.addf %291, %292 : vector<2x32xf32>
    %294 = vector.extract_strided_slice %288 {offsets = [0, 32], sizes = [2, 32], strides = [1, 1]} : vector<2x128xf32> to vector<2x32xf32>
    %cst_103 = arith.constant 5.000000e-01 : f32
    %295 = vector.broadcast %cst_103 : f32 to vector<2x32xf32>
    %296 = arith.mulf %295, %294 : vector<2x32xf32>
    %cst_104 = arith.constant 5.000000e-01 : f32
    %297 = vector.broadcast %cst_104 : f32 to vector<2x32xf32>
    %298 = arith.addf %296, %297 : vector<2x32xf32>
    %299 = vector.extract_strided_slice %288 {offsets = [0, 64], sizes = [2, 32], strides = [1, 1]} : vector<2x128xf32> to vector<2x32xf32>
    %cst_105 = arith.constant 5.000000e-01 : f32
    %300 = vector.broadcast %cst_105 : f32 to vector<2x32xf32>
    %301 = arith.mulf %300, %299 : vector<2x32xf32>
    %cst_106 = arith.constant 5.000000e-01 : f32
    %302 = vector.broadcast %cst_106 : f32 to vector<2x32xf32>
    %303 = arith.addf %301, %302 : vector<2x32xf32>
    %304 = vector.extract_strided_slice %288 {offsets = [0, 96], sizes = [2, 32], strides = [1, 1]} : vector<2x128xf32> to vector<2x32xf32>
    %305 = arith.mulf %298, %254 : vector<2x32xf32>
    %306 = arith.mulf %293, %304 : vector<2x32xf32>
    %307 = arith.addf %305, %306 : vector<2x32xf32>
    %308 = math.tanh %307 : vector<2x32xf32>
    %309 = arith.mulf %303, %308 : vector<2x32xf32>
    %c8_107 = arith.constant 8 : index
    %c0_108 = arith.constant 0 : index
    %310 = vector.load %arg12[%c8_107, %c0_108] : memref<16x32xf32, #tpu.memory_space<vmem>>, vector<2x32xf32>
    tpu.vector_store %arg12[%c8_107, %c0_108], %309 {strides = array<i32>} : memref<16x32xf32, #tpu.memory_space<vmem>>, vector<2x32xf32>,
    %311 = tpu.concatenate %284, %309 in 1 : vector<2x32xf32>, vector<2x32xf32> -> vector<2x64xf32>
    %cst_109 = arith.constant dense<0.000000e+00> : vector<2x256xf32>
    %312 = tpu.matmul %311, %9, %cst_109 {dimension_numbers = #tpu.dot_dimension_numbers<[1], [0], [0], [1], [0, 0, 1, 1], [], []>, precision = #tpu.contract_precision<fp32>} : vector<2x64xf32>, vector<64x256xf32>, vector<2x256xf32> -> vector<2x256xf32>
    %313 = vector.extract_strided_slice %312 {offsets = [0, 0], sizes = [2, 128], strides = [1, 1]} : vector<2x256xf32> to vector<2x128xf32>
    %c12 = arith.constant 12 : index
    %c0_110 = arith.constant 0 : index
    %314 = vector.load %arg11[%c12, %c0_110] : memref<16x128xf32, #tpu.memory_space<vmem>>, vector<2x128xf32>
    %315 = arith.addf %313, %314 : vector<2x128xf32>
    %316 = math.tanh %315 : vector<2x128xf32>
    %317 = vector.extract_strided_slice %316 {offsets = [0, 0], sizes = [2, 32], strides = [1, 1]} : vector<2x128xf32> to vector<2x32xf32>
    %cst_111 = arith.constant 5.000000e-01 : f32
    %318 = vector.broadcast %cst_111 : f32 to vector<2x32xf32>
    %319 = arith.mulf %318, %317 : vector<2x32xf32>
    %cst_112 = arith.constant 5.000000e-01 : f32
    %320 = vector.broadcast %cst_112 : f32 to vector<2x32xf32>
    %321 = arith.addf %319, %320 : vector<2x32xf32>
    %322 = vector.extract_strided_slice %316 {offsets = [0, 32], sizes = [2, 32], strides = [1, 1]} : vector<2x128xf32> to vector<2x32xf32>
    %cst_113 = arith.constant 5.000000e-01 : f32
    %323 = vector.broadcast %cst_113 : f32 to vector<2x32xf32>
    %324 = arith.mulf %323, %322 : vector<2x32xf32>
    %cst_114 = arith.constant 5.000000e-01 : f32
    %325 = vector.broadcast %cst_114 : f32 to vector<2x32xf32>
    %326 = arith.addf %324, %325 : vector<2x32xf32>
    %327 = vector.extract_strided_slice %316 {offsets = [0, 64], sizes = [2, 32], strides = [1, 1]} : vector<2x128xf32> to vector<2x32xf32>
    %cst_115 = arith.constant 5.000000e-01 : f32
    %328 = vector.broadcast %cst_115 : f32 to vector<2x32xf32>
    %329 = arith.mulf %328, %327 : vector<2x32xf32>
    %cst_116 = arith.constant 5.000000e-01 : f32
    %330 = vector.broadcast %cst_116 : f32 to vector<2x32xf32>
    %331 = arith.addf %329, %330 : vector<2x32xf32>
    %332 = vector.extract_strided_slice %316 {offsets = [0, 96], sizes = [2, 32], strides = [1, 1]} : vector<2x128xf32> to vector<2x32xf32>
    %333 = arith.mulf %326, %282 : vector<2x32xf32>
    %334 = arith.mulf %321, %332 : vector<2x32xf32>
    %335 = arith.addf %333, %334 : vector<2x32xf32>
    %336 = math.tanh %335 : vector<2x32xf32>
    %337 = arith.mulf %331, %336 : vector<2x32xf32>
    %338 = vector.extract_strided_slice %312 {offsets = [0, 128], sizes = [2, 128], strides = [1, 1]} : vector<2x256xf32> to vector<2x128xf32>
    %339 = vector.broadcast %10 : vector<1x128xf32> to vector<2x128xf32>
    %340 = arith.addf %338, %339 : vector<2x128xf32>
    %341 = math.tanh %340 : vector<2x128xf32>
    %342 = vector.extract_strided_slice %341 {offsets = [0, 0], sizes = [2, 32], strides = [1, 1]} : vector<2x128xf32> to vector<2x32xf32>
    %cst_117 = arith.constant 5.000000e-01 : f32
    %343 = vector.broadcast %cst_117 : f32 to vector<2x32xf32>
    %344 = arith.mulf %343, %342 : vector<2x32xf32>
    %cst_118 = arith.constant 5.000000e-01 : f32
    %345 = vector.broadcast %cst_118 : f32 to vector<2x32xf32>
    %346 = arith.addf %344, %345 : vector<2x32xf32>
    %347 = vector.extract_strided_slice %341 {offsets = [0, 32], sizes = [2, 32], strides = [1, 1]} : vector<2x128xf32> to vector<2x32xf32>
    %cst_119 = arith.constant 5.000000e-01 : f32
    %348 = vector.broadcast %cst_119 : f32 to vector<2x32xf32>
    %349 = arith.mulf %348, %347 : vector<2x32xf32>
    %cst_120 = arith.constant 5.000000e-01 : f32
    %350 = vector.broadcast %cst_120 : f32 to vector<2x32xf32>
    %351 = arith.addf %349, %350 : vector<2x32xf32>
    %352 = vector.extract_strided_slice %341 {offsets = [0, 64], sizes = [2, 32], strides = [1, 1]} : vector<2x128xf32> to vector<2x32xf32>
    %cst_121 = arith.constant 5.000000e-01 : f32
    %353 = vector.broadcast %cst_121 : f32 to vector<2x32xf32>
    %354 = arith.mulf %353, %352 : vector<2x32xf32>
    %cst_122 = arith.constant 5.000000e-01 : f32
    %355 = vector.broadcast %cst_122 : f32 to vector<2x32xf32>
    %356 = arith.addf %354, %355 : vector<2x32xf32>
    %357 = vector.extract_strided_slice %341 {offsets = [0, 96], sizes = [2, 32], strides = [1, 1]} : vector<2x128xf32> to vector<2x32xf32>
    %358 = arith.mulf %351, %307 : vector<2x32xf32>
    %359 = arith.mulf %346, %357 : vector<2x32xf32>
    %360 = arith.addf %358, %359 : vector<2x32xf32>
    %361 = math.tanh %360 : vector<2x32xf32>
    %362 = arith.mulf %356, %361 : vector<2x32xf32>
    %c10_123 = arith.constant 10 : index
    %c0_124 = arith.constant 0 : index
    %363 = vector.load %arg12[%c10_123, %c0_124] : memref<16x32xf32, #tpu.memory_space<vmem>>, vector<2x32xf32>
    tpu.vector_store %arg12[%c10_123, %c0_124], %362 {strides = array<i32>} : memref<16x32xf32, #tpu.memory_space<vmem>>, vector<2x32xf32>,
    %364 = tpu.concatenate %337, %362 in 1 : vector<2x32xf32>, vector<2x32xf32> -> vector<2x64xf32>
    %cst_125 = arith.constant dense<0.000000e+00> : vector<2x256xf32>
    %365 = tpu.matmul %364, %9, %cst_125 {dimension_numbers = #tpu.dot_dimension_numbers<[1], [0], [0], [1], [0, 0, 1, 1], [], []>, precision = #tpu.contract_precision<fp32>} : vector<2x64xf32>, vector<64x256xf32>, vector<2x256xf32> -> vector<2x256xf32>
    %366 = vector.extract_strided_slice %365 {offsets = [0, 0], sizes = [2, 128], strides = [1, 1]} : vector<2x256xf32> to vector<2x128xf32>
    %c14 = arith.constant 14 : index
    %c0_126 = arith.constant 0 : index
    %367 = vector.load %arg11[%c14, %c0_126] : memref<16x128xf32, #tpu.memory_space<vmem>>, vector<2x128xf32>
    %368 = arith.addf %366, %367 : vector<2x128xf32>
    %369 = math.tanh %368 : vector<2x128xf32>
    %370 = vector.extract_strided_slice %369 {offsets = [0, 0], sizes = [2, 32], strides = [1, 1]} : vector<2x128xf32> to vector<2x32xf32>
    %cst_127 = arith.constant 5.000000e-01 : f32
    %371 = vector.broadcast %cst_127 : f32 to vector<2x32xf32>
    %372 = arith.mulf %371, %370 : vector<2x32xf32>
    %cst_128 = arith.constant 5.000000e-01 : f32
    %373 = vector.broadcast %cst_128 : f32 to vector<2x32xf32>
    %374 = arith.addf %372, %373 : vector<2x32xf32>
    %375 = vector.extract_strided_slice %369 {offsets = [0, 32], sizes = [2, 32], strides = [1, 1]} : vector<2x128xf32> to vector<2x32xf32>
    %cst_129 = arith.constant 5.000000e-01 : f32
    %376 = vector.broadcast %cst_129 : f32 to vector<2x32xf32>
    %377 = arith.mulf %376, %375 : vector<2x32xf32>
    %cst_130 = arith.constant 5.000000e-01 : f32
    %378 = vector.broadcast %cst_130 : f32 to vector<2x32xf32>
    %379 = arith.addf %377, %378 : vector<2x32xf32>
    %380 = vector.extract_strided_slice %369 {offsets = [0, 64], sizes = [2, 32], strides = [1, 1]} : vector<2x128xf32> to vector<2x32xf32>
    %cst_131 = arith.constant 5.000000e-01 : f32
    %381 = vector.broadcast %cst_131 : f32 to vector<2x32xf32>
    %382 = arith.mulf %381, %380 : vector<2x32xf32>
    %cst_132 = arith.constant 5.000000e-01 : f32
    %383 = vector.broadcast %cst_132 : f32 to vector<2x32xf32>
    %384 = arith.addf %382, %383 : vector<2x32xf32>
    %385 = vector.extract_strided_slice %369 {offsets = [0, 96], sizes = [2, 32], strides = [1, 1]} : vector<2x128xf32> to vector<2x32xf32>
    %386 = arith.mulf %379, %335 : vector<2x32xf32>
    %387 = arith.mulf %374, %385 : vector<2x32xf32>
    %388 = arith.addf %386, %387 : vector<2x32xf32>
    %389 = math.tanh %388 : vector<2x32xf32>
    %390 = arith.mulf %384, %389 : vector<2x32xf32>
    %391 = vector.extract_strided_slice %365 {offsets = [0, 128], sizes = [2, 128], strides = [1, 1]} : vector<2x256xf32> to vector<2x128xf32>
    %392 = vector.broadcast %10 : vector<1x128xf32> to vector<2x128xf32>
    %393 = arith.addf %391, %392 : vector<2x128xf32>
    %394 = math.tanh %393 : vector<2x128xf32>
    %395 = vector.extract_strided_slice %394 {offsets = [0, 0], sizes = [2, 32], strides = [1, 1]} : vector<2x128xf32> to vector<2x32xf32>
    %cst_133 = arith.constant 5.000000e-01 : f32
    %396 = vector.broadcast %cst_133 : f32 to vector<2x32xf32>
    %397 = arith.mulf %396, %395 : vector<2x32xf32>
    %cst_134 = arith.constant 5.000000e-01 : f32
    %398 = vector.broadcast %cst_134 : f32 to vector<2x32xf32>
    %399 = arith.addf %397, %398 : vector<2x32xf32>
    %400 = vector.extract_strided_slice %394 {offsets = [0, 32], sizes = [2, 32], strides = [1, 1]} : vector<2x128xf32> to vector<2x32xf32>
    %cst_135 = arith.constant 5.000000e-01 : f32
    %401 = vector.broadcast %cst_135 : f32 to vector<2x32xf32>
    %402 = arith.mulf %401, %400 : vector<2x32xf32>
    %cst_136 = arith.constant 5.000000e-01 : f32
    %403 = vector.broadcast %cst_136 : f32 to vector<2x32xf32>
    %404 = arith.addf %402, %403 : vector<2x32xf32>
    %405 = vector.extract_strided_slice %394 {offsets = [0, 64], sizes = [2, 32], strides = [1, 1]} : vector<2x128xf32> to vector<2x32xf32>
    %cst_137 = arith.constant 5.000000e-01 : f32
    %406 = vector.broadcast %cst_137 : f32 to vector<2x32xf32>
    %407 = arith.mulf %406, %405 : vector<2x32xf32>
    %cst_138 = arith.constant 5.000000e-01 : f32
    %408 = vector.broadcast %cst_138 : f32 to vector<2x32xf32>
    %409 = arith.addf %407, %408 : vector<2x32xf32>
    %410 = vector.extract_strided_slice %394 {offsets = [0, 96], sizes = [2, 32], strides = [1, 1]} : vector<2x128xf32> to vector<2x32xf32>
    %411 = arith.mulf %404, %360 : vector<2x32xf32>
    %412 = arith.mulf %399, %410 : vector<2x32xf32>
    %413 = arith.addf %411, %412 : vector<2x32xf32>
    %414 = math.tanh %413 : vector<2x32xf32>
    %415 = arith.mulf %409, %414 : vector<2x32xf32>
    %c12_139 = arith.constant 12 : index
    %c0_140 = arith.constant 0 : index
    %416 = vector.load %arg12[%c12_139, %c0_140] : memref<16x32xf32, #tpu.memory_space<vmem>>, vector<2x32xf32>
    tpu.vector_store %arg12[%c12_139, %c0_140], %415 {strides = array<i32>} : memref<16x32xf32, #tpu.memory_space<vmem>>, vector<2x32xf32>,
    %417 = tpu.concatenate %390, %415 in 1 : vector<2x32xf32>, vector<2x32xf32> -> vector<2x64xf32>
    %cst_141 = arith.constant dense<0.000000e+00> : vector<2x256xf32>
    %418 = tpu.matmul %417, %9, %cst_141 {dimension_numbers = #tpu.dot_dimension_numbers<[1], [0], [0], [1], [0, 0, 1, 1], [], []>, precision = #tpu.contract_precision<fp32>} : vector<2x64xf32>, vector<64x256xf32>, vector<2x256xf32> -> vector<2x256xf32>
    %419 = vector.extract_strided_slice %418 {offsets = [0, 128], sizes = [2, 128], strides = [1, 1]} : vector<2x256xf32> to vector<2x128xf32>
    %420 = vector.broadcast %10 : vector<1x128xf32> to vector<2x128xf32>
    %421 = arith.addf %419, %420 : vector<2x128xf32>
    %422 = math.tanh %421 : vector<2x128xf32>
    %423 = vector.extract_strided_slice %422 {offsets = [0, 0], sizes = [2, 32], strides = [1, 1]} : vector<2x128xf32> to vector<2x32xf32>
    %cst_142 = arith.constant 5.000000e-01 : f32
    %424 = vector.broadcast %cst_142 : f32 to vector<2x32xf32>
    %425 = arith.mulf %424, %423 : vector<2x32xf32>
    %cst_143 = arith.constant 5.000000e-01 : f32
    %426 = vector.broadcast %cst_143 : f32 to vector<2x32xf32>
    %427 = arith.addf %425, %426 : vector<2x32xf32>
    %428 = vector.extract_strided_slice %422 {offsets = [0, 32], sizes = [2, 32], strides = [1, 1]} : vector<2x128xf32> to vector<2x32xf32>
    %cst_144 = arith.constant 5.000000e-01 : f32
    %429 = vector.broadcast %cst_144 : f32 to vector<2x32xf32>
    %430 = arith.mulf %429, %428 : vector<2x32xf32>
    %cst_145 = arith.constant 5.000000e-01 : f32
    %431 = vector.broadcast %cst_145 : f32 to vector<2x32xf32>
    %432 = arith.addf %430, %431 : vector<2x32xf32>
    %433 = vector.extract_strided_slice %422 {offsets = [0, 64], sizes = [2, 32], strides = [1, 1]} : vector<2x128xf32> to vector<2x32xf32>
    %cst_146 = arith.constant 5.000000e-01 : f32
    %434 = vector.broadcast %cst_146 : f32 to vector<2x32xf32>
    %435 = arith.mulf %434, %433 : vector<2x32xf32>
    %cst_147 = arith.constant 5.000000e-01 : f32
    %436 = vector.broadcast %cst_147 : f32 to vector<2x32xf32>
    %437 = arith.addf %435, %436 : vector<2x32xf32>
    %438 = vector.extract_strided_slice %422 {offsets = [0, 96], sizes = [2, 32], strides = [1, 1]} : vector<2x128xf32> to vector<2x32xf32>
    %439 = arith.mulf %432, %413 : vector<2x32xf32>
    %440 = arith.mulf %427, %438 : vector<2x32xf32>
    %441 = arith.addf %439, %440 : vector<2x32xf32>
    %442 = math.tanh %441 : vector<2x32xf32>
    %443 = arith.mulf %437, %442 : vector<2x32xf32>
    %c14_148 = arith.constant 14 : index
    %c0_149 = arith.constant 0 : index
    %444 = vector.load %arg12[%c14_148, %c0_149] : memref<16x32xf32, #tpu.memory_space<vmem>>, vector<2x32xf32>
    tpu.vector_store %arg12[%c14_148, %c0_149], %443 {strides = array<i32>} : memref<16x32xf32, #tpu.memory_space<vmem>>, vector<2x32xf32>,
    %c0_150 = arith.constant 0 : index
    %c0_151 = arith.constant 0 : index
    %c0_152 = arith.constant 0 : index
    %445 = vector.load %arg9[%c0_150, %c0_151, %c0_152] : memref<2x2x32xf32, #tpu.memory_space<vmem>>, vector<1x2x32xf32>
    %446 = vector.shape_cast %445 : vector<1x2x32xf32> to vector<2x32xf32>
    %447 = vector.shape_cast %390 : vector<2x32xf32> to vector<1x2x32xf32>
    tpu.vector_store %arg9[%c0_150, %c0_151, %c0_152], %447 {strides = array<i32>} : memref<2x2x32xf32, #tpu.memory_space<vmem>>, vector<1x2x32xf32>,
    %c0_153 = arith.constant 0 : index
    %c0_154 = arith.constant 0 : index
    %c0_155 = arith.constant 0 : index
    %448 = vector.load %arg10[%c0_153, %c0_154, %c0_155] : memref<2x2x32xf32, #tpu.memory_space<vmem>>, vector<1x2x32xf32>
    %449 = vector.shape_cast %448 : vector<1x2x32xf32> to vector<2x32xf32>
    %450 = vector.shape_cast %388 : vector<2x32xf32> to vector<1x2x32xf32>
    tpu.vector_store %arg10[%c0_153, %c0_154, %c0_155], %450 {strides = array<i32>} : memref<2x2x32xf32, #tpu.memory_space<vmem>>, vector<1x2x32xf32>,
    %c1_156 = arith.constant 1 : index
    %c0_157 = arith.constant 0 : index
    %c0_158 = arith.constant 0 : index
    %451 = vector.load %arg9[%c1_156, %c0_157, %c0_158] : memref<2x2x32xf32, #tpu.memory_space<vmem>>, vector<1x2x32xf32>
    %452 = vector.shape_cast %451 : vector<1x2x32xf32> to vector<2x32xf32>
    %453 = vector.shape_cast %443 : vector<2x32xf32> to vector<1x2x32xf32>
    tpu.vector_store %arg9[%c1_156, %c0_157, %c0_158], %453 {strides = array<i32>} : memref<2x2x32xf32, #tpu.memory_space<vmem>>, vector<1x2x32xf32>,
    %c1_159 = arith.constant 1 : index
    %c0_160 = arith.constant 0 : index
    %c0_161 = arith.constant 0 : index
    %454 = vector.load %arg10[%c1_159, %c0_160, %c0_161] : memref<2x2x32xf32, #tpu.memory_space<vmem>>, vector<1x2x32xf32>
    %455 = vector.shape_cast %454 : vector<1x2x32xf32> to vector<2x32xf32>
    %456 = vector.shape_cast %441 : vector<2x32xf32> to vector<1x2x32xf32>
    tpu.vector_store %arg10[%c1_159, %c0_160, %c0_161], %456 {strides = array<i32>} : memref<2x2x32xf32, #tpu.memory_space<vmem>>, vector<1x2x32xf32>,
    %c0_162 = arith.constant 0 : index
    %c0_163 = arith.constant 0 : index
    %457 = vector.load %arg12[%c0_162, %c0_163] : memref<16x32xf32, #tpu.memory_space<vmem>>, vector<16x32xf32>
    %c0_164 = arith.constant 0 : index
    %c0_165 = arith.constant 0 : index
    %458 = vector.load %arg4[%c0_164, %c0_165] : memref<32x16xf32, #tpu.memory_space<vmem>>, vector<32x16xf32>
    %cst_166 = arith.constant dense<0.000000e+00> : vector<16x16xf32>
    %459 = tpu.matmul %457, %458, %cst_166 {dimension_numbers = #tpu.dot_dimension_numbers<[1], [0], [0], [1], [0, 0, 1, 1], [], []>, precision = #tpu.contract_precision<fp32>} : vector<16x32xf32>, vector<32x16xf32>, vector<16x16xf32> -> vector<16x16xf32>
    %c0_167 = arith.constant 0 : index
    %c0_168 = arith.constant 0 : index
    %460 = vector.load %arg5[%c0_167, %c0_168] : memref<1x16xf32, #tpu.memory_space<vmem>>, vector<1x16xf32>
    %461 = vector.broadcast %460 : vector<1x16xf32> to vector<16x16xf32>
    %462 = arith.addf %459, %461 : vector<16x16xf32>
    %c0_169 = arith.constant 0 : index
    %c0_170 = arith.constant 0 : index
    %463 = vector.load %arg8[%c0_169, %c0_170] : memref<16x16xf32, #tpu.memory_space<vmem>>, vector<16x16xf32>
    tpu.vector_store %arg8[%c0_169, %c0_170], %462 {strides = array<i32>} : memref<16x16xf32, #tpu.memory_space<vmem>>, vector<16x16xf32>,
    return
  }
}

</mosaic_0001>

<llo_original>
// kernel: decoder_forward.1
$region0: #{decoder_forward.1}
  #allocation0 [shape = 'u32[]', space=smem, size = 0x4, offset = 0x4, fixed_abs, tag = 'smem constant byte address 0x4 - core index']
  #allocation1 [shape = 'u32[144,128]{1,0:T(1,128)}', space=vmem, size = 0x12000, scoped, tag = 'internal scratch']
  #allocation2 [shape = 'f32[16,128]{1,0:T(8,128)}', space=vmem, size = 0x2000, scoped, tag = 'scratch operand']
  #allocation3 [shape = 'f32[16,32]{1,0:T(8,128)}', space=vmem, size = 0x2000, scoped, tag = 'scratch operand']
  %s0 = inlined_call_operand.vmem [shape: s32[16,1], index: 0, kind: input, shape index: {}]
  %s1 = inlined_call_operand.vmem [shape: f32[16,128], index: 1, kind: input, shape index: {}]
  %s2 = inlined_call_operand.hbm [shape: f32[64,256], index: 2, kind: input, shape index: {}]
  %s3 = inlined_call_operand.vmem [shape: f32[1,128], index: 3, kind: input, shape index: {}]
  %s4 = inlined_call_operand.vmem [shape: f32[32,16], index: 4, kind: input, shape index: {}]
  %s5 = inlined_call_operand.vmem [shape: f32[1,16], index: 5, kind: input, shape index: {}]
  %s6 = inlined_call_operand.vmem [shape: f32[2,2,32], index: 6, kind: input, shape index: {}]
  %s7 = inlined_call_operand.vmem [shape: f32[2,2,32], index: 7, kind: input, shape index: {}]
  %s8 = inlined_call_operand.vmem [shape: f32[16,16], index: 8, kind: output, shape index: {0}]
  %s9 = inlined_call_operand.hbm [shape: f32[2,2,32], index: 9, kind: output, shape index: {1}]
  %s10 = inlined_call_operand.hbm [shape: f32[2,2,32], index: 10, kind: output, shape index: {2}]
  %11 = xla_tuple %s8, %s9, %s10
  %s12 = sld [smem:[#allocation0]]
  $region62: #{decoder_forward.1} parent=0
    _
  %s14 = ssub.s32 1, %s12
  %s15 = scalar_select 0, %s14, %s12
  $region1: #{decoder_forward.1} parent=0
    #allocation4 [shape = 'u8[65536]{0}', space=vmem, size = 0x10000, scoped, tag = 'input window, operand 2, single buffered']
    #allocation5 [shape = 's32[1]{0}', space=sflag, size = 0x4, scoped, tag = 'scoped memory for decoder_forward.1']
    #allocation6 [shape = 's32[1]{0}', space=sflag, size = 0x4, scoped, tag = 'scoped memory for decoder_forward.1']
    #allocation7 [shape = 'u8[2048]{0}', space=vmem, size = 0x800, scoped, tag = 'output window, operand 1, single buffered']
    #allocation8 [shape = 'u8[2048]{0}', space=vmem, size = 0x800, scoped, tag = 'output window, operand 2, single buffered']
    #allocation9 [shape = 's32[1]{0}', space=sflag, size = 0x4, scoped, tag = 'scoped memory for decoder_forward.1']
    %16 = vsyncpa [#allocation5], 0
    %17 = vsyncpa [#allocation6], 0
    %18 = vsyncpa [#allocation9], 0
    // Predicated region
    $region2: #{decoder_forward.1} parent=1 // pred_check
      _
    $region3: #{decoder_forward.1} parent=1 // pred_check_branch
      %20 = sbr.rel (0) target = $region5
    $region4: #{decoder_forward.1} parent=1 // pred_region
      _
    $region5: #{decoder_forward.1} parent=1 // pred_fallthru
      _
    // Predicated region
    $region6: #{decoder_forward.1} parent=1 // pred_check
      _
    $region7: #{decoder_forward.1} parent=1 // pred_check_branch
      %22 = sbr.rel (0) target = $region9
    $region8: #{decoder_forward.1} parent=1 // pred_region
      _
    $region9: #{decoder_forward.1} parent=1 // pred_fallthru
      _
    // Predicated region
    $region10: #{decoder_forward.1} parent=1 // pred_check
      _
    $region11: #{decoder_forward.1} parent=1 // pred_check_branch
      %24 = sbr.rel (0) target = $region13
    $region12: #{decoder_forward.1} parent=1 // pred_region
      %s26 = ssub.s32 2048, 2048
      %27 = vsyncadd [#allocation5], %s26
      %s28 = sshll.u32 [#allocation4], 4
      %s29 = int_to_ptr.vmem [resolvable:$true] %s28
      %34 = dma.hbm_to_vmem [thread:$0]  %s2, 2048, %s29, [#allocation5], 256, 256, 16
    $region13: #{decoder_forward.1} parent=1 // pred_fallthru
      _
    // Predicated region
    $region14: #{decoder_forward.1} parent=1 // pred_check
      _
    $region15: #{decoder_forward.1} parent=1 // pred_check_branch
      %36 = sbr.rel (0) target = $region17
    $region16: #{decoder_forward.1} parent=1 // pred_region
      _
    $region17: #{decoder_forward.1} parent=1 // pred_fallthru
      _
    // Predicated region
    $region18: #{decoder_forward.1} parent=1 // pred_check
      _
    $region19: #{decoder_forward.1} parent=1 // pred_check_branch
      %38 = sbr.rel (0) target = $region21
    $region20: #{decoder_forward.1} parent=1 // pred_region
      _
    $region21: #{decoder_forward.1} parent=1 // pred_fallthru
      _
    // Predicated region
    $region22: #{decoder_forward.1} parent=1 // pred_check
      _
    $region23: #{decoder_forward.1} parent=1 // pred_check_branch
      %40 = sbr.rel (0) target = $region25
    $region24: #{decoder_forward.1} parent=1 // pred_region
      _
    $region25: #{decoder_forward.1} parent=1 // pred_fallthru
      _
    // Predicated region
    $region26: #{decoder_forward.1} parent=1 // pred_check
      _
    $region27: #{decoder_forward.1} parent=1 // pred_check_branch
      %42 = sbr.rel (0) target = $region29
    $region28: #{decoder_forward.1} parent=1 // pred_region
      _
    $region29: #{decoder_forward.1} parent=1 // pred_fallthru
      _
    // Predicated region
    $region30: #{decoder_forward.1} parent=1 // pred_check
      _
    $region31: #{decoder_forward.1} parent=1 // pred_check_branch
      %44 = sbr.rel (0) target = $region33
    $region32: #{decoder_forward.1} parent=1 // pred_region
      _
    $region33: #{decoder_forward.1} parent=1 // pred_fallthru
      _
    // Predicated region
    $region34: #{decoder_forward.1} parent=1 // pred_check
      _
    $region35: #{decoder_forward.1} parent=1 // pred_check_branch
      %46 = sbr.rel (0) target = $region37
    $region36: #{decoder_forward.1} parent=1 // pred_region
      %47 = dma.done [#allocation5], 2048
    $region37: #{decoder_forward.1} parent=1 // pred_fallthru
      _
    %v48 = vlaneseq
    %v49 = vand.u32 %v48, 127
    %v50 = vld [vmem:[%s0] sm:$0xff]
    %v51 = vld [vmem:[%s0 + $0x8] sm:$0xff]
    %52 = vset.pattern.permute.xlu0 0
    %53 = vperm.xlu0 %52, %v50
    %v54 = vpop.permute.xlu0 %53
    %55 = vset.pattern.permute.xlu0 0
    %56 = vperm.xlu0 %55, %v51
    %v57 = vpop.permute.xlu0 %56
    %vm58 = vcmp.eq.s32.totalorder %v54, %v49
    %vm59 = vcmp.eq.s32.totalorder %v57, %v49
    %v60 = vsel %vm58, 1, 0
    %v61 = vsel %vm59, 1, 0
    %v62 = vcvt.s32.f32 %v60
    %v63 = vcvt.s32.f32 %v61
    %v64 = vld [vmem:[%s1] sm:$0xff]
    %v65 = vld [vmem:[%s1 + $0x8] sm:$0xff]
    %vm66 = vcmask 130048
    %v68 = vsel %vm66, %v62, 0
    %v71 = vsel %vm66, %v63, 0
    %73 = vmatprep.subr.mxu0 0.0
    %v74 = vand.u32 %v64, 4294901760
    %75 = vmatpush1.msra.mxu0 %v74
    %76 = vmatprep.subr.mxu0 0.0
    %v77 = vand.u32 %v65, 4294901760
    %78 = vmatpush1.msra.mxu0 %v77
    %79 = vmatprep.subr.mxu0 0.0
    %80 = vmatpush1.msra.mxu0 0.0
    %81 = vmatprep.subr.mxu0 0.0
    %82 = vmatpush1.msra.mxu0 0.0
    %83 = vmatprep.subr.mxu0 0.0
    %84 = vmatpush1.msra.mxu0 0.0
    %85 = vmatprep.subr.mxu0 0.0
    %86 = vmatpush1.msra.mxu0 0.0
    %87 = vmatprep.subr.mxu0 0.0
    %88 = vmatpush1.msra.mxu0 0.0
    %89 = vmatprep.subr.mxu0 0.0
    %90 = vmatpush1.msra.mxu0 0.0
    %91 = vmatprep.subr.mxu0 0.0
    %92 = vmatpush1.msra.mxu0 0.0
    %93 = vmatprep.subr.mxu0 0.0
    %94 = vmatpush1.msra.mxu0 0.0
    %95 = vmatprep.subr.mxu0 0.0
    %96 = vmatpush1.msra.mxu0 0.0
    %97 = vmatprep.subr.mxu0 0.0
    %98 = vmatpush1.msra.mxu0 0.0
    %99 = vmatprep.subr.mxu0 0.0
    %100 = vmatpush1.msra.mxu0 0.0
    %101 = vmatprep.subr.mxu0 0.0
    %102 = vmatpush1.msra.mxu0 0.0
    %103 = vmatprep.subr.mxu0 0.0
    %104 = vmatpush1.msra.mxu0 0.0
    %105 = vmatprep.subr.mxu0 0.0
    %106 = vmatpush1.msra.mxu0 0.0
    %107 = vmatprep.subr.mxu0 0.0
    %108 = vmatpush1.msra.mxu0 0.0
    %109 = vmatprep.subr.mxu0 0.0
    %110 = vmatpush1.msra.mxu0 0.0
    %111 = vmatprep.subr.mxu0 0.0
    %112 = vmatpush1.msra.mxu0 0.0
    %113 = vmatprep.subr.mxu0 0.0
    %114 = vmatpush1.msra.mxu0 0.0
    %115 = vmatprep.subr.mxu0 0.0
    %116 = vmatpush1.msra.mxu0 0.0
    %117 = vmatprep.subr.mxu0 0.0
    %118 = vmatpush1.msra.mxu0 0.0
    %119 = vmatprep.subr.mxu0 0.0
    %120 = vmatpush1.msra.mxu0 0.0
    %121 = vmatprep.subr.mxu0 0.0
    %122 = vmatpush1.msra.mxu0 0.0
    %123 = vmatprep.subr.mxu0 0.0
    %124 = vmatpush1.msra.mxu0 0.0
    %125 = vmatprep.subr.mxu0 0.0
    %126 = vmatpush1.msra.mxu0 0.0
    %127 = vmatprep.subr.mxu0 0.0
    %128 = vmatpush1.msra.mxu0 0.0
    %129 = vmatprep.subr.mxu0 0.0
    %130 = vmatpush1.msra.mxu0 0.0
    %131 = vmatprep.subr.mxu0 0.0
    %132 = vmatpush1.msra.mxu0 0.0
    %133 = vmatprep.subr.mxu0 0.0
    %134 = vmatpush1.msra.mxu0 0.0
    %135 = vmatprep.subr.mxu0 0.0
    %136 = vmatpush1.msra.mxu0 0.0
    %137 = vmatprep.subr.mxu0 0.0
    %138 = vmatpush1.msra.mxu0 0.0
    %139 = vmatprep.mubr.f32.mxu0 0.0
    %v140 = vand.u32 %v68, 4294901760
    %v141 = vsub.f32 %v68, %v140
    %v142 = vand.u32 %v141, 4294901760
    %v143 = vsub.f32 %v141, %v142
    %v144 = vand.u32 %v143, 4294901760
    %145 = vmatmul.mubr.f32.gmra.mrb[0].mxu0 %v144
    %v146 = vpop.f32.mrb[0].mxu0
    %v147 = vadd.f32 0.0, %v146
    %v148 = vpop.f32.mrb[0].mxu0
    %149 = vmatprep.mubr.f32.mxu0 0.0
    %v150 = vand.u32 %v71, 4294901760
    %v151 = vsub.f32 %v71, %v150
    %v152 = vand.u32 %v151, 4294901760
    %v153 = vsub.f32 %v151, %v152
    %v154 = vand.u32 %v153, 4294901760
    %155 = vmatmul.mubr.f32.gmra.mrb[0].mxu0 %v154
    %v156 = vpop.f32.mrb[0].mxu0
    %v157 = vadd.f32 0.0, %v156
    %v158 = vpop.f32.mrb[0].mxu0
    %159 = vdwg.mxu0
    %160 = vmatprep.subr.mxu0 0.0
    %v161 = vand.u32 %v64, 4294901760
    %v162 = vsub.f32 %v64, %v161
    %v163 = vand.u32 %v162, 4294901760
    %v164 = vsub.f32 %v162, %v163
    %v165 = vand.u32 %v164, 4294901760
    %166 = vmatpush1.msra.mxu0 %v165
    %167 = vmatprep.subr.mxu0 0.0
    %v168 = vand.u32 %v65, 4294901760
    %v169 = vsub.f32 %v65, %v168
    %v170 = vand.u32 %v169, 4294901760
    %v171 = vsub.f32 %v169, %v170
    %v172 = vand.u32 %v171, 4294901760
    %173 = vmatpush1.msra.mxu0 %v172
    %174 = vmatprep.subr.mxu0 0.0
    %175 = vmatpush1.msra.mxu0 0.0
    %176 = vmatprep.subr.mxu0 0.0
    %177 = vmatpush1.msra.mxu0 0.0
    %178 = vmatprep.subr.mxu0 0.0
    %179 = vmatpush1.msra.mxu0 0.0
    %180 = vmatprep.subr.mxu0 0.0
    %181 = vmatpush1.msra.mxu0 0.0
    %182 = vmatprep.subr.mxu0 0.0
    %183 = vmatpush1.msra.mxu0 0.0
    %184 = vmatprep.subr.mxu0 0.0
    %185 = vmatpush1.msra.mxu0 0.0
    %186 = vmatprep.subr.mxu0 0.0
    %187 = vmatpush1.msra.mxu0 0.0
    %188 = vmatprep.subr.mxu0 0.0
    %189 = vmatpush1.msra.mxu0 0.0
    %190 = vmatprep.subr.mxu0 0.0
    %191 = vmatpush1.msra.mxu0 0.0
    %192 = vmatprep.subr.mxu0 0.0
    %193 = vmatpush1.msra.mxu0 0.0
    %194 = vmatprep.subr.mxu0 0.0
    %195 = vmatpush1.msra.mxu0 0.0
    %196 = vmatprep.subr.mxu0 0.0
    %197 = vmatpush1.msra.mxu0 0.0
    %198 = vmatprep.subr.mxu0 0.0
    %199 = vmatpush1.msra.mxu0 0.0
    %200 = vmatprep.subr.mxu0 0.0
    %201 = vmatpush1.msra.mxu0 0.0
    %202 = vmatprep.subr.mxu0 0.0
    %203 = vmatpush1.msra.mxu0 0.0
    %204 = vmatprep.subr.mxu0 0.0
    %205 = vmatpush1.msra.mxu0 0.0
    %206 = vmatprep.subr.mxu0 0.0
    %207 = vmatpush1.msra.mxu0 0.0
    %208 = vmatprep.subr.mxu0 0.0
    %209 = vmatpush1.msra.mxu0 0.0
    %210 = vmatprep.subr.mxu0 0.0
    %211 = vmatpush1.msra.mxu0 0.0
    %212 = vmatprep.subr.mxu0 0.0
    %213 = vmatpush1.msra.mxu0 0.0
    %214 = vmatprep.subr.mxu0 0.0
    %215 = vmatpush1.msra.mxu0 0.0
    %216 = vmatprep.subr.mxu0 0.0
    %217 = vmatpush1.msra.mxu0 0.0
    %218 = vmatprep.subr.mxu0 0.0
    %219 = vmatpush1.msra.mxu0 0.0
    %220 = vmatprep.subr.mxu0 0.0
    %221 = vmatpush1.msra.mxu0 0.0
    %222 = vmatprep.subr.mxu0 0.0
    %223 = vmatpush1.msra.mxu0 0.0
    %224 = vmatprep.subr.mxu0 0.0
    %225 = vmatpush1.msra.mxu0 0.0
    %226 = vmatprep.subr.mxu0 0.0
    %227 = vmatpush1.msra.mxu0 0.0
    %228 = vmatprep.subr.mxu0 0.0
    %229 = vmatpush1.msra.mxu0 0.0
    %230 = vmatprep.subr.mxu0 0.0
    %231 = vmatpush1.msra.mxu0 0.0
    %232 = vmatprep.subr.mxu0 0.0
    %233 = vmatpush1.msra.mxu0 0.0
    %234 = vmatprep.mubr.f32.mxu0 0.0
    %v235 = vand.u32 %v68, 4294901760
    %236 = vmatmul.mubr.f32.gmra.mrb[0].mxu0 %v235
    %v237 = vpop.f32.mrb[0].mxu0
    %v238 = vadd.f32 %v147, %v237
    %v239 = vpop.f32.mrb[0].mxu0
    %240 = vmatprep.mubr.f32.mxu0 0.0
    %v241 = vand.u32 %v71, 4294901760
    %242 = vmatmul.mubr.f32.gmra.mrb[0].mxu0 %v241
    %v243 = vpop.f32.mrb[0].mxu0
    %v244 = vadd.f32 %v157, %v243
    %v245 = vpop.f32.mrb[0].mxu0
    %246 = vdwg.mxu0
    %247 = vmatprep.subr.mxu0 0.0
    %v248 = vand.u32 %v64, 4294901760
    %v249 = vsub.f32 %v64, %v248
    %250 = vmatpush1.msra.mxu0 %v249
    %251 = vmatprep.subr.mxu0 0.0
    %v252 = vand.u32 %v65, 4294901760
    %v253 = vsub.f32 %v65, %v252
    %254 = vmatpush1.msra.mxu0 %v253
    %255 = vmatprep.subr.mxu0 0.0
    %256 = vmatpush1.msra.mxu0 0.0
    %257 = vmatprep.subr.mxu0 0.0
    %258 = vmatpush1.msra.mxu0 0.0
    %259 = vmatprep.subr.mxu0 0.0
    %260 = vmatpush1.msra.mxu0 0.0
    %261 = vmatprep.subr.mxu0 0.0
    %262 = vmatpush1.msra.mxu0 0.0
    %263 = vmatprep.subr.mxu0 0.0
    %264 = vmatpush1.msra.mxu0 0.0
    %265 = vmatprep.subr.mxu0 0.0
    %266 = vmatpush1.msra.mxu0 0.0
    %267 = vmatprep.subr.mxu0 0.0
    %268 = vmatpush1.msra.mxu0 0.0
    %269 = vmatprep.subr.mxu0 0.0
    %270 = vmatpush1.msra.mxu0 0.0
    %271 = vmatprep.subr.mxu0 0.0
    %272 = vmatpush1.msra.mxu0 0.0
    %273 = vmatprep.subr.mxu0 0.0
    %274 = vmatpush1.msra.mxu0 0.0
    %275 = vmatprep.subr.mxu0 0.0
    %276 = vmatpush1.msra.mxu0 0.0
    %277 = vmatprep.subr.mxu0 0.0
    %278 = vmatpush1.msra.mxu0 0.0
    %279 = vmatprep.subr.mxu0 0.0
    %280 = vmatpush1.msra.mxu0 0.0
    %281 = vmatprep.subr.mxu0 0.0
    %282 = vmatpush1.msra.mxu0 0.0
    %283 = vmatprep.subr.mxu0 0.0
    %284 = vmatpush1.msra.mxu0 0.0
    %285 = vmatprep.subr.mxu0 0.0
    %286 = vmatpush1.msra.mxu0 0.0
    %287 = vmatprep.subr.mxu0 0.0
    %288 = vmatpush1.msra.mxu0 0.0
    %289 = vmatprep.subr.mxu0 0.0
    %290 = vmatpush1.msra.mxu0 0.0
    %291 = vmatprep.subr.mxu0 0.0
    %292 = vmatpush1.msra.mxu0 0.0
    %293 = vmatprep.subr.mxu0 0.0
    %294 = vmatpush1.msra.mxu0 0.0
    %295 = vmatprep.subr.mxu0 0.0
    %296 = vmatpush1.msra.mxu0 0.0
    %297 = vmatprep.subr.mxu0 0.0
    %298 = vmatpush1.msra.mxu0 0.0
    %299 = vmatprep.subr.mxu0 0.0
    %300 = vmatpush1.msra.mxu0 0.0
    %301 = vmatprep.subr.mxu0 0.0
    %302 = vmatpush1.msra.mxu0 0.0
    %303 = vmatprep.subr.mxu0 0.0
    %304 = vmatpush1.msra.mxu0 0.0
    %305 = vmatprep.subr.mxu0 0.0
    %306 = vmatpush1.msra.mxu0 0.0
    %307 = vmatprep.subr.mxu0 0.0
    %308 = vmatpush1.msra.mxu0 0.0
    %309 = vmatprep.subr.mxu0 0.0
    %310 = vmatpush1.msra.mxu0 0.0
    %311 = vmatprep.subr.mxu0 0.0
    %312 = vmatpush1.msra.mxu0 0.0
    %313 = vmatprep.subr.mxu0 0.0
    %314 = vmatpush1.msra.mxu0 0.0
    %315 = vmatprep.mubr.f32.mxu0 0.0
    %v316 = vand.u32 %v68, 4294901760
    %v317 = vsub.f32 %v68, %v316
    %318 = vmatmul.mubr.f32.gmra.mrb[0].mxu0 %v317
    %v319 = vpop.f32.mrb[0].mxu0
    %v320 = vadd.f32 %v238, %v319
    %v321 = vpop.f32.mrb[0].mxu0
    %322 = vmatprep.mubr.f32.mxu0 0.0
    %v323 = vand.u32 %v71, 4294901760
    %v324 = vsub.f32 %v71, %v323
    %325 = vmatmul.mubr.f32.gmra.mrb[0].mxu0 %v324
    %v326 = vpop.f32.mrb[0].mxu0
    %v327 = vadd.f32 %v244, %v326
    %v328 = vpop.f32.mrb[0].mxu0
    %329 = vdwg.mxu0
    %330 = vmatprep.subr.mxu0 0.0
    %v331 = vand.u32 %v64, 4294901760
    %332 = vmatpush1.msra.mxu0 %v331
    %333 = vmatprep.subr.mxu0 0.0
    %v334 = vand.u32 %v65, 4294901760
    %335 = vmatpush1.msra.mxu0 %v334
    %336 = vmatprep.subr.mxu0 0.0
    %337 = vmatpush1.msra.mxu0 0.0
    %338 = vmatprep.subr.mxu0 0.0
    %339 = vmatpush1.msra.mxu0 0.0
    %340 = vmatprep.subr.mxu0 0.0
    %341 = vmatpush1.msra.mxu0 0.0
    %342 = vmatprep.subr.mxu0 0.0
    %343 = vmatpush1.msra.mxu0 0.0
    %344 = vmatprep.subr.mxu0 0.0
    %345 = vmatpush1.msra.mxu0 0.0
    %346 = vmatprep.subr.mxu0 0.0
    %347 = vmatpush1.msra.mxu0 0.0
    %348 = vmatprep.subr.mxu0 0.0
    %349 = vmatpush1.msra.mxu0 0.0
    %350 = vmatprep.subr.mxu0 0.0
    %351 = vmatpush1.msra.mxu0 0.0
    %352 = vmatprep.subr.mxu0 0.0
    %353 = vmatpush1.msra.mxu0 0.0
    %354 = vmatprep.subr.mxu0 0.0
    %355 = vmatpush1.msra.mxu0 0.0
    %356 = vmatprep.subr.mxu0 0.0
    %357 = vmatpush1.msra.mxu0 0.0
    %358 = vmatprep.subr.mxu0 0.0
    %359 = vmatpush1.msra.mxu0 0.0
    %360 = vmatprep.subr.mxu0 0.0
    %361 = vmatpush1.msra.mxu0 0.0
    %362 = vmatprep.subr.mxu0 0.0
    %363 = vmatpush1.msra.mxu0 0.0
    %364 = vmatprep.subr.mxu0 0.0
    %365 = vmatpush1.msra.mxu0 0.0
    %366 = vmatprep.subr.mxu0 0.0
    %367 = vmatpush1.msra.mxu0 0.0
    %368 = vmatprep.subr.mxu0 0.0
    %369 = vmatpush1.msra.mxu0 0.0
    %370 = vmatprep.subr.mxu0 0.0
    %371 = vmatpush1.msra.mxu0 0.0
    %372 = vmatprep.subr.mxu0 0.0
    %373 = vmatpush1.msra.mxu0 0.0
    %374 = vmatprep.subr.mxu0 0.0
    %375 = vmatpush1.msra.mxu0 0.0
    %376 = vmatprep.subr.mxu0 0.0
    %377 = vmatpush1.msra.mxu0 0.0
    %378 = vmatprep.subr.mxu0 0.0
    %379 = vmatpush1.msra.mxu0 0.0
    %380 = vmatprep.subr.mxu0 0.0
    %381 = vmatpush1.msra.mxu0 0.0
    %382 = vmatprep.subr.mxu0 0.0
    %383 = vmatpush1.msra.mxu0 0.0
    %384 = vmatprep.subr.mxu0 0.0
    %385 = vmatpush1.msra.mxu0 0.0
    %386 = vmatprep.subr.mxu0 0.0
    %387 = vmatpush1.msra.mxu0 0.0
    %388 = vmatprep.subr.mxu0 0.0
    %389 = vmatpush1.msra.mxu0 0.0
    %390 = vmatprep.subr.mxu0 0.0
    %391 = vmatpush1.msra.mxu0 0.0
    %392 = vmatprep.subr.mxu0 0.0
    %393 = vmatpush1.msra.mxu0 0.0
    %394 = vmatprep.subr.mxu0 0.0
    %395 = vmatpush1.msra.mxu0 0.0
    %396 = vmatprep.mubr.f32.mxu0 0.0
    %v397 = vand.u32 %v68, 4294901760
    %v398 = vsub.f32 %v68, %v397
    %v399 = vand.u32 %v398, 4294901760
    %400 = vmatmul.mubr.f32.gmra.mrb[0].mxu0 %v399
    %v401 = vpop.f32.mrb[0].mxu0
    %v402 = vadd.f32 %v320, %v401
    %v403 = vpop.f32.mrb[0].mxu0
    %404 = vmatprep.mubr.f32.mxu0 0.0
    %v405 = vand.u32 %v71, 4294901760
    %v406 = vsub.f32 %v71, %v405
    %v407 = vand.u32 %v406, 4294901760
    %408 = vmatmul.mubr.f32.gmra.mrb[0].mxu0 %v407
    %v409 = vpop.f32.mrb[0].mxu0
    %v410 = vadd.f32 %v327, %v409
    %v411 = vpop.f32.mrb[0].mxu0
    %412 = vdwg.mxu0
    %413 = vmatprep.subr.mxu0 0.0
    %v414 = vand.u32 %v64, 4294901760
    %v415 = vsub.f32 %v64, %v414
    %v416 = vand.u32 %v415, 4294901760
    %417 = vmatpush1.msra.mxu0 %v416
    %418 = vmatprep.subr.mxu0 0.0
    %v419 = vand.u32 %v65, 4294901760
    %v420 = vsub.f32 %v65, %v419
    %v421 = vand.u32 %v420, 4294901760
    %422 = vmatpush1.msra.mxu0 %v421
    %423 = vmatprep.subr.mxu0 0.0
    %424 = vmatpush1.msra.mxu0 0.0
    %425 = vmatprep.subr.mxu0 0.0
    %426 = vmatpush1.msra.mxu0 0.0
    %427 = vmatprep.subr.mxu0 0.0
    %428 = vmatpush1.msra.mxu0 0.0
    %429 = vmatprep.subr.mxu0 0.0
    %430 = vmatpush1.msra.mxu0 0.0
    %431 = vmatprep.subr.mxu0 0.0
    %432 = vmatpush1.msra.mxu0 0.0
    %433 = vmatprep.subr.mxu0 0.0
    %434 = vmatpush1.msra.mxu0 0.0
    %435 = vmatprep.subr.mxu0 0.0
    %436 = vmatpush1.msra.mxu0 0.0
    %437 = vmatprep.subr.mxu0 0.0
    %438 = vmatpush1.msra.mxu0 0.0
    %439 = vmatprep.subr.mxu0 0.0
    %440 = vmatpush1.msra.mxu0 0.0
    %441 = vmatprep.subr.mxu0 0.0
    %442 = vmatpush1.msra.mxu0 0.0
    %443 = vmatprep.subr.mxu0 0.0
    %444 = vmatpush1.msra.mxu0 0.0
    %445 = vmatprep.subr.mxu0 0.0
    %446 = vmatpush1.msra.mxu0 0.0
    %447 = vmatprep.subr.mxu0 0.0
    %448 = vmatpush1.msra.mxu0 0.0
    %449 = vmatprep.subr.mxu0 0.0
    %450 = vmatpush1.msra.mxu0 0.0
    %451 = vmatprep.subr.mxu0 0.0
    %452 = vmatpush1.msra.mxu0 0.0
    %453 = vmatprep.subr.mxu0 0.0
    %454 = vmatpush1.msra.mxu0 0.0
    %455 = vmatprep.subr.mxu0 0.0
    %456 = vmatpush1.msra.mxu0 0.0
    %457 = vmatprep.subr.mxu0 0.0
    %458 = vmatpush1.msra.mxu0 0.0
    %459 = vmatprep.subr.mxu0 0.0
    %460 = vmatpush1.msra.mxu0 0.0
    %461 = vmatprep.subr.mxu0 0.0
    %462 = vmatpush1.msra.mxu0 0.0
    %463 = vmatprep.subr.mxu0 0.0
    %464 = vmatpush1.msra.mxu0 0.0
    %465 = vmatprep.subr.mxu0 0.0
    %466 = vmatpush1.msra.mxu0 0.0
    %467 = vmatprep.subr.mxu0 0.0
    %468 = vmatpush1.msra.mxu0 0.0
    %469 = vmatprep.subr.mxu0 0.0
    %470 = vmatpush1.msra.mxu0 0.0
    %471 = vmatprep.subr.mxu0 0.0
    %472 = vmatpush1.msra.mxu0 0.0
    %473 = vmatprep.subr.mxu0 0.0
    %474 = vmatpush1.msra.mxu0 0.0
    %475 = vmatprep.subr.mxu0 0.0
    %476 = vmatpush1.msra.mxu0 0.0
    %477 = vmatprep.subr.mxu0 0.0
    %478 = vmatpush1.msra.mxu0 0.0
    %479 = vmatprep.subr.mxu0 0.0
    %480 = vmatpush1.msra.mxu0 0.0
    %481 = vmatprep.subr.mxu0 0.0
    %482 = vmatpush1.msra.mxu0 0.0
    %483 = vmatprep.mubr.f32.mxu0 0.0
    %v484 = vand.u32 %v68, 4294901760
    %485 = vmatmul.mubr.f32.gmra.mrb[0].mxu0 %v484
    %v486 = vpop.f32.mrb[0].mxu0
    %v487 = vadd.f32 %v402, %v486
    %v488 = vpop.f32.mrb[0].mxu0
    %489 = vmatprep.mubr.f32.mxu0 0.0
    %v490 = vand.u32 %v71, 4294901760
    %491 = vmatmul.mubr.f32.gmra.mrb[0].mxu0 %v490
    %v492 = vpop.f32.mrb[0].mxu0
    %v493 = vadd.f32 %v410, %v492
    %v494 = vpop.f32.mrb[0].mxu0
    %495 = vdwg.mxu0
    %496 = vmatprep.subr.mxu0 0.0
    %v497 = vand.u32 %v64, 4294901760
    %498 = vmatpush1.msra.mxu0 %v497
    %499 = vmatprep.subr.mxu0 0.0
    %v500 = vand.u32 %v65, 4294901760
    %501 = vmatpush1.msra.mxu0 %v500
    %502 = vmatprep.subr.mxu0 0.0
    %503 = vmatpush1.msra.mxu0 0.0
    %504 = vmatprep.subr.mxu0 0.0
    %505 = vmatpush1.msra.mxu0 0.0
    %506 = vmatprep.subr.mxu0 0.0
    %507 = vmatpush1.msra.mxu0 0.0
    %508 = vmatprep.subr.mxu0 0.0
    %509 = vmatpush1.msra.mxu0 0.0
    %510 = vmatprep.subr.mxu0 0.0
    %511 = vmatpush1.msra.mxu0 0.0
    %512 = vmatprep.subr.mxu0 0.0
    %513 = vmatpush1.msra.mxu0 0.0
    %514 = vmatprep.subr.mxu0 0.0
    %515 = vmatpush1.msra.mxu0 0.0
    %516 = vmatprep.subr.mxu0 0.0
    %517 = vmatpush1.msra.mxu0 0.0
    %518 = vmatprep.subr.mxu0 0.0
    %519 = vmatpush1.msra.mxu0 0.0
    %520 = vmatprep.subr.mxu0 0.0
    %521 = vmatpush1.msra.mxu0 0.0
    %522 = vmatprep.subr.mxu0 0.0
    %523 = vmatpush1.msra.mxu0 0.0
    %524 = vmatprep.subr.mxu0 0.0
    %525 = vmatpush1.msra.mxu0 0.0
    %526 = vmatprep.subr.mxu0 0.0
    %527 = vmatpush1.msra.mxu0 0.0
    %528 = vmatprep.subr.mxu0 0.0
    %529 = vmatpush1.msra.mxu0 0.0
    %530 = vmatprep.subr.mxu0 0.0
    %531 = vmatpush1.msra.mxu0 0.0
    %532 = vmatprep.subr.mxu0 0.0
    %533 = vmatpush1.msra.mxu0 0.0
    %534 = vmatprep.subr.mxu0 0.0
    %535 = vmatpush1.msra.mxu0 0.0
    %536 = vmatprep.subr.mxu0 0.0
    %537 = vmatpush1.msra.mxu0 0.0
    %538 = vmatprep.subr.mxu0 0.0
    %539 = vmatpush1.msra.mxu0 0.0
    %540 = vmatprep.subr.mxu0 0.0
    %541 = vmatpush1.msra.mxu0 0.0
    %542 = vmatprep.subr.mxu0 0.0
    %543 = vmatpush1.msra.mxu0 0.0
    %544 = vmatprep.subr.mxu0 0.0
    %545 = vmatpush1.msra.mxu0 0.0
    %546 = vmatprep.subr.mxu0 0.0
    %547 = vmatpush1.msra.mxu0 0.0
    %548 = vmatprep.subr.mxu0 0.0
    %549 = vmatpush1.msra.mxu0 0.0
    %550 = vmatprep.subr.mxu0 0.0
    %551 = vmatpush1.msra.mxu0 0.0
    %552 = vmatprep.subr.mxu0 0.0
    %553 = vmatpush1.msra.mxu0 0.0
    %554 = vmatprep.subr.mxu0 0.0
    %555 = vmatpush1.msra.mxu0 0.0
    %556 = vmatprep.subr.mxu0 0.0
    %557 = vmatpush1.msra.mxu0 0.0
    %558 = vmatprep.subr.mxu0 0.0
    %559 = vmatpush1.msra.mxu0 0.0
    %560 = vmatprep.subr.mxu0 0.0
    %561 = vmatpush1.msra.mxu0 0.0
    %562 = vmatprep.mubr.f32.mxu0 0.0
    %v563 = vand.u32 %v68, 4294901760
    %564 = vmatmul.mubr.f32.gmra.mrb[0].mxu0 %v563
    %v565 = vpop.f32.mrb[0].mxu0
    %v566 = vadd.f32 %v487, %v565
    %v567 = vpop.f32.mrb[0].mxu0
    %568 = vmatprep.mubr.f32.mxu0 0.0
    %v569 = vand.u32 %v71, 4294901760
    %570 = vmatmul.mubr.f32.gmra.mrb[0].mxu0 %v569
    %v571 = vpop.f32.mrb[0].mxu0
    %v572 = vadd.f32 %v493, %v571
    %v573 = vpop.f32.mrb[0].mxu0
    %574 = vdwg.mxu0
    %575 = vst [vmem:[#allocation2] sm:$0xff] %v566
    %576 = vst [vmem:[#allocation2 + $0x8] sm:$0xff] %v572
    %v577 = vld [vmem:[#allocation4] sm:$0xff]
    %v578 = vld [vmem:[#allocation4 + $0x8] sm:$0xff]
    %v579 = vld [vmem:[#allocation4 + $0x10] sm:$0xff]
    %v580 = vld [vmem:[#allocation4 + $0x18] sm:$0xff]
    %v581 = vld [vmem:[#allocation4 + $0x20] sm:$0xff]
    %v582 = vld [vmem:[#allocation4 + $0x28] sm:$0xff]
    %v583 = vld [vmem:[#allocation4 + $0x30] sm:$0xff]
    %v584 = vld [vmem:[#allocation4 + $0x38] sm:$0xff]
    %v585 = vld [vmem:[#allocation4 + $0x40] sm:$0xff]
    %v586 = vld [vmem:[#allocation4 + $0x48] sm:$0xff]
    %v587 = vld [vmem:[#allocation4 + $0x50] sm:$0xff]
    %v588 = vld [vmem:[#allocation4 + $0x58] sm:$0xff]
    %v589 = vld [vmem:[#allocation4 + $0x60] sm:$0xff]
    %v590 = vld [vmem:[#allocation4 + $0x68] sm:$0xff]
    %v591 = vld [vmem:[#allocation4 + $0x70] sm:$0xff]
    %v592 = vld [vmem:[#allocation4 + $0x78] sm:$0xff]
    %v593 = vld [vmem:[%s3] sm:$0x1]
    %v594 = vld [vmem:[%s6] sm:$0x3]
    %v595 = vld [vmem:[%s7] sm:$0x3]
    %s596 = scalar_lea.vmem %s6, 2
    %v597 = vld [vmem:[%s596] sm:$0x3]
    %s598 = scalar_lea.vmem %s7, 2
    %v599 = vld [vmem:[%s598] sm:$0x3]
    %601 = vrot.lane.b32.xlu0 %v597, 32
    %v602 = vpop.permute.xlu0 %601
    %vm604 = vcmask 261120
    %v605 = vsel %vm604, %v594, %v602
    %vm606 = vcmask 523264
    %v608 = vsel %vm606, %v605, 0
    %v610 = vand.u32 %v578, 4294901760
    %611 = vmatprep.subr.mxu0 %v610
    %v612 = vand.u32 %v577, 4294901760
    %613 = vmatpush1.msra.mxu0 %v612
    %v614 = vand.u32 %v580, 4294901760
    %615 = vmatprep.subr.mxu0 %v614
    %v616 = vand.u32 %v579, 4294901760
    %617 = vmatpush1.msra.mxu0 %v616
    %v618 = vand.u32 %v582, 4294901760
    %619 = vmatprep.subr.mxu0 %v618
    %v620 = vand.u32 %v581, 4294901760
    %621 = vmatpush1.msra.mxu0 %v620
    %v622 = vand.u32 %v584, 4294901760
    %623 = vmatprep.subr.mxu0 %v622
    %v624 = vand.u32 %v583, 4294901760
    %625 = vmatpush1.msra.mxu0 %v624
    %v626 = vand.u32 %v586, 4294901760
    %627 = vmatprep.subr.mxu0 %v626
    %v628 = vand.u32 %v585, 4294901760
    %629 = vmatpush1.msra.mxu0 %v628
    %v630 = vand.u32 %v588, 4294901760
    %631 = vmatprep.subr.mxu0 %v630
    %v632 = vand.u32 %v587, 4294901760
    %633 = vmatpush1.msra.mxu0 %v632
    %v634 = vand.u32 %v590, 4294901760
    %635 = vmatprep.subr.mxu0 %v634
    %v636 = vand.u32 %v589, 4294901760
    %637 = vmatpush1.msra.mxu0 %v636
    %v638 = vand.u32 %v592, 4294901760
    %639 = vmatprep.subr.mxu0 %v638
    %v640 = vand.u32 %v591, 4294901760
    %641 = vmatpush1.msra.mxu0 %v640
    %642 = vmatprep.subr.mxu0 0.0
    %643 = vmatpush1.msra.mxu0 0.0
    %644 = vmatprep.subr.mxu0 0.0
    %645 = vmatpush1.msra.mxu0 0.0
    %646 = vmatprep.subr.mxu0 0.0
    %647 = vmatpush1.msra.mxu0 0.0
    %648 = vmatprep.subr.mxu0 0.0
    %649 = vmatpush1.msra.mxu0 0.0
    %650 = vmatprep.subr.mxu0 0.0
    %651 = vmatpush1.msra.mxu0 0.0
    %652 = vmatprep.subr.mxu0 0.0
    %653 = vmatpush1.msra.mxu0 0.0
    %654 = vmatprep.subr.mxu0 0.0
    %655 = vmatpush1.msra.mxu0 0.0
    %656 = vmatprep.subr.mxu0 0.0
    %657 = vmatpush1.msra.mxu0 0.0
    %658 = vmatprep.subr.mxu0 0.0
    %659 = vmatpush1.msra.mxu0 0.0
    %660 = vmatprep.subr.mxu0 0.0
    %661 = vmatpush1.msra.mxu0 0.0
    %662 = vmatprep.subr.mxu0 0.0
    %663 = vmatpush1.msra.mxu0 0.0
    %664 = vmatprep.subr.mxu0 0.0
    %665 = vmatpush1.msra.mxu0 0.0
    %666 = vmatprep.subr.mxu0 0.0
    %667 = vmatpush1.msra.mxu0 0.0
    %668 = vmatprep.subr.mxu0 0.0
    %669 = vmatpush1.msra.mxu0 0.0
    %670 = vmatprep.subr.mxu0 0.0
    %671 = vmatpush1.msra.mxu0 0.0
    %672 = vmatprep.subr.mxu0 0.0
    %673 = vmatpush1.msra.mxu0 0.0
    %674 = vmatprep.subr.mxu0 0.0
    %675 = vmatpush1.msra.mxu0 0.0
    %676 = vmatprep.subr.mxu0 0.0
    %677 = vmatpush1.msra.mxu0 0.0
    %678 = vmatprep.subr.mxu0 0.0
    %679 = vmatpush1.msra.mxu0 0.0
    %680 = vmatprep.subr.mxu0 0.0
    %681 = vmatpush1.msra.mxu0 0.0
    %682 = vmatprep.subr.mxu0 0.0
    %683 = vmatpush1.msra.mxu0 0.0
    %684 = vmatprep.subr.mxu0 0.0
    %685 = vmatpush1.msra.mxu0 0.0
    %686 = vmatprep.subr.mxu0 0.0
    %687 = vmatpush1.msra.mxu0 0.0
    %688 = vmatprep.subr.mxu0 0.0
    %689 = vmatpush1.msra.mxu0 0.0
    %690 = vmatprep.mubr.f32.mxu0 0.0
    %v691 = vand.u32 %v608, 4294901760
    %v692 = vsub.f32 %v608, %v691
    %v693 = vand.u32 %v692, 4294901760
    %v694 = vsub.f32 %v692, %v693
    %v695 = vand.u32 %v694, 4294901760
    %696 = vmatmul.mubr.f32.gmra.mrb[0].mxu0 %v695
    %v697 = vpop.f32.mrb[0].mxu0
    %v698 = vadd.f32 0.0, %v697
    %v699 = vpop.f32.mrb[0].mxu0
    %700 = vdwg.mxu0
    %v701 = vand.u32 %v578, 4294901760
    %v702 = vsub.f32 %v578, %v701
    %v703 = vand.u32 %v702, 4294901760
    %v704 = vsub.f32 %v702, %v703
    %v705 = vand.u32 %v704, 4294901760
    %706 = vmatprep.subr.mxu0 %v705
    %v707 = vand.u32 %v577, 4294901760
    %v708 = vsub.f32 %v577, %v707
    %v709 = vand.u32 %v708, 4294901760
    %v710 = vsub.f32 %v708, %v709
    %v711 = vand.u32 %v710, 4294901760
    %712 = vmatpush1.msra.mxu0 %v711
    %v713 = vand.u32 %v580, 4294901760
    %v714 = vsub.f32 %v580, %v713
    %v715 = vand.u32 %v714, 4294901760
    %v716 = vsub.f32 %v714, %v715
    %v717 = vand.u32 %v716, 4294901760
    %718 = vmatprep.subr.mxu0 %v717
    %v719 = vand.u32 %v579, 4294901760
    %v720 = vsub.f32 %v579, %v719
    %v721 = vand.u32 %v720, 4294901760
    %v722 = vsub.f32 %v720, %v721
    %v723 = vand.u32 %v722, 4294901760
    %724 = vmatpush1.msra.mxu0 %v723
    %v725 = vand.u32 %v582, 4294901760
    %v726 = vsub.f32 %v582, %v725
    %v727 = vand.u32 %v726, 4294901760
    %v728 = vsub.f32 %v726, %v727
    %v729 = vand.u32 %v728, 4294901760
    %730 = vmatprep.subr.mxu0 %v729
    %v731 = vand.u32 %v581, 4294901760
    %v732 = vsub.f32 %v581, %v731
    %v733 = vand.u32 %v732, 4294901760
    %v734 = vsub.f32 %v732, %v733
    %v735 = vand.u32 %v734, 4294901760
    %736 = vmatpush1.msra.mxu0 %v735
    %v737 = vand.u32 %v584, 4294901760
    %v738 = vsub.f32 %v584, %v737
    %v739 = vand.u32 %v738, 4294901760
    %v740 = vsub.f32 %v738, %v739
    %v741 = vand.u32 %v740, 4294901760
    %742 = vmatprep.subr.mxu0 %v741
    %v743 = vand.u32 %v583, 4294901760
    %v744 = vsub.f32 %v583, %v743
    %v745 = vand.u32 %v744, 4294901760
    %v746 = vsub.f32 %v744, %v745
    %v747 = vand.u32 %v746, 4294901760
    %748 = vmatpush1.msra.mxu0 %v747
    %v749 = vand.u32 %v586, 4294901760
    %v750 = vsub.f32 %v586, %v749
    %v751 = vand.u32 %v750, 4294901760
    %v752 = vsub.f32 %v750, %v751
    %v753 = vand.u32 %v752, 4294901760
    %754 = vmatprep.subr.mxu0 %v753
    %v755 = vand.u32 %v585, 4294901760
    %v756 = vsub.f32 %v585, %v755
    %v757 = vand.u32 %v756, 4294901760
    %v758 = vsub.f32 %v756, %v757
    %v759 = vand.u32 %v758, 4294901760
    %760 = vmatpush1.msra.mxu0 %v759
    %v761 = vand.u32 %v588, 4294901760
    %v762 = vsub.f32 %v588, %v761
    %v763 = vand.u32 %v762, 4294901760
    %v764 = vsub.f32 %v762, %v763
    %v765 = vand.u32 %v764, 4294901760
    %766 = vmatprep.subr.mxu0 %v765
    %v767 = vand.u32 %v587, 4294901760
    %v768 = vsub.f32 %v587, %v767
    %v769 = vand.u32 %v768, 4294901760
    %v770 = vsub.f32 %v768, %v769
    %v771 = vand.u32 %v770, 4294901760
    %772 = vmatpush1.msra.mxu0 %v771
    %v773 = vand.u32 %v590, 4294901760
    %v774 = vsub.f32 %v590, %v773
    %v775 = vand.u32 %v774, 4294901760
    %v776 = vsub.f32 %v774, %v775
    %v777 = vand.u32 %v776, 4294901760
    %778 = vmatprep.subr.mxu0 %v777
    %v779 = vand.u32 %v589, 4294901760
    %v780 = vsub.f32 %v589, %v779
    %v781 = vand.u32 %v780, 4294901760
    %v782 = vsub.f32 %v780, %v781
    %v783 = vand.u32 %v782, 4294901760
    %784 = vmatpush1.msra.mxu0 %v783
    %v785 = vand.u32 %v592, 4294901760
    %v786 = vsub.f32 %v592, %v785
    %v787 = vand.u32 %v786, 4294901760
    %v788 = vsub.f32 %v786, %v787
    %v789 = vand.u32 %v788, 4294901760
    %790 = vmatprep.subr.mxu0 %v789
    %v791 = vand.u32 %v591, 4294901760
    %v792 = vsub.f32 %v591, %v791
    %v793 = vand.u32 %v792, 4294901760
    %v794 = vsub.f32 %v792, %v793
    %v795 = vand.u32 %v794, 4294901760
    %796 = vmatpush1.msra.mxu0 %v795
    %797 = vmatprep.subr.mxu0 0.0
    %798 = vmatpush1.msra.mxu0 0.0
    %799 = vmatprep.subr.mxu0 0.0
    %800 = vmatpush1.msra.mxu0 0.0
    %801 = vmatprep.subr.mxu0 0.0
    %802 = vmatpush1.msra.mxu0 0.0
    %803 = vmatprep.subr.mxu0 0.0
    %804 = vmatpush1.msra.mxu0 0.0
    %805 = vmatprep.subr.mxu0 0.0
    %806 = vmatpush1.msra.mxu0 0.0
    %807 = vmatprep.subr.mxu0 0.0
    %808 = vmatpush1.msra.mxu0 0.0
    %809 = vmatprep.subr.mxu0 0.0
    %810 = vmatpush1.msra.mxu0 0.0
    %811 = vmatprep.subr.mxu0 0.0
    %812 = vmatpush1.msra.mxu0 0.0
    %813 = vmatprep.subr.mxu0 0.0
    %814 = vmatpush1.msra.mxu0 0.0
    %815 = vmatprep.subr.mxu0 0.0
    %816 = vmatpush1.msra.mxu0 0.0
    %817 = vmatprep.subr.mxu0 0.0
    %818 = vmatpush1.msra.mxu0 0.0
    %819 = vmatprep.subr.mxu0 0.0
    %820 = vmatpush1.msra.mxu0 0.0
    %821 = vmatprep.subr.mxu0 0.0
    %822 = vmatpush1.msra.mxu0 0.0
    %823 = vmatprep.subr.mxu0 0.0
    %824 = vmatpush1.msra.mxu0 0.0
    %825 = vmatprep.subr.mxu0 0.0
    %826 = vmatpush1.msra.mxu0 0.0
    %827 = vmatprep.subr.mxu0 0.0
    %828 = vmatpush1.msra.mxu0 0.0
    %829 = vmatprep.subr.mxu0 0.0
    %830 = vmatpush1.msra.mxu0 0.0
    %831 = vmatprep.subr.mxu0 0.0
    %832 = vmatpush1.msra.mxu0 0.0
    %833 = vmatprep.subr.mxu0 0.0
    %834 = vmatpush1.msra.mxu0 0.0
    %835 = vmatprep.subr.mxu0 0.0
    %836 = vmatpush1.msra.mxu0 0.0
    %837 = vmatprep.subr.mxu0 0.0
    %838 = vmatpush1.msra.mxu0 0.0
    %839 = vmatprep.subr.mxu0 0.0
    %840 = vmatpush1.msra.mxu0 0.0
    %841 = vmatprep.subr.mxu0 0.0
    %842 = vmatpush1.msra.mxu0 0.0
    %843 = vmatprep.subr.mxu0 0.0
    %844 = vmatpush1.msra.mxu0 0.0
    %845 = vmatprep.mubr.f32.mxu0 0.0
    %v846 = vand.u32 %v608, 4294901760
    %847 = vmatmul.mubr.f32.gmra.mrb[0].mxu0 %v846
    %v848 = vpop.f32.mrb[0].mxu0
    %v849 = vadd.f32 %v698, %v848
    %v850 = vpop.f32.mrb[0].mxu0
    %851 = vdwg.mxu0
    %v852 = vand.u32 %v578, 4294901760
    %v853 = vsub.f32 %v578, %v852
    %854 = vmatprep.subr.mxu0 %v853
    %v855 = vand.u32 %v577, 4294901760
    %v856 = vsub.f32 %v577, %v855
    %857 = vmatpush1.msra.mxu0 %v856
    %v858 = vand.u32 %v580, 4294901760
    %v859 = vsub.f32 %v580, %v858
    %860 = vmatprep.subr.mxu0 %v859
    %v861 = vand.u32 %v579, 4294901760
    %v862 = vsub.f32 %v579, %v861
    %863 = vmatpush1.msra.mxu0 %v862
    %v864 = vand.u32 %v582, 4294901760
    %v865 = vsub.f32 %v582, %v864
    %866 = vmatprep.subr.mxu0 %v865
    %v867 = vand.u32 %v581, 4294901760
    %v868 = vsub.f32 %v581, %v867
    %869 = vmatpush1.msra.mxu0 %v868
    %v870 = vand.u32 %v584, 4294901760
    %v871 = vsub.f32 %v584, %v870
    %872 = vmatprep.subr.mxu0 %v871
    %v873 = vand.u32 %v583, 4294901760
    %v874 = vsub.f32 %v583, %v873
    %875 = vmatpush1.msra.mxu0 %v874
    %v876 = vand.u32 %v586, 4294901760
    %v877 = vsub.f32 %v586, %v876
    %878 = vmatprep.subr.mxu0 %v877
    %v879 = vand.u32 %v585, 4294901760
    %v880 = vsub.f32 %v585, %v879
    %881 = vmatpush1.msra.mxu0 %v880
    %v882 = vand.u32 %v588, 4294901760
    %v883 = vsub.f32 %v588, %v882
    %884 = vmatprep.subr.mxu0 %v883
    %v885 = vand.u32 %v587, 4294901760
    %v886 = vsub.f32 %v587, %v885
    %887 = vmatpush1.msra.mxu0 %v886
    %v888 = vand.u32 %v590, 4294901760
    %v889 = vsub.f32 %v590, %v888
    %890 = vmatprep.subr.mxu0 %v889
    %v891 = vand.u32 %v589, 4294901760
    %v892 = vsub.f32 %v589, %v891
    %893 = vmatpush1.msra.mxu0 %v892
    %v894 = vand.u32 %v592, 4294901760
    %v895 = vsub.f32 %v592, %v894
    %896 = vmatprep.subr.mxu0 %v895
    %v897 = vand.u32 %v591, 4294901760
    %v898 = vsub.f32 %v591, %v897
    %899 = vmatpush1.msra.mxu0 %v898
    %900 = vmatprep.subr.mxu0 0.0
    %901 = vmatpush1.msra.mxu0 0.0
    %902 = vmatprep.subr.mxu0 0.0
    %903 = vmatpush1.msra.mxu0 0.0
    %904 = vmatprep.subr.mxu0 0.0
    %905 = vmatpush1.msra.mxu0 0.0
    %906 = vmatprep.subr.mxu0 0.0
    %907 = vmatpush1.msra.mxu0 0.0
    %908 = vmatprep.subr.mxu0 0.0
    %909 = vmatpush1.msra.mxu0 0.0
    %910 = vmatprep.subr.mxu0 0.0
    %911 = vmatpush1.msra.mxu0 0.0
    %912 = vmatprep.subr.mxu0 0.0
    %913 = vmatpush1.msra.mxu0 0.0
    %914 = vmatprep.subr.mxu0 0.0
    %915 = vmatpush1.msra.mxu0 0.0
    %916 = vmatprep.subr.mxu0 0.0
    %917 = vmatpush1.msra.mxu0 0.0
    %918 = vmatprep.subr.mxu0 0.0
    %919 = vmatpush1.msra.mxu0 0.0
    %920 = vmatprep.subr.mxu0 0.0
    %921 = vmatpush1.msra.mxu0 0.0
    %922 = vmatprep.subr.mxu0 0.0
    %923 = vmatpush1.msra.mxu0 0.0
    %924 = vmatprep.subr.mxu0 0.0
    %925 = vmatpush1.msra.mxu0 0.0
    %926 = vmatprep.subr.mxu0 0.0
    %927 = vmatpush1.msra.mxu0 0.0
    %928 = vmatprep.subr.mxu0 0.0
    %929 = vmatpush1.msra.mxu0 0.0
    %930 = vmatprep.subr.mxu0 0.0
    %931 = vmatpush1.msra.mxu0 0.0
    %932 = vmatprep.subr.mxu0 0.0
    %933 = vmatpush1.msra.mxu0 0.0
    %934 = vmatprep.subr.mxu0 0.0
    %935 = vmatpush1.msra.mxu0 0.0
    %936 = vmatprep.subr.mxu0 0.0
    %937 = vmatpush1.msra.mxu0 0.0
    %938 = vmatprep.subr.mxu0 0.0
    %939 = vmatpush1.msra.mxu0 0.0
    %940 = vmatprep.subr.mxu0 0.0
    %941 = vmatpush1.msra.mxu0 0.0
    %942 = vmatprep.subr.mxu0 0.0
    %943 = vmatpush1.msra.mxu0 0.0
    %944 = vmatprep.subr.mxu0 0.0
    %945 = vmatpush1.msra.mxu0 0.0
    %946 = vmatprep.subr.mxu0 0.0
    %947 = vmatpush1.msra.mxu0 0.0
    %948 = vmatprep.mubr.f32.mxu0 0.0
    %v949 = vand.u32 %v608, 4294901760
    %v950 = vsub.f32 %v608, %v949
    %951 = vmatmul.mubr.f32.gmra.mrb[0].mxu0 %v950
    %v952 = vpop.f32.mrb[0].mxu0
    %v953 = vadd.f32 %v849, %v952
    %v954 = vpop.f32.mrb[0].mxu0
    %955 = vdwg.mxu0
    %v956 = vand.u32 %v578, 4294901760
    %957 = vmatprep.subr.mxu0 %v956
    %v958 = vand.u32 %v577, 4294901760
    %959 = vmatpush1.msra.mxu0 %v958
    %v960 = vand.u32 %v580, 4294901760
    %961 = vmatprep.subr.mxu0 %v960
    %v962 = vand.u32 %v579, 4294901760
    %963 = vmatpush1.msra.mxu0 %v962
    %v964 = vand.u32 %v582, 4294901760
    %965 = vmatprep.subr.mxu0 %v964
    %v966 = vand.u32 %v581, 4294901760
    %967 = vmatpush1.msra.mxu0 %v966
    %v968 = vand.u32 %v584, 4294901760
    %969 = vmatprep.subr.mxu0 %v968
    %v970 = vand.u32 %v583, 4294901760
    %971 = vmatpush1.msra.mxu0 %v970
    %v972 = vand.u32 %v586, 4294901760
    %973 = vmatprep.subr.mxu0 %v972
    %v974 = vand.u32 %v585, 4294901760
    %975 = vmatpush1.msra.mxu0 %v974
    %v976 = vand.u32 %v588, 4294901760
    %977 = vmatprep.subr.mxu0 %v976
    %v978 = vand.u32 %v587, 4294901760
    %979 = vmatpush1.msra.mxu0 %v978
    %v980 = vand.u32 %v590, 4294901760
    %981 = vmatprep.subr.mxu0 %v980
    %v982 = vand.u32 %v589, 4294901760
    %983 = vmatpush1.msra.mxu0 %v982
    %v984 = vand.u32 %v592, 4294901760
    %985 = vmatprep.subr.mxu0 %v984
    %v986 = vand.u32 %v591, 4294901760
    %987 = vmatpush1.msra.mxu0 %v986
    %988 = vmatprep.subr.mxu0 0.0
    %989 = vmatpush1.msra.mxu0 0.0
    %990 = vmatprep.subr.mxu0 0.0
    %991 = vmatpush1.msra.mxu0 0.0
    %992 = vmatprep.subr.mxu0 0.0
    %993 = vmatpush1.msra.mxu0 0.0
    %994 = vmatprep.subr.mxu0 0.0
    %995 = vmatpush1.msra.mxu0 0.0
    %996 = vmatprep.subr.mxu0 0.0
    %997 = vmatpush1.msra.mxu0 0.0
    %998 = vmatprep.subr.mxu0 0.0
    %999 = vmatpush1.msra.mxu0 0.0
    %1000 = vmatprep.subr.mxu0 0.0
    %1001 = vmatpush1.msra.mxu0 0.0
    %1002 = vmatprep.subr.mxu0 0.0
    %1003 = vmatpush1.msra.mxu0 0.0
    %1004 = vmatprep.subr.mxu0 0.0
    %1005 = vmatpush1.msra.mxu0 0.0
    %1006 = vmatprep.subr.mxu0 0.0
    %1007 = vmatpush1.msra.mxu0 0.0
    %1008 = vmatprep.subr.mxu0 0.0
    %1009 = vmatpush1.msra.mxu0 0.0
    %1010 = vmatprep.subr.mxu0 0.0
    %1011 = vmatpush1.msra.mxu0 0.0
    %1012 = vmatprep.subr.mxu0 0.0
    %1013 = vmatpush1.msra.mxu0 0.0
    %1014 = vmatprep.subr.mxu0 0.0
    %1015 = vmatpush1.msra.mxu0 0.0
    %1016 = vmatprep.subr.mxu0 0.0
    %1017 = vmatpush1.msra.mxu0 0.0
    %1018 = vmatprep.subr.mxu0 0.0
    %1019 = vmatpush1.msra.mxu0 0.0
    %1020 = vmatprep.subr.mxu0 0.0
    %1021 = vmatpush1.msra.mxu0 0.0
    %1022 = vmatprep.subr.mxu0 0.0
    %1023 = vmatpush1.msra.mxu0 0.0
    %1024 = vmatprep.subr.mxu0 0.0
    %1025 = vmatpush1.msra.mxu0 0.0
    %1026 = vmatprep.subr.mxu0 0.0
    %1027 = vmatpush1.msra.mxu0 0.0
    %1028 = vmatprep.subr.mxu0 0.0
    %1029 = vmatpush1.msra.mxu0 0.0
    %1030 = vmatprep.subr.mxu0 0.0
    %1031 = vmatpush1.msra.mxu0 0.0
    %1032 = vmatprep.subr.mxu0 0.0
    %1033 = vmatpush1.msra.mxu0 0.0
    %1034 = vmatprep.subr.mxu0 0.0
    %1035 = vmatpush1.msra.mxu0 0.0
    %1036 = vmatprep.mubr.f32.mxu0 0.0
    %v1037 = vand.u32 %v608, 4294901760
    %v1038 = vsub.f32 %v608, %v1037
    %v1039 = vand.u32 %v1038, 4294901760
    %1040 = vmatmul.mubr.f32.gmra.mrb[0].mxu0 %v1039
    %v1041 = vpop.f32.mrb[0].mxu0
    %v1042 = vadd.f32 %v953, %v1041
    %v1043 = vpop.f32.mrb[0].mxu0
    %1044 = vdwg.mxu0
    %v1045 = vand.u32 %v578, 4294901760
    %v1046 = vsub.f32 %v578, %v1045
    %v1047 = vand.u32 %v1046, 4294901760
    %1048 = vmatprep.subr.mxu0 %v1047
    %v1049 = vand.u32 %v577, 4294901760
    %v1050 = vsub.f32 %v577, %v1049
    %v1051 = vand.u32 %v1050, 4294901760
    %1052 = vmatpush1.msra.mxu0 %v1051
    %v1053 = vand.u32 %v580, 4294901760
    %v1054 = vsub.f32 %v580, %v1053
    %v1055 = vand.u32 %v1054, 4294901760
    %1056 = vmatprep.subr.mxu0 %v1055
    %v1057 = vand.u32 %v579, 4294901760
    %v1058 = vsub.f32 %v579, %v1057
    %v1059 = vand.u32 %v1058, 4294901760
    %1060 = vmatpush1.msra.mxu0 %v1059
    %v1061 = vand.u32 %v582, 4294901760
    %v1062 = vsub.f32 %v582, %v1061
    %v1063 = vand.u32 %v1062, 4294901760
    %1064 = vmatprep.subr.mxu0 %v1063
    %v1065 = vand.u32 %v581, 4294901760
    %v1066 = vsub.f32 %v581, %v1065
    %v1067 = vand.u32 %v1066, 4294901760
    %1068 = vmatpush1.msra.mxu0 %v1067
    %v1069 = vand.u32 %v584, 4294901760
    %v1070 = vsub.f32 %v584, %v1069
    %v1071 = vand.u32 %v1070, 4294901760
    %1072 = vmatprep.subr.mxu0 %v1071
    %v1073 = vand.u32 %v583, 4294901760
    %v1074 = vsub.f32 %v583, %v1073
    %v1075 = vand.u32 %v1074, 4294901760
    %1076 = vmatpush1.msra.mxu0 %v1075
    %v1077 = vand.u32 %v586, 4294901760
    %v1078 = vsub.f32 %v586, %v1077
    %v1079 = vand.u32 %v1078, 4294901760
    %1080 = vmatprep.subr.mxu0 %v1079
    %v1081 = vand.u32 %v585, 4294901760
    %v1082 = vsub.f32 %v585, %v1081
    %v1083 = vand.u32 %v1082, 4294901760
    %1084 = vmatpush1.msra.mxu0 %v1083
    %v1085 = vand.u32 %v588, 4294901760
    %v1086 = vsub.f32 %v588, %v1085
    %v1087 = vand.u32 %v1086, 4294901760
    %1088 = vmatprep.subr.mxu0 %v1087
    %v1089 = vand.u32 %v587, 4294901760
    %v1090 = vsub.f32 %v587, %v1089
    %v1091 = vand.u32 %v1090, 4294901760
    %1092 = vmatpush1.msra.mxu0 %v1091
    %v1093 = vand.u32 %v590, 4294901760
    %v1094 = vsub.f32 %v590, %v1093
    %v1095 = vand.u32 %v1094, 4294901760
    %1096 = vmatprep.subr.mxu0 %v1095
    %v1097 = vand.u32 %v589, 4294901760
    %v1098 = vsub.f32 %v589, %v1097
    %v1099 = vand.u32 %v1098, 4294901760
    %1100 = vmatpush1.msra.mxu0 %v1099
    %v1101 = vand.u32 %v592, 4294901760
    %v1102 = vsub.f32 %v592, %v1101
    %v1103 = vand.u32 %v1102, 4294901760
    %1104 = vmatprep.subr.mxu0 %v1103
    %v1105 = vand.u32 %v591, 4294901760
    %v1106 = vsub.f32 %v591, %v1105
    %v1107 = vand.u32 %v1106, 4294901760
    %1108 = vmatpush1.msra.mxu0 %v1107
    %1109 = vmatprep.subr.mxu0 0.0
    %1110 = vmatpush1.msra.mxu0 0.0
    %1111 = vmatprep.subr.mxu0 0.0
    %1112 = vmatpush1.msra.mxu0 0.0
    %1113 = vmatprep.subr.mxu0 0.0
    %1114 = vmatpush1.msra.mxu0 0.0
    %1115 = vmatprep.subr.mxu0 0.0
    %1116 = vmatpush1.msra.mxu0 0.0
    %1117 = vmatprep.subr.mxu0 0.0
    %1118 = vmatpush1.msra.mxu0 0.0
    %1119 = vmatprep.subr.mxu0 0.0
    %1120 = vmatpush1.msra.mxu0 0.0
    %1121 = vmatprep.subr.mxu0 0.0
    %1122 = vmatpush1.msra.mxu0 0.0
    %1123 = vmatprep.subr.mxu0 0.0
    %1124 = vmatpush1.msra.mxu0 0.0
    %1125 = vmatprep.subr.mxu0 0.0
    %1126 = vmatpush1.msra.mxu0 0.0
    %1127 = vmatprep.subr.mxu0 0.0
    %1128 = vmatpush1.msra.mxu0 0.0
    %1129 = vmatprep.subr.mxu0 0.0
    %1130 = vmatpush1.msra.mxu0 0.0
    %1131 = vmatprep.subr.mxu0 0.0
    %1132 = vmatpush1.msra.mxu0 0.0
    %1133 = vmatprep.subr.mxu0 0.0
    %1134 = vmatpush1.msra.mxu0 0.0
    %1135 = vmatprep.subr.mxu0 0.0
    %1136 = vmatpush1.msra.mxu0 0.0
    %1137 = vmatprep.subr.mxu0 0.0
    %1138 = vmatpush1.msra.mxu0 0.0
    %1139 = vmatprep.subr.mxu0 0.0
    %1140 = vmatpush1.msra.mxu0 0.0
    %1141 = vmatprep.subr.mxu0 0.0
    %1142 = vmatpush1.msra.mxu0 0.0
    %1143 = vmatprep.subr.mxu0 0.0
    %1144 = vmatpush1.msra.mxu0 0.0
    %1145 = vmatprep.subr.mxu0 0.0
    %1146 = vmatpush1.msra.mxu0 0.0
    %1147 = vmatprep.subr.mxu0 0.0
    %1148 = vmatpush1.msra.mxu0 0.0
    %1149 = vmatprep.subr.mxu0 0.0
    %1150 = vmatpush1.msra.mxu0 0.0
    %1151 = vmatprep.subr.mxu0 0.0
    %1152 = vmatpush1.msra.mxu0 0.0
    %1153 = vmatprep.subr.mxu0 0.0
    %1154 = vmatpush1.msra.mxu0 0.0
    %1155 = vmatprep.subr.mxu0 0.0
    %1156 = vmatpush1.msra.mxu0 0.0
    %1157 = vmatprep.mubr.f32.mxu0 0.0
    %v1158 = vand.u32 %v608, 4294901760
    %1159 = vmatmul.mubr.f32.gmra.mrb[0].mxu0 %v1158
    %v1160 = vpop.f32.mrb[0].mxu0
    %v1161 = vadd.f32 %v1042, %v1160
    %v1162 = vpop.f32.mrb[0].mxu0
    %1163 = vdwg.mxu0
    %v1164 = vand.u32 %v578, 4294901760
    %1165 = vmatprep.subr.mxu0 %v1164
    %v1166 = vand.u32 %v577, 4294901760
    %1167 = vmatpush1.msra.mxu0 %v1166
    %v1168 = vand.u32 %v580, 4294901760
    %1169 = vmatprep.subr.mxu0 %v1168
    %v1170 = vand.u32 %v579, 4294901760
    %1171 = vmatpush1.msra.mxu0 %v1170
    %v1172 = vand.u32 %v582, 4294901760
    %1173 = vmatprep.subr.mxu0 %v1172
    %v1174 = vand.u32 %v581, 4294901760
    %1175 = vmatpush1.msra.mxu0 %v1174
    %v1176 = vand.u32 %v584, 4294901760
    %1177 = vmatprep.subr.mxu0 %v1176
    %v1178 = vand.u32 %v583, 4294901760
    %1179 = vmatpush1.msra.mxu0 %v1178
    %v1180 = vand.u32 %v586, 4294901760
    %1181 = vmatprep.subr.mxu0 %v1180
    %v1182 = vand.u32 %v585, 4294901760
    %1183 = vmatpush1.msra.mxu0 %v1182
    %v1184 = vand.u32 %v588, 4294901760
    %1185 = vmatprep.subr.mxu0 %v1184
    %v1186 = vand.u32 %v587, 4294901760
    %1187 = vmatpush1.msra.mxu0 %v1186
    %v1188 = vand.u32 %v590, 4294901760
    %1189 = vmatprep.subr.mxu0 %v1188
    %v1190 = vand.u32 %v589, 4294901760
    %1191 = vmatpush1.msra.mxu0 %v1190
    %v1192 = vand.u32 %v592, 4294901760
    %1193 = vmatprep.subr.mxu0 %v1192
    %v1194 = vand.u32 %v591, 4294901760
    %1195 = vmatpush1.msra.mxu0 %v1194
    %1196 = vmatprep.subr.mxu0 0.0
    %1197 = vmatpush1.msra.mxu0 0.0
    %1198 = vmatprep.subr.mxu0 0.0
    %1199 = vmatpush1.msra.mxu0 0.0
    %1200 = vmatprep.subr.mxu0 0.0
    %1201 = vmatpush1.msra.mxu0 0.0
    %1202 = vmatprep.subr.mxu0 0.0
    %1203 = vmatpush1.msra.mxu0 0.0
    %1204 = vmatprep.subr.mxu0 0.0
    %1205 = vmatpush1.msra.mxu0 0.0
    %1206 = vmatprep.subr.mxu0 0.0
    %1207 = vmatpush1.msra.mxu0 0.0
    %1208 = vmatprep.subr.mxu0 0.0
    %1209 = vmatpush1.msra.mxu0 0.0
    %1210 = vmatprep.subr.mxu0 0.0
    %1211 = vmatpush1.msra.mxu0 0.0
    %1212 = vmatprep.subr.mxu0 0.0
    %1213 = vmatpush1.msra.mxu0 0.0
    %1214 = vmatprep.subr.mxu0 0.0
    %1215 = vmatpush1.msra.mxu0 0.0
    %1216 = vmatprep.subr.mxu0 0.0
    %1217 = vmatpush1.msra.mxu0 0.0
    %1218 = vmatprep.subr.mxu0 0.0
    %1219 = vmatpush1.msra.mxu0 0.0
    %1220 = vmatprep.subr.mxu0 0.0
    %1221 = vmatpush1.msra.mxu0 0.0
    %1222 = vmatprep.subr.mxu0 0.0
    %1223 = vmatpush1.msra.mxu0 0.0
    %1224 = vmatprep.subr.mxu0 0.0
    %1225 = vmatpush1.msra.mxu0 0.0
    %1226 = vmatprep.subr.mxu0 0.0
    %1227 = vmatpush1.msra.mxu0 0.0
    %1228 = vmatprep.subr.mxu0 0.0
    %1229 = vmatpush1.msra.mxu0 0.0
    %1230 = vmatprep.subr.mxu0 0.0
    %1231 = vmatpush1.msra.mxu0 0.0
    %1232 = vmatprep.subr.mxu0 0.0
    %1233 = vmatpush1.msra.mxu0 0.0
    %1234 = vmatprep.subr.mxu0 0.0
    %1235 = vmatpush1.msra.mxu0 0.0
    %1236 = vmatprep.subr.mxu0 0.0
    %1237 = vmatpush1.msra.mxu0 0.0
    %1238 = vmatprep.subr.mxu0 0.0
    %1239 = vmatpush1.msra.mxu0 0.0
    %1240 = vmatprep.subr.mxu0 0.0
    %1241 = vmatpush1.msra.mxu0 0.0
    %1242 = vmatprep.subr.mxu0 0.0
    %1243 = vmatpush1.msra.mxu0 0.0
    %1244 = vmatprep.mubr.f32.mxu0 0.0
    %v1245 = vand.u32 %v608, 4294901760
    %1246 = vmatmul.mubr.f32.gmra.mrb[0].mxu0 %v1245
    %v1247 = vpop.f32.mrb[0].mxu0
    %v1248 = vadd.f32 %v1161, %v1247
    %v1249 = vpop.f32.mrb[0].mxu0
    %1250 = vdwg.mxu0
    %v1251 = vld [vmem:[#allocation2] sm:$0x3]
    %v1252 = vadd.f32 %v1248, %v1251
    %v1253 = vtanh.pop %v1252
    %v1254 = vmul.f32 %v1253, 0.5
    %v1255 = vadd.f32 %v1254, 0.5
    %1257 = vrot.lane.b32.xlu0 %v595, 32
    %v1258 = vpop.permute.xlu0 %1257
    %v1260 = vmul.f32 %v1255, %v1258
    %1262 = vrot.lane.b32.xlu0 %v1253, 32
    %v1263 = vpop.permute.xlu0 %1262
    %v1265 = vmul.f32 %v1255, %v1263
    %1267 = vrot.lane.b32.xlu0 %v1265, 32
    %v1268 = vpop.permute.xlu0 %1267
    %v1270 = vadd.f32 %v1260, %v1268
    %v1271 = vtanh.pop %v1270
    %1273 = vrot.lane.b32.xlu0 %v1271, 32
    %v1274 = vpop.permute.xlu0 %1273
    %v1276 = vmul.f32 %v1255, %v1274
    %1278 = vrot.lane.b32.xlu0 %v1276, 64
    %v1279 = vpop.permute.xlu0 %1278
    %v1281 = vsel %vm604, %v1279, %v602
    %v1283 = vsel %vm606, %v1281, 0
    %v1285 = vand.u32 %v578, 4294901760
    %1286 = vmatprep.subr.mxu0 %v1285
    %v1287 = vand.u32 %v577, 4294901760
    %1288 = vmatpush1.msra.mxu0 %v1287
    %v1289 = vand.u32 %v580, 4294901760
    %1290 = vmatprep.subr.mxu0 %v1289
    %v1291 = vand.u32 %v579, 4294901760
    %1292 = vmatpush1.msra.mxu0 %v1291
    %v1293 = vand.u32 %v582, 4294901760
    %1294 = vmatprep.subr.mxu0 %v1293
    %v1295 = vand.u32 %v581, 4294901760
    %1296 = vmatpush1.msra.mxu0 %v1295
    %v1297 = vand.u32 %v584, 4294901760
    %1298 = vmatprep.subr.mxu0 %v1297
    %v1299 = vand.u32 %v583, 4294901760
    %1300 = vmatpush1.msra.mxu0 %v1299
    %v1301 = vand.u32 %v586, 4294901760
    %1302 = vmatprep.subr.mxu0 %v1301
    %v1303 = vand.u32 %v585, 4294901760
    %1304 = vmatpush1.msra.mxu0 %v1303
    %v1305 = vand.u32 %v588, 4294901760
    %1306 = vmatprep.subr.mxu0 %v1305
    %v1307 = vand.u32 %v587, 4294901760
    %1308 = vmatpush1.msra.mxu0 %v1307
    %v1309 = vand.u32 %v590, 4294901760
    %1310 = vmatprep.subr.mxu0 %v1309
    %v1311 = vand.u32 %v589, 4294901760
    %1312 = vmatpush1.msra.mxu0 %v1311
    %v1313 = vand.u32 %v592, 4294901760
    %1314 = vmatprep.subr.mxu0 %v1313
    %v1315 = vand.u32 %v591, 4294901760
    %1316 = vmatpush1.msra.mxu0 %v1315
    %1317 = vmatprep.subr.mxu0 0.0
    %1318 = vmatpush1.msra.mxu0 0.0
    %1319 = vmatprep.subr.mxu0 0.0
    %1320 = vmatpush1.msra.mxu0 0.0
    %1321 = vmatprep.subr.mxu0 0.0
    %1322 = vmatpush1.msra.mxu0 0.0
    %1323 = vmatprep.subr.mxu0 0.0
    %1324 = vmatpush1.msra.mxu0 0.0
    %1325 = vmatprep.subr.mxu0 0.0
    %1326 = vmatpush1.msra.mxu0 0.0
    %1327 = vmatprep.subr.mxu0 0.0
    %1328 = vmatpush1.msra.mxu0 0.0
    %1329 = vmatprep.subr.mxu0 0.0
    %1330 = vmatpush1.msra.mxu0 0.0
    %1331 = vmatprep.subr.mxu0 0.0
    %1332 = vmatpush1.msra.mxu0 0.0
    %1333 = vmatprep.subr.mxu0 0.0
    %1334 = vmatpush1.msra.mxu0 0.0
    %1335 = vmatprep.subr.mxu0 0.0
    %1336 = vmatpush1.msra.mxu0 0.0
    %1337 = vmatprep.subr.mxu0 0.0
    %1338 = vmatpush1.msra.mxu0 0.0
    %1339 = vmatprep.subr.mxu0 0.0
    %1340 = vmatpush1.msra.mxu0 0.0
    %1341 = vmatprep.subr.mxu0 0.0
    %1342 = vmatpush1.msra.mxu0 0.0
    %1343 = vmatprep.subr.mxu0 0.0
    %1344 = vmatpush1.msra.mxu0 0.0
    %1345 = vmatprep.subr.mxu0 0.0
    %1346 = vmatpush1.msra.mxu0 0.0
    %1347 = vmatprep.subr.mxu0 0.0
    %1348 = vmatpush1.msra.mxu0 0.0
    %1349 = vmatprep.subr.mxu0 0.0
    %1350 = vmatpush1.msra.mxu0 0.0
    %1351 = vmatprep.subr.mxu0 0.0
    %1352 = vmatpush1.msra.mxu0 0.0
    %1353 = vmatprep.subr.mxu0 0.0
    %1354 = vmatpush1.msra.mxu0 0.0
    %1355 = vmatprep.subr.mxu0 0.0
    %1356 = vmatpush1.msra.mxu0 0.0
    %1357 = vmatprep.subr.mxu0 0.0
    %1358 = vmatpush1.msra.mxu0 0.0
    %1359 = vmatprep.subr.mxu0 0.0
    %1360 = vmatpush1.msra.mxu0 0.0
    %1361 = vmatprep.subr.mxu0 0.0
    %1362 = vmatpush1.msra.mxu0 0.0
    %1363 = vmatprep.subr.mxu0 0.0
    %1364 = vmatpush1.msra.mxu0 0.0
    %1365 = vmatprep.mubr.f32.mxu0 0.0
    %v1366 = vand.u32 %v1283, 4294901760
    %v1367 = vsub.f32 %v1283, %v1366
    %v1368 = vand.u32 %v1367, 4294901760
    %v1369 = vsub.f32 %v1367, %v1368
    %v1370 = vand.u32 %v1369, 4294901760
    %1371 = vmatmul.mubr.f32.gmra.mrb[0].mxu0 %v1370
    %v1372 = vpop.f32.mrb[0].mxu0
    %v1373 = vadd.f32 0.0, %v1372
    %v1374 = vpop.f32.mrb[0].mxu0
    %v1375 = vadd.f32 0.0, %v1374
    %1376 = vdwg.mxu0
    %v1377 = vand.u32 %v578, 4294901760
    %v1378 = vsub.f32 %v578, %v1377
    %v1379 = vand.u32 %v1378, 4294901760
    %v1380 = vsub.f32 %v1378, %v1379
    %v1381 = vand.u32 %v1380, 4294901760
    %1382 = vmatprep.subr.mxu0 %v1381
    %v1383 = vand.u32 %v577, 4294901760
    %v1384 = vsub.f32 %v577, %v1383
    %v1385 = vand.u32 %v1384, 4294901760
    %v1386 = vsub.f32 %v1384, %v1385
    %v1387 = vand.u32 %v1386, 4294901760
    %1388 = vmatpush1.msra.mxu0 %v1387
    %v1389 = vand.u32 %v580, 4294901760
    %v1390 = vsub.f32 %v580, %v1389
    %v1391 = vand.u32 %v1390, 4294901760
    %v1392 = vsub.f32 %v1390, %v1391
    %v1393 = vand.u32 %v1392, 4294901760
    %1394 = vmatprep.subr.mxu0 %v1393
    %v1395 = vand.u32 %v579, 4294901760
    %v1396 = vsub.f32 %v579, %v1395
    %v1397 = vand.u32 %v1396, 4294901760
    %v1398 = vsub.f32 %v1396, %v1397
    %v1399 = vand.u32 %v1398, 4294901760
    %1400 = vmatpush1.msra.mxu0 %v1399
    %v1401 = vand.u32 %v582, 4294901760
    %v1402 = vsub.f32 %v582, %v1401
    %v1403 = vand.u32 %v1402, 4294901760
    %v1404 = vsub.f32 %v1402, %v1403
    %v1405 = vand.u32 %v1404, 4294901760
    %1406 = vmatprep.subr.mxu0 %v1405
    %v1407 = vand.u32 %v581, 4294901760
    %v1408 = vsub.f32 %v581, %v1407
    %v1409 = vand.u32 %v1408, 4294901760
    %v1410 = vsub.f32 %v1408, %v1409
    %v1411 = vand.u32 %v1410, 4294901760
    %1412 = vmatpush1.msra.mxu0 %v1411
    %v1413 = vand.u32 %v584, 4294901760
    %v1414 = vsub.f32 %v584, %v1413
    %v1415 = vand.u32 %v1414, 4294901760
    %v1416 = vsub.f32 %v1414, %v1415
    %v1417 = vand.u32 %v1416, 4294901760
    %1418 = vmatprep.subr.mxu0 %v1417
    %v1419 = vand.u32 %v583, 4294901760
    %v1420 = vsub.f32 %v583, %v1419
    %v1421 = vand.u32 %v1420, 4294901760
    %v1422 = vsub.f32 %v1420, %v1421
    %v1423 = vand.u32 %v1422, 4294901760
    %1424 = vmatpush1.msra.mxu0 %v1423
    %v1425 = vand.u32 %v586, 4294901760
    %v1426 = vsub.f32 %v586, %v1425
    %v1427 = vand.u32 %v1426, 4294901760
    %v1428 = vsub.f32 %v1426, %v1427
    %v1429 = vand.u32 %v1428, 4294901760
    %1430 = vmatprep.subr.mxu0 %v1429
    %v1431 = vand.u32 %v585, 4294901760
    %v1432 = vsub.f32 %v585, %v1431
    %v1433 = vand.u32 %v1432, 4294901760
    %v1434 = vsub.f32 %v1432, %v1433
    %v1435 = vand.u32 %v1434, 4294901760
    %1436 = vmatpush1.msra.mxu0 %v1435
    %v1437 = vand.u32 %v588, 4294901760
    %v1438 = vsub.f32 %v588, %v1437
    %v1439 = vand.u32 %v1438, 4294901760
    %v1440 = vsub.f32 %v1438, %v1439
    %v1441 = vand.u32 %v1440, 4294901760
    %1442 = vmatprep.subr.mxu0 %v1441
    %v1443 = vand.u32 %v587, 4294901760
    %v1444 = vsub.f32 %v587, %v1443
    %v1445 = vand.u32 %v1444, 4294901760
    %v1446 = vsub.f32 %v1444, %v1445
    %v1447 = vand.u32 %v1446, 4294901760
    %1448 = vmatpush1.msra.mxu0 %v1447
    %v1449 = vand.u32 %v590, 4294901760
    %v1450 = vsub.f32 %v590, %v1449
    %v1451 = vand.u32 %v1450, 4294901760
    %v1452 = vsub.f32 %v1450, %v1451
    %v1453 = vand.u32 %v1452, 4294901760
    %1454 = vmatprep.subr.mxu0 %v1453
    %v1455 = vand.u32 %v589, 4294901760
    %v1456 = vsub.f32 %v589, %v1455
    %v1457 = vand.u32 %v1456, 4294901760
    %v1458 = vsub.f32 %v1456, %v1457
    %v1459 = vand.u32 %v1458, 4294901760
    %1460 = vmatpush1.msra.mxu0 %v1459
    %v1461 = vand.u32 %v592, 4294901760
    %v1462 = vsub.f32 %v592, %v1461
    %v1463 = vand.u32 %v1462, 4294901760
    %v1464 = vsub.f32 %v1462, %v1463
    %v1465 = vand.u32 %v1464, 4294901760
    %1466 = vmatprep.subr.mxu0 %v1465
    %v1467 = vand.u32 %v591, 4294901760
    %v1468 = vsub.f32 %v591, %v1467
    %v1469 = vand.u32 %v1468, 4294901760
    %v1470 = vsub.f32 %v1468, %v1469
    %v1471 = vand.u32 %v1470, 4294901760
    %1472 = vmatpush1.msra.mxu0 %v1471
    %1473 = vmatprep.subr.mxu0 0.0
    %1474 = vmatpush1.msra.mxu0 0.0
    %1475 = vmatprep.subr.mxu0 0.0
    %1476 = vmatpush1.msra.mxu0 0.0
    %1477 = vmatprep.subr.mxu0 0.0
    %1478 = vmatpush1.msra.mxu0 0.0
    %1479 = vmatprep.subr.mxu0 0.0
    %1480 = vmatpush1.msra.mxu0 0.0
    %1481 = vmatprep.subr.mxu0 0.0
    %1482 = vmatpush1.msra.mxu0 0.0
    %1483 = vmatprep.subr.mxu0 0.0
    %1484 = vmatpush1.msra.mxu0 0.0
    %1485 = vmatprep.subr.mxu0 0.0
    %1486 = vmatpush1.msra.mxu0 0.0
    %1487 = vmatprep.subr.mxu0 0.0
    %1488 = vmatpush1.msra.mxu0 0.0
    %1489 = vmatprep.subr.mxu0 0.0
    %1490 = vmatpush1.msra.mxu0 0.0
    %1491 = vmatprep.subr.mxu0 0.0
    %1492 = vmatpush1.msra.mxu0 0.0
    %1493 = vmatprep.subr.mxu0 0.0
    %1494 = vmatpush1.msra.mxu0 0.0
    %1495 = vmatprep.subr.mxu0 0.0
    %1496 = vmatpush1.msra.mxu0 0.0
    %1497 = vmatprep.subr.mxu0 0.0
    %1498 = vmatpush1.msra.mxu0 0.0
    %1499 = vmatprep.subr.mxu0 0.0
    %1500 = vmatpush1.msra.mxu0 0.0
    %1501 = vmatprep.subr.mxu0 0.0
    %1502 = vmatpush1.msra.mxu0 0.0
    %1503 = vmatprep.subr.mxu0 0.0
    %1504 = vmatpush1.msra.mxu0 0.0
    %1505 = vmatprep.subr.mxu0 0.0
    %1506 = vmatpush1.msra.mxu0 0.0
    %1507 = vmatprep.subr.mxu0 0.0
    %1508 = vmatpush1.msra.mxu0 0.0
    %1509 = vmatprep.subr.mxu0 0.0
    %1510 = vmatpush1.msra.mxu0 0.0
    %1511 = vmatprep.subr.mxu0 0.0
    %1512 = vmatpush1.msra.mxu0 0.0
    %1513 = vmatprep.subr.mxu0 0.0
    %1514 = vmatpush1.msra.mxu0 0.0
    %1515 = vmatprep.subr.mxu0 0.0
    %1516 = vmatpush1.msra.mxu0 0.0
    %1517 = vmatprep.subr.mxu0 0.0
    %1518 = vmatpush1.msra.mxu0 0.0
    %1519 = vmatprep.subr.mxu0 0.0
    %1520 = vmatpush1.msra.mxu0 0.0
    %1521 = vmatprep.mubr.f32.mxu0 0.0
    %v1522 = vand.u32 %v1283, 4294901760
    %1523 = vmatmul.mubr.f32.gmra.mrb[0].mxu0 %v1522
    %v1524 = vpop.f32.mrb[0].mxu0
    %v1525 = vadd.f32 %v1373, %v1524
    %v1526 = vpop.f32.mrb[0].mxu0
    %v1527 = vadd.f32 %v1375, %v1526
    %1528 = vdwg.mxu0
    %v1529 = vand.u32 %v578, 4294901760
    %v1530 = vsub.f32 %v578, %v1529
    %1531 = vmatprep.subr.mxu0 %v1530
    %v1532 = vand.u32 %v577, 4294901760
    %v1533 = vsub.f32 %v577, %v1532
    %1534 = vmatpush1.msra.mxu0 %v1533
    %v1535 = vand.u32 %v580, 4294901760
    %v1536 = vsub.f32 %v580, %v1535
    %1537 = vmatprep.subr.mxu0 %v1536
    %v1538 = vand.u32 %v579, 4294901760
    %v1539 = vsub.f32 %v579, %v1538
    %1540 = vmatpush1.msra.mxu0 %v1539
    %v1541 = vand.u32 %v582, 4294901760
    %v1542 = vsub.f32 %v582, %v1541
    %1543 = vmatprep.subr.mxu0 %v1542
    %v1544 = vand.u32 %v581, 4294901760
    %v1545 = vsub.f32 %v581, %v1544
    %1546 = vmatpush1.msra.mxu0 %v1545
    %v1547 = vand.u32 %v584, 4294901760
    %v1548 = vsub.f32 %v584, %v1547
    %1549 = vmatprep.subr.mxu0 %v1548
    %v1550 = vand.u32 %v583, 4294901760
    %v1551 = vsub.f32 %v583, %v1550
    %1552 = vmatpush1.msra.mxu0 %v1551
    %v1553 = vand.u32 %v586, 4294901760
    %v1554 = vsub.f32 %v586, %v1553
    %1555 = vmatprep.subr.mxu0 %v1554
    %v1556 = vand.u32 %v585, 4294901760
    %v1557 = vsub.f32 %v585, %v1556
    %1558 = vmatpush1.msra.mxu0 %v1557
    %v1559 = vand.u32 %v588, 4294901760
    %v1560 = vsub.f32 %v588, %v1559
    %1561 = vmatprep.subr.mxu0 %v1560
    %v1562 = vand.u32 %v587, 4294901760
    %v1563 = vsub.f32 %v587, %v1562
    %1564 = vmatpush1.msra.mxu0 %v1563
    %v1565 = vand.u32 %v590, 4294901760
    %v1566 = vsub.f32 %v590, %v1565
    %1567 = vmatprep.subr.mxu0 %v1566
    %v1568 = vand.u32 %v589, 4294901760
    %v1569 = vsub.f32 %v589, %v1568
    %1570 = vmatpush1.msra.mxu0 %v1569
    %v1571 = vand.u32 %v592, 4294901760
    %v1572 = vsub.f32 %v592, %v1571
    %1573 = vmatprep.subr.mxu0 %v1572
    %v1574 = vand.u32 %v591, 4294901760
    %v1575 = vsub.f32 %v591, %v1574
    %1576 = vmatpush1.msra.mxu0 %v1575
    %1577 = vmatprep.subr.mxu0 0.0
    %1578 = vmatpush1.msra.mxu0 0.0
    %1579 = vmatprep.subr.mxu0 0.0
    %1580 = vmatpush1.msra.mxu0 0.0
    %1581 = vmatprep.subr.mxu0 0.0
    %1582 = vmatpush1.msra.mxu0 0.0
    %1583 = vmatprep.subr.mxu0 0.0
    %1584 = vmatpush1.msra.mxu0 0.0
    %1585 = vmatprep.subr.mxu0 0.0
    %1586 = vmatpush1.msra.mxu0 0.0
    %1587 = vmatprep.subr.mxu0 0.0
    %1588 = vmatpush1.msra.mxu0 0.0
    %1589 = vmatprep.subr.mxu0 0.0
    %1590 = vmatpush1.msra.mxu0 0.0
    %1591 = vmatprep.subr.mxu0 0.0
    %1592 = vmatpush1.msra.mxu0 0.0
    %1593 = vmatprep.subr.mxu0 0.0
    %1594 = vmatpush1.msra.mxu0 0.0
    %1595 = vmatprep.subr.mxu0 0.0
    %1596 = vmatpush1.msra.mxu0 0.0
    %1597 = vmatprep.subr.mxu0 0.0
    %1598 = vmatpush1.msra.mxu0 0.0
    %1599 = vmatprep.subr.mxu0 0.0
    %1600 = vmatpush1.msra.mxu0 0.0
    %1601 = vmatprep.subr.mxu0 0.0
    %1602 = vmatpush1.msra.mxu0 0.0
    %1603 = vmatprep.subr.mxu0 0.0
    %1604 = vmatpush1.msra.mxu0 0.0
    %1605 = vmatprep.subr.mxu0 0.0
    %1606 = vmatpush1.msra.mxu0 0.0
    %1607 = vmatprep.subr.mxu0 0.0
    %1608 = vmatpush1.msra.mxu0 0.0
    %1609 = vmatprep.subr.mxu0 0.0
    %1610 = vmatpush1.msra.mxu0 0.0
    %1611 = vmatprep.subr.mxu0 0.0
    %1612 = vmatpush1.msra.mxu0 0.0
    %1613 = vmatprep.subr.mxu0 0.0
    %1614 = vmatpush1.msra.mxu0 0.0
    %1615 = vmatprep.subr.mxu0 0.0
    %1616 = vmatpush1.msra.mxu0 0.0
    %1617 = vmatprep.subr.mxu0 0.0
    %1618 = vmatpush1.msra.mxu0 0.0
    %1619 = vmatprep.subr.mxu0 0.0
    %1620 = vmatpush1.msra.mxu0 0.0
    %1621 = vmatprep.subr.mxu0 0.0
    %1622 = vmatpush1.msra.mxu0 0.0
    %1623 = vmatprep.subr.mxu0 0.0
    %1624 = vmatpush1.msra.mxu0 0.0
    %1625 = vmatprep.mubr.f32.mxu0 0.0
    %v1626 = vand.u32 %v1283, 4294901760
    %v1627 = vsub.f32 %v1283, %v1626
    %1628 = vmatmul.mubr.f32.gmra.mrb[0].mxu0 %v1627
    %v1629 = vpop.f32.mrb[0].mxu0
    %v1630 = vadd.f32 %v1525, %v1629
    %v1631 = vpop.f32.mrb[0].mxu0
    %v1632 = vadd.f32 %v1527, %v1631
    %1633 = vdwg.mxu0
    %v1634 = vand.u32 %v578, 4294901760
    %1635 = vmatprep.subr.mxu0 %v1634
    %v1636 = vand.u32 %v577, 4294901760
    %1637 = vmatpush1.msra.mxu0 %v1636
    %v1638 = vand.u32 %v580, 4294901760
    %1639 = vmatprep.subr.mxu0 %v1638
    %v1640 = vand.u32 %v579, 4294901760
    %1641 = vmatpush1.msra.mxu0 %v1640
    %v1642 = vand.u32 %v582, 4294901760
    %1643 = vmatprep.subr.mxu0 %v1642
    %v1644 = vand.u32 %v581, 4294901760
    %1645 = vmatpush1.msra.mxu0 %v1644
    %v1646 = vand.u32 %v584, 4294901760
    %1647 = vmatprep.subr.mxu0 %v1646
    %v1648 = vand.u32 %v583, 4294901760
    %1649 = vmatpush1.msra.mxu0 %v1648
    %v1650 = vand.u32 %v586, 4294901760
    %1651 = vmatprep.subr.mxu0 %v1650
    %v1652 = vand.u32 %v585, 4294901760
    %1653 = vmatpush1.msra.mxu0 %v1652
    %v1654 = vand.u32 %v588, 4294901760
    %1655 = vmatprep.subr.mxu0 %v1654
    %v1656 = vand.u32 %v587, 4294901760
    %1657 = vmatpush1.msra.mxu0 %v1656
    %v1658 = vand.u32 %v590, 4294901760
    %1659 = vmatprep.subr.mxu0 %v1658
    %v1660 = vand.u32 %v589, 4294901760
    %1661 = vmatpush1.msra.mxu0 %v1660
    %v1662 = vand.u32 %v592, 4294901760
    %1663 = vmatprep.subr.mxu0 %v1662
    %v1664 = vand.u32 %v591, 4294901760
    %1665 = vmatpush1.msra.mxu0 %v1664
    %1666 = vmatprep.subr.mxu0 0.0
    %1667 = vmatpush1.msra.mxu0 0.0
    %1668 = vmatprep.subr.mxu0 0.0
    %1669 = vmatpush1.msra.mxu0 0.0
    %1670 = vmatprep.subr.mxu0 0.0
    %1671 = vmatpush1.msra.mxu0 0.0
    %1672 = vmatprep.subr.mxu0 0.0
    %1673 = vmatpush1.msra.mxu0 0.0
    %1674 = vmatprep.subr.mxu0 0.0
    %1675 = vmatpush1.msra.mxu0 0.0
    %1676 = vmatprep.subr.mxu0 0.0
    %1677 = vmatpush1.msra.mxu0 0.0
    %1678 = vmatprep.subr.mxu0 0.0
    %1679 = vmatpush1.msra.mxu0 0.0
    %1680 = vmatprep.subr.mxu0 0.0
    %1681 = vmatpush1.msra.mxu0 0.0
    %1682 = vmatprep.subr.mxu0 0.0
    %1683 = vmatpush1.msra.mxu0 0.0
    %1684 = vmatprep.subr.mxu0 0.0
    %1685 = vmatpush1.msra.mxu0 0.0
    %1686 = vmatprep.subr.mxu0 0.0
    %1687 = vmatpush1.msra.mxu0 0.0
    %1688 = vmatprep.subr.mxu0 0.0
    %1689 = vmatpush1.msra.mxu0 0.0
    %1690 = vmatprep.subr.mxu0 0.0
    %1691 = vmatpush1.msra.mxu0 0.0
    %1692 = vmatprep.subr.mxu0 0.0
    %1693 = vmatpush1.msra.mxu0 0.0
    %1694 = vmatprep.subr.mxu0 0.0
    %1695 = vmatpush1.msra.mxu0 0.0
    %1696 = vmatprep.subr.mxu0 0.0
    %1697 = vmatpush1.msra.mxu0 0.0
    %1698 = vmatprep.subr.mxu0 0.0
    %1699 = vmatpush1.msra.mxu0 0.0
    %1700 = vmatprep.subr.mxu0 0.0
    %1701 = vmatpush1.msra.mxu0 0.0
    %1702 = vmatprep.subr.mxu0 0.0
    %1703 = vmatpush1.msra.mxu0 0.0
    %1704 = vmatprep.subr.mxu0 0.0
    %1705 = vmatpush1.msra.mxu0 0.0
    %1706 = vmatprep.subr.mxu0 0.0
    %1707 = vmatpush1.msra.mxu0 0.0
    %1708 = vmatprep.subr.mxu0 0.0
    %1709 = vmatpush1.msra.mxu0 0.0
    %1710 = vmatprep.subr.mxu0 0.0
    %1711 = vmatpush1.msra.mxu0 0.0
    %1712 = vmatprep.subr.mxu0 0.0
    %1713 = vmatpush1.msra.mxu0 0.0
    %1714 = vmatprep.mubr.f32.mxu0 0.0
    %v1715 = vand.u32 %v1283, 4294901760
    %v1716 = vsub.f32 %v1283, %v1715
    %v1717 = vand.u32 %v1716, 4294901760
    %1718 = vmatmul.mubr.f32.gmra.mrb[0].mxu0 %v1717
    %v1719 = vpop.f32.mrb[0].mxu0
    %v1720 = vadd.f32 %v1630, %v1719
    %v1721 = vpop.f32.mrb[0].mxu0
    %v1722 = vadd.f32 %v1632, %v1721
    %1723 = vdwg.mxu0
    %v1724 = vand.u32 %v578, 4294901760
    %v1725 = vsub.f32 %v578, %v1724
    %v1726 = vand.u32 %v1725, 4294901760
    %1727 = vmatprep.subr.mxu0 %v1726
    %v1728 = vand.u32 %v577, 4294901760
    %v1729 = vsub.f32 %v577, %v1728
    %v1730 = vand.u32 %v1729, 4294901760
    %1731 = vmatpush1.msra.mxu0 %v1730
    %v1732 = vand.u32 %v580, 4294901760
    %v1733 = vsub.f32 %v580, %v1732
    %v1734 = vand.u32 %v1733, 4294901760
    %1735 = vmatprep.subr.mxu0 %v1734
    %v1736 = vand.u32 %v579, 4294901760
    %v1737 = vsub.f32 %v579, %v1736
    %v1738 = vand.u32 %v1737, 4294901760
    %1739 = vmatpush1.msra.mxu0 %v1738
    %v1740 = vand.u32 %v582, 4294901760
    %v1741 = vsub.f32 %v582, %v1740
    %v1742 = vand.u32 %v1741, 4294901760
    %1743 = vmatprep.subr.mxu0 %v1742
    %v1744 = vand.u32 %v581, 4294901760
    %v1745 = vsub.f32 %v581, %v1744
    %v1746 = vand.u32 %v1745, 4294901760
    %1747 = vmatpush1.msra.mxu0 %v1746
    %v1748 = vand.u32 %v584, 4294901760
    %v1749 = vsub.f32 %v584, %v1748
    %v1750 = vand.u32 %v1749, 4294901760
    %1751 = vmatprep.subr.mxu0 %v1750
    %v1752 = vand.u32 %v583, 4294901760
    %v1753 = vsub.f32 %v583, %v1752
    %v1754 = vand.u32 %v1753, 4294901760
    %1755 = vmatpush1.msra.mxu0 %v1754
    %v1756 = vand.u32 %v586, 4294901760
    %v1757 = vsub.f32 %v586, %v1756
    %v1758 = vand.u32 %v1757, 4294901760
    %1759 = vmatprep.subr.mxu0 %v1758
    %v1760 = vand.u32 %v585, 4294901760
    %v1761 = vsub.f32 %v585, %v1760
    %v1762 = vand.u32 %v1761, 4294901760
    %1763 = vmatpush1.msra.mxu0 %v1762
    %v1764 = vand.u32 %v588, 4294901760
    %v1765 = vsub.f32 %v588, %v1764
    %v1766 = vand.u32 %v1765, 4294901760
    %1767 = vmatprep.subr.mxu0 %v1766
    %v1768 = vand.u32 %v587, 4294901760
    %v1769 = vsub.f32 %v587, %v1768
    %v1770 = vand.u32 %v1769, 4294901760
    %1771 = vmatpush1.msra.mxu0 %v1770
    %v1772 = vand.u32 %v590, 4294901760
    %v1773 = vsub.f32 %v590, %v1772
    %v1774 = vand.u32 %v1773, 4294901760
    %1775 = vmatprep.subr.mxu0 %v1774
    %v1776 = vand.u32 %v589, 4294901760
    %v1777 = vsub.f32 %v589, %v1776
    %v1778 = vand.u32 %v1777, 4294901760
    %1779 = vmatpush1.msra.mxu0 %v1778
    %v1780 = vand.u32 %v592, 4294901760
    %v1781 = vsub.f32 %v592, %v1780
    %v1782 = vand.u32 %v1781, 4294901760
    %1783 = vmatprep.subr.mxu0 %v1782
    %v1784 = vand.u32 %v591, 4294901760
    %v1785 = vsub.f32 %v591, %v1784
    %v1786 = vand.u32 %v1785, 4294901760
    %1787 = vmatpush1.msra.mxu0 %v1786
    %1788 = vmatprep.subr.mxu0 0.0
    %1789 = vmatpush1.msra.mxu0 0.0
    %1790 = vmatprep.subr.mxu0 0.0
    %1791 = vmatpush1.msra.mxu0 0.0
    %1792 = vmatprep.subr.mxu0 0.0
    %1793 = vmatpush1.msra.mxu0 0.0
    %1794 = vmatprep.subr.mxu0 0.0
    %1795 = vmatpush1.msra.mxu0 0.0
    %1796 = vmatprep.subr.mxu0 0.0
    %1797 = vmatpush1.msra.mxu0 0.0
    %1798 = vmatprep.subr.mxu0 0.0
    %1799 = vmatpush1.msra.mxu0 0.0
    %1800 = vmatprep.subr.mxu0 0.0
    %1801 = vmatpush1.msra.mxu0 0.0
    %1802 = vmatprep.subr.mxu0 0.0
    %1803 = vmatpush1.msra.mxu0 0.0
    %1804 = vmatprep.subr.mxu0 0.0
    %1805 = vmatpush1.msra.mxu0 0.0
    %1806 = vmatprep.subr.mxu0 0.0
    %1807 = vmatpush1.msra.mxu0 0.0
    %1808 = vmatprep.subr.mxu0 0.0
    %1809 = vmatpush1.msra.mxu0 0.0
    %1810 = vmatprep.subr.mxu0 0.0
    %1811 = vmatpush1.msra.mxu0 0.0
    %1812 = vmatprep.subr.mxu0 0.0
    %1813 = vmatpush1.msra.mxu0 0.0
    %1814 = vmatprep.subr.mxu0 0.0
    %1815 = vmatpush1.msra.mxu0 0.0
    %1816 = vmatprep.subr.mxu0 0.0
    %1817 = vmatpush1.msra.mxu0 0.0
    %1818 = vmatprep.subr.mxu0 0.0
    %1819 = vmatpush1.msra.mxu0 0.0
    %1820 = vmatprep.subr.mxu0 0.0
    %1821 = vmatpush1.msra.mxu0 0.0
    %1822 = vmatprep.subr.mxu0 0.0
    %1823 = vmatpush1.msra.mxu0 0.0
    %1824 = vmatprep.subr.mxu0 0.0
    %1825 = vmatpush1.msra.mxu0 0.0
    %1826 = vmatprep.subr.mxu0 0.0
    %1827 = vmatpush1.msra.mxu0 0.0
    %1828 = vmatprep.subr.mxu0 0.0
    %1829 = vmatpush1.msra.mxu0 0.0
    %1830 = vmatprep.subr.mxu0 0.0
    %1831 = vmatpush1.msra.mxu0 0.0
    %1832 = vmatprep.subr.mxu0 0.0
    %1833 = vmatpush1.msra.mxu0 0.0
    %1834 = vmatprep.subr.mxu0 0.0
    %1835 = vmatpush1.msra.mxu0 0.0
    %1836 = vmatprep.mubr.f32.mxu0 0.0
    %v1837 = vand.u32 %v1283, 4294901760
    %1838 = vmatmul.mubr.f32.gmra.mrb[0].mxu0 %v1837
    %v1839 = vpop.f32.mrb[0].mxu0
    %v1840 = vadd.f32 %v1720, %v1839
    %v1841 = vpop.f32.mrb[0].mxu0
    %v1842 = vadd.f32 %v1722, %v1841
    %1843 = vdwg.mxu0
    %v1844 = vand.u32 %v578, 4294901760
    %1845 = vmatprep.subr.mxu0 %v1844
    %v1846 = vand.u32 %v577, 4294901760
    %1847 = vmatpush1.msra.mxu0 %v1846
    %v1848 = vand.u32 %v580, 4294901760
    %1849 = vmatprep.subr.mxu0 %v1848
    %v1850 = vand.u32 %v579, 4294901760
    %1851 = vmatpush1.msra.mxu0 %v1850
    %v1852 = vand.u32 %v582, 4294901760
    %1853 = vmatprep.subr.mxu0 %v1852
    %v1854 = vand.u32 %v581, 4294901760
    %1855 = vmatpush1.msra.mxu0 %v1854
    %v1856 = vand.u32 %v584, 4294901760
    %1857 = vmatprep.subr.mxu0 %v1856
    %v1858 = vand.u32 %v583, 4294901760
    %1859 = vmatpush1.msra.mxu0 %v1858
    %v1860 = vand.u32 %v586, 4294901760
    %1861 = vmatprep.subr.mxu0 %v1860
    %v1862 = vand.u32 %v585, 4294901760
    %1863 = vmatpush1.msra.mxu0 %v1862
    %v1864 = vand.u32 %v588, 4294901760
    %1865 = vmatprep.subr.mxu0 %v1864
    %v1866 = vand.u32 %v587, 4294901760
    %1867 = vmatpush1.msra.mxu0 %v1866
    %v1868 = vand.u32 %v590, 4294901760
    %1869 = vmatprep.subr.mxu0 %v1868
    %v1870 = vand.u32 %v589, 4294901760
    %1871 = vmatpush1.msra.mxu0 %v1870
    %v1872 = vand.u32 %v592, 4294901760
    %1873 = vmatprep.subr.mxu0 %v1872
    %v1874 = vand.u32 %v591, 4294901760
    %1875 = vmatpush1.msra.mxu0 %v1874
    %1876 = vmatprep.subr.mxu0 0.0
    %1877 = vmatpush1.msra.mxu0 0.0
    %1878 = vmatprep.subr.mxu0 0.0
    %1879 = vmatpush1.msra.mxu0 0.0
    %1880 = vmatprep.subr.mxu0 0.0
    %1881 = vmatpush1.msra.mxu0 0.0
    %1882 = vmatprep.subr.mxu0 0.0
    %1883 = vmatpush1.msra.mxu0 0.0
    %1884 = vmatprep.subr.mxu0 0.0
    %1885 = vmatpush1.msra.mxu0 0.0
    %1886 = vmatprep.subr.mxu0 0.0
    %1887 = vmatpush1.msra.mxu0 0.0
    %1888 = vmatprep.subr.mxu0 0.0
    %1889 = vmatpush1.msra.mxu0 0.0
    %1890 = vmatprep.subr.mxu0 0.0
    %1891 = vmatpush1.msra.mxu0 0.0
    %1892 = vmatprep.subr.mxu0 0.0
    %1893 = vmatpush1.msra.mxu0 0.0
    %1894 = vmatprep.subr.mxu0 0.0
    %1895 = vmatpush1.msra.mxu0 0.0
    %1896 = vmatprep.subr.mxu0 0.0
    %1897 = vmatpush1.msra.mxu0 0.0
    %1898 = vmatprep.subr.mxu0 0.0
    %1899 = vmatpush1.msra.mxu0 0.0
    %1900 = vmatprep.subr.mxu0 0.0
    %1901 = vmatpush1.msra.mxu0 0.0
    %1902 = vmatprep.subr.mxu0 0.0
    %1903 = vmatpush1.msra.mxu0 0.0
    %1904 = vmatprep.subr.mxu0 0.0
    %1905 = vmatpush1.msra.mxu0 0.0
    %1906 = vmatprep.subr.mxu0 0.0
    %1907 = vmatpush1.msra.mxu0 0.0
    %1908 = vmatprep.subr.mxu0 0.0
    %1909 = vmatpush1.msra.mxu0 0.0
    %1910 = vmatprep.subr.mxu0 0.0
    %1911 = vmatpush1.msra.mxu0 0.0
    %1912 = vmatprep.subr.mxu0 0.0
    %1913 = vmatpush1.msra.mxu0 0.0
    %1914 = vmatprep.subr.mxu0 0.0
    %1915 = vmatpush1.msra.mxu0 0.0
    %1916 = vmatprep.subr.mxu0 0.0
    %1917 = vmatpush1.msra.mxu0 0.0
    %1918 = vmatprep.subr.mxu0 0.0
    %1919 = vmatpush1.msra.mxu0 0.0
    %1920 = vmatprep.subr.mxu0 0.0
    %1921 = vmatpush1.msra.mxu0 0.0
    %1922 = vmatprep.subr.mxu0 0.0
    %1923 = vmatpush1.msra.mxu0 0.0
    %1924 = vmatprep.mubr.f32.mxu0 0.0
    %v1925 = vand.u32 %v1283, 4294901760
    %1926 = vmatmul.mubr.f32.gmra.mrb[0].mxu0 %v1925
    %v1927 = vpop.f32.mrb[0].mxu0
    %v1928 = vadd.f32 %v1840, %v1927
    %v1929 = vpop.f32.mrb[0].mxu0
    %v1930 = vadd.f32 %v1842, %v1929
    %1931 = vdwg.mxu0
    %v1932 = vld [vmem:[#allocation2 + $0x2] sm:$0x3]
    %v1933 = vadd.f32 %v1928, %v1932
    %v1934 = vtanh.pop %v1933
    %v1935 = vmul.f32 %v1934, 0.5
    %v1936 = vadd.f32 %v1935, 0.5
    %v1937 = vmul.f32 %v1936, %v1270
    %1939 = vrot.lane.b32.xlu0 %v1934, 32
    %v1940 = vpop.permute.xlu0 %1939
    %v1942 = vmul.f32 %v1936, %v1940
    %1944 = vrot.lane.b32.xlu0 %v1942, 32
    %v1945 = vpop.permute.xlu0 %1944
    %v1947 = vadd.f32 %v1937, %v1945
    %v1948 = vtanh.pop %v1947
    %1950 = vrot.lane.b32.xlu0 %v1948, 32
    %v1951 = vpop.permute.xlu0 %1950
    %v1953 = vmul.f32 %v1936, %v1951
    %v1955 = vlaneseq
    %v1956 = vshrl.u32 %v1955, 7
    %v1957 = vsub.s32 0, %v1956
    %v1958 = vrot.slane %v593, %v1957
    %v1960 = vadd.f32 %v1930, %v1958
    %v1961 = vtanh.pop %v1960
    %v1962 = vmul.f32 %v1961, 0.5
    %v1963 = vadd.f32 %v1962, 0.5
    %1965 = vrot.lane.b32.xlu0 %v599, 32
    %v1966 = vpop.permute.xlu0 %1965
    %v1968 = vmul.f32 %v1963, %v1966
    %1970 = vrot.lane.b32.xlu0 %v1961, 32
    %v1971 = vpop.permute.xlu0 %1970
    %v1973 = vmul.f32 %v1963, %v1971
    %1975 = vrot.lane.b32.xlu0 %v1973, 32
    %v1976 = vpop.permute.xlu0 %1975
    %v1978 = vadd.f32 %v1968, %v1976
    %v1979 = vtanh.pop %v1978
    %1981 = vrot.lane.b32.xlu0 %v1979, 32
    %v1982 = vpop.permute.xlu0 %1981
    %v1984 = vmul.f32 %v1963, %v1982
    %1986 = vrot.lane.b32.xlu0 %v1984, 64
    %v1987 = vpop.permute.xlu0 %1986
    %vm1989 = vcmask 254976
    %1990 = vst.msk [vmem:[#allocation3] sm:$0x3] %vm1989, %v1987
    %1992 = vrot.lane.b32.xlu0 %v1953, 64
    %v1993 = vpop.permute.xlu0 %1992
    %1995 = vrot.lane.b32.xlu0 %v1984, 96
    %v1996 = vpop.permute.xlu0 %1995
    %v1998 = vsel %vm604, %v1993, %v1996
    %v2000 = vsel %vm606, %v1998, 0
    %v2002 = vand.u32 %v578, 4294901760
    %2003 = vmatprep.subr.mxu0 %v2002
    %v2004 = vand.u32 %v577, 4294901760
    %2005 = vmatpush1.msra.mxu0 %v2004
    %v2006 = vand.u32 %v580, 4294901760
    %2007 = vmatprep.subr.mxu0 %v2006
    %v2008 = vand.u32 %v579, 4294901760
    %2009 = vmatpush1.msra.mxu0 %v2008
    %v2010 = vand.u32 %v582, 4294901760
    %2011 = vmatprep.subr.mxu0 %v2010
    %v2012 = vand.u32 %v581, 4294901760
    %2013 = vmatpush1.msra.mxu0 %v2012
    %v2014 = vand.u32 %v584, 4294901760
    %2015 = vmatprep.subr.mxu0 %v2014
    %v2016 = vand.u32 %v583, 4294901760
    %2017 = vmatpush1.msra.mxu0 %v2016
    %v2018 = vand.u32 %v586, 4294901760
    %2019 = vmatprep.subr.mxu0 %v2018
    %v2020 = vand.u32 %v585, 4294901760
    %2021 = vmatpush1.msra.mxu0 %v2020
    %v2022 = vand.u32 %v588, 4294901760
    %2023 = vmatprep.subr.mxu0 %v2022
    %v2024 = vand.u32 %v587, 4294901760
    %2025 = vmatpush1.msra.mxu0 %v2024
    %v2026 = vand.u32 %v590, 4294901760
    %2027 = vmatprep.subr.mxu0 %v2026
    %v2028 = vand.u32 %v589, 4294901760
    %2029 = vmatpush1.msra.mxu0 %v2028
    %v2030 = vand.u32 %v592, 4294901760
    %2031 = vmatprep.subr.mxu0 %v2030
    %v2032 = vand.u32 %v591, 4294901760
    %2033 = vmatpush1.msra.mxu0 %v2032
    %2034 = vmatprep.subr.mxu0 0.0
    %2035 = vmatpush1.msra.mxu0 0.0
    %2036 = vmatprep.subr.mxu0 0.0
    %2037 = vmatpush1.msra.mxu0 0.0
    %2038 = vmatprep.subr.mxu0 0.0
    %2039 = vmatpush1.msra.mxu0 0.0
    %2040 = vmatprep.subr.mxu0 0.0
    %2041 = vmatpush1.msra.mxu0 0.0
    %2042 = vmatprep.subr.mxu0 0.0
    %2043 = vmatpush1.msra.mxu0 0.0
    %2044 = vmatprep.subr.mxu0 0.0
    %2045 = vmatpush1.msra.mxu0 0.0
    %2046 = vmatprep.subr.mxu0 0.0
    %2047 = vmatpush1.msra.mxu0 0.0
    %2048 = vmatprep.subr.mxu0 0.0
    %2049 = vmatpush1.msra.mxu0 0.0
    %2050 = vmatprep.subr.mxu0 0.0
    %2051 = vmatpush1.msra.mxu0 0.0
    %2052 = vmatprep.subr.mxu0 0.0
    %2053 = vmatpush1.msra.mxu0 0.0
    %2054 = vmatprep.subr.mxu0 0.0
    %2055 = vmatpush1.msra.mxu0 0.0
    %2056 = vmatprep.subr.mxu0 0.0
    %2057 = vmatpush1.msra.mxu0 0.0
    %2058 = vmatprep.subr.mxu0 0.0
    %2059 = vmatpush1.msra.mxu0 0.0
    %2060 = vmatprep.subr.mxu0 0.0
    %2061 = vmatpush1.msra.mxu0 0.0
    %2062 = vmatprep.subr.mxu0 0.0
    %2063 = vmatpush1.msra.mxu0 0.0
    %2064 = vmatprep.subr.mxu0 0.0
    %2065 = vmatpush1.msra.mxu0 0.0
    %2066 = vmatprep.subr.mxu0 0.0
    %2067 = vmatpush1.msra.mxu0 0.0
    %2068 = vmatprep.subr.mxu0 0.0
    %2069 = vmatpush1.msra.mxu0 0.0
    %2070 = vmatprep.subr.mxu0 0.0
    %2071 = vmatpush1.msra.mxu0 0.0
    %2072 = vmatprep.subr.mxu0 0.0
    %2073 = vmatpush1.msra.mxu0 0.0
    %2074 = vmatprep.subr.mxu0 0.0
    %2075 = vmatpush1.msra.mxu0 0.0
    %2076 = vmatprep.subr.mxu0 0.0
    %2077 = vmatpush1.msra.mxu0 0.0
    %2078 = vmatprep.subr.mxu0 0.0
    %2079 = vmatpush1.msra.mxu0 0.0
    %2080 = vmatprep.subr.mxu0 0.0
    %2081 = vmatpush1.msra.mxu0 0.0
    %2082 = vmatprep.mubr.f32.mxu0 0.0
    %v2083 = vand.u32 %v2000, 4294901760
    %v2084 = vsub.f32 %v2000, %v2083
    %v2085 = vand.u32 %v2084, 4294901760
    %v2086 = vsub.f32 %v2084, %v2085
    %v2087 = vand.u32 %v2086, 4294901760
    %2088 = vmatmul.mubr.f32.gmra.mrb[0].mxu0 %v2087
    %v2089 = vpop.f32.mrb[0].mxu0
    %v2090 = vadd.f32 0.0, %v2089
    %v2091 = vpop.f32.mrb[0].mxu0
    %v2092 = vadd.f32 0.0, %v2091
    %2093 = vdwg.mxu0
    %v2094 = vand.u32 %v578, 4294901760
    %v2095 = vsub.f32 %v578, %v2094
    %v2096 = vand.u32 %v2095, 4294901760
    %v2097 = vsub.f32 %v2095, %v2096
    %v2098 = vand.u32 %v2097, 4294901760
    %2099 = vmatprep.subr.mxu0 %v2098
    %v2100 = vand.u32 %v577, 4294901760
    %v2101 = vsub.f32 %v577, %v2100
    %v2102 = vand.u32 %v2101, 4294901760
    %v2103 = vsub.f32 %v2101, %v2102
    %v2104 = vand.u32 %v2103, 4294901760
    %2105 = vmatpush1.msra.mxu0 %v2104
    %v2106 = vand.u32 %v580, 4294901760
    %v2107 = vsub.f32 %v580, %v2106
    %v2108 = vand.u32 %v2107, 4294901760
    %v2109 = vsub.f32 %v2107, %v2108
    %v2110 = vand.u32 %v2109, 4294901760
    %2111 = vmatprep.subr.mxu0 %v2110
    %v2112 = vand.u32 %v579, 4294901760
    %v2113 = vsub.f32 %v579, %v2112
    %v2114 = vand.u32 %v2113, 4294901760
    %v2115 = vsub.f32 %v2113, %v2114
    %v2116 = vand.u32 %v2115, 4294901760
    %2117 = vmatpush1.msra.mxu0 %v2116
    %v2118 = vand.u32 %v582, 4294901760
    %v2119 = vsub.f32 %v582, %v2118
    %v2120 = vand.u32 %v2119, 4294901760
    %v2121 = vsub.f32 %v2119, %v2120
    %v2122 = vand.u32 %v2121, 4294901760
    %2123 = vmatprep.subr.mxu0 %v2122
    %v2124 = vand.u32 %v581, 4294901760
    %v2125 = vsub.f32 %v581, %v2124
    %v2126 = vand.u32 %v2125, 4294901760
    %v2127 = vsub.f32 %v2125, %v2126
    %v2128 = vand.u32 %v2127, 4294901760
    %2129 = vmatpush1.msra.mxu0 %v2128
    %v2130 = vand.u32 %v584, 4294901760
    %v2131 = vsub.f32 %v584, %v2130
    %v2132 = vand.u32 %v2131, 4294901760
    %v2133 = vsub.f32 %v2131, %v2132
    %v2134 = vand.u32 %v2133, 4294901760
    %2135 = vmatprep.subr.mxu0 %v2134
    %v2136 = vand.u32 %v583, 4294901760
    %v2137 = vsub.f32 %v583, %v2136
    %v2138 = vand.u32 %v2137, 4294901760
    %v2139 = vsub.f32 %v2137, %v2138
    %v2140 = vand.u32 %v2139, 4294901760
    %2141 = vmatpush1.msra.mxu0 %v2140
    %v2142 = vand.u32 %v586, 4294901760
    %v2143 = vsub.f32 %v586, %v2142
    %v2144 = vand.u32 %v2143, 4294901760
    %v2145 = vsub.f32 %v2143, %v2144
    %v2146 = vand.u32 %v2145, 4294901760
    %2147 = vmatprep.subr.mxu0 %v2146
    %v2148 = vand.u32 %v585, 4294901760
    %v2149 = vsub.f32 %v585, %v2148
    %v2150 = vand.u32 %v2149, 4294901760
    %v2151 = vsub.f32 %v2149, %v2150
    %v2152 = vand.u32 %v2151, 4294901760
    %2153 = vmatpush1.msra.mxu0 %v2152
    %v2154 = vand.u32 %v588, 4294901760
    %v2155 = vsub.f32 %v588, %v2154
    %v2156 = vand.u32 %v2155, 4294901760
    %v2157 = vsub.f32 %v2155, %v2156
    %v2158 = vand.u32 %v2157, 4294901760
    %2159 = vmatprep.subr.mxu0 %v2158
    %v2160 = vand.u32 %v587, 4294901760
    %v2161 = vsub.f32 %v587, %v2160
    %v2162 = vand.u32 %v2161, 4294901760
    %v2163 = vsub.f32 %v2161, %v2162
    %v2164 = vand.u32 %v2163, 4294901760
    %2165 = vmatpush1.msra.mxu0 %v2164
    %v2166 = vand.u32 %v590, 4294901760
    %v2167 = vsub.f32 %v590, %v2166
    %v2168 = vand.u32 %v2167, 4294901760
    %v2169 = vsub.f32 %v2167, %v2168
    %v2170 = vand.u32 %v2169, 4294901760
    %2171 = vmatprep.subr.mxu0 %v2170
    %v2172 = vand.u32 %v589, 4294901760
    %v2173 = vsub.f32 %v589, %v2172
    %v2174 = vand.u32 %v2173, 4294901760
    %v2175 = vsub.f32 %v2173, %v2174
    %v2176 = vand.u32 %v2175, 4294901760
    %2177 = vmatpush1.msra.mxu0 %v2176
    %v2178 = vand.u32 %v592, 4294901760
    %v2179 = vsub.f32 %v592, %v2178
    %v2180 = vand.u32 %v2179, 4294901760
    %v2181 = vsub.f32 %v2179, %v2180
    %v2182 = vand.u32 %v2181, 4294901760
    %2183 = vmatprep.subr.mxu0 %v2182
    %v2184 = vand.u32 %v591, 4294901760
    %v2185 = vsub.f32 %v591, %v2184
    %v2186 = vand.u32 %v2185, 4294901760
    %v2187 = vsub.f32 %v2185, %v2186
    %v2188 = vand.u32 %v2187, 4294901760
    %2189 = vmatpush1.msra.mxu0 %v2188
    %2190 = vmatprep.subr.mxu0 0.0
    %2191 = vmatpush1.msra.mxu0 0.0
    %2192 = vmatprep.subr.mxu0 0.0
    %2193 = vmatpush1.msra.mxu0 0.0
    %2194 = vmatprep.subr.mxu0 0.0
    %2195 = vmatpush1.msra.mxu0 0.0
    %2196 = vmatprep.subr.mxu0 0.0
    %2197 = vmatpush1.msra.mxu0 0.0
    %2198 = vmatprep.subr.mxu0 0.0
    %2199 = vmatpush1.msra.mxu0 0.0
    %2200 = vmatprep.subr.mxu0 0.0
    %2201 = vmatpush1.msra.mxu0 0.0
    %2202 = vmatprep.subr.mxu0 0.0
    %2203 = vmatpush1.msra.mxu0 0.0
    %2204 = vmatprep.subr.mxu0 0.0
    %2205 = vmatpush1.msra.mxu0 0.0
    %2206 = vmatprep.subr.mxu0 0.0
    %2207 = vmatpush1.msra.mxu0 0.0
    %2208 = vmatprep.subr.mxu0 0.0
    %2209 = vmatpush1.msra.mxu0 0.0
    %2210 = vmatprep.subr.mxu0 0.0
    %2211 = vmatpush1.msra.mxu0 0.0
    %2212 = vmatprep.subr.mxu0 0.0
    %2213 = vmatpush1.msra.mxu0 0.0
    %2214 = vmatprep.subr.mxu0 0.0
    %2215 = vmatpush1.msra.mxu0 0.0
    %2216 = vmatprep.subr.mxu0 0.0
    %2217 = vmatpush1.msra.mxu0 0.0
    %2218 = vmatprep.subr.mxu0 0.0
    %2219 = vmatpush1.msra.mxu0 0.0
    %2220 = vmatprep.subr.mxu0 0.0
    %2221 = vmatpush1.msra.mxu0 0.0
    %2222 = vmatprep.subr.mxu0 0.0
    %2223 = vmatpush1.msra.mxu0 0.0
    %2224 = vmatprep.subr.mxu0 0.0
    %2225 = vmatpush1.msra.mxu0 0.0
    %2226 = vmatprep.subr.mxu0 0.0
    %2227 = vmatpush1.msra.mxu0 0.0
    %2228 = vmatprep.subr.mxu0 0.0
    %2229 = vmatpush1.msra.mxu0 0.0
    %2230 = vmatprep.subr.mxu0 0.0
    %2231 = vmatpush1.msra.mxu0 0.0
    %2232 = vmatprep.subr.mxu0 0.0
    %2233 = vmatpush1.msra.mxu0 0.0
    %2234 = vmatprep.subr.mxu0 0.0
    %2235 = vmatpush1.msra.mxu0 0.0
    %2236 = vmatprep.subr.mxu0 0.0
    %2237 = vmatpush1.msra.mxu0 0.0
    %2238 = vmatprep.mubr.f32.mxu0 0.0
    %v2239 = vand.u32 %v2000, 4294901760
    %2240 = vmatmul.mubr.f32.gmra.mrb[0].mxu0 %v2239
    %v2241 = vpop.f32.mrb[0].mxu0
    %v2242 = vadd.f32 %v2090, %v2241
    %v2243 = vpop.f32.mrb[0].mxu0
    %v2244 = vadd.f32 %v2092, %v2243
    %2245 = vdwg.mxu0
    %v2246 = vand.u32 %v578, 4294901760
    %v2247 = vsub.f32 %v578, %v2246
    %2248 = vmatprep.subr.mxu0 %v2247
    %v2249 = vand.u32 %v577, 4294901760
    %v2250 = vsub.f32 %v577, %v2249
    %2251 = vmatpush1.msra.mxu0 %v2250
    %v2252 = vand.u32 %v580, 4294901760
    %v2253 = vsub.f32 %v580, %v2252
    %2254 = vmatprep.subr.mxu0 %v2253
    %v2255 = vand.u32 %v579, 4294901760
    %v2256 = vsub.f32 %v579, %v2255
    %2257 = vmatpush1.msra.mxu0 %v2256
    %v2258 = vand.u32 %v582, 4294901760
    %v2259 = vsub.f32 %v582, %v2258
    %2260 = vmatprep.subr.mxu0 %v2259
    %v2261 = vand.u32 %v581, 4294901760
    %v2262 = vsub.f32 %v581, %v2261
    %2263 = vmatpush1.msra.mxu0 %v2262
    %v2264 = vand.u32 %v584, 4294901760
    %v2265 = vsub.f32 %v584, %v2264
    %2266 = vmatprep.subr.mxu0 %v2265
    %v2267 = vand.u32 %v583, 4294901760
    %v2268 = vsub.f32 %v583, %v2267
    %2269 = vmatpush1.msra.mxu0 %v2268
    %v2270 = vand.u32 %v586, 4294901760
    %v2271 = vsub.f32 %v586, %v2270
    %2272 = vmatprep.subr.mxu0 %v2271
    %v2273 = vand.u32 %v585, 4294901760
    %v2274 = vsub.f32 %v585, %v2273
    %2275 = vmatpush1.msra.mxu0 %v2274
    %v2276 = vand.u32 %v588, 4294901760
    %v2277 = vsub.f32 %v588, %v2276
    %2278 = vmatprep.subr.mxu0 %v2277
    %v2279 = vand.u32 %v587, 4294901760
    %v2280 = vsub.f32 %v587, %v2279
    %2281 = vmatpush1.msra.mxu0 %v2280
    %v2282 = vand.u32 %v590, 4294901760
    %v2283 = vsub.f32 %v590, %v2282
    %2284 = vmatprep.subr.mxu0 %v2283
    %v2285 = vand.u32 %v589, 4294901760
    %v2286 = vsub.f32 %v589, %v2285
    %2287 = vmatpush1.msra.mxu0 %v2286
    %v2288 = vand.u32 %v592, 4294901760
    %v2289 = vsub.f32 %v592, %v2288
    %2290 = vmatprep.subr.mxu0 %v2289
    %v2291 = vand.u32 %v591, 4294901760
    %v2292 = vsub.f32 %v591, %v2291
    %2293 = vmatpush1.msra.mxu0 %v2292
    %2294 = vmatprep.subr.mxu0 0.0
    %2295 = vmatpush1.msra.mxu0 0.0
    %2296 = vmatprep.subr.mxu0 0.0
    %2297 = vmatpush1.msra.mxu0 0.0
    %2298 = vmatprep.subr.mxu0 0.0
    %2299 = vmatpush1.msra.mxu0 0.0
    %2300 = vmatprep.subr.mxu0 0.0
    %2301 = vmatpush1.msra.mxu0 0.0
    %2302 = vmatprep.subr.mxu0 0.0
    %2303 = vmatpush1.msra.mxu0 0.0
    %2304 = vmatprep.subr.mxu0 0.0
    %2305 = vmatpush1.msra.mxu0 0.0
    %2306 = vmatprep.subr.mxu0 0.0
    %2307 = vmatpush1.msra.mxu0 0.0
    %2308 = vmatprep.subr.mxu0 0.0
    %2309 = vmatpush1.msra.mxu0 0.0
    %2310 = vmatprep.subr.mxu0 0.0
    %2311 = vmatpush1.msra.mxu0 0.0
    %2312 = vmatprep.subr.mxu0 0.0
    %2313 = vmatpush1.msra.mxu0 0.0
    %2314 = vmatprep.subr.mxu0 0.0
    %2315 = vmatpush1.msra.mxu0 0.0
    %2316 = vmatprep.subr.mxu0 0.0
    %2317 = vmatpush1.msra.mxu0 0.0
    %2318 = vmatprep.subr.mxu0 0.0
    %2319 = vmatpush1.msra.mxu0 0.0
    %2320 = vmatprep.subr.mxu0 0.0
    %2321 = vmatpush1.msra.mxu0 0.0
    %2322 = vmatprep.subr.mxu0 0.0
    %2323 = vmatpush1.msra.mxu0 0.0
    %2324 = vmatprep.subr.mxu0 0.0
    %2325 = vmatpush1.msra.mxu0 0.0
    %2326 = vmatprep.subr.mxu0 0.0
    %2327 = vmatpush1.msra.mxu0 0.0
    %2328 = vmatprep.subr.mxu0 0.0
    %2329 = vmatpush1.msra.mxu0 0.0
    %2330 = vmatprep.subr.mxu0 0.0
    %2331 = vmatpush1.msra.mxu0 0.0
    %2332 = vmatprep.subr.mxu0 0.0
    %2333 = vmatpush1.msra.mxu0 0.0
    %2334 = vmatprep.subr.mxu0 0.0
    %2335 = vmatpush1.msra.mxu0 0.0
    %2336 = vmatprep.subr.mxu0 0.0
    %2337 = vmatpush1.msra.mxu0 0.0
    %2338 = vmatprep.subr.mxu0 0.0
    %2339 = vmatpush1.msra.mxu0 0.0
    %2340 = vmatprep.subr.mxu0 0.0
    %2341 = vmatpush1.msra.mxu0 0.0
    %2342 = vmatprep.mubr.f32.mxu0 0.0
    %v2343 = vand.u32 %v2000, 4294901760
    %v2344 = vsub.f32 %v2000, %v2343
    %2345 = vmatmul.mubr.f32.gmra.mrb[0].mxu0 %v2344
    %v2346 = vpop.f32.mrb[0].mxu0
    %v2347 = vadd.f32 %v2242, %v2346
    %v2348 = vpop.f32.mrb[0].mxu0
    %v2349 = vadd.f32 %v2244, %v2348
    %2350 = vdwg.mxu0
    %v2351 = vand.u32 %v578, 4294901760
    %2352 = vmatprep.subr.mxu0 %v2351
    %v2353 = vand.u32 %v577, 4294901760
    %2354 = vmatpush1.msra.mxu0 %v2353
    %v2355 = vand.u32 %v580, 4294901760
    %2356 = vmatprep.subr.mxu0 %v2355
    %v2357 = vand.u32 %v579, 4294901760
    %2358 = vmatpush1.msra.mxu0 %v2357
    %v2359 = vand.u32 %v582, 4294901760
    %2360 = vmatprep.subr.mxu0 %v2359
    %v2361 = vand.u32 %v581, 4294901760
    %2362 = vmatpush1.msra.mxu0 %v2361
    %v2363 = vand.u32 %v584, 4294901760
    %2364 = vmatprep.subr.mxu0 %v2363
    %v2365 = vand.u32 %v583, 4294901760
    %2366 = vmatpush1.msra.mxu0 %v2365
    %v2367 = vand.u32 %v586, 4294901760
    %2368 = vmatprep.subr.mxu0 %v2367
    %v2369 = vand.u32 %v585, 4294901760
    %2370 = vmatpush1.msra.mxu0 %v2369
    %v2371 = vand.u32 %v588, 4294901760
    %2372 = vmatprep.subr.mxu0 %v2371
    %v2373 = vand.u32 %v587, 4294901760
    %2374 = vmatpush1.msra.mxu0 %v2373
    %v2375 = vand.u32 %v590, 4294901760
    %2376 = vmatprep.subr.mxu0 %v2375
    %v2377 = vand.u32 %v589, 4294901760
    %2378 = vmatpush1.msra.mxu0 %v2377
    %v2379 = vand.u32 %v592, 4294901760
    %2380 = vmatprep.subr.mxu0 %v2379
    %v2381 = vand.u32 %v591, 4294901760
    %2382 = vmatpush1.msra.mxu0 %v2381
    %2383 = vmatprep.subr.mxu0 0.0
    %2384 = vmatpush1.msra.mxu0 0.0
    %2385 = vmatprep.subr.mxu0 0.0
    %2386 = vmatpush1.msra.mxu0 0.0
    %2387 = vmatprep.subr.mxu0 0.0
    %2388 = vmatpush1.msra.mxu0 0.0
    %2389 = vmatprep.subr.mxu0 0.0
    %2390 = vmatpush1.msra.mxu0 0.0
    %2391 = vmatprep.subr.mxu0 0.0
    %2392 = vmatpush1.msra.mxu0 0.0
    %2393 = vmatprep.subr.mxu0 0.0
    %2394 = vmatpush1.msra.mxu0 0.0
    %2395 = vmatprep.subr.mxu0 0.0
    %2396 = vmatpush1.msra.mxu0 0.0
    %2397 = vmatprep.subr.mxu0 0.0
    %2398 = vmatpush1.msra.mxu0 0.0
    %2399 = vmatprep.subr.mxu0 0.0
    %2400 = vmatpush1.msra.mxu0 0.0
    %2401 = vmatprep.subr.mxu0 0.0
    %2402 = vmatpush1.msra.mxu0 0.0
    %2403 = vmatprep.subr.mxu0 0.0
    %2404 = vmatpush1.msra.mxu0 0.0
    %2405 = vmatprep.subr.mxu0 0.0
    %2406 = vmatpush1.msra.mxu0 0.0
    %2407 = vmatprep.subr.mxu0 0.0
    %2408 = vmatpush1.msra.mxu0 0.0
    %2409 = vmatprep.subr.mxu0 0.0
    %2410 = vmatpush1.msra.mxu0 0.0
    %2411 = vmatprep.subr.mxu0 0.0
    %2412 = vmatpush1.msra.mxu0 0.0
    %2413 = vmatprep.subr.mxu0 0.0
    %2414 = vmatpush1.msra.mxu0 0.0
    %2415 = vmatprep.subr.mxu0 0.0
    %2416 = vmatpush1.msra.mxu0 0.0
    %2417 = vmatprep.subr.mxu0 0.0
    %2418 = vmatpush1.msra.mxu0 0.0
    %2419 = vmatprep.subr.mxu0 0.0
    %2420 = vmatpush1.msra.mxu0 0.0
    %2421 = vmatprep.subr.mxu0 0.0
    %2422 = vmatpush1.msra.mxu0 0.0
    %2423 = vmatprep.subr.mxu0 0.0
    %2424 = vmatpush1.msra.mxu0 0.0
    %2425 = vmatprep.subr.mxu0 0.0
    %2426 = vmatpush1.msra.mxu0 0.0
    %2427 = vmatprep.subr.mxu0 0.0
    %2428 = vmatpush1.msra.mxu0 0.0
    %2429 = vmatprep.subr.mxu0 0.0
    %2430 = vmatpush1.msra.mxu0 0.0
    %2431 = vmatprep.mubr.f32.mxu0 0.0
    %v2432 = vand.u32 %v2000, 4294901760
    %v2433 = vsub.f32 %v2000, %v2432
    %v2434 = vand.u32 %v2433, 4294901760
    %2435 = vmatmul.mubr.f32.gmra.mrb[0].mxu0 %v2434
    %v2436 = vpop.f32.mrb[0].mxu0
    %v2437 = vadd.f32 %v2347, %v2436
    %v2438 = vpop.f32.mrb[0].mxu0
    %v2439 = vadd.f32 %v2349, %v2438
    %2440 = vdwg.mxu0
    %v2441 = vand.u32 %v578, 4294901760
    %v2442 = vsub.f32 %v578, %v2441
    %v2443 = vand.u32 %v2442, 4294901760
    %2444 = vmatprep.subr.mxu0 %v2443
    %v2445 = vand.u32 %v577, 4294901760
    %v2446 = vsub.f32 %v577, %v2445
    %v2447 = vand.u32 %v2446, 4294901760
    %2448 = vmatpush1.msra.mxu0 %v2447
    %v2449 = vand.u32 %v580, 4294901760
    %v2450 = vsub.f32 %v580, %v2449
    %v2451 = vand.u32 %v2450, 4294901760
    %2452 = vmatprep.subr.mxu0 %v2451
    %v2453 = vand.u32 %v579, 4294901760
    %v2454 = vsub.f32 %v579, %v2453
    %v2455 = vand.u32 %v2454, 4294901760
    %2456 = vmatpush1.msra.mxu0 %v2455
    %v2457 = vand.u32 %v582, 4294901760
    %v2458 = vsub.f32 %v582, %v2457
    %v2459 = vand.u32 %v2458, 4294901760
    %2460 = vmatprep.subr.mxu0 %v2459
    %v2461 = vand.u32 %v581, 4294901760
    %v2462 = vsub.f32 %v581, %v2461
    %v2463 = vand.u32 %v2462, 4294901760
    %2464 = vmatpush1.msra.mxu0 %v2463
    %v2465 = vand.u32 %v584, 4294901760
    %v2466 = vsub.f32 %v584, %v2465
    %v2467 = vand.u32 %v2466, 4294901760
    %2468 = vmatprep.subr.mxu0 %v2467
    %v2469 = vand.u32 %v583, 4294901760
    %v2470 = vsub.f32 %v583, %v2469
    %v2471 = vand.u32 %v2470, 4294901760
    %2472 = vmatpush1.msra.mxu0 %v2471
    %v2473 = vand.u32 %v586, 4294901760
    %v2474 = vsub.f32 %v586, %v2473
    %v2475 = vand.u32 %v2474, 4294901760
    %2476 = vmatprep.subr.mxu0 %v2475
    %v2477 = vand.u32 %v585, 4294901760
    %v2478 = vsub.f32 %v585, %v2477
    %v2479 = vand.u32 %v2478, 4294901760
    %2480 = vmatpush1.msra.mxu0 %v2479
    %v2481 = vand.u32 %v588, 4294901760
    %v2482 = vsub.f32 %v588, %v2481
    %v2483 = vand.u32 %v2482, 4294901760
    %2484 = vmatprep.subr.mxu0 %v2483
    %v2485 = vand.u32 %v587, 4294901760
    %v2486 = vsub.f32 %v587, %v2485
    %v2487 = vand.u32 %v2486, 4294901760
    %2488 = vmatpush1.msra.mxu0 %v2487
    %v2489 = vand.u32 %v590, 4294901760
    %v2490 = vsub.f32 %v590, %v2489
    %v2491 = vand.u32 %v2490, 4294901760
    %2492 = vmatprep.subr.mxu0 %v2491
    %v2493 = vand.u32 %v589, 4294901760
    %v2494 = vsub.f32 %v589, %v2493
    %v2495 = vand.u32 %v2494, 4294901760
    %2496 = vmatpush1.msra.mxu0 %v2495
    %v2497 = vand.u32 %v592, 4294901760
    %v2498 = vsub.f32 %v592, %v2497
    %v2499 = vand.u32 %v2498, 4294901760
    %2500 = vmatprep.subr.mxu0 %v2499
    %v2501 = vand.u32 %v591, 4294901760
    %v2502 = vsub.f32 %v591, %v2501
    %v2503 = vand.u32 %v2502, 4294901760
    %2504 = vmatpush1.msra.mxu0 %v2503
    %2505 = vmatprep.subr.mxu0 0.0
    %2506 = vmatpush1.msra.mxu0 0.0
    %2507 = vmatprep.subr.mxu0 0.0
    %2508 = vmatpush1.msra.mxu0 0.0
    %2509 = vmatprep.subr.mxu0 0.0
    %2510 = vmatpush1.msra.mxu0 0.0
    %2511 = vmatprep.subr.mxu0 0.0
    %2512 = vmatpush1.msra.mxu0 0.0
    %2513 = vmatprep.subr.mxu0 0.0
    %2514 = vmatpush1.msra.mxu0 0.0
    %2515 = vmatprep.subr.mxu0 0.0
    %2516 = vmatpush1.msra.mxu0 0.0
    %2517 = vmatprep.subr.mxu0 0.0
    %2518 = vmatpush1.msra.mxu0 0.0
    %2519 = vmatprep.subr.mxu0 0.0
    %2520 = vmatpush1.msra.mxu0 0.0
    %2521 = vmatprep.subr.mxu0 0.0
    %2522 = vmatpush1.msra.mxu0 0.0
    %2523 = vmatprep.subr.mxu0 0.0
    %2524 = vmatpush1.msra.mxu0 0.0
    %2525 = vmatprep.subr.mxu0 0.0
    %2526 = vmatpush1.msra.mxu0 0.0
    %2527 = vmatprep.subr.mxu0 0.0
    %2528 = vmatpush1.msra.mxu0 0.0
    %2529 = vmatprep.subr.mxu0 0.0
    %2530 = vmatpush1.msra.mxu0 0.0
    %2531 = vmatprep.subr.mxu0 0.0
    %2532 = vmatpush1.msra.mxu0 0.0
    %2533 = vmatprep.subr.mxu0 0.0
    %2534 = vmatpush1.msra.mxu0 0.0
    %2535 = vmatprep.subr.mxu0 0.0
    %2536 = vmatpush1.msra.mxu0 0.0
    %2537 = vmatprep.subr.mxu0 0.0
    %2538 = vmatpush1.msra.mxu0 0.0
    %2539 = vmatprep.subr.mxu0 0.0
    %2540 = vmatpush1.msra.mxu0 0.0
    %2541 = vmatprep.subr.mxu0 0.0
    %2542 = vmatpush1.msra.mxu0 0.0
    %2543 = vmatprep.subr.mxu0 0.0
    %2544 = vmatpush1.msra.mxu0 0.0
    %2545 = vmatprep.subr.mxu0 0.0
    %2546 = vmatpush1.msra.mxu0 0.0
    %2547 = vmatprep.subr.mxu0 0.0
    %2548 = vmatpush1.msra.mxu0 0.0
    %2549 = vmatprep.subr.mxu0 0.0
    %2550 = vmatpush1.msra.mxu0 0.0
    %2551 = vmatprep.subr.mxu0 0.0
    %2552 = vmatpush1.msra.mxu0 0.0
    %2553 = vmatprep.mubr.f32.mxu0 0.0
    %v2554 = vand.u32 %v2000, 4294901760
    %2555 = vmatmul.mubr.f32.gmra.mrb[0].mxu0 %v2554
    %v2556 = vpop.f32.mrb[0].mxu0
    %v2557 = vadd.f32 %v2437, %v2556
    %v2558 = vpop.f32.mrb[0].mxu0
    %v2559 = vadd.f32 %v2439, %v2558
    %2560 = vdwg.mxu0
    %v2561 = vand.u32 %v578, 4294901760
    %2562 = vmatprep.subr.mxu0 %v2561
    %v2563 = vand.u32 %v577, 4294901760
    %2564 = vmatpush1.msra.mxu0 %v2563
    %v2565 = vand.u32 %v580, 4294901760
    %2566 = vmatprep.subr.mxu0 %v2565
    %v2567 = vand.u32 %v579, 4294901760
    %2568 = vmatpush1.msra.mxu0 %v2567
    %v2569 = vand.u32 %v582, 4294901760
    %2570 = vmatprep.subr.mxu0 %v2569
    %v2571 = vand.u32 %v581, 4294901760
    %2572 = vmatpush1.msra.mxu0 %v2571
    %v2573 = vand.u32 %v584, 4294901760
    %2574 = vmatprep.subr.mxu0 %v2573
    %v2575 = vand.u32 %v583, 4294901760
    %2576 = vmatpush1.msra.mxu0 %v2575
    %v2577 = vand.u32 %v586, 4294901760
    %2578 = vmatprep.subr.mxu0 %v2577
    %v2579 = vand.u32 %v585, 4294901760
    %2580 = vmatpush1.msra.mxu0 %v2579
    %v2581 = vand.u32 %v588, 4294901760
    %2582 = vmatprep.subr.mxu0 %v2581
    %v2583 = vand.u32 %v587, 4294901760
    %2584 = vmatpush1.msra.mxu0 %v2583
    %v2585 = vand.u32 %v590, 4294901760
    %2586 = vmatprep.subr.mxu0 %v2585
    %v2587 = vand.u32 %v589, 4294901760
    %2588 = vmatpush1.msra.mxu0 %v2587
    %v2589 = vand.u32 %v592, 4294901760
    %2590 = vmatprep.subr.mxu0 %v2589
    %v2591 = vand.u32 %v591, 4294901760
    %2592 = vmatpush1.msra.mxu0 %v2591
    %2593 = vmatprep.subr.mxu0 0.0
    %2594 = vmatpush1.msra.mxu0 0.0
    %2595 = vmatprep.subr.mxu0 0.0
    %2596 = vmatpush1.msra.mxu0 0.0
    %2597 = vmatprep.subr.mxu0 0.0
    %2598 = vmatpush1.msra.mxu0 0.0
    %2599 = vmatprep.subr.mxu0 0.0
    %2600 = vmatpush1.msra.mxu0 0.0
    %2601 = vmatprep.subr.mxu0 0.0
    %2602 = vmatpush1.msra.mxu0 0.0
    %2603 = vmatprep.subr.mxu0 0.0
    %2604 = vmatpush1.msra.mxu0 0.0
    %2605 = vmatprep.subr.mxu0 0.0
    %2606 = vmatpush1.msra.mxu0 0.0
    %2607 = vmatprep.subr.mxu0 0.0
    %2608 = vmatpush1.msra.mxu0 0.0
    %2609 = vmatprep.subr.mxu0 0.0
    %2610 = vmatpush1.msra.mxu0 0.0
    %2611 = vmatprep.subr.mxu0 0.0
    %2612 = vmatpush1.msra.mxu0 0.0
    %2613 = vmatprep.subr.mxu0 0.0
    %2614 = vmatpush1.msra.mxu0 0.0
    %2615 = vmatprep.subr.mxu0 0.0
    %2616 = vmatpush1.msra.mxu0 0.0
    %2617 = vmatprep.subr.mxu0 0.0
    %2618 = vmatpush1.msra.mxu0 0.0
    %2619 = vmatprep.subr.mxu0 0.0
    %2620 = vmatpush1.msra.mxu0 0.0
    %2621 = vmatprep.subr.mxu0 0.0
    %2622 = vmatpush1.msra.mxu0 0.0
    %2623 = vmatprep.subr.mxu0 0.0
    %2624 = vmatpush1.msra.mxu0 0.0
    %2625 = vmatprep.subr.mxu0 0.0
    %2626 = vmatpush1.msra.mxu0 0.0
    %2627 = vmatprep.subr.mxu0 0.0
    %2628 = vmatpush1.msra.mxu0 0.0
    %2629 = vmatprep.subr.mxu0 0.0
    %2630 = vmatpush1.msra.mxu0 0.0
    %2631 = vmatprep.subr.mxu0 0.0
    %2632 = vmatpush1.msra.mxu0 0.0
    %2633 = vmatprep.subr.mxu0 0.0
    %2634 = vmatpush1.msra.mxu0 0.0
    %2635 = vmatprep.subr.mxu0 0.0
    %2636 = vmatpush1.msra.mxu0 0.0
    %2637 = vmatprep.subr.mxu0 0.0
    %2638 = vmatpush1.msra.mxu0 0.0
    %2639 = vmatprep.subr.mxu0 0.0
    %2640 = vmatpush1.msra.mxu0 0.0
    %2641 = vmatprep.mubr.f32.mxu0 0.0
    %v2642 = vand.u32 %v2000, 4294901760
    %2643 = vmatmul.mubr.f32.gmra.mrb[0].mxu0 %v2642
    %v2644 = vpop.f32.mrb[0].mxu0
    %v2645 = vadd.f32 %v2557, %v2644
    %v2646 = vpop.f32.mrb[0].mxu0
    %v2647 = vadd.f32 %v2559, %v2646
    %2648 = vdwg.mxu0
    %v2649 = vld [vmem:[#allocation2 + $0x4] sm:$0x3]
    %v2650 = vadd.f32 %v2645, %v2649
    %v2651 = vtanh.pop %v2650
    %v2652 = vmul.f32 %v2651, 0.5
    %v2653 = vadd.f32 %v2652, 0.5
    %v2654 = vmul.f32 %v2653, %v1947
    %2656 = vrot.lane.b32.xlu0 %v2651, 32
    %v2657 = vpop.permute.xlu0 %2656
    %v2659 = vmul.f32 %v2653, %v2657
    %2661 = vrot.lane.b32.xlu0 %v2659, 32
    %v2662 = vpop.permute.xlu0 %2661
    %v2664 = vadd.f32 %v2654, %v2662
    %v2665 = vtanh.pop %v2664
    %2667 = vrot.lane.b32.xlu0 %v2665, 32
    %v2668 = vpop.permute.xlu0 %2667
    %v2670 = vmul.f32 %v2653, %v2668
    %v2671 = vadd.f32 %v2647, %v1958
    %v2672 = vtanh.pop %v2671
    %v2673 = vmul.f32 %v2672, 0.5
    %v2674 = vadd.f32 %v2673, 0.5
    %v2675 = vmul.f32 %v2674, %v1978
    %2677 = vrot.lane.b32.xlu0 %v2672, 32
    %v2678 = vpop.permute.xlu0 %2677
    %v2680 = vmul.f32 %v2674, %v2678
    %2682 = vrot.lane.b32.xlu0 %v2680, 32
    %v2683 = vpop.permute.xlu0 %2682
    %v2685 = vadd.f32 %v2675, %v2683
    %v2686 = vtanh.pop %v2685
    %2688 = vrot.lane.b32.xlu0 %v2686, 32
    %v2689 = vpop.permute.xlu0 %2688
    %v2691 = vmul.f32 %v2674, %v2689
    %2693 = vrot.lane.b32.xlu0 %v2691, 64
    %v2694 = vpop.permute.xlu0 %2693
    %2696 = vst.msk [vmem:[#allocation3 + $0x2] sm:$0x3] %vm1989, %v2694
    %2698 = vrot.lane.b32.xlu0 %v2670, 64
    %v2699 = vpop.permute.xlu0 %2698
    %2701 = vrot.lane.b32.xlu0 %v2691, 96
    %v2702 = vpop.permute.xlu0 %2701
    %v2704 = vsel %vm604, %v2699, %v2702
    %v2706 = vsel %vm606, %v2704, 0
    %v2708 = vand.u32 %v578, 4294901760
    %2709 = vmatprep.subr.mxu0 %v2708
    %v2710 = vand.u32 %v577, 4294901760
    %2711 = vmatpush1.msra.mxu0 %v2710
    %v2712 = vand.u32 %v580, 4294901760
    %2713 = vmatprep.subr.mxu0 %v2712
    %v2714 = vand.u32 %v579, 4294901760
    %2715 = vmatpush1.msra.mxu0 %v2714
    %v2716 = vand.u32 %v582, 4294901760
    %2717 = vmatprep.subr.mxu0 %v2716
    %v2718 = vand.u32 %v581, 4294901760
    %2719 = vmatpush1.msra.mxu0 %v2718
    %v2720 = vand.u32 %v584, 4294901760
    %2721 = vmatprep.subr.mxu0 %v2720
    %v2722 = vand.u32 %v583, 4294901760
    %2723 = vmatpush1.msra.mxu0 %v2722
    %v2724 = vand.u32 %v586, 4294901760
    %2725 = vmatprep.subr.mxu0 %v2724
    %v2726 = vand.u32 %v585, 4294901760
    %2727 = vmatpush1.msra.mxu0 %v2726
    %v2728 = vand.u32 %v588, 4294901760
    %2729 = vmatprep.subr.mxu0 %v2728
    %v2730 = vand.u32 %v587, 4294901760
    %2731 = vmatpush1.msra.mxu0 %v2730
    %v2732 = vand.u32 %v590, 4294901760
    %2733 = vmatprep.subr.mxu0 %v2732
    %v2734 = vand.u32 %v589, 4294901760
    %2735 = vmatpush1.msra.mxu0 %v2734
    %v2736 = vand.u32 %v592, 4294901760
    %2737 = vmatprep.subr.mxu0 %v2736
    %v2738 = vand.u32 %v591, 4294901760
    %2739 = vmatpush1.msra.mxu0 %v2738
    %2740 = vmatprep.subr.mxu0 0.0
    %2741 = vmatpush1.msra.mxu0 0.0
    %2742 = vmatprep.subr.mxu0 0.0
    %2743 = vmatpush1.msra.mxu0 0.0
    %2744 = vmatprep.subr.mxu0 0.0
    %2745 = vmatpush1.msra.mxu0 0.0
    %2746 = vmatprep.subr.mxu0 0.0
    %2747 = vmatpush1.msra.mxu0 0.0
    %2748 = vmatprep.subr.mxu0 0.0
    %2749 = vmatpush1.msra.mxu0 0.0
    %2750 = vmatprep.subr.mxu0 0.0
    %2751 = vmatpush1.msra.mxu0 0.0
    %2752 = vmatprep.subr.mxu0 0.0
    %2753 = vmatpush1.msra.mxu0 0.0
    %2754 = vmatprep.subr.mxu0 0.0
    %2755 = vmatpush1.msra.mxu0 0.0
    %2756 = vmatprep.subr.mxu0 0.0
    %2757 = vmatpush1.msra.mxu0 0.0
    %2758 = vmatprep.subr.mxu0 0.0
    %2759 = vmatpush1.msra.mxu0 0.0
    %2760 = vmatprep.subr.mxu0 0.0
    %2761 = vmatpush1.msra.mxu0 0.0
    %2762 = vmatprep.subr.mxu0 0.0
    %2763 = vmatpush1.msra.mxu0 0.0
    %2764 = vmatprep.subr.mxu0 0.0
    %2765 = vmatpush1.msra.mxu0 0.0
    %2766 = vmatprep.subr.mxu0 0.0
    %2767 = vmatpush1.msra.mxu0 0.0
    %2768 = vmatprep.subr.mxu0 0.0
    %2769 = vmatpush1.msra.mxu0 0.0
    %2770 = vmatprep.subr.mxu0 0.0
    %2771 = vmatpush1.msra.mxu0 0.0
    %2772 = vmatprep.subr.mxu0 0.0
    %2773 = vmatpush1.msra.mxu0 0.0
    %2774 = vmatprep.subr.mxu0 0.0
    %2775 = vmatpush1.msra.mxu0 0.0
    %2776 = vmatprep.subr.mxu0 0.0
    %2777 = vmatpush1.msra.mxu0 0.0
    %2778 = vmatprep.subr.mxu0 0.0
    %2779 = vmatpush1.msra.mxu0 0.0
    %2780 = vmatprep.subr.mxu0 0.0
    %2781 = vmatpush1.msra.mxu0 0.0
    %2782 = vmatprep.subr.mxu0 0.0
    %2783 = vmatpush1.msra.mxu0 0.0
    %2784 = vmatprep.subr.mxu0 0.0
    %2785 = vmatpush1.msra.mxu0 0.0
    %2786 = vmatprep.subr.mxu0 0.0
    %2787 = vmatpush1.msra.mxu0 0.0
    %2788 = vmatprep.mubr.f32.mxu0 0.0
    %v2789 = vand.u32 %v2706, 4294901760
    %v2790 = vsub.f32 %v2706, %v2789
    %v2791 = vand.u32 %v2790, 4294901760
    %v2792 = vsub.f32 %v2790, %v2791
    %v2793 = vand.u32 %v2792, 4294901760
    %2794 = vmatmul.mubr.f32.gmra.mrb[0].mxu0 %v2793
    %v2795 = vpop.f32.mrb[0].mxu0
    %v2796 = vadd.f32 0.0, %v2795
    %v2797 = vpop.f32.mrb[0].mxu0
    %v2798 = vadd.f32 0.0, %v2797
    %2799 = vdwg.mxu0
    %v2800 = vand.u32 %v578, 4294901760
    %v2801 = vsub.f32 %v578, %v2800
    %v2802 = vand.u32 %v2801, 4294901760
    %v2803 = vsub.f32 %v2801, %v2802
    %v2804 = vand.u32 %v2803, 4294901760
    %2805 = vmatprep.subr.mxu0 %v2804
    %v2806 = vand.u32 %v577, 4294901760
    %v2807 = vsub.f32 %v577, %v2806
    %v2808 = vand.u32 %v2807, 4294901760
    %v2809 = vsub.f32 %v2807, %v2808
    %v2810 = vand.u32 %v2809, 4294901760
    %2811 = vmatpush1.msra.mxu0 %v2810
    %v2812 = vand.u32 %v580, 4294901760
    %v2813 = vsub.f32 %v580, %v2812
    %v2814 = vand.u32 %v2813, 4294901760
    %v2815 = vsub.f32 %v2813, %v2814
    %v2816 = vand.u32 %v2815, 4294901760
    %2817 = vmatprep.subr.mxu0 %v2816
    %v2818 = vand.u32 %v579, 4294901760
    %v2819 = vsub.f32 %v579, %v2818
    %v2820 = vand.u32 %v2819, 4294901760
    %v2821 = vsub.f32 %v2819, %v2820
    %v2822 = vand.u32 %v2821, 4294901760
    %2823 = vmatpush1.msra.mxu0 %v2822
    %v2824 = vand.u32 %v582, 4294901760
    %v2825 = vsub.f32 %v582, %v2824
    %v2826 = vand.u32 %v2825, 4294901760
    %v2827 = vsub.f32 %v2825, %v2826
    %v2828 = vand.u32 %v2827, 4294901760
    %2829 = vmatprep.subr.mxu0 %v2828
    %v2830 = vand.u32 %v581, 4294901760
    %v2831 = vsub.f32 %v581, %v2830
    %v2832 = vand.u32 %v2831, 4294901760
    %v2833 = vsub.f32 %v2831, %v2832
    %v2834 = vand.u32 %v2833, 4294901760
    %2835 = vmatpush1.msra.mxu0 %v2834
    %v2836 = vand.u32 %v584, 4294901760
    %v2837 = vsub.f32 %v584, %v2836
    %v2838 = vand.u32 %v2837, 4294901760
    %v2839 = vsub.f32 %v2837, %v2838
    %v2840 = vand.u32 %v2839, 4294901760
    %2841 = vmatprep.subr.mxu0 %v2840
    %v2842 = vand.u32 %v583, 4294901760
    %v2843 = vsub.f32 %v583, %v2842
    %v2844 = vand.u32 %v2843, 4294901760
    %v2845 = vsub.f32 %v2843, %v2844
    %v2846 = vand.u32 %v2845, 4294901760
    %2847 = vmatpush1.msra.mxu0 %v2846
    %v2848 = vand.u32 %v586, 4294901760
    %v2849 = vsub.f32 %v586, %v2848
    %v2850 = vand.u32 %v2849, 4294901760
    %v2851 = vsub.f32 %v2849, %v2850
    %v2852 = vand.u32 %v2851, 4294901760
    %2853 = vmatprep.subr.mxu0 %v2852
    %v2854 = vand.u32 %v585, 4294901760
    %v2855 = vsub.f32 %v585, %v2854
    %v2856 = vand.u32 %v2855, 4294901760
    %v2857 = vsub.f32 %v2855, %v2856
    %v2858 = vand.u32 %v2857, 4294901760
    %2859 = vmatpush1.msra.mxu0 %v2858
    %v2860 = vand.u32 %v588, 4294901760
    %v2861 = vsub.f32 %v588, %v2860
    %v2862 = vand.u32 %v2861, 4294901760
    %v2863 = vsub.f32 %v2861, %v2862
    %v2864 = vand.u32 %v2863, 4294901760
    %2865 = vmatprep.subr.mxu0 %v2864
    %v2866 = vand.u32 %v587, 4294901760
    %v2867 = vsub.f32 %v587, %v2866
    %v2868 = vand.u32 %v2867, 4294901760
    %v2869 = vsub.f32 %v2867, %v2868
    %v2870 = vand.u32 %v2869, 4294901760
    %2871 = vmatpush1.msra.mxu0 %v2870
    %v2872 = vand.u32 %v590, 4294901760
    %v2873 = vsub.f32 %v590, %v2872
    %v2874 = vand.u32 %v2873, 4294901760
    %v2875 = vsub.f32 %v2873, %v2874
    %v2876 = vand.u32 %v2875, 4294901760
    %2877 = vmatprep.subr.mxu0 %v2876
    %v2878 = vand.u32 %v589, 4294901760
    %v2879 = vsub.f32 %v589, %v2878
    %v2880 = vand.u32 %v2879, 4294901760
    %v2881 = vsub.f32 %v2879, %v2880
    %v2882 = vand.u32 %v2881, 4294901760
    %2883 = vmatpush1.msra.mxu0 %v2882
    %v2884 = vand.u32 %v592, 4294901760
    %v2885 = vsub.f32 %v592, %v2884
    %v2886 = vand.u32 %v2885, 4294901760
    %v2887 = vsub.f32 %v2885, %v2886
    %v2888 = vand.u32 %v2887, 4294901760
    %2889 = vmatprep.subr.mxu0 %v2888
    %v2890 = vand.u32 %v591, 4294901760
    %v2891 = vsub.f32 %v591, %v2890
    %v2892 = vand.u32 %v2891, 4294901760
    %v2893 = vsub.f32 %v2891, %v2892
    %v2894 = vand.u32 %v2893, 4294901760
    %2895 = vmatpush1.msra.mxu0 %v2894
    %2896 = vmatprep.subr.mxu0 0.0
    %2897 = vmatpush1.msra.mxu0 0.0
    %2898 = vmatprep.subr.mxu0 0.0
    %2899 = vmatpush1.msra.mxu0 0.0
    %2900 = vmatprep.subr.mxu0 0.0
    %2901 = vmatpush1.msra.mxu0 0.0
    %2902 = vmatprep.subr.mxu0 0.0
    %2903 = vmatpush1.msra.mxu0 0.0
    %2904 = vmatprep.subr.mxu0 0.0
    %2905 = vmatpush1.msra.mxu0 0.0
    %2906 = vmatprep.subr.mxu0 0.0
    %2907 = vmatpush1.msra.mxu0 0.0
    %2908 = vmatprep.subr.mxu0 0.0
    %2909 = vmatpush1.msra.mxu0 0.0
    %2910 = vmatprep.subr.mxu0 0.0
    %2911 = vmatpush1.msra.mxu0 0.0
    %2912 = vmatprep.subr.mxu0 0.0
    %2913 = vmatpush1.msra.mxu0 0.0
    %2914 = vmatprep.subr.mxu0 0.0
    %2915 = vmatpush1.msra.mxu0 0.0
    %2916 = vmatprep.subr.mxu0 0.0
    %2917 = vmatpush1.msra.mxu0 0.0
    %2918 = vmatprep.subr.mxu0 0.0
    %2919 = vmatpush1.msra.mxu0 0.0
    %2920 = vmatprep.subr.mxu0 0.0
    %2921 = vmatpush1.msra.mxu0 0.0
    %2922 = vmatprep.subr.mxu0 0.0
    %2923 = vmatpush1.msra.mxu0 0.0
    %2924 = vmatprep.subr.mxu0 0.0
    %2925 = vmatpush1.msra.mxu0 0.0
    %2926 = vmatprep.subr.mxu0 0.0
    %2927 = vmatpush1.msra.mxu0 0.0
    %2928 = vmatprep.subr.mxu0 0.0
    %2929 = vmatpush1.msra.mxu0 0.0
    %2930 = vmatprep.subr.mxu0 0.0
    %2931 = vmatpush1.msra.mxu0 0.0
    %2932 = vmatprep.subr.mxu0 0.0
    %2933 = vmatpush1.msra.mxu0 0.0
    %2934 = vmatprep.subr.mxu0 0.0
    %2935 = vmatpush1.msra.mxu0 0.0
    %2936 = vmatprep.subr.mxu0 0.0
    %2937 = vmatpush1.msra.mxu0 0.0
    %2938 = vmatprep.subr.mxu0 0.0
    %2939 = vmatpush1.msra.mxu0 0.0
    %2940 = vmatprep.subr.mxu0 0.0
    %2941 = vmatpush1.msra.mxu0 0.0
    %2942 = vmatprep.subr.mxu0 0.0
    %2943 = vmatpush1.msra.mxu0 0.0
    %2944 = vmatprep.mubr.f32.mxu0 0.0
    %v2945 = vand.u32 %v2706, 4294901760
    %2946 = vmatmul.mubr.f32.gmra.mrb[0].mxu0 %v2945
    %v2947 = vpop.f32.mrb[0].mxu0
    %v2948 = vadd.f32 %v2796, %v2947
    %v2949 = vpop.f32.mrb[0].mxu0
    %v2950 = vadd.f32 %v2798, %v2949
    %2951 = vdwg.mxu0
    %v2952 = vand.u32 %v578, 4294901760
    %v2953 = vsub.f32 %v578, %v2952
    %2954 = vmatprep.subr.mxu0 %v2953
    %v2955 = vand.u32 %v577, 4294901760
    %v2956 = vsub.f32 %v577, %v2955
    %2957 = vmatpush1.msra.mxu0 %v2956
    %v2958 = vand.u32 %v580, 4294901760
    %v2959 = vsub.f32 %v580, %v2958
    %2960 = vmatprep.subr.mxu0 %v2959
    %v2961 = vand.u32 %v579, 4294901760
    %v2962 = vsub.f32 %v579, %v2961
    %2963 = vmatpush1.msra.mxu0 %v2962
    %v2964 = vand.u32 %v582, 4294901760
    %v2965 = vsub.f32 %v582, %v2964
    %2966 = vmatprep.subr.mxu0 %v2965
    %v2967 = vand.u32 %v581, 4294901760
    %v2968 = vsub.f32 %v581, %v2967
    %2969 = vmatpush1.msra.mxu0 %v2968
    %v2970 = vand.u32 %v584, 4294901760
    %v2971 = vsub.f32 %v584, %v2970
    %2972 = vmatprep.subr.mxu0 %v2971
    %v2973 = vand.u32 %v583, 4294901760
    %v2974 = vsub.f32 %v583, %v2973
    %2975 = vmatpush1.msra.mxu0 %v2974
    %v2976 = vand.u32 %v586, 4294901760
    %v2977 = vsub.f32 %v586, %v2976
    %2978 = vmatprep.subr.mxu0 %v2977
    %v2979 = vand.u32 %v585, 4294901760
    %v2980 = vsub.f32 %v585, %v2979
    %2981 = vmatpush1.msra.mxu0 %v2980
    %v2982 = vand.u32 %v588, 4294901760
    %v2983 = vsub.f32 %v588, %v2982
    %2984 = vmatprep.subr.mxu0 %v2983
    %v2985 = vand.u32 %v587, 4294901760
    %v2986 = vsub.f32 %v587, %v2985
    %2987 = vmatpush1.msra.mxu0 %v2986
    %v2988 = vand.u32 %v590, 4294901760
    %v2989 = vsub.f32 %v590, %v2988
    %2990 = vmatprep.subr.mxu0 %v2989
    %v2991 = vand.u32 %v589, 4294901760
    %v2992 = vsub.f32 %v589, %v2991
    %2993 = vmatpush1.msra.mxu0 %v2992
    %v2994 = vand.u32 %v592, 4294901760
    %v2995 = vsub.f32 %v592, %v2994
    %2996 = vmatprep.subr.mxu0 %v2995
    %v2997 = vand.u32 %v591, 4294901760
    %v2998 = vsub.f32 %v591, %v2997
    %2999 = vmatpush1.msra.mxu0 %v2998
    %3000 = vmatprep.subr.mxu0 0.0
    %3001 = vmatpush1.msra.mxu0 0.0
    %3002 = vmatprep.subr.mxu0 0.0
    %3003 = vmatpush1.msra.mxu0 0.0
    %3004 = vmatprep.subr.mxu0 0.0
    %3005 = vmatpush1.msra.mxu0 0.0
    %3006 = vmatprep.subr.mxu0 0.0
    %3007 = vmatpush1.msra.mxu0 0.0
    %3008 = vmatprep.subr.mxu0 0.0
    %3009 = vmatpush1.msra.mxu0 0.0
    %3010 = vmatprep.subr.mxu0 0.0
    %3011 = vmatpush1.msra.mxu0 0.0
    %3012 = vmatprep.subr.mxu0 0.0
    %3013 = vmatpush1.msra.mxu0 0.0
    %3014 = vmatprep.subr.mxu0 0.0
    %3015 = vmatpush1.msra.mxu0 0.0
    %3016 = vmatprep.subr.mxu0 0.0
    %3017 = vmatpush1.msra.mxu0 0.0
    %3018 = vmatprep.subr.mxu0 0.0
    %3019 = vmatpush1.msra.mxu0 0.0
    %3020 = vmatprep.subr.mxu0 0.0
    %3021 = vmatpush1.msra.mxu0 0.0
    %3022 = vmatprep.subr.mxu0 0.0
    %3023 = vmatpush1.msra.mxu0 0.0
    %3024 = vmatprep.subr.mxu0 0.0
    %3025 = vmatpush1.msra.mxu0 0.0
    %3026 = vmatprep.subr.mxu0 0.0
    %3027 = vmatpush1.msra.mxu0 0.0
    %3028 = vmatprep.subr.mxu0 0.0
    %3029 = vmatpush1.msra.mxu0 0.0
    %3030 = vmatprep.subr.mxu0 0.0
    %3031 = vmatpush1.msra.mxu0 0.0
    %3032 = vmatprep.subr.mxu0 0.0
    %3033 = vmatpush1.msra.mxu0 0.0
    %3034 = vmatprep.subr.mxu0 0.0
    %3035 = vmatpush1.msra.mxu0 0.0
    %3036 = vmatprep.subr.mxu0 0.0
    %3037 = vmatpush1.msra.mxu0 0.0
    %3038 = vmatprep.subr.mxu0 0.0
    %3039 = vmatpush1.msra.mxu0 0.0
    %3040 = vmatprep.subr.mxu0 0.0
    %3041 = vmatpush1.msra.mxu0 0.0
    %3042 = vmatprep.subr.mxu0 0.0
    %3043 = vmatpush1.msra.mxu0 0.0
    %3044 = vmatprep.subr.mxu0 0.0
    %3045 = vmatpush1.msra.mxu0 0.0
    %3046 = vmatprep.subr.mxu0 0.0
    %3047 = vmatpush1.msra.mxu0 0.0
    %3048 = vmatprep.mubr.f32.mxu0 0.0
    %v3049 = vand.u32 %v2706, 4294901760
    %v3050 = vsub.f32 %v2706, %v3049
    %3051 = vmatmul.mubr.f32.gmra.mrb[0].mxu0 %v3050
    %v3052 = vpop.f32.mrb[0].mxu0
    %v3053 = vadd.f32 %v2948, %v3052
    %v3054 = vpop.f32.mrb[0].mxu0
    %v3055 = vadd.f32 %v2950, %v3054
    %3056 = vdwg.mxu0
    %v3057 = vand.u32 %v578, 4294901760
    %3058 = vmatprep.subr.mxu0 %v3057
    %v3059 = vand.u32 %v577, 4294901760
    %3060 = vmatpush1.msra.mxu0 %v3059
    %v3061 = vand.u32 %v580, 4294901760
    %3062 = vmatprep.subr.mxu0 %v3061
    %v3063 = vand.u32 %v579, 4294901760
    %3064 = vmatpush1.msra.mxu0 %v3063
    %v3065 = vand.u32 %v582, 4294901760
    %3066 = vmatprep.subr.mxu0 %v3065
    %v3067 = vand.u32 %v581, 4294901760
    %3068 = vmatpush1.msra.mxu0 %v3067
    %v3069 = vand.u32 %v584, 4294901760
    %3070 = vmatprep.subr.mxu0 %v3069
    %v3071 = vand.u32 %v583, 4294901760
    %3072 = vmatpush1.msra.mxu0 %v3071
    %v3073 = vand.u32 %v586, 4294901760
    %3074 = vmatprep.subr.mxu0 %v3073
    %v3075 = vand.u32 %v585, 4294901760
    %3076 = vmatpush1.msra.mxu0 %v3075
    %v3077 = vand.u32 %v588, 4294901760
    %3078 = vmatprep.subr.mxu0 %v3077
    %v3079 = vand.u32 %v587, 4294901760
    %3080 = vmatpush1.msra.mxu0 %v3079
    %v3081 = vand.u32 %v590, 4294901760
    %3082 = vmatprep.subr.mxu0 %v3081
    %v3083 = vand.u32 %v589, 4294901760
    %3084 = vmatpush1.msra.mxu0 %v3083
    %v3085 = vand.u32 %v592, 4294901760
    %3086 = vmatprep.subr.mxu0 %v3085
    %v3087 = vand.u32 %v591, 4294901760
    %3088 = vmatpush1.msra.mxu0 %v3087
    %3089 = vmatprep.subr.mxu0 0.0
    %3090 = vmatpush1.msra.mxu0 0.0
    %3091 = vmatprep.subr.mxu0 0.0
    %3092 = vmatpush1.msra.mxu0 0.0
    %3093 = vmatprep.subr.mxu0 0.0
    %3094 = vmatpush1.msra.mxu0 0.0
    %3095 = vmatprep.subr.mxu0 0.0
    %3096 = vmatpush1.msra.mxu0 0.0
    %3097 = vmatprep.subr.mxu0 0.0
    %3098 = vmatpush1.msra.mxu0 0.0
    %3099 = vmatprep.subr.mxu0 0.0
    %3100 = vmatpush1.msra.mxu0 0.0
    %3101 = vmatprep.subr.mxu0 0.0
    %3102 = vmatpush1.msra.mxu0 0.0
    %3103 = vmatprep.subr.mxu0 0.0
    %3104 = vmatpush1.msra.mxu0 0.0
    %3105 = vmatprep.subr.mxu0 0.0
    %3106 = vmatpush1.msra.mxu0 0.0
    %3107 = vmatprep.subr.mxu0 0.0
    %3108 = vmatpush1.msra.mxu0 0.0
    %3109 = vmatprep.subr.mxu0 0.0
    %3110 = vmatpush1.msra.mxu0 0.0
    %3111 = vmatprep.subr.mxu0 0.0
    %3112 = vmatpush1.msra.mxu0 0.0
    %3113 = vmatprep.subr.mxu0 0.0
    %3114 = vmatpush1.msra.mxu0 0.0
    %3115 = vmatprep.subr.mxu0 0.0
    %3116 = vmatpush1.msra.mxu0 0.0
    %3117 = vmatprep.subr.mxu0 0.0
    %3118 = vmatpush1.msra.mxu0 0.0
    %3119 = vmatprep.subr.mxu0 0.0
    %3120 = vmatpush1.msra.mxu0 0.0
    %3121 = vmatprep.subr.mxu0 0.0
    %3122 = vmatpush1.msra.mxu0 0.0
    %3123 = vmatprep.subr.mxu0 0.0
    %3124 = vmatpush1.msra.mxu0 0.0
    %3125 = vmatprep.subr.mxu0 0.0
    %3126 = vmatpush1.msra.mxu0 0.0
    %3127 = vmatprep.subr.mxu0 0.0
    %3128 = vmatpush1.msra.mxu0 0.0
    %3129 = vmatprep.subr.mxu0 0.0
    %3130 = vmatpush1.msra.mxu0 0.0
    %3131 = vmatprep.subr.mxu0 0.0
    %3132 = vmatpush1.msra.mxu0 0.0
    %3133 = vmatprep.subr.mxu0 0.0
    %3134 = vmatpush1.msra.mxu0 0.0
    %3135 = vmatprep.subr.mxu0 0.0
    %3136 = vmatpush1.msra.mxu0 0.0
    %3137 = vmatprep.mubr.f32.mxu0 0.0
    %v3138 = vand.u32 %v2706, 4294901760
    %v3139 = vsub.f32 %v2706, %v3138
    %v3140 = vand.u32 %v3139, 4294901760
    %3141 = vmatmul.mubr.f32.gmra.mrb[0].mxu0 %v3140
    %v3142 = vpop.f32.mrb[0].mxu0
    %v3143 = vadd.f32 %v3053, %v3142
    %v3144 = vpop.f32.mrb[0].mxu0
    %v3145 = vadd.f32 %v3055, %v3144
    %3146 = vdwg.mxu0
    %v3147 = vand.u32 %v578, 4294901760
    %v3148 = vsub.f32 %v578, %v3147
    %v3149 = vand.u32 %v3148, 4294901760
    %3150 = vmatprep.subr.mxu0 %v3149
    %v3151 = vand.u32 %v577, 4294901760
    %v3152 = vsub.f32 %v577, %v3151
    %v3153 = vand.u32 %v3152, 4294901760
    %3154 = vmatpush1.msra.mxu0 %v3153
    %v3155 = vand.u32 %v580, 4294901760
    %v3156 = vsub.f32 %v580, %v3155
    %v3157 = vand.u32 %v3156, 4294901760
    %3158 = vmatprep.subr.mxu0 %v3157
    %v3159 = vand.u32 %v579, 4294901760
    %v3160 = vsub.f32 %v579, %v3159
    %v3161 = vand.u32 %v3160, 4294901760
    %3162 = vmatpush1.msra.mxu0 %v3161
    %v3163 = vand.u32 %v582, 4294901760
    %v3164 = vsub.f32 %v582, %v3163
    %v3165 = vand.u32 %v3164, 4294901760
    %3166 = vmatprep.subr.mxu0 %v3165
    %v3167 = vand.u32 %v581, 4294901760
    %v3168 = vsub.f32 %v581, %v3167
    %v3169 = vand.u32 %v3168, 4294901760
    %3170 = vmatpush1.msra.mxu0 %v3169
    %v3171 = vand.u32 %v584, 4294901760
    %v3172 = vsub.f32 %v584, %v3171
    %v3173 = vand.u32 %v3172, 4294901760
    %3174 = vmatprep.subr.mxu0 %v3173
    %v3175 = vand.u32 %v583, 4294901760
    %v3176 = vsub.f32 %v583, %v3175
    %v3177 = vand.u32 %v3176, 4294901760
    %3178 = vmatpush1.msra.mxu0 %v3177
    %v3179 = vand.u32 %v586, 4294901760
    %v3180 = vsub.f32 %v586, %v3179
    %v3181 = vand.u32 %v3180, 4294901760
    %3182 = vmatprep.subr.mxu0 %v3181
    %v3183 = vand.u32 %v585, 4294901760
    %v3184 = vsub.f32 %v585, %v3183
    %v3185 = vand.u32 %v3184, 4294901760
    %3186 = vmatpush1.msra.mxu0 %v3185
    %v3187 = vand.u32 %v588, 4294901760
    %v3188 = vsub.f32 %v588, %v3187
    %v3189 = vand.u32 %v3188, 4294901760
    %3190 = vmatprep.subr.mxu0 %v3189
    %v3191 = vand.u32 %v587, 4294901760
    %v3192 = vsub.f32 %v587, %v3191
    %v3193 = vand.u32 %v3192, 4294901760
    %3194 = vmatpush1.msra.mxu0 %v3193
    %v3195 = vand.u32 %v590, 4294901760
    %v3196 = vsub.f32 %v590, %v3195
    %v3197 = vand.u32 %v3196, 4294901760
    %3198 = vmatprep.subr.mxu0 %v3197
    %v3199 = vand.u32 %v589, 4294901760
    %v3200 = vsub.f32 %v589, %v3199
    %v3201 = vand.u32 %v3200, 4294901760
    %3202 = vmatpush1.msra.mxu0 %v3201
    %v3203 = vand.u32 %v592, 4294901760
    %v3204 = vsub.f32 %v592, %v3203
    %v3205 = vand.u32 %v3204, 4294901760
    %3206 = vmatprep.subr.mxu0 %v3205
    %v3207 = vand.u32 %v591, 4294901760
    %v3208 = vsub.f32 %v591, %v3207
    %v3209 = vand.u32 %v3208, 4294901760
    %3210 = vmatpush1.msra.mxu0 %v3209
    %3211 = vmatprep.subr.mxu0 0.0
    %3212 = vmatpush1.msra.mxu0 0.0
    %3213 = vmatprep.subr.mxu0 0.0
    %3214 = vmatpush1.msra.mxu0 0.0
    %3215 = vmatprep.subr.mxu0 0.0
    %3216 = vmatpush1.msra.mxu0 0.0
    %3217 = vmatprep.subr.mxu0 0.0
    %3218 = vmatpush1.msra.mxu0 0.0
    %3219 = vmatprep.subr.mxu0 0.0
    %3220 = vmatpush1.msra.mxu0 0.0
    %3221 = vmatprep.subr.mxu0 0.0
    %3222 = vmatpush1.msra.mxu0 0.0
    %3223 = vmatprep.subr.mxu0 0.0
    %3224 = vmatpush1.msra.mxu0 0.0
    %3225 = vmatprep.subr.mxu0 0.0
    %3226 = vmatpush1.msra.mxu0 0.0
    %3227 = vmatprep.subr.mxu0 0.0
    %3228 = vmatpush1.msra.mxu0 0.0
    %3229 = vmatprep.subr.mxu0 0.0
    %3230 = vmatpush1.msra.mxu0 0.0
    %3231 = vmatprep.subr.mxu0 0.0
    %3232 = vmatpush1.msra.mxu0 0.0
    %3233 = vmatprep.subr.mxu0 0.0
    %3234 = vmatpush1.msra.mxu0 0.0
    %3235 = vmatprep.subr.mxu0 0.0
    %3236 = vmatpush1.msra.mxu0 0.0
    %3237 = vmatprep.subr.mxu0 0.0
    %3238 = vmatpush1.msra.mxu0 0.0
    %3239 = vmatprep.subr.mxu0 0.0
    %3240 = vmatpush1.msra.mxu0 0.0
    %3241 = vmatprep.subr.mxu0 0.0
    %3242 = vmatpush1.msra.mxu0 0.0
    %3243 = vmatprep.subr.mxu0 0.0
    %3244 = vmatpush1.msra.mxu0 0.0
    %3245 = vmatprep.subr.mxu0 0.0
    %3246 = vmatpush1.msra.mxu0 0.0
    %3247 = vmatprep.subr.mxu0 0.0
    %3248 = vmatpush1.msra.mxu0 0.0
    %3249 = vmatprep.subr.mxu0 0.0
    %3250 = vmatpush1.msra.mxu0 0.0
    %3251 = vmatprep.subr.mxu0 0.0
    %3252 = vmatpush1.msra.mxu0 0.0
    %3253 = vmatprep.subr.mxu0 0.0
    %3254 = vmatpush1.msra.mxu0 0.0
    %3255 = vmatprep.subr.mxu0 0.0
    %3256 = vmatpush1.msra.mxu0 0.0
    %3257 = vmatprep.subr.mxu0 0.0
    %3258 = vmatpush1.msra.mxu0 0.0
    %3259 = vmatprep.mubr.f32.mxu0 0.0
    %v3260 = vand.u32 %v2706, 4294901760
    %3261 = vmatmul.mubr.f32.gmra.mrb[0].mxu0 %v3260
    %v3262 = vpop.f32.mrb[0].mxu0
    %v3263 = vadd.f32 %v3143, %v3262
    %v3264 = vpop.f32.mrb[0].mxu0
    %v3265 = vadd.f32 %v3145, %v3264
    %3266 = vdwg.mxu0
    %v3267 = vand.u32 %v578, 4294901760
    %3268 = vmatprep.subr.mxu0 %v3267
    %v3269 = vand.u32 %v577, 4294901760
    %3270 = vmatpush1.msra.mxu0 %v3269
    %v3271 = vand.u32 %v580, 4294901760
    %3272 = vmatprep.subr.mxu0 %v3271
    %v3273 = vand.u32 %v579, 4294901760
    %3274 = vmatpush1.msra.mxu0 %v3273
    %v3275 = vand.u32 %v582, 4294901760
    %3276 = vmatprep.subr.mxu0 %v3275
    %v3277 = vand.u32 %v581, 4294901760
    %3278 = vmatpush1.msra.mxu0 %v3277
    %v3279 = vand.u32 %v584, 4294901760
    %3280 = vmatprep.subr.mxu0 %v3279
    %v3281 = vand.u32 %v583, 4294901760
    %3282 = vmatpush1.msra.mxu0 %v3281
    %v3283 = vand.u32 %v586, 4294901760
    %3284 = vmatprep.subr.mxu0 %v3283
    %v3285 = vand.u32 %v585, 4294901760
    %3286 = vmatpush1.msra.mxu0 %v3285
    %v3287 = vand.u32 %v588, 4294901760
    %3288 = vmatprep.subr.mxu0 %v3287
    %v3289 = vand.u32 %v587, 4294901760
    %3290 = vmatpush1.msra.mxu0 %v3289
    %v3291 = vand.u32 %v590, 4294901760
    %3292 = vmatprep.subr.mxu0 %v3291
    %v3293 = vand.u32 %v589, 4294901760
    %3294 = vmatpush1.msra.mxu0 %v3293
    %v3295 = vand.u32 %v592, 4294901760
    %3296 = vmatprep.subr.mxu0 %v3295
    %v3297 = vand.u32 %v591, 4294901760
    %3298 = vmatpush1.msra.mxu0 %v3297
    %3299 = vmatprep.subr.mxu0 0.0
    %3300 = vmatpush1.msra.mxu0 0.0
    %3301 = vmatprep.subr.mxu0 0.0
    %3302 = vmatpush1.msra.mxu0 0.0
    %3303 = vmatprep.subr.mxu0 0.0
    %3304 = vmatpush1.msra.mxu0 0.0
    %3305 = vmatprep.subr.mxu0 0.0
    %3306 = vmatpush1.msra.mxu0 0.0
    %3307 = vmatprep.subr.mxu0 0.0
    %3308 = vmatpush1.msra.mxu0 0.0
    %3309 = vmatprep.subr.mxu0 0.0
    %3310 = vmatpush1.msra.mxu0 0.0
    %3311 = vmatprep.subr.mxu0 0.0
    %3312 = vmatpush1.msra.mxu0 0.0
    %3313 = vmatprep.subr.mxu0 0.0
    %3314 = vmatpush1.msra.mxu0 0.0
    %3315 = vmatprep.subr.mxu0 0.0
    %3316 = vmatpush1.msra.mxu0 0.0
    %3317 = vmatprep.subr.mxu0 0.0
    %3318 = vmatpush1.msra.mxu0 0.0
    %3319 = vmatprep.subr.mxu0 0.0
    %3320 = vmatpush1.msra.mxu0 0.0
    %3321 = vmatprep.subr.mxu0 0.0
    %3322 = vmatpush1.msra.mxu0 0.0
    %3323 = vmatprep.subr.mxu0 0.0
    %3324 = vmatpush1.msra.mxu0 0.0
    %3325 = vmatprep.subr.mxu0 0.0
    %3326 = vmatpush1.msra.mxu0 0.0
    %3327 = vmatprep.subr.mxu0 0.0
    %3328 = vmatpush1.msra.mxu0 0.0
    %3329 = vmatprep.subr.mxu0 0.0
    %3330 = vmatpush1.msra.mxu0 0.0
    %3331 = vmatprep.subr.mxu0 0.0
    %3332 = vmatpush1.msra.mxu0 0.0
    %3333 = vmatprep.subr.mxu0 0.0
    %3334 = vmatpush1.msra.mxu0 0.0
    %3335 = vmatprep.subr.mxu0 0.0
    %3336 = vmatpush1.msra.mxu0 0.0
    %3337 = vmatprep.subr.mxu0 0.0
    %3338 = vmatpush1.msra.mxu0 0.0
    %3339 = vmatprep.subr.mxu0 0.0
    %3340 = vmatpush1.msra.mxu0 0.0
    %3341 = vmatprep.subr.mxu0 0.0
    %3342 = vmatpush1.msra.mxu0 0.0
    %3343 = vmatprep.subr.mxu0 0.0
    %3344 = vmatpush1.msra.mxu0 0.0
    %3345 = vmatprep.subr.mxu0 0.0
    %3346 = vmatpush1.msra.mxu0 0.0
    %3347 = vmatprep.mubr.f32.mxu0 0.0
    %v3348 = vand.u32 %v2706, 4294901760
    %3349 = vmatmul.mubr.f32.gmra.mrb[0].mxu0 %v3348
    %v3350 = vpop.f32.mrb[0].mxu0
    %v3351 = vadd.f32 %v3263, %v3350
    %v3352 = vpop.f32.mrb[0].mxu0
    %v3353 = vadd.f32 %v3265, %v3352
    %3354 = vdwg.mxu0
    %v3355 = vld [vmem:[#allocation2 + $0x6] sm:$0x3]
    %v3356 = vadd.f32 %v3351, %v3355
    %v3357 = vtanh.pop %v3356
    %v3358 = vmul.f32 %v3357, 0.5
    %v3359 = vadd.f32 %v3358, 0.5
    %v3360 = vmul.f32 %v3359, %v2664
    %3362 = vrot.lane.b32.xlu0 %v3357, 32
    %v3363 = vpop.permute.xlu0 %3362
    %v3365 = vmul.f32 %v3359, %v3363
    %3367 = vrot.lane.b32.xlu0 %v3365, 32
    %v3368 = vpop.permute.xlu0 %3367
    %v3370 = vadd.f32 %v3360, %v3368
    %v3371 = vtanh.pop %v3370
    %3373 = vrot.lane.b32.xlu0 %v3371, 32
    %v3374 = vpop.permute.xlu0 %3373
    %v3376 = vmul.f32 %v3359, %v3374
    %v3377 = vadd.f32 %v3353, %v1958
    %v3378 = vtanh.pop %v3377
    %v3379 = vmul.f32 %v3378, 0.5
    %v3380 = vadd.f32 %v3379, 0.5
    %v3381 = vmul.f32 %v3380, %v2685
    %3383 = vrot.lane.b32.xlu0 %v3378, 32
    %v3384 = vpop.permute.xlu0 %3383
    %v3386 = vmul.f32 %v3380, %v3384
    %3388 = vrot.lane.b32.xlu0 %v3386, 32
    %v3389 = vpop.permute.xlu0 %3388
    %v3391 = vadd.f32 %v3381, %v3389
    %v3392 = vtanh.pop %v3391
    %3394 = vrot.lane.b32.xlu0 %v3392, 32
    %v3395 = vpop.permute.xlu0 %3394
    %v3397 = vmul.f32 %v3380, %v3395
    %3399 = vrot.lane.b32.xlu0 %v3397, 64
    %v3400 = vpop.permute.xlu0 %3399
    %3402 = vst.msk [vmem:[#allocation3 + $0x4] sm:$0x3] %vm1989, %v3400
    %3404 = vrot.lane.b32.xlu0 %v3376, 64
    %v3405 = vpop.permute.xlu0 %3404
    %3407 = vrot.lane.b32.xlu0 %v3397, 96
    %v3408 = vpop.permute.xlu0 %3407
    %v3410 = vsel %vm604, %v3405, %v3408
    %v3412 = vsel %vm606, %v3410, 0
    %v3414 = vand.u32 %v578, 4294901760
    %3415 = vmatprep.subr.mxu0 %v3414
    %v3416 = vand.u32 %v577, 4294901760
    %3417 = vmatpush1.msra.mxu0 %v3416
    %v3418 = vand.u32 %v580, 4294901760
    %3419 = vmatprep.subr.mxu0 %v3418
    %v3420 = vand.u32 %v579, 4294901760
    %3421 = vmatpush1.msra.mxu0 %v3420
    %v3422 = vand.u32 %v582, 4294901760
    %3423 = vmatprep.subr.mxu0 %v3422
    %v3424 = vand.u32 %v581, 4294901760
    %3425 = vmatpush1.msra.mxu0 %v3424
    %v3426 = vand.u32 %v584, 4294901760
    %3427 = vmatprep.subr.mxu0 %v3426
    %v3428 = vand.u32 %v583, 4294901760
    %3429 = vmatpush1.msra.mxu0 %v3428
    %v3430 = vand.u32 %v586, 4294901760
    %3431 = vmatprep.subr.mxu0 %v3430
    %v3432 = vand.u32 %v585, 4294901760
    %3433 = vmatpush1.msra.mxu0 %v3432
    %v3434 = vand.u32 %v588, 4294901760
    %3435 = vmatprep.subr.mxu0 %v3434
    %v3436 = vand.u32 %v587, 4294901760
    %3437 = vmatpush1.msra.mxu0 %v3436
    %v3438 = vand.u32 %v590, 4294901760
    %3439 = vmatprep.subr.mxu0 %v3438
    %v3440 = vand.u32 %v589, 4294901760
    %3441 = vmatpush1.msra.mxu0 %v3440
    %v3442 = vand.u32 %v592, 4294901760
    %3443 = vmatprep.subr.mxu0 %v3442
    %v3444 = vand.u32 %v591, 4294901760
    %3445 = vmatpush1.msra.mxu0 %v3444
    %3446 = vmatprep.subr.mxu0 0.0
    %3447 = vmatpush1.msra.mxu0 0.0
    %3448 = vmatprep.subr.mxu0 0.0
    %3449 = vmatpush1.msra.mxu0 0.0
    %3450 = vmatprep.subr.mxu0 0.0
    %3451 = vmatpush1.msra.mxu0 0.0
    %3452 = vmatprep.subr.mxu0 0.0
    %3453 = vmatpush1.msra.mxu0 0.0
    %3454 = vmatprep.subr.mxu0 0.0
    %3455 = vmatpush1.msra.mxu0 0.0
    %3456 = vmatprep.subr.mxu0 0.0
    %3457 = vmatpush1.msra.mxu0 0.0
    %3458 = vmatprep.subr.mxu0 0.0
    %3459 = vmatpush1.msra.mxu0 0.0
    %3460 = vmatprep.subr.mxu0 0.0
    %3461 = vmatpush1.msra.mxu0 0.0
    %3462 = vmatprep.subr.mxu0 0.0
    %3463 = vmatpush1.msra.mxu0 0.0
    %3464 = vmatprep.subr.mxu0 0.0
    %3465 = vmatpush1.msra.mxu0 0.0
    %3466 = vmatprep.subr.mxu0 0.0
    %3467 = vmatpush1.msra.mxu0 0.0
    %3468 = vmatprep.subr.mxu0 0.0
    %3469 = vmatpush1.msra.mxu0 0.0
    %3470 = vmatprep.subr.mxu0 0.0
    %3471 = vmatpush1.msra.mxu0 0.0
    %3472 = vmatprep.subr.mxu0 0.0
    %3473 = vmatpush1.msra.mxu0 0.0
    %3474 = vmatprep.subr.mxu0 0.0
    %3475 = vmatpush1.msra.mxu0 0.0
    %3476 = vmatprep.subr.mxu0 0.0
    %3477 = vmatpush1.msra.mxu0 0.0
    %3478 = vmatprep.subr.mxu0 0.0
    %3479 = vmatpush1.msra.mxu0 0.0
    %3480 = vmatprep.subr.mxu0 0.0
    %3481 = vmatpush1.msra.mxu0 0.0
    %3482 = vmatprep.subr.mxu0 0.0
    %3483 = vmatpush1.msra.mxu0 0.0
    %3484 = vmatprep.subr.mxu0 0.0
    %3485 = vmatpush1.msra.mxu0 0.0
    %3486 = vmatprep.subr.mxu0 0.0
    %3487 = vmatpush1.msra.mxu0 0.0
    %3488 = vmatprep.subr.mxu0 0.0
    %3489 = vmatpush1.msra.mxu0 0.0
    %3490 = vmatprep.subr.mxu0 0.0
    %3491 = vmatpush1.msra.mxu0 0.0
    %3492 = vmatprep.subr.mxu0 0.0
    %3493 = vmatpush1.msra.mxu0 0.0
    %3494 = vmatprep.mubr.f32.mxu0 0.0
    %v3495 = vand.u32 %v3412, 4294901760
    %v3496 = vsub.f32 %v3412, %v3495
    %v3497 = vand.u32 %v3496, 4294901760
    %v3498 = vsub.f32 %v3496, %v3497
    %v3499 = vand.u32 %v3498, 4294901760
    %3500 = vmatmul.mubr.f32.gmra.mrb[0].mxu0 %v3499
    %v3501 = vpop.f32.mrb[0].mxu0
    %v3502 = vadd.f32 0.0, %v3501
    %v3503 = vpop.f32.mrb[0].mxu0
    %v3504 = vadd.f32 0.0, %v3503
    %3505 = vdwg.mxu0
    %v3506 = vand.u32 %v578, 4294901760
    %v3507 = vsub.f32 %v578, %v3506
    %v3508 = vand.u32 %v3507, 4294901760
    %v3509 = vsub.f32 %v3507, %v3508
    %v3510 = vand.u32 %v3509, 4294901760
    %3511 = vmatprep.subr.mxu0 %v3510
    %v3512 = vand.u32 %v577, 4294901760
    %v3513 = vsub.f32 %v577, %v3512
    %v3514 = vand.u32 %v3513, 4294901760
    %v3515 = vsub.f32 %v3513, %v3514
    %v3516 = vand.u32 %v3515, 4294901760
    %3517 = vmatpush1.msra.mxu0 %v3516
    %v3518 = vand.u32 %v580, 4294901760
    %v3519 = vsub.f32 %v580, %v3518
    %v3520 = vand.u32 %v3519, 4294901760
    %v3521 = vsub.f32 %v3519, %v3520
    %v3522 = vand.u32 %v3521, 4294901760
    %3523 = vmatprep.subr.mxu0 %v3522
    %v3524 = vand.u32 %v579, 4294901760
    %v3525 = vsub.f32 %v579, %v3524
    %v3526 = vand.u32 %v3525, 4294901760
    %v3527 = vsub.f32 %v3525, %v3526
    %v3528 = vand.u32 %v3527, 4294901760
    %3529 = vmatpush1.msra.mxu0 %v3528
    %v3530 = vand.u32 %v582, 4294901760
    %v3531 = vsub.f32 %v582, %v3530
    %v3532 = vand.u32 %v3531, 4294901760
    %v3533 = vsub.f32 %v3531, %v3532
    %v3534 = vand.u32 %v3533, 4294901760
    %3535 = vmatprep.subr.mxu0 %v3534
    %v3536 = vand.u32 %v581, 4294901760
    %v3537 = vsub.f32 %v581, %v3536
    %v3538 = vand.u32 %v3537, 4294901760
    %v3539 = vsub.f32 %v3537, %v3538
    %v3540 = vand.u32 %v3539, 4294901760
    %3541 = vmatpush1.msra.mxu0 %v3540
    %v3542 = vand.u32 %v584, 4294901760
    %v3543 = vsub.f32 %v584, %v3542
    %v3544 = vand.u32 %v3543, 4294901760
    %v3545 = vsub.f32 %v3543, %v3544
    %v3546 = vand.u32 %v3545, 4294901760
    %3547 = vmatprep.subr.mxu0 %v3546
    %v3548 = vand.u32 %v583, 4294901760
    %v3549 = vsub.f32 %v583, %v3548
    %v3550 = vand.u32 %v3549, 4294901760
    %v3551 = vsub.f32 %v3549, %v3550
    %v3552 = vand.u32 %v3551, 4294901760
    %3553 = vmatpush1.msra.mxu0 %v3552
    %v3554 = vand.u32 %v586, 4294901760
    %v3555 = vsub.f32 %v586, %v3554
    %v3556 = vand.u32 %v3555, 4294901760
    %v3557 = vsub.f32 %v3555, %v3556
    %v3558 = vand.u32 %v3557, 4294901760
    %3559 = vmatprep.subr.mxu0 %v3558
    %v3560 = vand.u32 %v585, 4294901760
    %v3561 = vsub.f32 %v585, %v3560
    %v3562 = vand.u32 %v3561, 4294901760
    %v3563 = vsub.f32 %v3561, %v3562
    %v3564 = vand.u32 %v3563, 4294901760
    %3565 = vmatpush1.msra.mxu0 %v3564
    %v3566 = vand.u32 %v588, 4294901760
    %v3567 = vsub.f32 %v588, %v3566
    %v3568 = vand.u32 %v3567, 4294901760
    %v3569 = vsub.f32 %v3567, %v3568
    %v3570 = vand.u32 %v3569, 4294901760
    %3571 = vmatprep.subr.mxu0 %v3570
    %v3572 = vand.u32 %v587, 4294901760
    %v3573 = vsub.f32 %v587, %v3572
    %v3574 = vand.u32 %v3573, 4294901760
    %v3575 = vsub.f32 %v3573, %v3574
    %v3576 = vand.u32 %v3575, 4294901760
    %3577 = vmatpush1.msra.mxu0 %v3576
    %v3578 = vand.u32 %v590, 4294901760
    %v3579 = vsub.f32 %v590, %v3578
    %v3580 = vand.u32 %v3579, 4294901760
    %v3581 = vsub.f32 %v3579, %v3580
    %v3582 = vand.u32 %v3581, 4294901760
    %3583 = vmatprep.subr.mxu0 %v3582
    %v3584 = vand.u32 %v589, 4294901760
    %v3585 = vsub.f32 %v589, %v3584
    %v3586 = vand.u32 %v3585, 4294901760
    %v3587 = vsub.f32 %v3585, %v3586
    %v3588 = vand.u32 %v3587, 4294901760
    %3589 = vmatpush1.msra.mxu0 %v3588
    %v3590 = vand.u32 %v592, 4294901760
    %v3591 = vsub.f32 %v592, %v3590
    %v3592 = vand.u32 %v3591, 4294901760
    %v3593 = vsub.f32 %v3591, %v3592
    %v3594 = vand.u32 %v3593, 4294901760
    %3595 = vmatprep.subr.mxu0 %v3594
    %v3596 = vand.u32 %v591, 4294901760
    %v3597 = vsub.f32 %v591, %v3596
    %v3598 = vand.u32 %v3597, 4294901760
    %v3599 = vsub.f32 %v3597, %v3598
    %v3600 = vand.u32 %v3599, 4294901760
    %3601 = vmatpush1.msra.mxu0 %v3600
    %3602 = vmatprep.subr.mxu0 0.0
    %3603 = vmatpush1.msra.mxu0 0.0
    %3604 = vmatprep.subr.mxu0 0.0
    %3605 = vmatpush1.msra.mxu0 0.0
    %3606 = vmatprep.subr.mxu0 0.0
    %3607 = vmatpush1.msra.mxu0 0.0
    %3608 = vmatprep.subr.mxu0 0.0
    %3609 = vmatpush1.msra.mxu0 0.0
    %3610 = vmatprep.subr.mxu0 0.0
    %3611 = vmatpush1.msra.mxu0 0.0
    %3612 = vmatprep.subr.mxu0 0.0
    %3613 = vmatpush1.msra.mxu0 0.0
    %3614 = vmatprep.subr.mxu0 0.0
    %3615 = vmatpush1.msra.mxu0 0.0
    %3616 = vmatprep.subr.mxu0 0.0
    %3617 = vmatpush1.msra.mxu0 0.0
    %3618 = vmatprep.subr.mxu0 0.0
    %3619 = vmatpush1.msra.mxu0 0.0
    %3620 = vmatprep.subr.mxu0 0.0
    %3621 = vmatpush1.msra.mxu0 0.0
    %3622 = vmatprep.subr.mxu0 0.0
    %3623 = vmatpush1.msra.mxu0 0.0
    %3624 = vmatprep.subr.mxu0 0.0
    %3625 = vmatpush1.msra.mxu0 0.0
    %3626 = vmatprep.subr.mxu0 0.0
    %3627 = vmatpush1.msra.mxu0 0.0
    %3628 = vmatprep.subr.mxu0 0.0
    %3629 = vmatpush1.msra.mxu0 0.0
    %3630 = vmatprep.subr.mxu0 0.0
    %3631 = vmatpush1.msra.mxu0 0.0
    %3632 = vmatprep.subr.mxu0 0.0
    %3633 = vmatpush1.msra.mxu0 0.0
    %3634 = vmatprep.subr.mxu0 0.0
    %3635 = vmatpush1.msra.mxu0 0.0
    %3636 = vmatprep.subr.mxu0 0.0
    %3637 = vmatpush1.msra.mxu0 0.0
    %3638 = vmatprep.subr.mxu0 0.0
    %3639 = vmatpush1.msra.mxu0 0.0
    %3640 = vmatprep.subr.mxu0 0.0
    %3641 = vmatpush1.msra.mxu0 0.0
    %3642 = vmatprep.subr.mxu0 0.0
    %3643 = vmatpush1.msra.mxu0 0.0
    %3644 = vmatprep.subr.mxu0 0.0
    %3645 = vmatpush1.msra.mxu0 0.0
    %3646 = vmatprep.subr.mxu0 0.0
    %3647 = vmatpush1.msra.mxu0 0.0
    %3648 = vmatprep.subr.mxu0 0.0
    %3649 = vmatpush1.msra.mxu0 0.0
    %3650 = vmatprep.mubr.f32.mxu0 0.0
    %v3651 = vand.u32 %v3412, 4294901760
    %3652 = vmatmul.mubr.f32.gmra.mrb[0].mxu0 %v3651
    %v3653 = vpop.f32.mrb[0].mxu0
    %v3654 = vadd.f32 %v3502, %v3653
    %v3655 = vpop.f32.mrb[0].mxu0
    %v3656 = vadd.f32 %v3504, %v3655
    %3657 = vdwg.mxu0
    %v3658 = vand.u32 %v578, 4294901760
    %v3659 = vsub.f32 %v578, %v3658
    %3660 = vmatprep.subr.mxu0 %v3659
    %v3661 = vand.u32 %v577, 4294901760
    %v3662 = vsub.f32 %v577, %v3661
    %3663 = vmatpush1.msra.mxu0 %v3662
    %v3664 = vand.u32 %v580, 4294901760
    %v3665 = vsub.f32 %v580, %v3664
    %3666 = vmatprep.subr.mxu0 %v3665
    %v3667 = vand.u32 %v579, 4294901760
    %v3668 = vsub.f32 %v579, %v3667
    %3669 = vmatpush1.msra.mxu0 %v3668
    %v3670 = vand.u32 %v582, 4294901760
    %v3671 = vsub.f32 %v582, %v3670
    %3672 = vmatprep.subr.mxu0 %v3671
    %v3673 = vand.u32 %v581, 4294901760
    %v3674 = vsub.f32 %v581, %v3673
    %3675 = vmatpush1.msra.mxu0 %v3674
    %v3676 = vand.u32 %v584, 4294901760
    %v3677 = vsub.f32 %v584, %v3676
    %3678 = vmatprep.subr.mxu0 %v3677
    %v3679 = vand.u32 %v583, 4294901760
    %v3680 = vsub.f32 %v583, %v3679
    %3681 = vmatpush1.msra.mxu0 %v3680
    %v3682 = vand.u32 %v586, 4294901760
    %v3683 = vsub.f32 %v586, %v3682
    %3684 = vmatprep.subr.mxu0 %v3683
    %v3685 = vand.u32 %v585, 4294901760
    %v3686 = vsub.f32 %v585, %v3685
    %3687 = vmatpush1.msra.mxu0 %v3686
    %v3688 = vand.u32 %v588, 4294901760
    %v3689 = vsub.f32 %v588, %v3688
    %3690 = vmatprep.subr.mxu0 %v3689
    %v3691 = vand.u32 %v587, 4294901760
    %v3692 = vsub.f32 %v587, %v3691
    %3693 = vmatpush1.msra.mxu0 %v3692
    %v3694 = vand.u32 %v590, 4294901760
    %v3695 = vsub.f32 %v590, %v3694
    %3696 = vmatprep.subr.mxu0 %v3695
    %v3697 = vand.u32 %v589, 4294901760
    %v3698 = vsub.f32 %v589, %v3697
    %3699 = vmatpush1.msra.mxu0 %v3698
    %v3700 = vand.u32 %v592, 4294901760
    %v3701 = vsub.f32 %v592, %v3700
    %3702 = vmatprep.subr.mxu0 %v3701
    %v3703 = vand.u32 %v591, 4294901760
    %v3704 = vsub.f32 %v591, %v3703
    %3705 = vmatpush1.msra.mxu0 %v3704
    %3706 = vmatprep.subr.mxu0 0.0
    %3707 = vmatpush1.msra.mxu0 0.0
    %3708 = vmatprep.subr.mxu0 0.0
    %3709 = vmatpush1.msra.mxu0 0.0
    %3710 = vmatprep.subr.mxu0 0.0
    %3711 = vmatpush1.msra.mxu0 0.0
    %3712 = vmatprep.subr.mxu0 0.0
    %3713 = vmatpush1.msra.mxu0 0.0
    %3714 = vmatprep.subr.mxu0 0.0
    %3715 = vmatpush1.msra.mxu0 0.0
    %3716 = vmatprep.subr.mxu0 0.0
    %3717 = vmatpush1.msra.mxu0 0.0
    %3718 = vmatprep.subr.mxu0 0.0
    %3719 = vmatpush1.msra.mxu0 0.0
    %3720 = vmatprep.subr.mxu0 0.0
    %3721 = vmatpush1.msra.mxu0 0.0
    %3722 = vmatprep.subr.mxu0 0.0
    %3723 = vmatpush1.msra.mxu0 0.0
    %3724 = vmatprep.subr.mxu0 0.0
    %3725 = vmatpush1.msra.mxu0 0.0
    %3726 = vmatprep.subr.mxu0 0.0
    %3727 = vmatpush1.msra.mxu0 0.0
    %3728 = vmatprep.subr.mxu0 0.0
    %3729 = vmatpush1.msra.mxu0 0.0
    %3730 = vmatprep.subr.mxu0 0.0
    %3731 = vmatpush1.msra.mxu0 0.0
    %3732 = vmatprep.subr.mxu0 0.0
    %3733 = vmatpush1.msra.mxu0 0.0
    %3734 = vmatprep.subr.mxu0 0.0
    %3735 = vmatpush1.msra.mxu0 0.0
    %3736 = vmatprep.subr.mxu0 0.0
    %3737 = vmatpush1.msra.mxu0 0.0
    %3738 = vmatprep.subr.mxu0 0.0
    %3739 = vmatpush1.msra.mxu0 0.0
    %3740 = vmatprep.subr.mxu0 0.0
    %3741 = vmatpush1.msra.mxu0 0.0
    %3742 = vmatprep.subr.mxu0 0.0
    %3743 = vmatpush1.msra.mxu0 0.0
    %3744 = vmatprep.subr.mxu0 0.0
    %3745 = vmatpush1.msra.mxu0 0.0
    %3746 = vmatprep.subr.mxu0 0.0
    %3747 = vmatpush1.msra.mxu0 0.0
    %3748 = vmatprep.subr.mxu0 0.0
    %3749 = vmatpush1.msra.mxu0 0.0
    %3750 = vmatprep.subr.mxu0 0.0
    %3751 = vmatpush1.msra.mxu0 0.0
    %3752 = vmatprep.subr.mxu0 0.0
    %3753 = vmatpush1.msra.mxu0 0.0
    %3754 = vmatprep.mubr.f32.mxu0 0.0
    %v3755 = vand.u32 %v3412, 4294901760
    %v3756 = vsub.f32 %v3412, %v3755
    %3757 = vmatmul.mubr.f32.gmra.mrb[0].mxu0 %v3756
    %v3758 = vpop.f32.mrb[0].mxu0
    %v3759 = vadd.f32 %v3654, %v3758
    %v3760 = vpop.f32.mrb[0].mxu0
    %v3761 = vadd.f32 %v3656, %v3760
    %3762 = vdwg.mxu0
    %v3763 = vand.u32 %v578, 4294901760
    %3764 = vmatprep.subr.mxu0 %v3763
    %v3765 = vand.u32 %v577, 4294901760
    %3766 = vmatpush1.msra.mxu0 %v3765
    %v3767 = vand.u32 %v580, 4294901760
    %3768 = vmatprep.subr.mxu0 %v3767
    %v3769 = vand.u32 %v579, 4294901760
    %3770 = vmatpush1.msra.mxu0 %v3769
    %v3771 = vand.u32 %v582, 4294901760
    %3772 = vmatprep.subr.mxu0 %v3771
    %v3773 = vand.u32 %v581, 4294901760
    %3774 = vmatpush1.msra.mxu0 %v3773
    %v3775 = vand.u32 %v584, 4294901760
    %3776 = vmatprep.subr.mxu0 %v3775
    %v3777 = vand.u32 %v583, 4294901760
    %3778 = vmatpush1.msra.mxu0 %v3777
    %v3779 = vand.u32 %v586, 4294901760
    %3780 = vmatprep.subr.mxu0 %v3779
    %v3781 = vand.u32 %v585, 4294901760
    %3782 = vmatpush1.msra.mxu0 %v3781
    %v3783 = vand.u32 %v588, 4294901760
    %3784 = vmatprep.subr.mxu0 %v3783
    %v3785 = vand.u32 %v587, 4294901760
    %3786 = vmatpush1.msra.mxu0 %v3785
    %v3787 = vand.u32 %v590, 4294901760
    %3788 = vmatprep.subr.mxu0 %v3787
    %v3789 = vand.u32 %v589, 4294901760
    %3790 = vmatpush1.msra.mxu0 %v3789
    %v3791 = vand.u32 %v592, 4294901760
    %3792 = vmatprep.subr.mxu0 %v3791
    %v3793 = vand.u32 %v591, 4294901760
    %3794 = vmatpush1.msra.mxu0 %v3793
    %3795 = vmatprep.subr.mxu0 0.0
    %3796 = vmatpush1.msra.mxu0 0.0
    %3797 = vmatprep.subr.mxu0 0.0
    %3798 = vmatpush1.msra.mxu0 0.0
    %3799 = vmatprep.subr.mxu0 0.0
    %3800 = vmatpush1.msra.mxu0 0.0
    %3801 = vmatprep.subr.mxu0 0.0
    %3802 = vmatpush1.msra.mxu0 0.0
    %3803 = vmatprep.subr.mxu0 0.0
    %3804 = vmatpush1.msra.mxu0 0.0
    %3805 = vmatprep.subr.mxu0 0.0
    %3806 = vmatpush1.msra.mxu0 0.0
    %3807 = vmatprep.subr.mxu0 0.0
    %3808 = vmatpush1.msra.mxu0 0.0
    %3809 = vmatprep.subr.mxu0 0.0
    %3810 = vmatpush1.msra.mxu0 0.0
    %3811 = vmatprep.subr.mxu0 0.0
    %3812 = vmatpush1.msra.mxu0 0.0
    %3813 = vmatprep.subr.mxu0 0.0
    %3814 = vmatpush1.msra.mxu0 0.0
    %3815 = vmatprep.subr.mxu0 0.0
    %3816 = vmatpush1.msra.mxu0 0.0
    %3817 = vmatprep.subr.mxu0 0.0
    %3818 = vmatpush1.msra.mxu0 0.0
    %3819 = vmatprep.subr.mxu0 0.0
    %3820 = vmatpush1.msra.mxu0 0.0
    %3821 = vmatprep.subr.mxu0 0.0
    %3822 = vmatpush1.msra.mxu0 0.0
    %3823 = vmatprep.subr.mxu0 0.0
    %3824 = vmatpush1.msra.mxu0 0.0
    %3825 = vmatprep.subr.mxu0 0.0
    %3826 = vmatpush1.msra.mxu0 0.0
    %3827 = vmatprep.subr.mxu0 0.0
    %3828 = vmatpush1.msra.mxu0 0.0
    %3829 = vmatprep.subr.mxu0 0.0
    %3830 = vmatpush1.msra.mxu0 0.0
    %3831 = vmatprep.subr.mxu0 0.0
    %3832 = vmatpush1.msra.mxu0 0.0
    %3833 = vmatprep.subr.mxu0 0.0
    %3834 = vmatpush1.msra.mxu0 0.0
    %3835 = vmatprep.subr.mxu0 0.0
    %3836 = vmatpush1.msra.mxu0 0.0
    %3837 = vmatprep.subr.mxu0 0.0
    %3838 = vmatpush1.msra.mxu0 0.0
    %3839 = vmatprep.subr.mxu0 0.0
    %3840 = vmatpush1.msra.mxu0 0.0
    %3841 = vmatprep.subr.mxu0 0.0
    %3842 = vmatpush1.msra.mxu0 0.0
    %3843 = vmatprep.mubr.f32.mxu0 0.0
    %v3844 = vand.u32 %v3412, 4294901760
    %v3845 = vsub.f32 %v3412, %v3844
    %v3846 = vand.u32 %v3845, 4294901760
    %3847 = vmatmul.mubr.f32.gmra.mrb[0].mxu0 %v3846
    %v3848 = vpop.f32.mrb[0].mxu0
    %v3849 = vadd.f32 %v3759, %v3848
    %v3850 = vpop.f32.mrb[0].mxu0
    %v3851 = vadd.f32 %v3761, %v3850
    %3852 = vdwg.mxu0
    %v3853 = vand.u32 %v578, 4294901760
    %v3854 = vsub.f32 %v578, %v3853
    %v3855 = vand.u32 %v3854, 4294901760
    %3856 = vmatprep.subr.mxu0 %v3855
    %v3857 = vand.u32 %v577, 4294901760
    %v3858 = vsub.f32 %v577, %v3857
    %v3859 = vand.u32 %v3858, 4294901760
    %3860 = vmatpush1.msra.mxu0 %v3859
    %v3861 = vand.u32 %v580, 4294901760
    %v3862 = vsub.f32 %v580, %v3861
    %v3863 = vand.u32 %v3862, 4294901760
    %3864 = vmatprep.subr.mxu0 %v3863
    %v3865 = vand.u32 %v579, 4294901760
    %v3866 = vsub.f32 %v579, %v3865
    %v3867 = vand.u32 %v3866, 4294901760
    %3868 = vmatpush1.msra.mxu0 %v3867
    %v3869 = vand.u32 %v582, 4294901760
    %v3870 = vsub.f32 %v582, %v3869
    %v3871 = vand.u32 %v3870, 4294901760
    %3872 = vmatprep.subr.mxu0 %v3871
    %v3873 = vand.u32 %v581, 4294901760
    %v3874 = vsub.f32 %v581, %v3873
    %v3875 = vand.u32 %v3874, 4294901760
    %3876 = vmatpush1.msra.mxu0 %v3875
    %v3877 = vand.u32 %v584, 4294901760
    %v3878 = vsub.f32 %v584, %v3877
    %v3879 = vand.u32 %v3878, 4294901760
    %3880 = vmatprep.subr.mxu0 %v3879
    %v3881 = vand.u32 %v583, 4294901760
    %v3882 = vsub.f32 %v583, %v3881
    %v3883 = vand.u32 %v3882, 4294901760
    %3884 = vmatpush1.msra.mxu0 %v3883
    %v3885 = vand.u32 %v586, 4294901760
    %v3886 = vsub.f32 %v586, %v3885
    %v3887 = vand.u32 %v3886, 4294901760
    %3888 = vmatprep.subr.mxu0 %v3887
    %v3889 = vand.u32 %v585, 4294901760
    %v3890 = vsub.f32 %v585, %v3889
    %v3891 = vand.u32 %v3890, 4294901760
    %3892 = vmatpush1.msra.mxu0 %v3891
    %v3893 = vand.u32 %v588, 4294901760
    %v3894 = vsub.f32 %v588, %v3893
    %v3895 = vand.u32 %v3894, 4294901760
    %3896 = vmatprep.subr.mxu0 %v3895
    %v3897 = vand.u32 %v587, 4294901760
    %v3898 = vsub.f32 %v587, %v3897
    %v3899 = vand.u32 %v3898, 4294901760
    %3900 = vmatpush1.msra.mxu0 %v3899
    %v3901 = vand.u32 %v590, 4294901760
    %v3902 = vsub.f32 %v590, %v3901
    %v3903 = vand.u32 %v3902, 4294901760
    %3904 = vmatprep.subr.mxu0 %v3903
    %v3905 = vand.u32 %v589, 4294901760
    %v3906 = vsub.f32 %v589, %v3905
    %v3907 = vand.u32 %v3906, 4294901760
    %3908 = vmatpush1.msra.mxu0 %v3907
    %v3909 = vand.u32 %v592, 4294901760
    %v3910 = vsub.f32 %v592, %v3909
    %v3911 = vand.u32 %v3910, 4294901760
    %3912 = vmatprep.subr.mxu0 %v3911
    %v3913 = vand.u32 %v591, 4294901760
    %v3914 = vsub.f32 %v591, %v3913
    %v3915 = vand.u32 %v3914, 4294901760
    %3916 = vmatpush1.msra.mxu0 %v3915
    %3917 = vmatprep.subr.mxu0 0.0
    %3918 = vmatpush1.msra.mxu0 0.0
    %3919 = vmatprep.subr.mxu0 0.0
    %3920 = vmatpush1.msra.mxu0 0.0
    %3921 = vmatprep.subr.mxu0 0.0
    %3922 = vmatpush1.msra.mxu0 0.0
    %3923 = vmatprep.subr.mxu0 0.0
    %3924 = vmatpush1.msra.mxu0 0.0
    %3925 = vmatprep.subr.mxu0 0.0
    %3926 = vmatpush1.msra.mxu0 0.0
    %3927 = vmatprep.subr.mxu0 0.0
    %3928 = vmatpush1.msra.mxu0 0.0
    %3929 = vmatprep.subr.mxu0 0.0
    %3930 = vmatpush1.msra.mxu0 0.0
    %3931 = vmatprep.subr.mxu0 0.0
    %3932 = vmatpush1.msra.mxu0 0.0
    %3933 = vmatprep.subr.mxu0 0.0
    %3934 = vmatpush1.msra.mxu0 0.0
    %3935 = vmatprep.subr.mxu0 0.0
    %3936 = vmatpush1.msra.mxu0 0.0
    %3937 = vmatprep.subr.mxu0 0.0
    %3938 = vmatpush1.msra.mxu0 0.0
    %3939 = vmatprep.subr.mxu0 0.0
    %3940 = vmatpush1.msra.mxu0 0.0
    %3941 = vmatprep.subr.mxu0 0.0
    %3942 = vmatpush1.msra.mxu0 0.0
    %3943 = vmatprep.subr.mxu0 0.0
    %3944 = vmatpush1.msra.mxu0 0.0
    %3945 = vmatprep.subr.mxu0 0.0
    %3946 = vmatpush1.msra.mxu0 0.0
    %3947 = vmatprep.subr.mxu0 0.0
    %3948 = vmatpush1.msra.mxu0 0.0
    %3949 = vmatprep.subr.mxu0 0.0
    %3950 = vmatpush1.msra.mxu0 0.0
    %3951 = vmatprep.subr.mxu0 0.0
    %3952 = vmatpush1.msra.mxu0 0.0
    %3953 = vmatprep.subr.mxu0 0.0
    %3954 = vmatpush1.msra.mxu0 0.0
    %3955 = vmatprep.subr.mxu0 0.0
    %3956 = vmatpush1.msra.mxu0 0.0
    %3957 = vmatprep.subr.mxu0 0.0
    %3958 = vmatpush1.msra.mxu0 0.0
    %3959 = vmatprep.subr.mxu0 0.0
    %3960 = vmatpush1.msra.mxu0 0.0
    %3961 = vmatprep.subr.mxu0 0.0
    %3962 = vmatpush1.msra.mxu0 0.0
    %3963 = vmatprep.subr.mxu0 0.0
    %3964 = vmatpush1.msra.mxu0 0.0
    %3965 = vmatprep.mubr.f32.mxu0 0.0
    %v3966 = vand.u32 %v3412, 4294901760
    %3967 = vmatmul.mubr.f32.gmra.mrb[0].mxu0 %v3966
    %v3968 = vpop.f32.mrb[0].mxu0
    %v3969 = vadd.f32 %v3849, %v3968
    %v3970 = vpop.f32.mrb[0].mxu0
    %v3971 = vadd.f32 %v3851, %v3970
    %3972 = vdwg.mxu0
    %v3973 = vand.u32 %v578, 4294901760
    %3974 = vmatprep.subr.mxu0 %v3973
    %v3975 = vand.u32 %v577, 4294901760
    %3976 = vmatpush1.msra.mxu0 %v3975
    %v3977 = vand.u32 %v580, 4294901760
    %3978 = vmatprep.subr.mxu0 %v3977
    %v3979 = vand.u32 %v579, 4294901760
    %3980 = vmatpush1.msra.mxu0 %v3979
    %v3981 = vand.u32 %v582, 4294901760
    %3982 = vmatprep.subr.mxu0 %v3981
    %v3983 = vand.u32 %v581, 4294901760
    %3984 = vmatpush1.msra.mxu0 %v3983
    %v3985 = vand.u32 %v584, 4294901760
    %3986 = vmatprep.subr.mxu0 %v3985
    %v3987 = vand.u32 %v583, 4294901760
    %3988 = vmatpush1.msra.mxu0 %v3987
    %v3989 = vand.u32 %v586, 4294901760
    %3990 = vmatprep.subr.mxu0 %v3989
    %v3991 = vand.u32 %v585, 4294901760
    %3992 = vmatpush1.msra.mxu0 %v3991
    %v3993 = vand.u32 %v588, 4294901760
    %3994 = vmatprep.subr.mxu0 %v3993
    %v3995 = vand.u32 %v587, 4294901760
    %3996 = vmatpush1.msra.mxu0 %v3995
    %v3997 = vand.u32 %v590, 4294901760
    %3998 = vmatprep.subr.mxu0 %v3997
    %v3999 = vand.u32 %v589, 4294901760
    %4000 = vmatpush1.msra.mxu0 %v3999
    %v4001 = vand.u32 %v592, 4294901760
    %4002 = vmatprep.subr.mxu0 %v4001
    %v4003 = vand.u32 %v591, 4294901760
    %4004 = vmatpush1.msra.mxu0 %v4003
    %4005 = vmatprep.subr.mxu0 0.0
    %4006 = vmatpush1.msra.mxu0 0.0
    %4007 = vmatprep.subr.mxu0 0.0
    %4008 = vmatpush1.msra.mxu0 0.0
    %4009 = vmatprep.subr.mxu0 0.0
    %4010 = vmatpush1.msra.mxu0 0.0
    %4011 = vmatprep.subr.mxu0 0.0
    %4012 = vmatpush1.msra.mxu0 0.0
    %4013 = vmatprep.subr.mxu0 0.0
    %4014 = vmatpush1.msra.mxu0 0.0
    %4015 = vmatprep.subr.mxu0 0.0
    %4016 = vmatpush1.msra.mxu0 0.0
    %4017 = vmatprep.subr.mxu0 0.0
    %4018 = vmatpush1.msra.mxu0 0.0
    %4019 = vmatprep.subr.mxu0 0.0
    %4020 = vmatpush1.msra.mxu0 0.0
    %4021 = vmatprep.subr.mxu0 0.0
    %4022 = vmatpush1.msra.mxu0 0.0
    %4023 = vmatprep.subr.mxu0 0.0
    %4024 = vmatpush1.msra.mxu0 0.0
    %4025 = vmatprep.subr.mxu0 0.0
    %4026 = vmatpush1.msra.mxu0 0.0
    %4027 = vmatprep.subr.mxu0 0.0
    %4028 = vmatpush1.msra.mxu0 0.0
    %4029 = vmatprep.subr.mxu0 0.0
    %4030 = vmatpush1.msra.mxu0 0.0
    %4031 = vmatprep.subr.mxu0 0.0
    %4032 = vmatpush1.msra.mxu0 0.0
    %4033 = vmatprep.subr.mxu0 0.0
    %4034 = vmatpush1.msra.mxu0 0.0
    %4035 = vmatprep.subr.mxu0 0.0
    %4036 = vmatpush1.msra.mxu0 0.0
    %4037 = vmatprep.subr.mxu0 0.0
    %4038 = vmatpush1.msra.mxu0 0.0
    %4039 = vmatprep.subr.mxu0 0.0
    %4040 = vmatpush1.msra.mxu0 0.0
    %4041 = vmatprep.subr.mxu0 0.0
    %4042 = vmatpush1.msra.mxu0 0.0
    %4043 = vmatprep.subr.mxu0 0.0
    %4044 = vmatpush1.msra.mxu0 0.0
    %4045 = vmatprep.subr.mxu0 0.0
    %4046 = vmatpush1.msra.mxu0 0.0
    %4047 = vmatprep.subr.mxu0 0.0
    %4048 = vmatpush1.msra.mxu0 0.0
    %4049 = vmatprep.subr.mxu0 0.0
    %4050 = vmatpush1.msra.mxu0 0.0
    %4051 = vmatprep.subr.mxu0 0.0
    %4052 = vmatpush1.msra.mxu0 0.0
    %4053 = vmatprep.mubr.f32.mxu0 0.0
    %v4054 = vand.u32 %v3412, 4294901760
    %4055 = vmatmul.mubr.f32.gmra.mrb[0].mxu0 %v4054
    %v4056 = vpop.f32.mrb[0].mxu0
    %v4057 = vadd.f32 %v3969, %v4056
    %v4058 = vpop.f32.mrb[0].mxu0
    %v4059 = vadd.f32 %v3971, %v4058
    %4060 = vdwg.mxu0
    %v4061 = vld [vmem:[#allocation2 + $0x8] sm:$0x3]
    %v4062 = vadd.f32 %v4057, %v4061
    %v4063 = vtanh.pop %v4062
    %v4064 = vmul.f32 %v4063, 0.5
    %v4065 = vadd.f32 %v4064, 0.5
    %v4066 = vmul.f32 %v4065, %v3370
    %4068 = vrot.lane.b32.xlu0 %v4063, 32
    %v4069 = vpop.permute.xlu0 %4068
    %v4071 = vmul.f32 %v4065, %v4069
    %4073 = vrot.lane.b32.xlu0 %v4071, 32
    %v4074 = vpop.permute.xlu0 %4073
    %v4076 = vadd.f32 %v4066, %v4074
    %v4077 = vtanh.pop %v4076
    %4079 = vrot.lane.b32.xlu0 %v4077, 32
    %v4080 = vpop.permute.xlu0 %4079
    %v4082 = vmul.f32 %v4065, %v4080
    %v4083 = vadd.f32 %v4059, %v1958
    %v4084 = vtanh.pop %v4083
    %v4085 = vmul.f32 %v4084, 0.5
    %v4086 = vadd.f32 %v4085, 0.5
    %v4087 = vmul.f32 %v4086, %v3391
    %4089 = vrot.lane.b32.xlu0 %v4084, 32
    %v4090 = vpop.permute.xlu0 %4089
    %v4092 = vmul.f32 %v4086, %v4090
    %4094 = vrot.lane.b32.xlu0 %v4092, 32
    %v4095 = vpop.permute.xlu0 %4094
    %v4097 = vadd.f32 %v4087, %v4095
    %v4098 = vtanh.pop %v4097
    %4100 = vrot.lane.b32.xlu0 %v4098, 32
    %v4101 = vpop.permute.xlu0 %4100
    %v4103 = vmul.f32 %v4086, %v4101
    %4105 = vrot.lane.b32.xlu0 %v4103, 64
    %v4106 = vpop.permute.xlu0 %4105
    %4108 = vst.msk [vmem:[#allocation3 + $0x6] sm:$0x3] %vm1989, %v4106
    %4110 = vrot.lane.b32.xlu0 %v4082, 64
    %v4111 = vpop.permute.xlu0 %4110
    %4113 = vrot.lane.b32.xlu0 %v4103, 96
    %v4114 = vpop.permute.xlu0 %4113
    %v4116 = vsel %vm604, %v4111, %v4114
    %v4118 = vsel %vm606, %v4116, 0
    %v4120 = vand.u32 %v578, 4294901760
    %4121 = vmatprep.subr.mxu0 %v4120
    %v4122 = vand.u32 %v577, 4294901760
    %4123 = vmatpush1.msra.mxu0 %v4122
    %v4124 = vand.u32 %v580, 4294901760
    %4125 = vmatprep.subr.mxu0 %v4124
    %v4126 = vand.u32 %v579, 4294901760
    %4127 = vmatpush1.msra.mxu0 %v4126
    %v4128 = vand.u32 %v582, 4294901760
    %4129 = vmatprep.subr.mxu0 %v4128
    %v4130 = vand.u32 %v581, 4294901760
    %4131 = vmatpush1.msra.mxu0 %v4130
    %v4132 = vand.u32 %v584, 4294901760
    %4133 = vmatprep.subr.mxu0 %v4132
    %v4134 = vand.u32 %v583, 4294901760
    %4135 = vmatpush1.msra.mxu0 %v4134
    %v4136 = vand.u32 %v586, 4294901760
    %4137 = vmatprep.subr.mxu0 %v4136
    %v4138 = vand.u32 %v585, 4294901760
    %4139 = vmatpush1.msra.mxu0 %v4138
    %v4140 = vand.u32 %v588, 4294901760
    %4141 = vmatprep.subr.mxu0 %v4140
    %v4142 = vand.u32 %v587, 4294901760
    %4143 = vmatpush1.msra.mxu0 %v4142
    %v4144 = vand.u32 %v590, 4294901760
    %4145 = vmatprep.subr.mxu0 %v4144
    %v4146 = vand.u32 %v589, 4294901760
    %4147 = vmatpush1.msra.mxu0 %v4146
    %v4148 = vand.u32 %v592, 4294901760
    %4149 = vmatprep.subr.mxu0 %v4148
    %v4150 = vand.u32 %v591, 4294901760
    %4151 = vmatpush1.msra.mxu0 %v4150
    %4152 = vmatprep.subr.mxu0 0.0
    %4153 = vmatpush1.msra.mxu0 0.0
    %4154 = vmatprep.subr.mxu0 0.0
    %4155 = vmatpush1.msra.mxu0 0.0
    %4156 = vmatprep.subr.mxu0 0.0
    %4157 = vmatpush1.msra.mxu0 0.0
    %4158 = vmatprep.subr.mxu0 0.0
    %4159 = vmatpush1.msra.mxu0 0.0
    %4160 = vmatprep.subr.mxu0 0.0
    %4161 = vmatpush1.msra.mxu0 0.0
    %4162 = vmatprep.subr.mxu0 0.0
    %4163 = vmatpush1.msra.mxu0 0.0
    %4164 = vmatprep.subr.mxu0 0.0
    %4165 = vmatpush1.msra.mxu0 0.0
    %4166 = vmatprep.subr.mxu0 0.0
    %4167 = vmatpush1.msra.mxu0 0.0
    %4168 = vmatprep.subr.mxu0 0.0
    %4169 = vmatpush1.msra.mxu0 0.0
    %4170 = vmatprep.subr.mxu0 0.0
    %4171 = vmatpush1.msra.mxu0 0.0
    %4172 = vmatprep.subr.mxu0 0.0
    %4173 = vmatpush1.msra.mxu0 0.0
    %4174 = vmatprep.subr.mxu0 0.0
    %4175 = vmatpush1.msra.mxu0 0.0
    %4176 = vmatprep.subr.mxu0 0.0
    %4177 = vmatpush1.msra.mxu0 0.0
    %4178 = vmatprep.subr.mxu0 0.0
    %4179 = vmatpush1.msra.mxu0 0.0
    %4180 = vmatprep.subr.mxu0 0.0
    %4181 = vmatpush1.msra.mxu0 0.0
    %4182 = vmatprep.subr.mxu0 0.0
    %4183 = vmatpush1.msra.mxu0 0.0
    %4184 = vmatprep.subr.mxu0 0.0
    %4185 = vmatpush1.msra.mxu0 0.0
    %4186 = vmatprep.subr.mxu0 0.0
    %4187 = vmatpush1.msra.mxu0 0.0
    %4188 = vmatprep.subr.mxu0 0.0
    %4189 = vmatpush1.msra.mxu0 0.0
    %4190 = vmatprep.subr.mxu0 0.0
    %4191 = vmatpush1.msra.mxu0 0.0
    %4192 = vmatprep.subr.mxu0 0.0
    %4193 = vmatpush1.msra.mxu0 0.0
    %4194 = vmatprep.subr.mxu0 0.0
    %4195 = vmatpush1.msra.mxu0 0.0
    %4196 = vmatprep.subr.mxu0 0.0
    %4197 = vmatpush1.msra.mxu0 0.0
    %4198 = vmatprep.subr.mxu0 0.0
    %4199 = vmatpush1.msra.mxu0 0.0
    %4200 = vmatprep.mubr.f32.mxu0 0.0
    %v4201 = vand.u32 %v4118, 4294901760
    %v4202 = vsub.f32 %v4118, %v4201
    %v4203 = vand.u32 %v4202, 4294901760
    %v4204 = vsub.f32 %v4202, %v4203
    %v4205 = vand.u32 %v4204, 4294901760
    %4206 = vmatmul.mubr.f32.gmra.mrb[0].mxu0 %v4205
    %v4207 = vpop.f32.mrb[0].mxu0
    %v4208 = vadd.f32 0.0, %v4207
    %v4209 = vpop.f32.mrb[0].mxu0
    %v4210 = vadd.f32 0.0, %v4209
    %4211 = vdwg.mxu0
    %v4212 = vand.u32 %v578, 4294901760
    %v4213 = vsub.f32 %v578, %v4212
    %v4214 = vand.u32 %v4213, 4294901760
    %v4215 = vsub.f32 %v4213, %v4214
    %v4216 = vand.u32 %v4215, 4294901760
    %4217 = vmatprep.subr.mxu0 %v4216
    %v4218 = vand.u32 %v577, 4294901760
    %v4219 = vsub.f32 %v577, %v4218
    %v4220 = vand.u32 %v4219, 4294901760
    %v4221 = vsub.f32 %v4219, %v4220
    %v4222 = vand.u32 %v4221, 4294901760
    %4223 = vmatpush1.msra.mxu0 %v4222
    %v4224 = vand.u32 %v580, 4294901760
    %v4225 = vsub.f32 %v580, %v4224
    %v4226 = vand.u32 %v4225, 4294901760
    %v4227 = vsub.f32 %v4225, %v4226
    %v4228 = vand.u32 %v4227, 4294901760
    %4229 = vmatprep.subr.mxu0 %v4228
    %v4230 = vand.u32 %v579, 4294901760
    %v4231 = vsub.f32 %v579, %v4230
    %v4232 = vand.u32 %v4231, 4294901760
    %v4233 = vsub.f32 %v4231, %v4232
    %v4234 = vand.u32 %v4233, 4294901760
    %4235 = vmatpush1.msra.mxu0 %v4234
    %v4236 = vand.u32 %v582, 4294901760
    %v4237 = vsub.f32 %v582, %v4236
    %v4238 = vand.u32 %v4237, 4294901760
    %v4239 = vsub.f32 %v4237, %v4238
    %v4240 = vand.u32 %v4239, 4294901760
    %4241 = vmatprep.subr.mxu0 %v4240
    %v4242 = vand.u32 %v581, 4294901760
    %v4243 = vsub.f32 %v581, %v4242
    %v4244 = vand.u32 %v4243, 4294901760
    %v4245 = vsub.f32 %v4243, %v4244
    %v4246 = vand.u32 %v4245, 4294901760
    %4247 = vmatpush1.msra.mxu0 %v4246
    %v4248 = vand.u32 %v584, 4294901760
    %v4249 = vsub.f32 %v584, %v4248
    %v4250 = vand.u32 %v4249, 4294901760
    %v4251 = vsub.f32 %v4249, %v4250
    %v4252 = vand.u32 %v4251, 4294901760
    %4253 = vmatprep.subr.mxu0 %v4252
    %v4254 = vand.u32 %v583, 4294901760
    %v4255 = vsub.f32 %v583, %v4254
    %v4256 = vand.u32 %v4255, 4294901760
    %v4257 = vsub.f32 %v4255, %v4256
    %v4258 = vand.u32 %v4257, 4294901760
    %4259 = vmatpush1.msra.mxu0 %v4258
    %v4260 = vand.u32 %v586, 4294901760
    %v4261 = vsub.f32 %v586, %v4260
    %v4262 = vand.u32 %v4261, 4294901760
    %v4263 = vsub.f32 %v4261, %v4262
    %v4264 = vand.u32 %v4263, 4294901760
    %4265 = vmatprep.subr.mxu0 %v4264
    %v4266 = vand.u32 %v585, 4294901760
    %v4267 = vsub.f32 %v585, %v4266
    %v4268 = vand.u32 %v4267, 4294901760
    %v4269 = vsub.f32 %v4267, %v4268
    %v4270 = vand.u32 %v4269, 4294901760
    %4271 = vmatpush1.msra.mxu0 %v4270
    %v4272 = vand.u32 %v588, 4294901760
    %v4273 = vsub.f32 %v588, %v4272
    %v4274 = vand.u32 %v4273, 4294901760
    %v4275 = vsub.f32 %v4273, %v4274
    %v4276 = vand.u32 %v4275, 4294901760
    %4277 = vmatprep.subr.mxu0 %v4276
    %v4278 = vand.u32 %v587, 4294901760
    %v4279 = vsub.f32 %v587, %v4278
    %v4280 = vand.u32 %v4279, 4294901760
    %v4281 = vsub.f32 %v4279, %v4280
    %v4282 = vand.u32 %v4281, 4294901760
    %4283 = vmatpush1.msra.mxu0 %v4282
    %v4284 = vand.u32 %v590, 4294901760
    %v4285 = vsub.f32 %v590, %v4284
    %v4286 = vand.u32 %v4285, 4294901760
    %v4287 = vsub.f32 %v4285, %v4286
    %v4288 = vand.u32 %v4287, 4294901760
    %4289 = vmatprep.subr.mxu0 %v4288
    %v4290 = vand.u32 %v589, 4294901760
    %v4291 = vsub.f32 %v589, %v4290
    %v4292 = vand.u32 %v4291, 4294901760
    %v4293 = vsub.f32 %v4291, %v4292
    %v4294 = vand.u32 %v4293, 4294901760
    %4295 = vmatpush1.msra.mxu0 %v4294
    %v4296 = vand.u32 %v592, 4294901760
    %v4297 = vsub.f32 %v592, %v4296
    %v4298 = vand.u32 %v4297, 4294901760
    %v4299 = vsub.f32 %v4297, %v4298
    %v4300 = vand.u32 %v4299, 4294901760
    %4301 = vmatprep.subr.mxu0 %v4300
    %v4302 = vand.u32 %v591, 4294901760
    %v4303 = vsub.f32 %v591, %v4302
    %v4304 = vand.u32 %v4303, 4294901760
    %v4305 = vsub.f32 %v4303, %v4304
    %v4306 = vand.u32 %v4305, 4294901760
    %4307 = vmatpush1.msra.mxu0 %v4306
    %4308 = vmatprep.subr.mxu0 0.0
    %4309 = vmatpush1.msra.mxu0 0.0
    %4310 = vmatprep.subr.mxu0 0.0
    %4311 = vmatpush1.msra.mxu0 0.0
    %4312 = vmatprep.subr.mxu0 0.0
    %4313 = vmatpush1.msra.mxu0 0.0
    %4314 = vmatprep.subr.mxu0 0.0
    %4315 = vmatpush1.msra.mxu0 0.0
    %4316 = vmatprep.subr.mxu0 0.0
    %4317 = vmatpush1.msra.mxu0 0.0
    %4318 = vmatprep.subr.mxu0 0.0
    %4319 = vmatpush1.msra.mxu0 0.0
    %4320 = vmatprep.subr.mxu0 0.0
    %4321 = vmatpush1.msra.mxu0 0.0
    %4322 = vmatprep.subr.mxu0 0.0
    %4323 = vmatpush1.msra.mxu0 0.0
    %4324 = vmatprep.subr.mxu0 0.0
    %4325 = vmatpush1.msra.mxu0 0.0
    %4326 = vmatprep.subr.mxu0 0.0
    %4327 = vmatpush1.msra.mxu0 0.0
    %4328 = vmatprep.subr.mxu0 0.0
    %4329 = vmatpush1.msra.mxu0 0.0
    %4330 = vmatprep.subr.mxu0 0.0
    %4331 = vmatpush1.msra.mxu0 0.0
    %4332 = vmatprep.subr.mxu0 0.0
    %4333 = vmatpush1.msra.mxu0 0.0
    %4334 = vmatprep.subr.mxu0 0.0
    %4335 = vmatpush1.msra.mxu0 0.0
    %4336 = vmatprep.subr.mxu0 0.0
    %4337 = vmatpush1.msra.mxu0 0.0
    %4338 = vmatprep.subr.mxu0 0.0
    %4339 = vmatpush1.msra.mxu0 0.0
    %4340 = vmatprep.subr.mxu0 0.0
    %4341 = vmatpush1.msra.mxu0 0.0
    %4342 = vmatprep.subr.mxu0 0.0
    %4343 = vmatpush1.msra.mxu0 0.0
    %4344 = vmatprep.subr.mxu0 0.0
    %4345 = vmatpush1.msra.mxu0 0.0
    %4346 = vmatprep.subr.mxu0 0.0
    %4347 = vmatpush1.msra.mxu0 0.0
    %4348 = vmatprep.subr.mxu0 0.0
    %4349 = vmatpush1.msra.mxu0 0.0
    %4350 = vmatprep.subr.mxu0 0.0
    %4351 = vmatpush1.msra.mxu0 0.0
    %4352 = vmatprep.subr.mxu0 0.0
    %4353 = vmatpush1.msra.mxu0 0.0
    %4354 = vmatprep.subr.mxu0 0.0
    %4355 = vmatpush1.msra.mxu0 0.0
    %4356 = vmatprep.mubr.f32.mxu0 0.0
    %v4357 = vand.u32 %v4118, 4294901760
    %4358 = vmatmul.mubr.f32.gmra.mrb[0].mxu0 %v4357
    %v4359 = vpop.f32.mrb[0].mxu0
    %v4360 = vadd.f32 %v4208, %v4359
    %v4361 = vpop.f32.mrb[0].mxu0
    %v4362 = vadd.f32 %v4210, %v4361
    %4363 = vdwg.mxu0
    %v4364 = vand.u32 %v578, 4294901760
    %v4365 = vsub.f32 %v578, %v4364
    %4366 = vmatprep.subr.mxu0 %v4365
    %v4367 = vand.u32 %v577, 4294901760
    %v4368 = vsub.f32 %v577, %v4367
    %4369 = vmatpush1.msra.mxu0 %v4368
    %v4370 = vand.u32 %v580, 4294901760
    %v4371 = vsub.f32 %v580, %v4370
    %4372 = vmatprep.subr.mxu0 %v4371
    %v4373 = vand.u32 %v579, 4294901760
    %v4374 = vsub.f32 %v579, %v4373
    %4375 = vmatpush1.msra.mxu0 %v4374
    %v4376 = vand.u32 %v582, 4294901760
    %v4377 = vsub.f32 %v582, %v4376
    %4378 = vmatprep.subr.mxu0 %v4377
    %v4379 = vand.u32 %v581, 4294901760
    %v4380 = vsub.f32 %v581, %v4379
    %4381 = vmatpush1.msra.mxu0 %v4380
    %v4382 = vand.u32 %v584, 4294901760
    %v4383 = vsub.f32 %v584, %v4382
    %4384 = vmatprep.subr.mxu0 %v4383
    %v4385 = vand.u32 %v583, 4294901760
    %v4386 = vsub.f32 %v583, %v4385
    %4387 = vmatpush1.msra.mxu0 %v4386
    %v4388 = vand.u32 %v586, 4294901760
    %v4389 = vsub.f32 %v586, %v4388
    %4390 = vmatprep.subr.mxu0 %v4389
    %v4391 = vand.u32 %v585, 4294901760
    %v4392 = vsub.f32 %v585, %v4391
    %4393 = vmatpush1.msra.mxu0 %v4392
    %v4394 = vand.u32 %v588, 4294901760
    %v4395 = vsub.f32 %v588, %v4394
    %4396 = vmatprep.subr.mxu0 %v4395
    %v4397 = vand.u32 %v587, 4294901760
    %v4398 = vsub.f32 %v587, %v4397
    %4399 = vmatpush1.msra.mxu0 %v4398
    %v4400 = vand.u32 %v590, 4294901760
    %v4401 = vsub.f32 %v590, %v4400
    %4402 = vmatprep.subr.mxu0 %v4401
    %v4403 = vand.u32 %v589, 4294901760
    %v4404 = vsub.f32 %v589, %v4403
    %4405 = vmatpush1.msra.mxu0 %v4404
    %v4406 = vand.u32 %v592, 4294901760
    %v4407 = vsub.f32 %v592, %v4406
    %4408 = vmatprep.subr.mxu0 %v4407
    %v4409 = vand.u32 %v591, 4294901760
    %v4410 = vsub.f32 %v591, %v4409
    %4411 = vmatpush1.msra.mxu0 %v4410
    %4412 = vmatprep.subr.mxu0 0.0
    %4413 = vmatpush1.msra.mxu0 0.0
    %4414 = vmatprep.subr.mxu0 0.0
    %4415 = vmatpush1.msra.mxu0 0.0
    %4416 = vmatprep.subr.mxu0 0.0
    %4417 = vmatpush1.msra.mxu0 0.0
    %4418 = vmatprep.subr.mxu0 0.0
    %4419 = vmatpush1.msra.mxu0 0.0
    %4420 = vmatprep.subr.mxu0 0.0
    %4421 = vmatpush1.msra.mxu0 0.0
    %4422 = vmatprep.subr.mxu0 0.0
    %4423 = vmatpush1.msra.mxu0 0.0
    %4424 = vmatprep.subr.mxu0 0.0
    %4425 = vmatpush1.msra.mxu0 0.0
    %4426 = vmatprep.subr.mxu0 0.0
    %4427 = vmatpush1.msra.mxu0 0.0
    %4428 = vmatprep.subr.mxu0 0.0
    %4429 = vmatpush1.msra.mxu0 0.0
    %4430 = vmatprep.subr.mxu0 0.0
    %4431 = vmatpush1.msra.mxu0 0.0
    %4432 = vmatprep.subr.mxu0 0.0
    %4433 = vmatpush1.msra.mxu0 0.0
    %4434 = vmatprep.subr.mxu0 0.0
    %4435 = vmatpush1.msra.mxu0 0.0
    %4436 = vmatprep.subr.mxu0 0.0
    %4437 = vmatpush1.msra.mxu0 0.0
    %4438 = vmatprep.subr.mxu0 0.0
    %4439 = vmatpush1.msra.mxu0 0.0
    %4440 = vmatprep.subr.mxu0 0.0
    %4441 = vmatpush1.msra.mxu0 0.0
    %4442 = vmatprep.subr.mxu0 0.0
    %4443 = vmatpush1.msra.mxu0 0.0
    %4444 = vmatprep.subr.mxu0 0.0
    %4445 = vmatpush1.msra.mxu0 0.0
    %4446 = vmatprep.subr.mxu0 0.0
    %4447 = vmatpush1.msra.mxu0 0.0
    %4448 = vmatprep.subr.mxu0 0.0
    %4449 = vmatpush1.msra.mxu0 0.0
    %4450 = vmatprep.subr.mxu0 0.0
    %4451 = vmatpush1.msra.mxu0 0.0
    %4452 = vmatprep.subr.mxu0 0.0
    %4453 = vmatpush1.msra.mxu0 0.0
    %4454 = vmatprep.subr.mxu0 0.0
    %4455 = vmatpush1.msra.mxu0 0.0
    %4456 = vmatprep.subr.mxu0 0.0
    %4457 = vmatpush1.msra.mxu0 0.0
    %4458 = vmatprep.subr.mxu0 0.0
    %4459 = vmatpush1.msra.mxu0 0.0
    %4460 = vmatprep.mubr.f32.mxu0 0.0
    %v4461 = vand.u32 %v4118, 4294901760
    %v4462 = vsub.f32 %v4118, %v4461
    %4463 = vmatmul.mubr.f32.gmra.mrb[0].mxu0 %v4462
    %v4464 = vpop.f32.mrb[0].mxu0
    %v4465 = vadd.f32 %v4360, %v4464
    %v4466 = vpop.f32.mrb[0].mxu0
    %v4467 = vadd.f32 %v4362, %v4466
    %4468 = vdwg.mxu0
    %v4469 = vand.u32 %v578, 4294901760
    %4470 = vmatprep.subr.mxu0 %v4469
    %v4471 = vand.u32 %v577, 4294901760
    %4472 = vmatpush1.msra.mxu0 %v4471
    %v4473 = vand.u32 %v580, 4294901760
    %4474 = vmatprep.subr.mxu0 %v4473
    %v4475 = vand.u32 %v579, 4294901760
    %4476 = vmatpush1.msra.mxu0 %v4475
    %v4477 = vand.u32 %v582, 4294901760
    %4478 = vmatprep.subr.mxu0 %v4477
    %v4479 = vand.u32 %v581, 4294901760
    %4480 = vmatpush1.msra.mxu0 %v4479
    %v4481 = vand.u32 %v584, 4294901760
    %4482 = vmatprep.subr.mxu0 %v4481
    %v4483 = vand.u32 %v583, 4294901760
    %4484 = vmatpush1.msra.mxu0 %v4483
    %v4485 = vand.u32 %v586, 4294901760
    %4486 = vmatprep.subr.mxu0 %v4485
    %v4487 = vand.u32 %v585, 4294901760
    %4488 = vmatpush1.msra.mxu0 %v4487
    %v4489 = vand.u32 %v588, 4294901760
    %4490 = vmatprep.subr.mxu0 %v4489
    %v4491 = vand.u32 %v587, 4294901760
    %4492 = vmatpush1.msra.mxu0 %v4491
    %v4493 = vand.u32 %v590, 4294901760
    %4494 = vmatprep.subr.mxu0 %v4493
    %v4495 = vand.u32 %v589, 4294901760
    %4496 = vmatpush1.msra.mxu0 %v4495
    %v4497 = vand.u32 %v592, 4294901760
    %4498 = vmatprep.subr.mxu0 %v4497
    %v4499 = vand.u32 %v591, 4294901760
    %4500 = vmatpush1.msra.mxu0 %v4499
    %4501 = vmatprep.subr.mxu0 0.0
    %4502 = vmatpush1.msra.mxu0 0.0
    %4503 = vmatprep.subr.mxu0 0.0
    %4504 = vmatpush1.msra.mxu0 0.0
    %4505 = vmatprep.subr.mxu0 0.0
    %4506 = vmatpush1.msra.mxu0 0.0
    %4507 = vmatprep.subr.mxu0 0.0
    %4508 = vmatpush1.msra.mxu0 0.0
    %4509 = vmatprep.subr.mxu0 0.0
    %4510 = vmatpush1.msra.mxu0 0.0
    %4511 = vmatprep.subr.mxu0 0.0
    %4512 = vmatpush1.msra.mxu0 0.0
    %4513 = vmatprep.subr.mxu0 0.0
    %4514 = vmatpush1.msra.mxu0 0.0
    %4515 = vmatprep.subr.mxu0 0.0
    %4516 = vmatpush1.msra.mxu0 0.0
    %4517 = vmatprep.subr.mxu0 0.0
    %4518 = vmatpush1.msra.mxu0 0.0
    %4519 = vmatprep.subr.mxu0 0.0
    %4520 = vmatpush1.msra.mxu0 0.0
    %4521 = vmatprep.subr.mxu0 0.0
    %4522 = vmatpush1.msra.mxu0 0.0
    %4523 = vmatprep.subr.mxu0 0.0
    %4524 = vmatpush1.msra.mxu0 0.0
    %4525 = vmatprep.subr.mxu0 0.0
    %4526 = vmatpush1.msra.mxu0 0.0
    %4527 = vmatprep.subr.mxu0 0.0
    %4528 = vmatpush1.msra.mxu0 0.0
    %4529 = vmatprep.subr.mxu0 0.0
    %4530 = vmatpush1.msra.mxu0 0.0
    %4531 = vmatprep.subr.mxu0 0.0
    %4532 = vmatpush1.msra.mxu0 0.0
    %4533 = vmatprep.subr.mxu0 0.0
    %4534 = vmatpush1.msra.mxu0 0.0
    %4535 = vmatprep.subr.mxu0 0.0
    %4536 = vmatpush1.msra.mxu0 0.0
    %4537 = vmatprep.subr.mxu0 0.0
    %4538 = vmatpush1.msra.mxu0 0.0
    %4539 = vmatprep.subr.mxu0 0.0
    %4540 = vmatpush1.msra.mxu0 0.0
    %4541 = vmatprep.subr.mxu0 0.0
    %4542 = vmatpush1.msra.mxu0 0.0
    %4543 = vmatprep.subr.mxu0 0.0
    %4544 = vmatpush1.msra.mxu0 0.0
    %4545 = vmatprep.subr.mxu0 0.0
    %4546 = vmatpush1.msra.mxu0 0.0
    %4547 = vmatprep.subr.mxu0 0.0
    %4548 = vmatpush1.msra.mxu0 0.0
    %4549 = vmatprep.mubr.f32.mxu0 0.0
    %v4550 = vand.u32 %v4118, 4294901760
    %v4551 = vsub.f32 %v4118, %v4550
    %v4552 = vand.u32 %v4551, 4294901760
    %4553 = vmatmul.mubr.f32.gmra.mrb[0].mxu0 %v4552
    %v4554 = vpop.f32.mrb[0].mxu0
    %v4555 = vadd.f32 %v4465, %v4554
    %v4556 = vpop.f32.mrb[0].mxu0
    %v4557 = vadd.f32 %v4467, %v4556
    %4558 = vdwg.mxu0
    %v4559 = vand.u32 %v578, 4294901760
    %v4560 = vsub.f32 %v578, %v4559
    %v4561 = vand.u32 %v4560, 4294901760
    %4562 = vmatprep.subr.mxu0 %v4561
    %v4563 = vand.u32 %v577, 4294901760
    %v4564 = vsub.f32 %v577, %v4563
    %v4565 = vand.u32 %v4564, 4294901760
    %4566 = vmatpush1.msra.mxu0 %v4565
    %v4567 = vand.u32 %v580, 4294901760
    %v4568 = vsub.f32 %v580, %v4567
    %v4569 = vand.u32 %v4568, 4294901760
    %4570 = vmatprep.subr.mxu0 %v4569
    %v4571 = vand.u32 %v579, 4294901760
    %v4572 = vsub.f32 %v579, %v4571
    %v4573 = vand.u32 %v4572, 4294901760
    %4574 = vmatpush1.msra.mxu0 %v4573
    %v4575 = vand.u32 %v582, 4294901760
    %v4576 = vsub.f32 %v582, %v4575
    %v4577 = vand.u32 %v4576, 4294901760
    %4578 = vmatprep.subr.mxu0 %v4577
    %v4579 = vand.u32 %v581, 4294901760
    %v4580 = vsub.f32 %v581, %v4579
    %v4581 = vand.u32 %v4580, 4294901760
    %4582 = vmatpush1.msra.mxu0 %v4581
    %v4583 = vand.u32 %v584, 4294901760
    %v4584 = vsub.f32 %v584, %v4583
    %v4585 = vand.u32 %v4584, 4294901760
    %4586 = vmatprep.subr.mxu0 %v4585
    %v4587 = vand.u32 %v583, 4294901760
    %v4588 = vsub.f32 %v583, %v4587
    %v4589 = vand.u32 %v4588, 4294901760
    %4590 = vmatpush1.msra.mxu0 %v4589
    %v4591 = vand.u32 %v586, 4294901760
    %v4592 = vsub.f32 %v586, %v4591
    %v4593 = vand.u32 %v4592, 4294901760
    %4594 = vmatprep.subr.mxu0 %v4593
    %v4595 = vand.u32 %v585, 4294901760
    %v4596 = vsub.f32 %v585, %v4595
    %v4597 = vand.u32 %v4596, 4294901760
    %4598 = vmatpush1.msra.mxu0 %v4597
    %v4599 = vand.u32 %v588, 4294901760
    %v4600 = vsub.f32 %v588, %v4599
    %v4601 = vand.u32 %v4600, 4294901760
    %4602 = vmatprep.subr.mxu0 %v4601
    %v4603 = vand.u32 %v587, 4294901760
    %v4604 = vsub.f32 %v587, %v4603
    %v4605 = vand.u32 %v4604, 4294901760
    %4606 = vmatpush1.msra.mxu0 %v4605
    %v4607 = vand.u32 %v590, 4294901760
    %v4608 = vsub.f32 %v590, %v4607
    %v4609 = vand.u32 %v4608, 4294901760
    %4610 = vmatprep.subr.mxu0 %v4609
    %v4611 = vand.u32 %v589, 4294901760
    %v4612 = vsub.f32 %v589, %v4611
    %v4613 = vand.u32 %v4612, 4294901760
    %4614 = vmatpush1.msra.mxu0 %v4613
    %v4615 = vand.u32 %v592, 4294901760
    %v4616 = vsub.f32 %v592, %v4615
    %v4617 = vand.u32 %v4616, 4294901760
    %4618 = vmatprep.subr.mxu0 %v4617
    %v4619 = vand.u32 %v591, 4294901760
    %v4620 = vsub.f32 %v591, %v4619
    %v4621 = vand.u32 %v4620, 4294901760
    %4622 = vmatpush1.msra.mxu0 %v4621
    %4623 = vmatprep.subr.mxu0 0.0
    %4624 = vmatpush1.msra.mxu0 0.0
    %4625 = vmatprep.subr.mxu0 0.0
    %4626 = vmatpush1.msra.mxu0 0.0
    %4627 = vmatprep.subr.mxu0 0.0
    %4628 = vmatpush1.msra.mxu0 0.0
    %4629 = vmatprep.subr.mxu0 0.0
    %4630 = vmatpush1.msra.mxu0 0.0
    %4631 = vmatprep.subr.mxu0 0.0
    %4632 = vmatpush1.msra.mxu0 0.0
    %4633 = vmatprep.subr.mxu0 0.0
    %4634 = vmatpush1.msra.mxu0 0.0
    %4635 = vmatprep.subr.mxu0 0.0
    %4636 = vmatpush1.msra.mxu0 0.0
    %4637 = vmatprep.subr.mxu0 0.0
    %4638 = vmatpush1.msra.mxu0 0.0
    %4639 = vmatprep.subr.mxu0 0.0
    %4640 = vmatpush1.msra.mxu0 0.0
    %4641 = vmatprep.subr.mxu0 0.0
    %4642 = vmatpush1.msra.mxu0 0.0
    %4643 = vmatprep.subr.mxu0 0.0
    %4644 = vmatpush1.msra.mxu0 0.0
    %4645 = vmatprep.subr.mxu0 0.0
    %4646 = vmatpush1.msra.mxu0 0.0
    %4647 = vmatprep.subr.mxu0 0.0
    %4648 = vmatpush1.msra.mxu0 0.0
    %4649 = vmatprep.subr.mxu0 0.0
    %4650 = vmatpush1.msra.mxu0 0.0
    %4651 = vmatprep.subr.mxu0 0.0
    %4652 = vmatpush1.msra.mxu0 0.0
    %4653 = vmatprep.subr.mxu0 0.0
    %4654 = vmatpush1.msra.mxu0 0.0
    %4655 = vmatprep.subr.mxu0 0.0
    %4656 = vmatpush1.msra.mxu0 0.0
    %4657 = vmatprep.subr.mxu0 0.0
    %4658 = vmatpush1.msra.mxu0 0.0
    %4659 = vmatprep.subr.mxu0 0.0
    %4660 = vmatpush1.msra.mxu0 0.0
    %4661 = vmatprep.subr.mxu0 0.0
    %4662 = vmatpush1.msra.mxu0 0.0
    %4663 = vmatprep.subr.mxu0 0.0
    %4664 = vmatpush1.msra.mxu0 0.0
    %4665 = vmatprep.subr.mxu0 0.0
    %4666 = vmatpush1.msra.mxu0 0.0
    %4667 = vmatprep.subr.mxu0 0.0
    %4668 = vmatpush1.msra.mxu0 0.0
    %4669 = vmatprep.subr.mxu0 0.0
    %4670 = vmatpush1.msra.mxu0 0.0
    %4671 = vmatprep.mubr.f32.mxu0 0.0
    %v4672 = vand.u32 %v4118, 4294901760
    %4673 = vmatmul.mubr.f32.gmra.mrb[0].mxu0 %v4672
    %v4674 = vpop.f32.mrb[0].mxu0
    %v4675 = vadd.f32 %v4555, %v4674
    %v4676 = vpop.f32.mrb[0].mxu0
    %v4677 = vadd.f32 %v4557, %v4676
    %4678 = vdwg.mxu0
    %v4679 = vand.u32 %v578, 4294901760
    %4680 = vmatprep.subr.mxu0 %v4679
    %v4681 = vand.u32 %v577, 4294901760
    %4682 = vmatpush1.msra.mxu0 %v4681
    %v4683 = vand.u32 %v580, 4294901760
    %4684 = vmatprep.subr.mxu0 %v4683
    %v4685 = vand.u32 %v579, 4294901760
    %4686 = vmatpush1.msra.mxu0 %v4685
    %v4687 = vand.u32 %v582, 4294901760
    %4688 = vmatprep.subr.mxu0 %v4687
    %v4689 = vand.u32 %v581, 4294901760
    %4690 = vmatpush1.msra.mxu0 %v4689
    %v4691 = vand.u32 %v584, 4294901760
    %4692 = vmatprep.subr.mxu0 %v4691
    %v4693 = vand.u32 %v583, 4294901760
    %4694 = vmatpush1.msra.mxu0 %v4693
    %v4695 = vand.u32 %v586, 4294901760
    %4696 = vmatprep.subr.mxu0 %v4695
    %v4697 = vand.u32 %v585, 4294901760
    %4698 = vmatpush1.msra.mxu0 %v4697
    %v4699 = vand.u32 %v588, 4294901760
    %4700 = vmatprep.subr.mxu0 %v4699
    %v4701 = vand.u32 %v587, 4294901760
    %4702 = vmatpush1.msra.mxu0 %v4701
    %v4703 = vand.u32 %v590, 4294901760
    %4704 = vmatprep.subr.mxu0 %v4703
    %v4705 = vand.u32 %v589, 4294901760
    %4706 = vmatpush1.msra.mxu0 %v4705
    %v4707 = vand.u32 %v592, 4294901760
    %4708 = vmatprep.subr.mxu0 %v4707
    %v4709 = vand.u32 %v591, 4294901760
    %4710 = vmatpush1.msra.mxu0 %v4709
    %4711 = vmatprep.subr.mxu0 0.0
    %4712 = vmatpush1.msra.mxu0 0.0
    %4713 = vmatprep.subr.mxu0 0.0
    %4714 = vmatpush1.msra.mxu0 0.0
    %4715 = vmatprep.subr.mxu0 0.0
    %4716 = vmatpush1.msra.mxu0 0.0
    %4717 = vmatprep.subr.mxu0 0.0
    %4718 = vmatpush1.msra.mxu0 0.0
    %4719 = vmatprep.subr.mxu0 0.0
    %4720 = vmatpush1.msra.mxu0 0.0
    %4721 = vmatprep.subr.mxu0 0.0
    %4722 = vmatpush1.msra.mxu0 0.0
    %4723 = vmatprep.subr.mxu0 0.0
    %4724 = vmatpush1.msra.mxu0 0.0
    %4725 = vmatprep.subr.mxu0 0.0
    %4726 = vmatpush1.msra.mxu0 0.0
    %4727 = vmatprep.subr.mxu0 0.0
    %4728 = vmatpush1.msra.mxu0 0.0
    %4729 = vmatprep.subr.mxu0 0.0
    %4730 = vmatpush1.msra.mxu0 0.0
    %4731 = vmatprep.subr.mxu0 0.0
    %4732 = vmatpush1.msra.mxu0 0.0
    %4733 = vmatprep.subr.mxu0 0.0
    %4734 = vmatpush1.msra.mxu0 0.0
    %4735 = vmatprep.subr.mxu0 0.0
    %4736 = vmatpush1.msra.mxu0 0.0
    %4737 = vmatprep.subr.mxu0 0.0
    %4738 = vmatpush1.msra.mxu0 0.0
    %4739 = vmatprep.subr.mxu0 0.0
    %4740 = vmatpush1.msra.mxu0 0.0
    %4741 = vmatprep.subr.mxu0 0.0
    %4742 = vmatpush1.msra.mxu0 0.0
    %4743 = vmatprep.subr.mxu0 0.0
    %4744 = vmatpush1.msra.mxu0 0.0
    %4745 = vmatprep.subr.mxu0 0.0
    %4746 = vmatpush1.msra.mxu0 0.0
    %4747 = vmatprep.subr.mxu0 0.0
    %4748 = vmatpush1.msra.mxu0 0.0
    %4749 = vmatprep.subr.mxu0 0.0
    %4750 = vmatpush1.msra.mxu0 0.0
    %4751 = vmatprep.subr.mxu0 0.0
    %4752 = vmatpush1.msra.mxu0 0.0
    %4753 = vmatprep.subr.mxu0 0.0
    %4754 = vmatpush1.msra.mxu0 0.0
    %4755 = vmatprep.subr.mxu0 0.0
    %4756 = vmatpush1.msra.mxu0 0.0
    %4757 = vmatprep.subr.mxu0 0.0
    %4758 = vmatpush1.msra.mxu0 0.0
    %4759 = vmatprep.mubr.f32.mxu0 0.0
    %v4760 = vand.u32 %v4118, 4294901760
    %4761 = vmatmul.mubr.f32.gmra.mrb[0].mxu0 %v4760
    %v4762 = vpop.f32.mrb[0].mxu0
    %v4763 = vadd.f32 %v4675, %v4762
    %v4764 = vpop.f32.mrb[0].mxu0
    %v4765 = vadd.f32 %v4677, %v4764
    %4766 = vdwg.mxu0
    %v4767 = vld [vmem:[#allocation2 + $0xa] sm:$0x3]
    %v4768 = vadd.f32 %v4763, %v4767
    %v4769 = vtanh.pop %v4768
    %v4770 = vmul.f32 %v4769, 0.5
    %v4771 = vadd.f32 %v4770, 0.5
    %v4772 = vmul.f32 %v4771, %v4076
    %4774 = vrot.lane.b32.xlu0 %v4769, 32
    %v4775 = vpop.permute.xlu0 %4774
    %v4777 = vmul.f32 %v4771, %v4775
    %4779 = vrot.lane.b32.xlu0 %v4777, 32
    %v4780 = vpop.permute.xlu0 %4779
    %v4782 = vadd.f32 %v4772, %v4780
    %v4783 = vtanh.pop %v4782
    %4785 = vrot.lane.b32.xlu0 %v4783, 32
    %v4786 = vpop.permute.xlu0 %4785
    %v4788 = vmul.f32 %v4771, %v4786
    %v4789 = vadd.f32 %v4765, %v1958
    %v4790 = vtanh.pop %v4789
    %v4791 = vmul.f32 %v4790, 0.5
    %v4792 = vadd.f32 %v4791, 0.5
    %v4793 = vmul.f32 %v4792, %v4097
    %4795 = vrot.lane.b32.xlu0 %v4790, 32
    %v4796 = vpop.permute.xlu0 %4795
    %v4798 = vmul.f32 %v4792, %v4796
    %4800 = vrot.lane.b32.xlu0 %v4798, 32
    %v4801 = vpop.permute.xlu0 %4800
    %v4803 = vadd.f32 %v4793, %v4801
    %v4804 = vtanh.pop %v4803
    %4806 = vrot.lane.b32.xlu0 %v4804, 32
    %v4807 = vpop.permute.xlu0 %4806
    %v4809 = vmul.f32 %v4792, %v4807
    %4811 = vrot.lane.b32.xlu0 %v4809, 64
    %v4812 = vpop.permute.xlu0 %4811
    %4814 = vst.msk [vmem:[#allocation3 + $0x8] sm:$0x3] %vm1989, %v4812
    %4816 = vrot.lane.b32.xlu0 %v4788, 64
    %v4817 = vpop.permute.xlu0 %4816
    %4819 = vrot.lane.b32.xlu0 %v4809, 96
    %v4820 = vpop.permute.xlu0 %4819
    %v4822 = vsel %vm604, %v4817, %v4820
    %v4824 = vsel %vm606, %v4822, 0
    %v4826 = vand.u32 %v578, 4294901760
    %4827 = vmatprep.subr.mxu0 %v4826
    %v4828 = vand.u32 %v577, 4294901760
    %4829 = vmatpush1.msra.mxu0 %v4828
    %v4830 = vand.u32 %v580, 4294901760
    %4831 = vmatprep.subr.mxu0 %v4830
    %v4832 = vand.u32 %v579, 4294901760
    %4833 = vmatpush1.msra.mxu0 %v4832
    %v4834 = vand.u32 %v582, 4294901760
    %4835 = vmatprep.subr.mxu0 %v4834
    %v4836 = vand.u32 %v581, 4294901760
    %4837 = vmatpush1.msra.mxu0 %v4836
    %v4838 = vand.u32 %v584, 4294901760
    %4839 = vmatprep.subr.mxu0 %v4838
    %v4840 = vand.u32 %v583, 4294901760
    %4841 = vmatpush1.msra.mxu0 %v4840
    %v4842 = vand.u32 %v586, 4294901760
    %4843 = vmatprep.subr.mxu0 %v4842
    %v4844 = vand.u32 %v585, 4294901760
    %4845 = vmatpush1.msra.mxu0 %v4844
    %v4846 = vand.u32 %v588, 4294901760
    %4847 = vmatprep.subr.mxu0 %v4846
    %v4848 = vand.u32 %v587, 4294901760
    %4849 = vmatpush1.msra.mxu0 %v4848
    %v4850 = vand.u32 %v590, 4294901760
    %4851 = vmatprep.subr.mxu0 %v4850
    %v4852 = vand.u32 %v589, 4294901760
    %4853 = vmatpush1.msra.mxu0 %v4852
    %v4854 = vand.u32 %v592, 4294901760
    %4855 = vmatprep.subr.mxu0 %v4854
    %v4856 = vand.u32 %v591, 4294901760
    %4857 = vmatpush1.msra.mxu0 %v4856
    %4858 = vmatprep.subr.mxu0 0.0
    %4859 = vmatpush1.msra.mxu0 0.0
    %4860 = vmatprep.subr.mxu0 0.0
    %4861 = vmatpush1.msra.mxu0 0.0
    %4862 = vmatprep.subr.mxu0 0.0
    %4863 = vmatpush1.msra.mxu0 0.0
    %4864 = vmatprep.subr.mxu0 0.0
    %4865 = vmatpush1.msra.mxu0 0.0
    %4866 = vmatprep.subr.mxu0 0.0
    %4867 = vmatpush1.msra.mxu0 0.0
    %4868 = vmatprep.subr.mxu0 0.0
    %4869 = vmatpush1.msra.mxu0 0.0
    %4870 = vmatprep.subr.mxu0 0.0
    %4871 = vmatpush1.msra.mxu0 0.0
    %4872 = vmatprep.subr.mxu0 0.0
    %4873 = vmatpush1.msra.mxu0 0.0
    %4874 = vmatprep.subr.mxu0 0.0
    %4875 = vmatpush1.msra.mxu0 0.0
    %4876 = vmatprep.subr.mxu0 0.0
    %4877 = vmatpush1.msra.mxu0 0.0
    %4878 = vmatprep.subr.mxu0 0.0
    %4879 = vmatpush1.msra.mxu0 0.0
    %4880 = vmatprep.subr.mxu0 0.0
    %4881 = vmatpush1.msra.mxu0 0.0
    %4882 = vmatprep.subr.mxu0 0.0
    %4883 = vmatpush1.msra.mxu0 0.0
    %4884 = vmatprep.subr.mxu0 0.0
    %4885 = vmatpush1.msra.mxu0 0.0
    %4886 = vmatprep.subr.mxu0 0.0
    %4887 = vmatpush1.msra.mxu0 0.0
    %4888 = vmatprep.subr.mxu0 0.0
    %4889 = vmatpush1.msra.mxu0 0.0
    %4890 = vmatprep.subr.mxu0 0.0
    %4891 = vmatpush1.msra.mxu0 0.0
    %4892 = vmatprep.subr.mxu0 0.0
    %4893 = vmatpush1.msra.mxu0 0.0
    %4894 = vmatprep.subr.mxu0 0.0
    %4895 = vmatpush1.msra.mxu0 0.0
    %4896 = vmatprep.subr.mxu0 0.0
    %4897 = vmatpush1.msra.mxu0 0.0
    %4898 = vmatprep.subr.mxu0 0.0
    %4899 = vmatpush1.msra.mxu0 0.0
    %4900 = vmatprep.subr.mxu0 0.0
    %4901 = vmatpush1.msra.mxu0 0.0
    %4902 = vmatprep.subr.mxu0 0.0
    %4903 = vmatpush1.msra.mxu0 0.0
    %4904 = vmatprep.subr.mxu0 0.0
    %4905 = vmatpush1.msra.mxu0 0.0
    %4906 = vmatprep.mubr.f32.mxu0 0.0
    %v4907 = vand.u32 %v4824, 4294901760
    %v4908 = vsub.f32 %v4824, %v4907
    %v4909 = vand.u32 %v4908, 4294901760
    %v4910 = vsub.f32 %v4908, %v4909
    %v4911 = vand.u32 %v4910, 4294901760
    %4912 = vmatmul.mubr.f32.gmra.mrb[0].mxu0 %v4911
    %v4913 = vpop.f32.mrb[0].mxu0
    %v4914 = vadd.f32 0.0, %v4913
    %v4915 = vpop.f32.mrb[0].mxu0
    %v4916 = vadd.f32 0.0, %v4915
    %4917 = vdwg.mxu0
    %v4918 = vand.u32 %v578, 4294901760
    %v4919 = vsub.f32 %v578, %v4918
    %v4920 = vand.u32 %v4919, 4294901760
    %v4921 = vsub.f32 %v4919, %v4920
    %v4922 = vand.u32 %v4921, 4294901760
    %4923 = vmatprep.subr.mxu0 %v4922
    %v4924 = vand.u32 %v577, 4294901760
    %v4925 = vsub.f32 %v577, %v4924
    %v4926 = vand.u32 %v4925, 4294901760
    %v4927 = vsub.f32 %v4925, %v4926
    %v4928 = vand.u32 %v4927, 4294901760
    %4929 = vmatpush1.msra.mxu0 %v4928
    %v4930 = vand.u32 %v580, 4294901760
    %v4931 = vsub.f32 %v580, %v4930
    %v4932 = vand.u32 %v4931, 4294901760
    %v4933 = vsub.f32 %v4931, %v4932
    %v4934 = vand.u32 %v4933, 4294901760
    %4935 = vmatprep.subr.mxu0 %v4934
    %v4936 = vand.u32 %v579, 4294901760
    %v4937 = vsub.f32 %v579, %v4936
    %v4938 = vand.u32 %v4937, 4294901760
    %v4939 = vsub.f32 %v4937, %v4938
    %v4940 = vand.u32 %v4939, 4294901760
    %4941 = vmatpush1.msra.mxu0 %v4940
    %v4942 = vand.u32 %v582, 4294901760
    %v4943 = vsub.f32 %v582, %v4942
    %v4944 = vand.u32 %v4943, 4294901760
    %v4945 = vsub.f32 %v4943, %v4944
    %v4946 = vand.u32 %v4945, 4294901760
    %4947 = vmatprep.subr.mxu0 %v4946
    %v4948 = vand.u32 %v581, 4294901760
    %v4949 = vsub.f32 %v581, %v4948
    %v4950 = vand.u32 %v4949, 4294901760
    %v4951 = vsub.f32 %v4949, %v4950
    %v4952 = vand.u32 %v4951, 4294901760
    %4953 = vmatpush1.msra.mxu0 %v4952
    %v4954 = vand.u32 %v584, 4294901760
    %v4955 = vsub.f32 %v584, %v4954
    %v4956 = vand.u32 %v4955, 4294901760
    %v4957 = vsub.f32 %v4955, %v4956
    %v4958 = vand.u32 %v4957, 4294901760
    %4959 = vmatprep.subr.mxu0 %v4958
    %v4960 = vand.u32 %v583, 4294901760
    %v4961 = vsub.f32 %v583, %v4960
    %v4962 = vand.u32 %v4961, 4294901760
    %v4963 = vsub.f32 %v4961, %v4962
    %v4964 = vand.u32 %v4963, 4294901760
    %4965 = vmatpush1.msra.mxu0 %v4964
    %v4966 = vand.u32 %v586, 4294901760
    %v4967 = vsub.f32 %v586, %v4966
    %v4968 = vand.u32 %v4967, 4294901760
    %v4969 = vsub.f32 %v4967, %v4968
    %v4970 = vand.u32 %v4969, 4294901760
    %4971 = vmatprep.subr.mxu0 %v4970
    %v4972 = vand.u32 %v585, 4294901760
    %v4973 = vsub.f32 %v585, %v4972
    %v4974 = vand.u32 %v4973, 4294901760
    %v4975 = vsub.f32 %v4973, %v4974
    %v4976 = vand.u32 %v4975, 4294901760
    %4977 = vmatpush1.msra.mxu0 %v4976
    %v4978 = vand.u32 %v588, 4294901760
    %v4979 = vsub.f32 %v588, %v4978
    %v4980 = vand.u32 %v4979, 4294901760
    %v4981 = vsub.f32 %v4979, %v4980
    %v4982 = vand.u32 %v4981, 4294901760
    %4983 = vmatprep.subr.mxu0 %v4982
    %v4984 = vand.u32 %v587, 4294901760
    %v4985 = vsub.f32 %v587, %v4984
    %v4986 = vand.u32 %v4985, 4294901760
    %v4987 = vsub.f32 %v4985, %v4986
    %v4988 = vand.u32 %v4987, 4294901760
    %4989 = vmatpush1.msra.mxu0 %v4988
    %v4990 = vand.u32 %v590, 4294901760
    %v4991 = vsub.f32 %v590, %v4990
    %v4992 = vand.u32 %v4991, 4294901760
    %v4993 = vsub.f32 %v4991, %v4992
    %v4994 = vand.u32 %v4993, 4294901760
    %4995 = vmatprep.subr.mxu0 %v4994
    %v4996 = vand.u32 %v589, 4294901760
    %v4997 = vsub.f32 %v589, %v4996
    %v4998 = vand.u32 %v4997, 4294901760
    %v4999 = vsub.f32 %v4997, %v4998
    %v5000 = vand.u32 %v4999, 4294901760
    %5001 = vmatpush1.msra.mxu0 %v5000
    %v5002 = vand.u32 %v592, 4294901760
    %v5003 = vsub.f32 %v592, %v5002
    %v5004 = vand.u32 %v5003, 4294901760
    %v5005 = vsub.f32 %v5003, %v5004
    %v5006 = vand.u32 %v5005, 4294901760
    %5007 = vmatprep.subr.mxu0 %v5006
    %v5008 = vand.u32 %v591, 4294901760
    %v5009 = vsub.f32 %v591, %v5008
    %v5010 = vand.u32 %v5009, 4294901760
    %v5011 = vsub.f32 %v5009, %v5010
    %v5012 = vand.u32 %v5011, 4294901760
    %5013 = vmatpush1.msra.mxu0 %v5012
    %5014 = vmatprep.subr.mxu0 0.0
    %5015 = vmatpush1.msra.mxu0 0.0
    %5016 = vmatprep.subr.mxu0 0.0
    %5017 = vmatpush1.msra.mxu0 0.0
    %5018 = vmatprep.subr.mxu0 0.0
    %5019 = vmatpush1.msra.mxu0 0.0
    %5020 = vmatprep.subr.mxu0 0.0
    %5021 = vmatpush1.msra.mxu0 0.0
    %5022 = vmatprep.subr.mxu0 0.0
    %5023 = vmatpush1.msra.mxu0 0.0
    %5024 = vmatprep.subr.mxu0 0.0
    %5025 = vmatpush1.msra.mxu0 0.0
    %5026 = vmatprep.subr.mxu0 0.0
    %5027 = vmatpush1.msra.mxu0 0.0
    %5028 = vmatprep.subr.mxu0 0.0
    %5029 = vmatpush1.msra.mxu0 0.0
    %5030 = vmatprep.subr.mxu0 0.0
    %5031 = vmatpush1.msra.mxu0 0.0
    %5032 = vmatprep.subr.mxu0 0.0
    %5033 = vmatpush1.msra.mxu0 0.0
    %5034 = vmatprep.subr.mxu0 0.0
    %5035 = vmatpush1.msra.mxu0 0.0
    %5036 = vmatprep.subr.mxu0 0.0
    %5037 = vmatpush1.msra.mxu0 0.0
    %5038 = vmatprep.subr.mxu0 0.0
    %5039 = vmatpush1.msra.mxu0 0.0
    %5040 = vmatprep.subr.mxu0 0.0
    %5041 = vmatpush1.msra.mxu0 0.0
    %5042 = vmatprep.subr.mxu0 0.0
    %5043 = vmatpush1.msra.mxu0 0.0
    %5044 = vmatprep.subr.mxu0 0.0
    %5045 = vmatpush1.msra.mxu0 0.0
    %5046 = vmatprep.subr.mxu0 0.0
    %5047 = vmatpush1.msra.mxu0 0.0
    %5048 = vmatprep.subr.mxu0 0.0
    %5049 = vmatpush1.msra.mxu0 0.0
    %5050 = vmatprep.subr.mxu0 0.0
    %5051 = vmatpush1.msra.mxu0 0.0
    %5052 = vmatprep.subr.mxu0 0.0
    %5053 = vmatpush1.msra.mxu0 0.0
    %5054 = vmatprep.subr.mxu0 0.0
    %5055 = vmatpush1.msra.mxu0 0.0
    %5056 = vmatprep.subr.mxu0 0.0
    %5057 = vmatpush1.msra.mxu0 0.0
    %5058 = vmatprep.subr.mxu0 0.0
    %5059 = vmatpush1.msra.mxu0 0.0
    %5060 = vmatprep.subr.mxu0 0.0
    %5061 = vmatpush1.msra.mxu0 0.0
    %5062 = vmatprep.mubr.f32.mxu0 0.0
    %v5063 = vand.u32 %v4824, 4294901760
    %5064 = vmatmul.mubr.f32.gmra.mrb[0].mxu0 %v5063
    %v5065 = vpop.f32.mrb[0].mxu0
    %v5066 = vadd.f32 %v4914, %v5065
    %v5067 = vpop.f32.mrb[0].mxu0
    %v5068 = vadd.f32 %v4916, %v5067
    %5069 = vdwg.mxu0
    %v5070 = vand.u32 %v578, 4294901760
    %v5071 = vsub.f32 %v578, %v5070
    %5072 = vmatprep.subr.mxu0 %v5071
    %v5073 = vand.u32 %v577, 4294901760
    %v5074 = vsub.f32 %v577, %v5073
    %5075 = vmatpush1.msra.mxu0 %v5074
    %v5076 = vand.u32 %v580, 4294901760
    %v5077 = vsub.f32 %v580, %v5076
    %5078 = vmatprep.subr.mxu0 %v5077
    %v5079 = vand.u32 %v579, 4294901760
    %v5080 = vsub.f32 %v579, %v5079
    %5081 = vmatpush1.msra.mxu0 %v5080
    %v5082 = vand.u32 %v582, 4294901760
    %v5083 = vsub.f32 %v582, %v5082
    %5084 = vmatprep.subr.mxu0 %v5083
    %v5085 = vand.u32 %v581, 4294901760
    %v5086 = vsub.f32 %v581, %v5085
    %5087 = vmatpush1.msra.mxu0 %v5086
    %v5088 = vand.u32 %v584, 4294901760
    %v5089 = vsub.f32 %v584, %v5088
    %5090 = vmatprep.subr.mxu0 %v5089
    %v5091 = vand.u32 %v583, 4294901760
    %v5092 = vsub.f32 %v583, %v5091
    %5093 = vmatpush1.msra.mxu0 %v5092
    %v5094 = vand.u32 %v586, 4294901760
    %v5095 = vsub.f32 %v586, %v5094
    %5096 = vmatprep.subr.mxu0 %v5095
    %v5097 = vand.u32 %v585, 4294901760
    %v5098 = vsub.f32 %v585, %v5097
    %5099 = vmatpush1.msra.mxu0 %v5098
    %v5100 = vand.u32 %v588, 4294901760
    %v5101 = vsub.f32 %v588, %v5100
    %5102 = vmatprep.subr.mxu0 %v5101
    %v5103 = vand.u32 %v587, 4294901760
    %v5104 = vsub.f32 %v587, %v5103
    %5105 = vmatpush1.msra.mxu0 %v5104
    %v5106 = vand.u32 %v590, 4294901760
    %v5107 = vsub.f32 %v590, %v5106
    %5108 = vmatprep.subr.mxu0 %v5107
    %v5109 = vand.u32 %v589, 4294901760
    %v5110 = vsub.f32 %v589, %v5109
    %5111 = vmatpush1.msra.mxu0 %v5110
    %v5112 = vand.u32 %v592, 4294901760
    %v5113 = vsub.f32 %v592, %v5112
    %5114 = vmatprep.subr.mxu0 %v5113
    %v5115 = vand.u32 %v591, 4294901760
    %v5116 = vsub.f32 %v591, %v5115
    %5117 = vmatpush1.msra.mxu0 %v5116
    %5118 = vmatprep.subr.mxu0 0.0
    %5119 = vmatpush1.msra.mxu0 0.0
    %5120 = vmatprep.subr.mxu0 0.0
    %5121 = vmatpush1.msra.mxu0 0.0
    %5122 = vmatprep.subr.mxu0 0.0
    %5123 = vmatpush1.msra.mxu0 0.0
    %5124 = vmatprep.subr.mxu0 0.0
    %5125 = vmatpush1.msra.mxu0 0.0
    %5126 = vmatprep.subr.mxu0 0.0
    %5127 = vmatpush1.msra.mxu0 0.0
    %5128 = vmatprep.subr.mxu0 0.0
    %5129 = vmatpush1.msra.mxu0 0.0
    %5130 = vmatprep.subr.mxu0 0.0
    %5131 = vmatpush1.msra.mxu0 0.0
    %5132 = vmatprep.subr.mxu0 0.0
    %5133 = vmatpush1.msra.mxu0 0.0
    %5134 = vmatprep.subr.mxu0 0.0
    %5135 = vmatpush1.msra.mxu0 0.0
    %5136 = vmatprep.subr.mxu0 0.0
    %5137 = vmatpush1.msra.mxu0 0.0
    %5138 = vmatprep.subr.mxu0 0.0
    %5139 = vmatpush1.msra.mxu0 0.0
    %5140 = vmatprep.subr.mxu0 0.0
    %5141 = vmatpush1.msra.mxu0 0.0
    %5142 = vmatprep.subr.mxu0 0.0
    %5143 = vmatpush1.msra.mxu0 0.0
    %5144 = vmatprep.subr.mxu0 0.0
    %5145 = vmatpush1.msra.mxu0 0.0
    %5146 = vmatprep.subr.mxu0 0.0
    %5147 = vmatpush1.msra.mxu0 0.0
    %5148 = vmatprep.subr.mxu0 0.0
    %5149 = vmatpush1.msra.mxu0 0.0
    %5150 = vmatprep.subr.mxu0 0.0
    %5151 = vmatpush1.msra.mxu0 0.0
    %5152 = vmatprep.subr.mxu0 0.0
    %5153 = vmatpush1.msra.mxu0 0.0
    %5154 = vmatprep.subr.mxu0 0.0
    %5155 = vmatpush1.msra.mxu0 0.0
    %5156 = vmatprep.subr.mxu0 0.0
    %5157 = vmatpush1.msra.mxu0 0.0
    %5158 = vmatprep.subr.mxu0 0.0
    %5159 = vmatpush1.msra.mxu0 0.0
    %5160 = vmatprep.subr.mxu0 0.0
    %5161 = vmatpush1.msra.mxu0 0.0
    %5162 = vmatprep.subr.mxu0 0.0
    %5163 = vmatpush1.msra.mxu0 0.0
    %5164 = vmatprep.subr.mxu0 0.0
    %5165 = vmatpush1.msra.mxu0 0.0
    %5166 = vmatprep.mubr.f32.mxu0 0.0
    %v5167 = vand.u32 %v4824, 4294901760
    %v5168 = vsub.f32 %v4824, %v5167
    %5169 = vmatmul.mubr.f32.gmra.mrb[0].mxu0 %v5168
    %v5170 = vpop.f32.mrb[0].mxu0
    %v5171 = vadd.f32 %v5066, %v5170
    %v5172 = vpop.f32.mrb[0].mxu0
    %v5173 = vadd.f32 %v5068, %v5172
    %5174 = vdwg.mxu0
    %v5175 = vand.u32 %v578, 4294901760
    %5176 = vmatprep.subr.mxu0 %v5175
    %v5177 = vand.u32 %v577, 4294901760
    %5178 = vmatpush1.msra.mxu0 %v5177
    %v5179 = vand.u32 %v580, 4294901760
    %5180 = vmatprep.subr.mxu0 %v5179
    %v5181 = vand.u32 %v579, 4294901760
    %5182 = vmatpush1.msra.mxu0 %v5181
    %v5183 = vand.u32 %v582, 4294901760
    %5184 = vmatprep.subr.mxu0 %v5183
    %v5185 = vand.u32 %v581, 4294901760
    %5186 = vmatpush1.msra.mxu0 %v5185
    %v5187 = vand.u32 %v584, 4294901760
    %5188 = vmatprep.subr.mxu0 %v5187
    %v5189 = vand.u32 %v583, 4294901760
    %5190 = vmatpush1.msra.mxu0 %v5189
    %v5191 = vand.u32 %v586, 4294901760
    %5192 = vmatprep.subr.mxu0 %v5191
    %v5193 = vand.u32 %v585, 4294901760
    %5194 = vmatpush1.msra.mxu0 %v5193
    %v5195 = vand.u32 %v588, 4294901760
    %5196 = vmatprep.subr.mxu0 %v5195
    %v5197 = vand.u32 %v587, 4294901760
    %5198 = vmatpush1.msra.mxu0 %v5197
    %v5199 = vand.u32 %v590, 4294901760
    %5200 = vmatprep.subr.mxu0 %v5199
    %v5201 = vand.u32 %v589, 4294901760
    %5202 = vmatpush1.msra.mxu0 %v5201
    %v5203 = vand.u32 %v592, 4294901760
    %5204 = vmatprep.subr.mxu0 %v5203
    %v5205 = vand.u32 %v591, 4294901760
    %5206 = vmatpush1.msra.mxu0 %v5205
    %5207 = vmatprep.subr.mxu0 0.0
    %5208 = vmatpush1.msra.mxu0 0.0
    %5209 = vmatprep.subr.mxu0 0.0
    %5210 = vmatpush1.msra.mxu0 0.0
    %5211 = vmatprep.subr.mxu0 0.0
    %5212 = vmatpush1.msra.mxu0 0.0
    %5213 = vmatprep.subr.mxu0 0.0
    %5214 = vmatpush1.msra.mxu0 0.0
    %5215 = vmatprep.subr.mxu0 0.0
    %5216 = vmatpush1.msra.mxu0 0.0
    %5217 = vmatprep.subr.mxu0 0.0
    %5218 = vmatpush1.msra.mxu0 0.0
    %5219 = vmatprep.subr.mxu0 0.0
    %5220 = vmatpush1.msra.mxu0 0.0
    %5221 = vmatprep.subr.mxu0 0.0
    %5222 = vmatpush1.msra.mxu0 0.0
    %5223 = vmatprep.subr.mxu0 0.0
    %5224 = vmatpush1.msra.mxu0 0.0
    %5225 = vmatprep.subr.mxu0 0.0
    %5226 = vmatpush1.msra.mxu0 0.0
    %5227 = vmatprep.subr.mxu0 0.0
    %5228 = vmatpush1.msra.mxu0 0.0
    %5229 = vmatprep.subr.mxu0 0.0
    %5230 = vmatpush1.msra.mxu0 0.0
    %5231 = vmatprep.subr.mxu0 0.0
    %5232 = vmatpush1.msra.mxu0 0.0
    %5233 = vmatprep.subr.mxu0 0.0
    %5234 = vmatpush1.msra.mxu0 0.0
    %5235 = vmatprep.subr.mxu0 0.0
    %5236 = vmatpush1.msra.mxu0 0.0
    %5237 = vmatprep.subr.mxu0 0.0
    %5238 = vmatpush1.msra.mxu0 0.0
    %5239 = vmatprep.subr.mxu0 0.0
    %5240 = vmatpush1.msra.mxu0 0.0
    %5241 = vmatprep.subr.mxu0 0.0
    %5242 = vmatpush1.msra.mxu0 0.0
    %5243 = vmatprep.subr.mxu0 0.0
    %5244 = vmatpush1.msra.mxu0 0.0
    %5245 = vmatprep.subr.mxu0 0.0
    %5246 = vmatpush1.msra.mxu0 0.0
    %5247 = vmatprep.subr.mxu0 0.0
    %5248 = vmatpush1.msra.mxu0 0.0
    %5249 = vmatprep.subr.mxu0 0.0
    %5250 = vmatpush1.msra.mxu0 0.0
    %5251 = vmatprep.subr.mxu0 0.0
    %5252 = vmatpush1.msra.mxu0 0.0
    %5253 = vmatprep.subr.mxu0 0.0
    %5254 = vmatpush1.msra.mxu0 0.0
    %5255 = vmatprep.mubr.f32.mxu0 0.0
    %v5256 = vand.u32 %v4824, 4294901760
    %v5257 = vsub.f32 %v4824, %v5256
    %v5258 = vand.u32 %v5257, 4294901760
    %5259 = vmatmul.mubr.f32.gmra.mrb[0].mxu0 %v5258
    %v5260 = vpop.f32.mrb[0].mxu0
    %v5261 = vadd.f32 %v5171, %v5260
    %v5262 = vpop.f32.mrb[0].mxu0
    %v5263 = vadd.f32 %v5173, %v5262
    %5264 = vdwg.mxu0
    %v5265 = vand.u32 %v578, 4294901760
    %v5266 = vsub.f32 %v578, %v5265
    %v5267 = vand.u32 %v5266, 4294901760
    %5268 = vmatprep.subr.mxu0 %v5267
    %v5269 = vand.u32 %v577, 4294901760
    %v5270 = vsub.f32 %v577, %v5269
    %v5271 = vand.u32 %v5270, 4294901760
    %5272 = vmatpush1.msra.mxu0 %v5271
    %v5273 = vand.u32 %v580, 4294901760
    %v5274 = vsub.f32 %v580, %v5273
    %v5275 = vand.u32 %v5274, 4294901760
    %5276 = vmatprep.subr.mxu0 %v5275
    %v5277 = vand.u32 %v579, 4294901760
    %v5278 = vsub.f32 %v579, %v5277
    %v5279 = vand.u32 %v5278, 4294901760
    %5280 = vmatpush1.msra.mxu0 %v5279
    %v5281 = vand.u32 %v582, 4294901760
    %v5282 = vsub.f32 %v582, %v5281
    %v5283 = vand.u32 %v5282, 4294901760
    %5284 = vmatprep.subr.mxu0 %v5283
    %v5285 = vand.u32 %v581, 4294901760
    %v5286 = vsub.f32 %v581, %v5285
    %v5287 = vand.u32 %v5286, 4294901760
    %5288 = vmatpush1.msra.mxu0 %v5287
    %v5289 = vand.u32 %v584, 4294901760
    %v5290 = vsub.f32 %v584, %v5289
    %v5291 = vand.u32 %v5290, 4294901760
    %5292 = vmatprep.subr.mxu0 %v5291
    %v5293 = vand.u32 %v583, 4294901760
    %v5294 = vsub.f32 %v583, %v5293
    %v5295 = vand.u32 %v5294, 4294901760
    %5296 = vmatpush1.msra.mxu0 %v5295
    %v5297 = vand.u32 %v586, 4294901760
    %v5298 = vsub.f32 %v586, %v5297
    %v5299 = vand.u32 %v5298, 4294901760
    %5300 = vmatprep.subr.mxu0 %v5299
    %v5301 = vand.u32 %v585, 4294901760
    %v5302 = vsub.f32 %v585, %v5301
    %v5303 = vand.u32 %v5302, 4294901760
    %5304 = vmatpush1.msra.mxu0 %v5303
    %v5305 = vand.u32 %v588, 4294901760
    %v5306 = vsub.f32 %v588, %v5305
    %v5307 = vand.u32 %v5306, 4294901760
    %5308 = vmatprep.subr.mxu0 %v5307
    %v5309 = vand.u32 %v587, 4294901760
    %v5310 = vsub.f32 %v587, %v5309
    %v5311 = vand.u32 %v5310, 4294901760
    %5312 = vmatpush1.msra.mxu0 %v5311
    %v5313 = vand.u32 %v590, 4294901760
    %v5314 = vsub.f32 %v590, %v5313
    %v5315 = vand.u32 %v5314, 4294901760
    %5316 = vmatprep.subr.mxu0 %v5315
    %v5317 = vand.u32 %v589, 4294901760
    %v5318 = vsub.f32 %v589, %v5317
    %v5319 = vand.u32 %v5318, 4294901760
    %5320 = vmatpush1.msra.mxu0 %v5319
    %v5321 = vand.u32 %v592, 4294901760
    %v5322 = vsub.f32 %v592, %v5321
    %v5323 = vand.u32 %v5322, 4294901760
    %5324 = vmatprep.subr.mxu0 %v5323
    %v5325 = vand.u32 %v591, 4294901760
    %v5326 = vsub.f32 %v591, %v5325
    %v5327 = vand.u32 %v5326, 4294901760
    %5328 = vmatpush1.msra.mxu0 %v5327
    %5329 = vmatprep.subr.mxu0 0.0
    %5330 = vmatpush1.msra.mxu0 0.0
    %5331 = vmatprep.subr.mxu0 0.0
    %5332 = vmatpush1.msra.mxu0 0.0
    %5333 = vmatprep.subr.mxu0 0.0
    %5334 = vmatpush1.msra.mxu0 0.0
    %5335 = vmatprep.subr.mxu0 0.0
    %5336 = vmatpush1.msra.mxu0 0.0
    %5337 = vmatprep.subr.mxu0 0.0
    %5338 = vmatpush1.msra.mxu0 0.0
    %5339 = vmatprep.subr.mxu0 0.0
    %5340 = vmatpush1.msra.mxu0 0.0
    %5341 = vmatprep.subr.mxu0 0.0
    %5342 = vmatpush1.msra.mxu0 0.0
    %5343 = vmatprep.subr.mxu0 0.0
    %5344 = vmatpush1.msra.mxu0 0.0
    %5345 = vmatprep.subr.mxu0 0.0
    %5346 = vmatpush1.msra.mxu0 0.0
    %5347 = vmatprep.subr.mxu0 0.0
    %5348 = vmatpush1.msra.mxu0 0.0
    %5349 = vmatprep.subr.mxu0 0.0
    %5350 = vmatpush1.msra.mxu0 0.0
    %5351 = vmatprep.subr.mxu0 0.0
    %5352 = vmatpush1.msra.mxu0 0.0
    %5353 = vmatprep.subr.mxu0 0.0
    %5354 = vmatpush1.msra.mxu0 0.0
    %5355 = vmatprep.subr.mxu0 0.0
    %5356 = vmatpush1.msra.mxu0 0.0
    %5357 = vmatprep.subr.mxu0 0.0
    %5358 = vmatpush1.msra.mxu0 0.0
    %5359 = vmatprep.subr.mxu0 0.0
    %5360 = vmatpush1.msra.mxu0 0.0
    %5361 = vmatprep.subr.mxu0 0.0
    %5362 = vmatpush1.msra.mxu0 0.0
    %5363 = vmatprep.subr.mxu0 0.0
    %5364 = vmatpush1.msra.mxu0 0.0
    %5365 = vmatprep.subr.mxu0 0.0
    %5366 = vmatpush1.msra.mxu0 0.0
    %5367 = vmatprep.subr.mxu0 0.0
    %5368 = vmatpush1.msra.mxu0 0.0
    %5369 = vmatprep.subr.mxu0 0.0
    %5370 = vmatpush1.msra.mxu0 0.0
    %5371 = vmatprep.subr.mxu0 0.0
    %5372 = vmatpush1.msra.mxu0 0.0
    %5373 = vmatprep.subr.mxu0 0.0
    %5374 = vmatpush1.msra.mxu0 0.0
    %5375 = vmatprep.subr.mxu0 0.0
    %5376 = vmatpush1.msra.mxu0 0.0
    %5377 = vmatprep.mubr.f32.mxu0 0.0
    %v5378 = vand.u32 %v4824, 4294901760
    %5379 = vmatmul.mubr.f32.gmra.mrb[0].mxu0 %v5378
    %v5380 = vpop.f32.mrb[0].mxu0
    %v5381 = vadd.f32 %v5261, %v5380
    %v5382 = vpop.f32.mrb[0].mxu0
    %v5383 = vadd.f32 %v5263, %v5382
    %5384 = vdwg.mxu0
    %v5385 = vand.u32 %v578, 4294901760
    %5386 = vmatprep.subr.mxu0 %v5385
    %v5387 = vand.u32 %v577, 4294901760
    %5388 = vmatpush1.msra.mxu0 %v5387
    %v5389 = vand.u32 %v580, 4294901760
    %5390 = vmatprep.subr.mxu0 %v5389
    %v5391 = vand.u32 %v579, 4294901760
    %5392 = vmatpush1.msra.mxu0 %v5391
    %v5393 = vand.u32 %v582, 4294901760
    %5394 = vmatprep.subr.mxu0 %v5393
    %v5395 = vand.u32 %v581, 4294901760
    %5396 = vmatpush1.msra.mxu0 %v5395
    %v5397 = vand.u32 %v584, 4294901760
    %5398 = vmatprep.subr.mxu0 %v5397
    %v5399 = vand.u32 %v583, 4294901760
    %5400 = vmatpush1.msra.mxu0 %v5399
    %v5401 = vand.u32 %v586, 4294901760
    %5402 = vmatprep.subr.mxu0 %v5401
    %v5403 = vand.u32 %v585, 4294901760
    %5404 = vmatpush1.msra.mxu0 %v5403
    %v5405 = vand.u32 %v588, 4294901760
    %5406 = vmatprep.subr.mxu0 %v5405
    %v5407 = vand.u32 %v587, 4294901760
    %5408 = vmatpush1.msra.mxu0 %v5407
    %v5409 = vand.u32 %v590, 4294901760
    %5410 = vmatprep.subr.mxu0 %v5409
    %v5411 = vand.u32 %v589, 4294901760
    %5412 = vmatpush1.msra.mxu0 %v5411
    %v5413 = vand.u32 %v592, 4294901760
    %5414 = vmatprep.subr.mxu0 %v5413
    %v5415 = vand.u32 %v591, 4294901760
    %5416 = vmatpush1.msra.mxu0 %v5415
    %5417 = vmatprep.subr.mxu0 0.0
    %5418 = vmatpush1.msra.mxu0 0.0
    %5419 = vmatprep.subr.mxu0 0.0
    %5420 = vmatpush1.msra.mxu0 0.0
    %5421 = vmatprep.subr.mxu0 0.0
    %5422 = vmatpush1.msra.mxu0 0.0
    %5423 = vmatprep.subr.mxu0 0.0
    %5424 = vmatpush1.msra.mxu0 0.0
    %5425 = vmatprep.subr.mxu0 0.0
    %5426 = vmatpush1.msra.mxu0 0.0
    %5427 = vmatprep.subr.mxu0 0.0
    %5428 = vmatpush1.msra.mxu0 0.0
    %5429 = vmatprep.subr.mxu0 0.0
    %5430 = vmatpush1.msra.mxu0 0.0
    %5431 = vmatprep.subr.mxu0 0.0
    %5432 = vmatpush1.msra.mxu0 0.0
    %5433 = vmatprep.subr.mxu0 0.0
    %5434 = vmatpush1.msra.mxu0 0.0
    %5435 = vmatprep.subr.mxu0 0.0
    %5436 = vmatpush1.msra.mxu0 0.0
    %5437 = vmatprep.subr.mxu0 0.0
    %5438 = vmatpush1.msra.mxu0 0.0
    %5439 = vmatprep.subr.mxu0 0.0
    %5440 = vmatpush1.msra.mxu0 0.0
    %5441 = vmatprep.subr.mxu0 0.0
    %5442 = vmatpush1.msra.mxu0 0.0
    %5443 = vmatprep.subr.mxu0 0.0
    %5444 = vmatpush1.msra.mxu0 0.0
    %5445 = vmatprep.subr.mxu0 0.0
    %5446 = vmatpush1.msra.mxu0 0.0
    %5447 = vmatprep.subr.mxu0 0.0
    %5448 = vmatpush1.msra.mxu0 0.0
    %5449 = vmatprep.subr.mxu0 0.0
    %5450 = vmatpush1.msra.mxu0 0.0
    %5451 = vmatprep.subr.mxu0 0.0
    %5452 = vmatpush1.msra.mxu0 0.0
    %5453 = vmatprep.subr.mxu0 0.0
    %5454 = vmatpush1.msra.mxu0 0.0
    %5455 = vmatprep.subr.mxu0 0.0
    %5456 = vmatpush1.msra.mxu0 0.0
    %5457 = vmatprep.subr.mxu0 0.0
    %5458 = vmatpush1.msra.mxu0 0.0
    %5459 = vmatprep.subr.mxu0 0.0
    %5460 = vmatpush1.msra.mxu0 0.0
    %5461 = vmatprep.subr.mxu0 0.0
    %5462 = vmatpush1.msra.mxu0 0.0
    %5463 = vmatprep.subr.mxu0 0.0
    %5464 = vmatpush1.msra.mxu0 0.0
    %5465 = vmatprep.mubr.f32.mxu0 0.0
    %v5466 = vand.u32 %v4824, 4294901760
    %5467 = vmatmul.mubr.f32.gmra.mrb[0].mxu0 %v5466
    %v5468 = vpop.f32.mrb[0].mxu0
    %v5469 = vadd.f32 %v5381, %v5468
    %v5470 = vpop.f32.mrb[0].mxu0
    %v5471 = vadd.f32 %v5383, %v5470
    %5472 = vdwg.mxu0
    %v5473 = vld [vmem:[#allocation2 + $0xc] sm:$0x3]
    %v5474 = vadd.f32 %v5469, %v5473
    %v5475 = vtanh.pop %v5474
    %v5476 = vmul.f32 %v5475, 0.5
    %v5477 = vadd.f32 %v5476, 0.5
    %v5478 = vmul.f32 %v5477, %v4782
    %5480 = vrot.lane.b32.xlu0 %v5475, 32
    %v5481 = vpop.permute.xlu0 %5480
    %v5483 = vmul.f32 %v5477, %v5481
    %5485 = vrot.lane.b32.xlu0 %v5483, 32
    %v5486 = vpop.permute.xlu0 %5485
    %v5488 = vadd.f32 %v5478, %v5486
    %v5489 = vtanh.pop %v5488
    %5491 = vrot.lane.b32.xlu0 %v5489, 32
    %v5492 = vpop.permute.xlu0 %5491
    %v5494 = vmul.f32 %v5477, %v5492
    %v5495 = vadd.f32 %v5471, %v1958
    %v5496 = vtanh.pop %v5495
    %v5497 = vmul.f32 %v5496, 0.5
    %v5498 = vadd.f32 %v5497, 0.5
    %v5499 = vmul.f32 %v5498, %v4803
    %5501 = vrot.lane.b32.xlu0 %v5496, 32
    %v5502 = vpop.permute.xlu0 %5501
    %v5504 = vmul.f32 %v5498, %v5502
    %5506 = vrot.lane.b32.xlu0 %v5504, 32
    %v5507 = vpop.permute.xlu0 %5506
    %v5509 = vadd.f32 %v5499, %v5507
    %v5510 = vtanh.pop %v5509
    %5512 = vrot.lane.b32.xlu0 %v5510, 32
    %v5513 = vpop.permute.xlu0 %5512
    %v5515 = vmul.f32 %v5498, %v5513
    %5517 = vrot.lane.b32.xlu0 %v5515, 64
    %v5518 = vpop.permute.xlu0 %5517
    %5520 = vst.msk [vmem:[#allocation3 + $0xa] sm:$0x3] %vm1989, %v5518
    %5522 = vrot.lane.b32.xlu0 %v5494, 64
    %v5523 = vpop.permute.xlu0 %5522
    %5525 = vrot.lane.b32.xlu0 %v5515, 96
    %v5526 = vpop.permute.xlu0 %5525
    %v5528 = vsel %vm604, %v5523, %v5526
    %v5530 = vsel %vm606, %v5528, 0
    %v5532 = vand.u32 %v578, 4294901760
    %5533 = vmatprep.subr.mxu0 %v5532
    %v5534 = vand.u32 %v577, 4294901760
    %5535 = vmatpush1.msra.mxu0 %v5534
    %v5536 = vand.u32 %v580, 4294901760
    %5537 = vmatprep.subr.mxu0 %v5536
    %v5538 = vand.u32 %v579, 4294901760
    %5539 = vmatpush1.msra.mxu0 %v5538
    %v5540 = vand.u32 %v582, 4294901760
    %5541 = vmatprep.subr.mxu0 %v5540
    %v5542 = vand.u32 %v581, 4294901760
    %5543 = vmatpush1.msra.mxu0 %v5542
    %v5544 = vand.u32 %v584, 4294901760
    %5545 = vmatprep.subr.mxu0 %v5544
    %v5546 = vand.u32 %v583, 4294901760
    %5547 = vmatpush1.msra.mxu0 %v5546
    %v5548 = vand.u32 %v586, 4294901760
    %5549 = vmatprep.subr.mxu0 %v5548
    %v5550 = vand.u32 %v585, 4294901760
    %5551 = vmatpush1.msra.mxu0 %v5550
    %v5552 = vand.u32 %v588, 4294901760
    %5553 = vmatprep.subr.mxu0 %v5552
    %v5554 = vand.u32 %v587, 4294901760
    %5555 = vmatpush1.msra.mxu0 %v5554
    %v5556 = vand.u32 %v590, 4294901760
    %5557 = vmatprep.subr.mxu0 %v5556
    %v5558 = vand.u32 %v589, 4294901760
    %5559 = vmatpush1.msra.mxu0 %v5558
    %v5560 = vand.u32 %v592, 4294901760
    %5561 = vmatprep.subr.mxu0 %v5560
    %v5562 = vand.u32 %v591, 4294901760
    %5563 = vmatpush1.msra.mxu0 %v5562
    %5564 = vmatprep.subr.mxu0 0.0
    %5565 = vmatpush1.msra.mxu0 0.0
    %5566 = vmatprep.subr.mxu0 0.0
    %5567 = vmatpush1.msra.mxu0 0.0
    %5568 = vmatprep.subr.mxu0 0.0
    %5569 = vmatpush1.msra.mxu0 0.0
    %5570 = vmatprep.subr.mxu0 0.0
    %5571 = vmatpush1.msra.mxu0 0.0
    %5572 = vmatprep.subr.mxu0 0.0
    %5573 = vmatpush1.msra.mxu0 0.0
    %5574 = vmatprep.subr.mxu0 0.0
    %5575 = vmatpush1.msra.mxu0 0.0
    %5576 = vmatprep.subr.mxu0 0.0
    %5577 = vmatpush1.msra.mxu0 0.0
    %5578 = vmatprep.subr.mxu0 0.0
    %5579 = vmatpush1.msra.mxu0 0.0
    %5580 = vmatprep.subr.mxu0 0.0
    %5581 = vmatpush1.msra.mxu0 0.0
    %5582 = vmatprep.subr.mxu0 0.0
    %5583 = vmatpush1.msra.mxu0 0.0
    %5584 = vmatprep.subr.mxu0 0.0
    %5585 = vmatpush1.msra.mxu0 0.0
    %5586 = vmatprep.subr.mxu0 0.0
    %5587 = vmatpush1.msra.mxu0 0.0
    %5588 = vmatprep.subr.mxu0 0.0
    %5589 = vmatpush1.msra.mxu0 0.0
    %5590 = vmatprep.subr.mxu0 0.0
    %5591 = vmatpush1.msra.mxu0 0.0
    %5592 = vmatprep.subr.mxu0 0.0
    %5593 = vmatpush1.msra.mxu0 0.0
    %5594 = vmatprep.subr.mxu0 0.0
    %5595 = vmatpush1.msra.mxu0 0.0
    %5596 = vmatprep.subr.mxu0 0.0
    %5597 = vmatpush1.msra.mxu0 0.0
    %5598 = vmatprep.subr.mxu0 0.0
    %5599 = vmatpush1.msra.mxu0 0.0
    %5600 = vmatprep.subr.mxu0 0.0
    %5601 = vmatpush1.msra.mxu0 0.0
    %5602 = vmatprep.subr.mxu0 0.0
    %5603 = vmatpush1.msra.mxu0 0.0
    %5604 = vmatprep.subr.mxu0 0.0
    %5605 = vmatpush1.msra.mxu0 0.0
    %5606 = vmatprep.subr.mxu0 0.0
    %5607 = vmatpush1.msra.mxu0 0.0
    %5608 = vmatprep.subr.mxu0 0.0
    %5609 = vmatpush1.msra.mxu0 0.0
    %5610 = vmatprep.subr.mxu0 0.0
    %5611 = vmatpush1.msra.mxu0 0.0
    %5612 = vmatprep.mubr.f32.mxu0 0.0
    %v5613 = vand.u32 %v5530, 4294901760
    %v5614 = vsub.f32 %v5530, %v5613
    %v5615 = vand.u32 %v5614, 4294901760
    %v5616 = vsub.f32 %v5614, %v5615
    %v5617 = vand.u32 %v5616, 4294901760
    %5618 = vmatmul.mubr.f32.gmra.mrb[0].mxu0 %v5617
    %v5619 = vpop.f32.mrb[0].mxu0
    %v5620 = vadd.f32 0.0, %v5619
    %v5621 = vpop.f32.mrb[0].mxu0
    %v5622 = vadd.f32 0.0, %v5621
    %5623 = vdwg.mxu0
    %v5624 = vand.u32 %v578, 4294901760
    %v5625 = vsub.f32 %v578, %v5624
    %v5626 = vand.u32 %v5625, 4294901760
    %v5627 = vsub.f32 %v5625, %v5626
    %v5628 = vand.u32 %v5627, 4294901760
    %5629 = vmatprep.subr.mxu0 %v5628
    %v5630 = vand.u32 %v577, 4294901760
    %v5631 = vsub.f32 %v577, %v5630
    %v5632 = vand.u32 %v5631, 4294901760
    %v5633 = vsub.f32 %v5631, %v5632
    %v5634 = vand.u32 %v5633, 4294901760
    %5635 = vmatpush1.msra.mxu0 %v5634
    %v5636 = vand.u32 %v580, 4294901760
    %v5637 = vsub.f32 %v580, %v5636
    %v5638 = vand.u32 %v5637, 4294901760
    %v5639 = vsub.f32 %v5637, %v5638
    %v5640 = vand.u32 %v5639, 4294901760
    %5641 = vmatprep.subr.mxu0 %v5640
    %v5642 = vand.u32 %v579, 4294901760
    %v5643 = vsub.f32 %v579, %v5642
    %v5644 = vand.u32 %v5643, 4294901760
    %v5645 = vsub.f32 %v5643, %v5644
    %v5646 = vand.u32 %v5645, 4294901760
    %5647 = vmatpush1.msra.mxu0 %v5646
    %v5648 = vand.u32 %v582, 4294901760
    %v5649 = vsub.f32 %v582, %v5648
    %v5650 = vand.u32 %v5649, 4294901760
    %v5651 = vsub.f32 %v5649, %v5650
    %v5652 = vand.u32 %v5651, 4294901760
    %5653 = vmatprep.subr.mxu0 %v5652
    %v5654 = vand.u32 %v581, 4294901760
    %v5655 = vsub.f32 %v581, %v5654
    %v5656 = vand.u32 %v5655, 4294901760
    %v5657 = vsub.f32 %v5655, %v5656
    %v5658 = vand.u32 %v5657, 4294901760
    %5659 = vmatpush1.msra.mxu0 %v5658
    %v5660 = vand.u32 %v584, 4294901760
    %v5661 = vsub.f32 %v584, %v5660
    %v5662 = vand.u32 %v5661, 4294901760
    %v5663 = vsub.f32 %v5661, %v5662
    %v5664 = vand.u32 %v5663, 4294901760
    %5665 = vmatprep.subr.mxu0 %v5664
    %v5666 = vand.u32 %v583, 4294901760
    %v5667 = vsub.f32 %v583, %v5666
    %v5668 = vand.u32 %v5667, 4294901760
    %v5669 = vsub.f32 %v5667, %v5668
    %v5670 = vand.u32 %v5669, 4294901760
    %5671 = vmatpush1.msra.mxu0 %v5670
    %v5672 = vand.u32 %v586, 4294901760
    %v5673 = vsub.f32 %v586, %v5672
    %v5674 = vand.u32 %v5673, 4294901760
    %v5675 = vsub.f32 %v5673, %v5674
    %v5676 = vand.u32 %v5675, 4294901760
    %5677 = vmatprep.subr.mxu0 %v5676
    %v5678 = vand.u32 %v585, 4294901760
    %v5679 = vsub.f32 %v585, %v5678
    %v5680 = vand.u32 %v5679, 4294901760
    %v5681 = vsub.f32 %v5679, %v5680
    %v5682 = vand.u32 %v5681, 4294901760
    %5683 = vmatpush1.msra.mxu0 %v5682
    %v5684 = vand.u32 %v588, 4294901760
    %v5685 = vsub.f32 %v588, %v5684
    %v5686 = vand.u32 %v5685, 4294901760
    %v5687 = vsub.f32 %v5685, %v5686
    %v5688 = vand.u32 %v5687, 4294901760
    %5689 = vmatprep.subr.mxu0 %v5688
    %v5690 = vand.u32 %v587, 4294901760
    %v5691 = vsub.f32 %v587, %v5690
    %v5692 = vand.u32 %v5691, 4294901760
    %v5693 = vsub.f32 %v5691, %v5692
    %v5694 = vand.u32 %v5693, 4294901760
    %5695 = vmatpush1.msra.mxu0 %v5694
    %v5696 = vand.u32 %v590, 4294901760
    %v5697 = vsub.f32 %v590, %v5696
    %v5698 = vand.u32 %v5697, 4294901760
    %v5699 = vsub.f32 %v5697, %v5698
    %v5700 = vand.u32 %v5699, 4294901760
    %5701 = vmatprep.subr.mxu0 %v5700
    %v5702 = vand.u32 %v589, 4294901760
    %v5703 = vsub.f32 %v589, %v5702
    %v5704 = vand.u32 %v5703, 4294901760
    %v5705 = vsub.f32 %v5703, %v5704
    %v5706 = vand.u32 %v5705, 4294901760
    %5707 = vmatpush1.msra.mxu0 %v5706
    %v5708 = vand.u32 %v592, 4294901760
    %v5709 = vsub.f32 %v592, %v5708
    %v5710 = vand.u32 %v5709, 4294901760
    %v5711 = vsub.f32 %v5709, %v5710
    %v5712 = vand.u32 %v5711, 4294901760
    %5713 = vmatprep.subr.mxu0 %v5712
    %v5714 = vand.u32 %v591, 4294901760
    %v5715 = vsub.f32 %v591, %v5714
    %v5716 = vand.u32 %v5715, 4294901760
    %v5717 = vsub.f32 %v5715, %v5716
    %v5718 = vand.u32 %v5717, 4294901760
    %5719 = vmatpush1.msra.mxu0 %v5718
    %5720 = vmatprep.subr.mxu0 0.0
    %5721 = vmatpush1.msra.mxu0 0.0
    %5722 = vmatprep.subr.mxu0 0.0
    %5723 = vmatpush1.msra.mxu0 0.0
    %5724 = vmatprep.subr.mxu0 0.0
    %5725 = vmatpush1.msra.mxu0 0.0
    %5726 = vmatprep.subr.mxu0 0.0
    %5727 = vmatpush1.msra.mxu0 0.0
    %5728 = vmatprep.subr.mxu0 0.0
    %5729 = vmatpush1.msra.mxu0 0.0
    %5730 = vmatprep.subr.mxu0 0.0
    %5731 = vmatpush1.msra.mxu0 0.0
    %5732 = vmatprep.subr.mxu0 0.0
    %5733 = vmatpush1.msra.mxu0 0.0
    %5734 = vmatprep.subr.mxu0 0.0
    %5735 = vmatpush1.msra.mxu0 0.0
    %5736 = vmatprep.subr.mxu0 0.0
    %5737 = vmatpush1.msra.mxu0 0.0
    %5738 = vmatprep.subr.mxu0 0.0
    %5739 = vmatpush1.msra.mxu0 0.0
    %5740 = vmatprep.subr.mxu0 0.0
    %5741 = vmatpush1.msra.mxu0 0.0
    %5742 = vmatprep.subr.mxu0 0.0
    %5743 = vmatpush1.msra.mxu0 0.0
    %5744 = vmatprep.subr.mxu0 0.0
    %5745 = vmatpush1.msra.mxu0 0.0
    %5746 = vmatprep.subr.mxu0 0.0
    %5747 = vmatpush1.msra.mxu0 0.0
    %5748 = vmatprep.subr.mxu0 0.0
    %5749 = vmatpush1.msra.mxu0 0.0
    %5750 = vmatprep.subr.mxu0 0.0
    %5751 = vmatpush1.msra.mxu0 0.0
    %5752 = vmatprep.subr.mxu0 0.0
    %5753 = vmatpush1.msra.mxu0 0.0
    %5754 = vmatprep.subr.mxu0 0.0
    %5755 = vmatpush1.msra.mxu0 0.0
    %5756 = vmatprep.subr.mxu0 0.0
    %5757 = vmatpush1.msra.mxu0 0.0
    %5758 = vmatprep.subr.mxu0 0.0
    %5759 = vmatpush1.msra.mxu0 0.0
    %5760 = vmatprep.subr.mxu0 0.0
    %5761 = vmatpush1.msra.mxu0 0.0
    %5762 = vmatprep.subr.mxu0 0.0
    %5763 = vmatpush1.msra.mxu0 0.0
    %5764 = vmatprep.subr.mxu0 0.0
    %5765 = vmatpush1.msra.mxu0 0.0
    %5766 = vmatprep.subr.mxu0 0.0
    %5767 = vmatpush1.msra.mxu0 0.0
    %5768 = vmatprep.mubr.f32.mxu0 0.0
    %v5769 = vand.u32 %v5530, 4294901760
    %5770 = vmatmul.mubr.f32.gmra.mrb[0].mxu0 %v5769
    %v5771 = vpop.f32.mrb[0].mxu0
    %v5772 = vadd.f32 %v5620, %v5771
    %v5773 = vpop.f32.mrb[0].mxu0
    %v5774 = vadd.f32 %v5622, %v5773
    %5775 = vdwg.mxu0
    %v5776 = vand.u32 %v578, 4294901760
    %v5777 = vsub.f32 %v578, %v5776
    %5778 = vmatprep.subr.mxu0 %v5777
    %v5779 = vand.u32 %v577, 4294901760
    %v5780 = vsub.f32 %v577, %v5779
    %5781 = vmatpush1.msra.mxu0 %v5780
    %v5782 = vand.u32 %v580, 4294901760
    %v5783 = vsub.f32 %v580, %v5782
    %5784 = vmatprep.subr.mxu0 %v5783
    %v5785 = vand.u32 %v579, 4294901760
    %v5786 = vsub.f32 %v579, %v5785
    %5787 = vmatpush1.msra.mxu0 %v5786
    %v5788 = vand.u32 %v582, 4294901760
    %v5789 = vsub.f32 %v582, %v5788
    %5790 = vmatprep.subr.mxu0 %v5789
    %v5791 = vand.u32 %v581, 4294901760
    %v5792 = vsub.f32 %v581, %v5791
    %5793 = vmatpush1.msra.mxu0 %v5792
    %v5794 = vand.u32 %v584, 4294901760
    %v5795 = vsub.f32 %v584, %v5794
    %5796 = vmatprep.subr.mxu0 %v5795
    %v5797 = vand.u32 %v583, 4294901760
    %v5798 = vsub.f32 %v583, %v5797
    %5799 = vmatpush1.msra.mxu0 %v5798
    %v5800 = vand.u32 %v586, 4294901760
    %v5801 = vsub.f32 %v586, %v5800
    %5802 = vmatprep.subr.mxu0 %v5801
    %v5803 = vand.u32 %v585, 4294901760
    %v5804 = vsub.f32 %v585, %v5803
    %5805 = vmatpush1.msra.mxu0 %v5804
    %v5806 = vand.u32 %v588, 4294901760
    %v5807 = vsub.f32 %v588, %v5806
    %5808 = vmatprep.subr.mxu0 %v5807
    %v5809 = vand.u32 %v587, 4294901760
    %v5810 = vsub.f32 %v587, %v5809
    %5811 = vmatpush1.msra.mxu0 %v5810
    %v5812 = vand.u32 %v590, 4294901760
    %v5813 = vsub.f32 %v590, %v5812
    %5814 = vmatprep.subr.mxu0 %v5813
    %v5815 = vand.u32 %v589, 4294901760
    %v5816 = vsub.f32 %v589, %v5815
    %5817 = vmatpush1.msra.mxu0 %v5816
    %v5818 = vand.u32 %v592, 4294901760
    %v5819 = vsub.f32 %v592, %v5818
    %5820 = vmatprep.subr.mxu0 %v5819
    %v5821 = vand.u32 %v591, 4294901760
    %v5822 = vsub.f32 %v591, %v5821
    %5823 = vmatpush1.msra.mxu0 %v5822
    %5824 = vmatprep.subr.mxu0 0.0
    %5825 = vmatpush1.msra.mxu0 0.0
    %5826 = vmatprep.subr.mxu0 0.0
    %5827 = vmatpush1.msra.mxu0 0.0
    %5828 = vmatprep.subr.mxu0 0.0
    %5829 = vmatpush1.msra.mxu0 0.0
    %5830 = vmatprep.subr.mxu0 0.0
    %5831 = vmatpush1.msra.mxu0 0.0
    %5832 = vmatprep.subr.mxu0 0.0
    %5833 = vmatpush1.msra.mxu0 0.0
    %5834 = vmatprep.subr.mxu0 0.0
    %5835 = vmatpush1.msra.mxu0 0.0
    %5836 = vmatprep.subr.mxu0 0.0
    %5837 = vmatpush1.msra.mxu0 0.0
    %5838 = vmatprep.subr.mxu0 0.0
    %5839 = vmatpush1.msra.mxu0 0.0
    %5840 = vmatprep.subr.mxu0 0.0
    %5841 = vmatpush1.msra.mxu0 0.0
    %5842 = vmatprep.subr.mxu0 0.0
    %5843 = vmatpush1.msra.mxu0 0.0
    %5844 = vmatprep.subr.mxu0 0.0
    %5845 = vmatpush1.msra.mxu0 0.0
    %5846 = vmatprep.subr.mxu0 0.0
    %5847 = vmatpush1.msra.mxu0 0.0
    %5848 = vmatprep.subr.mxu0 0.0
    %5849 = vmatpush1.msra.mxu0 0.0
    %5850 = vmatprep.subr.mxu0 0.0
    %5851 = vmatpush1.msra.mxu0 0.0
    %5852 = vmatprep.subr.mxu0 0.0
    %5853 = vmatpush1.msra.mxu0 0.0
    %5854 = vmatprep.subr.mxu0 0.0
    %5855 = vmatpush1.msra.mxu0 0.0
    %5856 = vmatprep.subr.mxu0 0.0
    %5857 = vmatpush1.msra.mxu0 0.0
    %5858 = vmatprep.subr.mxu0 0.0
    %5859 = vmatpush1.msra.mxu0 0.0
    %5860 = vmatprep.subr.mxu0 0.0
    %5861 = vmatpush1.msra.mxu0 0.0
    %5862 = vmatprep.subr.mxu0 0.0
    %5863 = vmatpush1.msra.mxu0 0.0
    %5864 = vmatprep.subr.mxu0 0.0
    %5865 = vmatpush1.msra.mxu0 0.0
    %5866 = vmatprep.subr.mxu0 0.0
    %5867 = vmatpush1.msra.mxu0 0.0
    %5868 = vmatprep.subr.mxu0 0.0
    %5869 = vmatpush1.msra.mxu0 0.0
    %5870 = vmatprep.subr.mxu0 0.0
    %5871 = vmatpush1.msra.mxu0 0.0
    %5872 = vmatprep.mubr.f32.mxu0 0.0
    %v5873 = vand.u32 %v5530, 4294901760
    %v5874 = vsub.f32 %v5530, %v5873
    %5875 = vmatmul.mubr.f32.gmra.mrb[0].mxu0 %v5874
    %v5876 = vpop.f32.mrb[0].mxu0
    %v5877 = vadd.f32 %v5772, %v5876
    %v5878 = vpop.f32.mrb[0].mxu0
    %v5879 = vadd.f32 %v5774, %v5878
    %5880 = vdwg.mxu0
    %v5881 = vand.u32 %v578, 4294901760
    %5882 = vmatprep.subr.mxu0 %v5881
    %v5883 = vand.u32 %v577, 4294901760
    %5884 = vmatpush1.msra.mxu0 %v5883
    %v5885 = vand.u32 %v580, 4294901760
    %5886 = vmatprep.subr.mxu0 %v5885
    %v5887 = vand.u32 %v579, 4294901760
    %5888 = vmatpush1.msra.mxu0 %v5887
    %v5889 = vand.u32 %v582, 4294901760
    %5890 = vmatprep.subr.mxu0 %v5889
    %v5891 = vand.u32 %v581, 4294901760
    %5892 = vmatpush1.msra.mxu0 %v5891
    %v5893 = vand.u32 %v584, 4294901760
    %5894 = vmatprep.subr.mxu0 %v5893
    %v5895 = vand.u32 %v583, 4294901760
    %5896 = vmatpush1.msra.mxu0 %v5895
    %v5897 = vand.u32 %v586, 4294901760
    %5898 = vmatprep.subr.mxu0 %v5897
    %v5899 = vand.u32 %v585, 4294901760
    %5900 = vmatpush1.msra.mxu0 %v5899
    %v5901 = vand.u32 %v588, 4294901760
    %5902 = vmatprep.subr.mxu0 %v5901
    %v5903 = vand.u32 %v587, 4294901760
    %5904 = vmatpush1.msra.mxu0 %v5903
    %v5905 = vand.u32 %v590, 4294901760
    %5906 = vmatprep.subr.mxu0 %v5905
    %v5907 = vand.u32 %v589, 4294901760
    %5908 = vmatpush1.msra.mxu0 %v5907
    %v5909 = vand.u32 %v592, 4294901760
    %5910 = vmatprep.subr.mxu0 %v5909
    %v5911 = vand.u32 %v591, 4294901760
    %5912 = vmatpush1.msra.mxu0 %v5911
    %5913 = vmatprep.subr.mxu0 0.0
    %5914 = vmatpush1.msra.mxu0 0.0
    %5915 = vmatprep.subr.mxu0 0.0
    %5916 = vmatpush1.msra.mxu0 0.0
    %5917 = vmatprep.subr.mxu0 0.0
    %5918 = vmatpush1.msra.mxu0 0.0
    %5919 = vmatprep.subr.mxu0 0.0
    %5920 = vmatpush1.msra.mxu0 0.0
    %5921 = vmatprep.subr.mxu0 0.0
    %5922 = vmatpush1.msra.mxu0 0.0
    %5923 = vmatprep.subr.mxu0 0.0
    %5924 = vmatpush1.msra.mxu0 0.0
    %5925 = vmatprep.subr.mxu0 0.0
    %5926 = vmatpush1.msra.mxu0 0.0
    %5927 = vmatprep.subr.mxu0 0.0
    %5928 = vmatpush1.msra.mxu0 0.0
    %5929 = vmatprep.subr.mxu0 0.0
    %5930 = vmatpush1.msra.mxu0 0.0
    %5931 = vmatprep.subr.mxu0 0.0
    %5932 = vmatpush1.msra.mxu0 0.0
    %5933 = vmatprep.subr.mxu0 0.0
    %5934 = vmatpush1.msra.mxu0 0.0
    %5935 = vmatprep.subr.mxu0 0.0
    %5936 = vmatpush1.msra.mxu0 0.0
    %5937 = vmatprep.subr.mxu0 0.0
    %5938 = vmatpush1.msra.mxu0 0.0
    %5939 = vmatprep.subr.mxu0 0.0
    %5940 = vmatpush1.msra.mxu0 0.0
    %5941 = vmatprep.subr.mxu0 0.0
    %5942 = vmatpush1.msra.mxu0 0.0
    %5943 = vmatprep.subr.mxu0 0.0
    %5944 = vmatpush1.msra.mxu0 0.0
    %5945 = vmatprep.subr.mxu0 0.0
    %5946 = vmatpush1.msra.mxu0 0.0
    %5947 = vmatprep.subr.mxu0 0.0
    %5948 = vmatpush1.msra.mxu0 0.0
    %5949 = vmatprep.subr.mxu0 0.0
    %5950 = vmatpush1.msra.mxu0 0.0
    %5951 = vmatprep.subr.mxu0 0.0
    %5952 = vmatpush1.msra.mxu0 0.0
    %5953 = vmatprep.subr.mxu0 0.0
    %5954 = vmatpush1.msra.mxu0 0.0
    %5955 = vmatprep.subr.mxu0 0.0
    %5956 = vmatpush1.msra.mxu0 0.0
    %5957 = vmatprep.subr.mxu0 0.0
    %5958 = vmatpush1.msra.mxu0 0.0
    %5959 = vmatprep.subr.mxu0 0.0
    %5960 = vmatpush1.msra.mxu0 0.0
    %5961 = vmatprep.mubr.f32.mxu0 0.0
    %v5962 = vand.u32 %v5530, 4294901760
    %v5963 = vsub.f32 %v5530, %v5962
    %v5964 = vand.u32 %v5963, 4294901760
    %5965 = vmatmul.mubr.f32.gmra.mrb[0].mxu0 %v5964
    %v5966 = vpop.f32.mrb[0].mxu0
    %v5967 = vadd.f32 %v5877, %v5966
    %v5968 = vpop.f32.mrb[0].mxu0
    %v5969 = vadd.f32 %v5879, %v5968
    %5970 = vdwg.mxu0
    %v5971 = vand.u32 %v578, 4294901760
    %v5972 = vsub.f32 %v578, %v5971
    %v5973 = vand.u32 %v5972, 4294901760
    %5974 = vmatprep.subr.mxu0 %v5973
    %v5975 = vand.u32 %v577, 4294901760
    %v5976 = vsub.f32 %v577, %v5975
    %v5977 = vand.u32 %v5976, 4294901760
    %5978 = vmatpush1.msra.mxu0 %v5977
    %v5979 = vand.u32 %v580, 4294901760
    %v5980 = vsub.f32 %v580, %v5979
    %v5981 = vand.u32 %v5980, 4294901760
    %5982 = vmatprep.subr.mxu0 %v5981
    %v5983 = vand.u32 %v579, 4294901760
    %v5984 = vsub.f32 %v579, %v5983
    %v5985 = vand.u32 %v5984, 4294901760
    %5986 = vmatpush1.msra.mxu0 %v5985
    %v5987 = vand.u32 %v582, 4294901760
    %v5988 = vsub.f32 %v582, %v5987
    %v5989 = vand.u32 %v5988, 4294901760
    %5990 = vmatprep.subr.mxu0 %v5989
    %v5991 = vand.u32 %v581, 4294901760
    %v5992 = vsub.f32 %v581, %v5991
    %v5993 = vand.u32 %v5992, 4294901760
    %5994 = vmatpush1.msra.mxu0 %v5993
    %v5995 = vand.u32 %v584, 4294901760
    %v5996 = vsub.f32 %v584, %v5995
    %v5997 = vand.u32 %v5996, 4294901760
    %5998 = vmatprep.subr.mxu0 %v5997
    %v5999 = vand.u32 %v583, 4294901760
    %v6000 = vsub.f32 %v583, %v5999
    %v6001 = vand.u32 %v6000, 4294901760
    %6002 = vmatpush1.msra.mxu0 %v6001
    %v6003 = vand.u32 %v586, 4294901760
    %v6004 = vsub.f32 %v586, %v6003
    %v6005 = vand.u32 %v6004, 4294901760
    %6006 = vmatprep.subr.mxu0 %v6005
    %v6007 = vand.u32 %v585, 4294901760
    %v6008 = vsub.f32 %v585, %v6007
    %v6009 = vand.u32 %v6008, 4294901760
    %6010 = vmatpush1.msra.mxu0 %v6009
    %v6011 = vand.u32 %v588, 4294901760
    %v6012 = vsub.f32 %v588, %v6011
    %v6013 = vand.u32 %v6012, 4294901760
    %6014 = vmatprep.subr.mxu0 %v6013
    %v6015 = vand.u32 %v587, 4294901760
    %v6016 = vsub.f32 %v587, %v6015
    %v6017 = vand.u32 %v6016, 4294901760
    %6018 = vmatpush1.msra.mxu0 %v6017
    %v6019 = vand.u32 %v590, 4294901760
    %v6020 = vsub.f32 %v590, %v6019
    %v6021 = vand.u32 %v6020, 4294901760
    %6022 = vmatprep.subr.mxu0 %v6021
    %v6023 = vand.u32 %v589, 4294901760
    %v6024 = vsub.f32 %v589, %v6023
    %v6025 = vand.u32 %v6024, 4294901760
    %6026 = vmatpush1.msra.mxu0 %v6025
    %v6027 = vand.u32 %v592, 4294901760
    %v6028 = vsub.f32 %v592, %v6027
    %v6029 = vand.u32 %v6028, 4294901760
    %6030 = vmatprep.subr.mxu0 %v6029
    %v6031 = vand.u32 %v591, 4294901760
    %v6032 = vsub.f32 %v591, %v6031
    %v6033 = vand.u32 %v6032, 4294901760
    %6034 = vmatpush1.msra.mxu0 %v6033
    %6035 = vmatprep.subr.mxu0 0.0
    %6036 = vmatpush1.msra.mxu0 0.0
    %6037 = vmatprep.subr.mxu0 0.0
    %6038 = vmatpush1.msra.mxu0 0.0
    %6039 = vmatprep.subr.mxu0 0.0
    %6040 = vmatpush1.msra.mxu0 0.0
    %6041 = vmatprep.subr.mxu0 0.0
    %6042 = vmatpush1.msra.mxu0 0.0
    %6043 = vmatprep.subr.mxu0 0.0
    %6044 = vmatpush1.msra.mxu0 0.0
    %6045 = vmatprep.subr.mxu0 0.0
    %6046 = vmatpush1.msra.mxu0 0.0
    %6047 = vmatprep.subr.mxu0 0.0
    %6048 = vmatpush1.msra.mxu0 0.0
    %6049 = vmatprep.subr.mxu0 0.0
    %6050 = vmatpush1.msra.mxu0 0.0
    %6051 = vmatprep.subr.mxu0 0.0
    %6052 = vmatpush1.msra.mxu0 0.0
    %6053 = vmatprep.subr.mxu0 0.0
    %6054 = vmatpush1.msra.mxu0 0.0
    %6055 = vmatprep.subr.mxu0 0.0
    %6056 = vmatpush1.msra.mxu0 0.0
    %6057 = vmatprep.subr.mxu0 0.0
    %6058 = vmatpush1.msra.mxu0 0.0
    %6059 = vmatprep.subr.mxu0 0.0
    %6060 = vmatpush1.msra.mxu0 0.0
    %6061 = vmatprep.subr.mxu0 0.0
    %6062 = vmatpush1.msra.mxu0 0.0
    %6063 = vmatprep.subr.mxu0 0.0
    %6064 = vmatpush1.msra.mxu0 0.0
    %6065 = vmatprep.subr.mxu0 0.0
    %6066 = vmatpush1.msra.mxu0 0.0
    %6067 = vmatprep.subr.mxu0 0.0
    %6068 = vmatpush1.msra.mxu0 0.0
    %6069 = vmatprep.subr.mxu0 0.0
    %6070 = vmatpush1.msra.mxu0 0.0
    %6071 = vmatprep.subr.mxu0 0.0
    %6072 = vmatpush1.msra.mxu0 0.0
    %6073 = vmatprep.subr.mxu0 0.0
    %6074 = vmatpush1.msra.mxu0 0.0
    %6075 = vmatprep.subr.mxu0 0.0
    %6076 = vmatpush1.msra.mxu0 0.0
    %6077 = vmatprep.subr.mxu0 0.0
    %6078 = vmatpush1.msra.mxu0 0.0
    %6079 = vmatprep.subr.mxu0 0.0
    %6080 = vmatpush1.msra.mxu0 0.0
    %6081 = vmatprep.subr.mxu0 0.0
    %6082 = vmatpush1.msra.mxu0 0.0
    %6083 = vmatprep.mubr.f32.mxu0 0.0
    %v6084 = vand.u32 %v5530, 4294901760
    %6085 = vmatmul.mubr.f32.gmra.mrb[0].mxu0 %v6084
    %v6086 = vpop.f32.mrb[0].mxu0
    %v6087 = vadd.f32 %v5967, %v6086
    %v6088 = vpop.f32.mrb[0].mxu0
    %v6089 = vadd.f32 %v5969, %v6088
    %6090 = vdwg.mxu0
    %v6091 = vand.u32 %v578, 4294901760
    %6092 = vmatprep.subr.mxu0 %v6091
    %v6093 = vand.u32 %v577, 4294901760
    %6094 = vmatpush1.msra.mxu0 %v6093
    %v6095 = vand.u32 %v580, 4294901760
    %6096 = vmatprep.subr.mxu0 %v6095
    %v6097 = vand.u32 %v579, 4294901760
    %6098 = vmatpush1.msra.mxu0 %v6097
    %v6099 = vand.u32 %v582, 4294901760
    %6100 = vmatprep.subr.mxu0 %v6099
    %v6101 = vand.u32 %v581, 4294901760
    %6102 = vmatpush1.msra.mxu0 %v6101
    %v6103 = vand.u32 %v584, 4294901760
    %6104 = vmatprep.subr.mxu0 %v6103
    %v6105 = vand.u32 %v583, 4294901760
    %6106 = vmatpush1.msra.mxu0 %v6105
    %v6107 = vand.u32 %v586, 4294901760
    %6108 = vmatprep.subr.mxu0 %v6107
    %v6109 = vand.u32 %v585, 4294901760
    %6110 = vmatpush1.msra.mxu0 %v6109
    %v6111 = vand.u32 %v588, 4294901760
    %6112 = vmatprep.subr.mxu0 %v6111
    %v6113 = vand.u32 %v587, 4294901760
    %6114 = vmatpush1.msra.mxu0 %v6113
    %v6115 = vand.u32 %v590, 4294901760
    %6116 = vmatprep.subr.mxu0 %v6115
    %v6117 = vand.u32 %v589, 4294901760
    %6118 = vmatpush1.msra.mxu0 %v6117
    %v6119 = vand.u32 %v592, 4294901760
    %6120 = vmatprep.subr.mxu0 %v6119
    %v6121 = vand.u32 %v591, 4294901760
    %6122 = vmatpush1.msra.mxu0 %v6121
    %6123 = vmatprep.subr.mxu0 0.0
    %6124 = vmatpush1.msra.mxu0 0.0
    %6125 = vmatprep.subr.mxu0 0.0
    %6126 = vmatpush1.msra.mxu0 0.0
    %6127 = vmatprep.subr.mxu0 0.0
    %6128 = vmatpush1.msra.mxu0 0.0
    %6129 = vmatprep.subr.mxu0 0.0
    %6130 = vmatpush1.msra.mxu0 0.0
    %6131 = vmatprep.subr.mxu0 0.0
    %6132 = vmatpush1.msra.mxu0 0.0
    %6133 = vmatprep.subr.mxu0 0.0
    %6134 = vmatpush1.msra.mxu0 0.0
    %6135 = vmatprep.subr.mxu0 0.0
    %6136 = vmatpush1.msra.mxu0 0.0
    %6137 = vmatprep.subr.mxu0 0.0
    %6138 = vmatpush1.msra.mxu0 0.0
    %6139 = vmatprep.subr.mxu0 0.0
    %6140 = vmatpush1.msra.mxu0 0.0
    %6141 = vmatprep.subr.mxu0 0.0
    %6142 = vmatpush1.msra.mxu0 0.0
    %6143 = vmatprep.subr.mxu0 0.0
    %6144 = vmatpush1.msra.mxu0 0.0
    %6145 = vmatprep.subr.mxu0 0.0
    %6146 = vmatpush1.msra.mxu0 0.0
    %6147 = vmatprep.subr.mxu0 0.0
    %6148 = vmatpush1.msra.mxu0 0.0
    %6149 = vmatprep.subr.mxu0 0.0
    %6150 = vmatpush1.msra.mxu0 0.0
    %6151 = vmatprep.subr.mxu0 0.0
    %6152 = vmatpush1.msra.mxu0 0.0
    %6153 = vmatprep.subr.mxu0 0.0
    %6154 = vmatpush1.msra.mxu0 0.0
    %6155 = vmatprep.subr.mxu0 0.0
    %6156 = vmatpush1.msra.mxu0 0.0
    %6157 = vmatprep.subr.mxu0 0.0
    %6158 = vmatpush1.msra.mxu0 0.0
    %6159 = vmatprep.subr.mxu0 0.0
    %6160 = vmatpush1.msra.mxu0 0.0
    %6161 = vmatprep.subr.mxu0 0.0
    %6162 = vmatpush1.msra.mxu0 0.0
    %6163 = vmatprep.subr.mxu0 0.0
    %6164 = vmatpush1.msra.mxu0 0.0
    %6165 = vmatprep.subr.mxu0 0.0
    %6166 = vmatpush1.msra.mxu0 0.0
    %6167 = vmatprep.subr.mxu0 0.0
    %6168 = vmatpush1.msra.mxu0 0.0
    %6169 = vmatprep.subr.mxu0 0.0
    %6170 = vmatpush1.msra.mxu0 0.0
    %6171 = vmatprep.mubr.f32.mxu0 0.0
    %v6172 = vand.u32 %v5530, 4294901760
    %6173 = vmatmul.mubr.f32.gmra.mrb[0].mxu0 %v6172
    %v6174 = vpop.f32.mrb[0].mxu0
    %v6175 = vadd.f32 %v6087, %v6174
    %v6176 = vpop.f32.mrb[0].mxu0
    %v6177 = vadd.f32 %v6089, %v6176
    %6178 = vdwg.mxu0
    %v6179 = vld [vmem:[#allocation2 + $0xe] sm:$0x3]
    %v6180 = vadd.f32 %v6175, %v6179
    %v6181 = vtanh.pop %v6180
    %v6182 = vmul.f32 %v6181, 0.5
    %v6183 = vadd.f32 %v6182, 0.5
    %v6184 = vmul.f32 %v6183, %v5488
    %6186 = vrot.lane.b32.xlu0 %v6181, 32
    %v6187 = vpop.permute.xlu0 %6186
    %v6189 = vmul.f32 %v6183, %v6187
    %6191 = vrot.lane.b32.xlu0 %v6189, 32
    %v6192 = vpop.permute.xlu0 %6191
    %v6194 = vadd.f32 %v6184, %v6192
    %v6195 = vtanh.pop %v6194
    %6197 = vrot.lane.b32.xlu0 %v6195, 32
    %v6198 = vpop.permute.xlu0 %6197
    %v6200 = vmul.f32 %v6183, %v6198
    %v6201 = vadd.f32 %v6177, %v1958
    %v6202 = vtanh.pop %v6201
    %v6203 = vmul.f32 %v6202, 0.5
    %v6204 = vadd.f32 %v6203, 0.5
    %v6205 = vmul.f32 %v6204, %v5509
    %6207 = vrot.lane.b32.xlu0 %v6202, 32
    %v6208 = vpop.permute.xlu0 %6207
    %v6210 = vmul.f32 %v6204, %v6208
    %6212 = vrot.lane.b32.xlu0 %v6210, 32
    %v6213 = vpop.permute.xlu0 %6212
    %v6215 = vadd.f32 %v6205, %v6213
    %v6216 = vtanh.pop %v6215
    %6218 = vrot.lane.b32.xlu0 %v6216, 32
    %v6219 = vpop.permute.xlu0 %6218
    %v6221 = vmul.f32 %v6204, %v6219
    %6223 = vrot.lane.b32.xlu0 %v6221, 64
    %v6224 = vpop.permute.xlu0 %6223
    %6226 = vst.msk [vmem:[#allocation3 + $0xc] sm:$0x3] %vm1989, %v6224
    %6228 = vrot.lane.b32.xlu0 %v6200, 64
    %v6229 = vpop.permute.xlu0 %6228
    %6231 = vrot.lane.b32.xlu0 %v6221, 96
    %v6232 = vpop.permute.xlu0 %6231
    %v6234 = vsel %vm604, %v6229, %v6232
    %v6236 = vsel %vm606, %v6234, 0
    %v6238 = vand.u32 %v578, 4294901760
    %6239 = vmatprep.subr.mxu0 %v6238
    %v6240 = vand.u32 %v577, 4294901760
    %6241 = vmatpush1.msra.mxu0 %v6240
    %v6242 = vand.u32 %v580, 4294901760
    %6243 = vmatprep.subr.mxu0 %v6242
    %v6244 = vand.u32 %v579, 4294901760
    %6245 = vmatpush1.msra.mxu0 %v6244
    %v6246 = vand.u32 %v582, 4294901760
    %6247 = vmatprep.subr.mxu0 %v6246
    %v6248 = vand.u32 %v581, 4294901760
    %6249 = vmatpush1.msra.mxu0 %v6248
    %v6250 = vand.u32 %v584, 4294901760
    %6251 = vmatprep.subr.mxu0 %v6250
    %v6252 = vand.u32 %v583, 4294901760
    %6253 = vmatpush1.msra.mxu0 %v6252
    %v6254 = vand.u32 %v586, 4294901760
    %6255 = vmatprep.subr.mxu0 %v6254
    %v6256 = vand.u32 %v585, 4294901760
    %6257 = vmatpush1.msra.mxu0 %v6256
    %v6258 = vand.u32 %v588, 4294901760
    %6259 = vmatprep.subr.mxu0 %v6258
    %v6260 = vand.u32 %v587, 4294901760
    %6261 = vmatpush1.msra.mxu0 %v6260
    %v6262 = vand.u32 %v590, 4294901760
    %6263 = vmatprep.subr.mxu0 %v6262
    %v6264 = vand.u32 %v589, 4294901760
    %6265 = vmatpush1.msra.mxu0 %v6264
    %v6266 = vand.u32 %v592, 4294901760
    %6267 = vmatprep.subr.mxu0 %v6266
    %v6268 = vand.u32 %v591, 4294901760
    %6269 = vmatpush1.msra.mxu0 %v6268
    %6270 = vmatprep.subr.mxu0 0.0
    %6271 = vmatpush1.msra.mxu0 0.0
    %6272 = vmatprep.subr.mxu0 0.0
    %6273 = vmatpush1.msra.mxu0 0.0
    %6274 = vmatprep.subr.mxu0 0.0
    %6275 = vmatpush1.msra.mxu0 0.0
    %6276 = vmatprep.subr.mxu0 0.0
    %6277 = vmatpush1.msra.mxu0 0.0
    %6278 = vmatprep.subr.mxu0 0.0
    %6279 = vmatpush1.msra.mxu0 0.0
    %6280 = vmatprep.subr.mxu0 0.0
    %6281 = vmatpush1.msra.mxu0 0.0
    %6282 = vmatprep.subr.mxu0 0.0
    %6283 = vmatpush1.msra.mxu0 0.0
    %6284 = vmatprep.subr.mxu0 0.0
    %6285 = vmatpush1.msra.mxu0 0.0
    %6286 = vmatprep.subr.mxu0 0.0
    %6287 = vmatpush1.msra.mxu0 0.0
    %6288 = vmatprep.subr.mxu0 0.0
    %6289 = vmatpush1.msra.mxu0 0.0
    %6290 = vmatprep.subr.mxu0 0.0
    %6291 = vmatpush1.msra.mxu0 0.0
    %6292 = vmatprep.subr.mxu0 0.0
    %6293 = vmatpush1.msra.mxu0 0.0
    %6294 = vmatprep.subr.mxu0 0.0
    %6295 = vmatpush1.msra.mxu0 0.0
    %6296 = vmatprep.subr.mxu0 0.0
    %6297 = vmatpush1.msra.mxu0 0.0
    %6298 = vmatprep.subr.mxu0 0.0
    %6299 = vmatpush1.msra.mxu0 0.0
    %6300 = vmatprep.subr.mxu0 0.0
    %6301 = vmatpush1.msra.mxu0 0.0
    %6302 = vmatprep.subr.mxu0 0.0
    %6303 = vmatpush1.msra.mxu0 0.0
    %6304 = vmatprep.subr.mxu0 0.0
    %6305 = vmatpush1.msra.mxu0 0.0
    %6306 = vmatprep.subr.mxu0 0.0
    %6307 = vmatpush1.msra.mxu0 0.0
    %6308 = vmatprep.subr.mxu0 0.0
    %6309 = vmatpush1.msra.mxu0 0.0
    %6310 = vmatprep.subr.mxu0 0.0
    %6311 = vmatpush1.msra.mxu0 0.0
    %6312 = vmatprep.subr.mxu0 0.0
    %6313 = vmatpush1.msra.mxu0 0.0
    %6314 = vmatprep.subr.mxu0 0.0
    %6315 = vmatpush1.msra.mxu0 0.0
    %6316 = vmatprep.subr.mxu0 0.0
    %6317 = vmatpush1.msra.mxu0 0.0
    %6318 = vmatprep.mubr.f32.mxu0 0.0
    %v6319 = vand.u32 %v6236, 4294901760
    %v6320 = vsub.f32 %v6236, %v6319
    %v6321 = vand.u32 %v6320, 4294901760
    %v6322 = vsub.f32 %v6320, %v6321
    %v6323 = vand.u32 %v6322, 4294901760
    %6324 = vmatmul.mubr.f32.gmra.mrb[0].mxu0 %v6323
    %v6325 = vpop.f32.mrb[0].mxu0
    %v6326 = vpop.f32.mrb[0].mxu0
    %v6327 = vadd.f32 0.0, %v6326
    %6328 = vdwg.mxu0
    %v6329 = vand.u32 %v578, 4294901760
    %v6330 = vsub.f32 %v578, %v6329
    %v6331 = vand.u32 %v6330, 4294901760
    %v6332 = vsub.f32 %v6330, %v6331
    %v6333 = vand.u32 %v6332, 4294901760
    %6334 = vmatprep.subr.mxu0 %v6333
    %v6335 = vand.u32 %v577, 4294901760
    %v6336 = vsub.f32 %v577, %v6335
    %v6337 = vand.u32 %v6336, 4294901760
    %v6338 = vsub.f32 %v6336, %v6337
    %v6339 = vand.u32 %v6338, 4294901760
    %6340 = vmatpush1.msra.mxu0 %v6339
    %v6341 = vand.u32 %v580, 4294901760
    %v6342 = vsub.f32 %v580, %v6341
    %v6343 = vand.u32 %v6342, 4294901760
    %v6344 = vsub.f32 %v6342, %v6343
    %v6345 = vand.u32 %v6344, 4294901760
    %6346 = vmatprep.subr.mxu0 %v6345
    %v6347 = vand.u32 %v579, 4294901760
    %v6348 = vsub.f32 %v579, %v6347
    %v6349 = vand.u32 %v6348, 4294901760
    %v6350 = vsub.f32 %v6348, %v6349
    %v6351 = vand.u32 %v6350, 4294901760
    %6352 = vmatpush1.msra.mxu0 %v6351
    %v6353 = vand.u32 %v582, 4294901760
    %v6354 = vsub.f32 %v582, %v6353
    %v6355 = vand.u32 %v6354, 4294901760
    %v6356 = vsub.f32 %v6354, %v6355
    %v6357 = vand.u32 %v6356, 4294901760
    %6358 = vmatprep.subr.mxu0 %v6357
    %v6359 = vand.u32 %v581, 4294901760
    %v6360 = vsub.f32 %v581, %v6359
    %v6361 = vand.u32 %v6360, 4294901760
    %v6362 = vsub.f32 %v6360, %v6361
    %v6363 = vand.u32 %v6362, 4294901760
    %6364 = vmatpush1.msra.mxu0 %v6363
    %v6365 = vand.u32 %v584, 4294901760
    %v6366 = vsub.f32 %v584, %v6365
    %v6367 = vand.u32 %v6366, 4294901760
    %v6368 = vsub.f32 %v6366, %v6367
    %v6369 = vand.u32 %v6368, 4294901760
    %6370 = vmatprep.subr.mxu0 %v6369
    %v6371 = vand.u32 %v583, 4294901760
    %v6372 = vsub.f32 %v583, %v6371
    %v6373 = vand.u32 %v6372, 4294901760
    %v6374 = vsub.f32 %v6372, %v6373
    %v6375 = vand.u32 %v6374, 4294901760
    %6376 = vmatpush1.msra.mxu0 %v6375
    %v6377 = vand.u32 %v586, 4294901760
    %v6378 = vsub.f32 %v586, %v6377
    %v6379 = vand.u32 %v6378, 4294901760
    %v6380 = vsub.f32 %v6378, %v6379
    %v6381 = vand.u32 %v6380, 4294901760
    %6382 = vmatprep.subr.mxu0 %v6381
    %v6383 = vand.u32 %v585, 4294901760
    %v6384 = vsub.f32 %v585, %v6383
    %v6385 = vand.u32 %v6384, 4294901760
    %v6386 = vsub.f32 %v6384, %v6385
    %v6387 = vand.u32 %v6386, 4294901760
    %6388 = vmatpush1.msra.mxu0 %v6387
    %v6389 = vand.u32 %v588, 4294901760
    %v6390 = vsub.f32 %v588, %v6389
    %v6391 = vand.u32 %v6390, 4294901760
    %v6392 = vsub.f32 %v6390, %v6391
    %v6393 = vand.u32 %v6392, 4294901760
    %6394 = vmatprep.subr.mxu0 %v6393
    %v6395 = vand.u32 %v587, 4294901760
    %v6396 = vsub.f32 %v587, %v6395
    %v6397 = vand.u32 %v6396, 4294901760
    %v6398 = vsub.f32 %v6396, %v6397
    %v6399 = vand.u32 %v6398, 4294901760
    %6400 = vmatpush1.msra.mxu0 %v6399
    %v6401 = vand.u32 %v590, 4294901760
    %v6402 = vsub.f32 %v590, %v6401
    %v6403 = vand.u32 %v6402, 4294901760
    %v6404 = vsub.f32 %v6402, %v6403
    %v6405 = vand.u32 %v6404, 4294901760
    %6406 = vmatprep.subr.mxu0 %v6405
    %v6407 = vand.u32 %v589, 4294901760
    %v6408 = vsub.f32 %v589, %v6407
    %v6409 = vand.u32 %v6408, 4294901760
    %v6410 = vsub.f32 %v6408, %v6409
    %v6411 = vand.u32 %v6410, 4294901760
    %6412 = vmatpush1.msra.mxu0 %v6411
    %v6413 = vand.u32 %v592, 4294901760
    %v6414 = vsub.f32 %v592, %v6413
    %v6415 = vand.u32 %v6414, 4294901760
    %v6416 = vsub.f32 %v6414, %v6415
    %v6417 = vand.u32 %v6416, 4294901760
    %6418 = vmatprep.subr.mxu0 %v6417
    %v6419 = vand.u32 %v591, 4294901760
    %v6420 = vsub.f32 %v591, %v6419
    %v6421 = vand.u32 %v6420, 4294901760
    %v6422 = vsub.f32 %v6420, %v6421
    %v6423 = vand.u32 %v6422, 4294901760
    %6424 = vmatpush1.msra.mxu0 %v6423
    %6425 = vmatprep.subr.mxu0 0.0
    %6426 = vmatpush1.msra.mxu0 0.0
    %6427 = vmatprep.subr.mxu0 0.0
    %6428 = vmatpush1.msra.mxu0 0.0
    %6429 = vmatprep.subr.mxu0 0.0
    %6430 = vmatpush1.msra.mxu0 0.0
    %6431 = vmatprep.subr.mxu0 0.0
    %6432 = vmatpush1.msra.mxu0 0.0
    %6433 = vmatprep.subr.mxu0 0.0
    %6434 = vmatpush1.msra.mxu0 0.0
    %6435 = vmatprep.subr.mxu0 0.0
    %6436 = vmatpush1.msra.mxu0 0.0
    %6437 = vmatprep.subr.mxu0 0.0
    %6438 = vmatpush1.msra.mxu0 0.0
    %6439 = vmatprep.subr.mxu0 0.0
    %6440 = vmatpush1.msra.mxu0 0.0
    %6441 = vmatprep.subr.mxu0 0.0
    %6442 = vmatpush1.msra.mxu0 0.0
    %6443 = vmatprep.subr.mxu0 0.0
    %6444 = vmatpush1.msra.mxu0 0.0
    %6445 = vmatprep.subr.mxu0 0.0
    %6446 = vmatpush1.msra.mxu0 0.0
    %6447 = vmatprep.subr.mxu0 0.0
    %6448 = vmatpush1.msra.mxu0 0.0
    %6449 = vmatprep.subr.mxu0 0.0
    %6450 = vmatpush1.msra.mxu0 0.0
    %6451 = vmatprep.subr.mxu0 0.0
    %6452 = vmatpush1.msra.mxu0 0.0
    %6453 = vmatprep.subr.mxu0 0.0
    %6454 = vmatpush1.msra.mxu0 0.0
    %6455 = vmatprep.subr.mxu0 0.0
    %6456 = vmatpush1.msra.mxu0 0.0
    %6457 = vmatprep.subr.mxu0 0.0
    %6458 = vmatpush1.msra.mxu0 0.0
    %6459 = vmatprep.subr.mxu0 0.0
    %6460 = vmatpush1.msra.mxu0 0.0
    %6461 = vmatprep.subr.mxu0 0.0
    %6462 = vmatpush1.msra.mxu0 0.0
    %6463 = vmatprep.subr.mxu0 0.0
    %6464 = vmatpush1.msra.mxu0 0.0
    %6465 = vmatprep.subr.mxu0 0.0
    %6466 = vmatpush1.msra.mxu0 0.0
    %6467 = vmatprep.subr.mxu0 0.0
    %6468 = vmatpush1.msra.mxu0 0.0
    %6469 = vmatprep.subr.mxu0 0.0
    %6470 = vmatpush1.msra.mxu0 0.0
    %6471 = vmatprep.subr.mxu0 0.0
    %6472 = vmatpush1.msra.mxu0 0.0
    %6473 = vmatprep.mubr.f32.mxu0 0.0
    %v6474 = vand.u32 %v6236, 4294901760
    %6475 = vmatmul.mubr.f32.gmra.mrb[0].mxu0 %v6474
    %v6476 = vpop.f32.mrb[0].mxu0
    %v6477 = vpop.f32.mrb[0].mxu0
    %v6478 = vadd.f32 %v6327, %v6477
    %6479 = vdwg.mxu0
    %v6480 = vand.u32 %v578, 4294901760
    %v6481 = vsub.f32 %v578, %v6480
    %6482 = vmatprep.subr.mxu0 %v6481
    %v6483 = vand.u32 %v577, 4294901760
    %v6484 = vsub.f32 %v577, %v6483
    %6485 = vmatpush1.msra.mxu0 %v6484
    %v6486 = vand.u32 %v580, 4294901760
    %v6487 = vsub.f32 %v580, %v6486
    %6488 = vmatprep.subr.mxu0 %v6487
    %v6489 = vand.u32 %v579, 4294901760
    %v6490 = vsub.f32 %v579, %v6489
    %6491 = vmatpush1.msra.mxu0 %v6490
    %v6492 = vand.u32 %v582, 4294901760
    %v6493 = vsub.f32 %v582, %v6492
    %6494 = vmatprep.subr.mxu0 %v6493
    %v6495 = vand.u32 %v581, 4294901760
    %v6496 = vsub.f32 %v581, %v6495
    %6497 = vmatpush1.msra.mxu0 %v6496
    %v6498 = vand.u32 %v584, 4294901760
    %v6499 = vsub.f32 %v584, %v6498
    %6500 = vmatprep.subr.mxu0 %v6499
    %v6501 = vand.u32 %v583, 4294901760
    %v6502 = vsub.f32 %v583, %v6501
    %6503 = vmatpush1.msra.mxu0 %v6502
    %v6504 = vand.u32 %v586, 4294901760
    %v6505 = vsub.f32 %v586, %v6504
    %6506 = vmatprep.subr.mxu0 %v6505
    %v6507 = vand.u32 %v585, 4294901760
    %v6508 = vsub.f32 %v585, %v6507
    %6509 = vmatpush1.msra.mxu0 %v6508
    %v6510 = vand.u32 %v588, 4294901760
    %v6511 = vsub.f32 %v588, %v6510
    %6512 = vmatprep.subr.mxu0 %v6511
    %v6513 = vand.u32 %v587, 4294901760
    %v6514 = vsub.f32 %v587, %v6513
    %6515 = vmatpush1.msra.mxu0 %v6514
    %v6516 = vand.u32 %v590, 4294901760
    %v6517 = vsub.f32 %v590, %v6516
    %6518 = vmatprep.subr.mxu0 %v6517
    %v6519 = vand.u32 %v589, 4294901760
    %v6520 = vsub.f32 %v589, %v6519
    %6521 = vmatpush1.msra.mxu0 %v6520
    %v6522 = vand.u32 %v592, 4294901760
    %v6523 = vsub.f32 %v592, %v6522
    %6524 = vmatprep.subr.mxu0 %v6523
    %v6525 = vand.u32 %v591, 4294901760
    %v6526 = vsub.f32 %v591, %v6525
    %6527 = vmatpush1.msra.mxu0 %v6526
    %6528 = vmatprep.subr.mxu0 0.0
    %6529 = vmatpush1.msra.mxu0 0.0
    %6530 = vmatprep.subr.mxu0 0.0
    %6531 = vmatpush1.msra.mxu0 0.0
    %6532 = vmatprep.subr.mxu0 0.0
    %6533 = vmatpush1.msra.mxu0 0.0
    %6534 = vmatprep.subr.mxu0 0.0
    %6535 = vmatpush1.msra.mxu0 0.0
    %6536 = vmatprep.subr.mxu0 0.0
    %6537 = vmatpush1.msra.mxu0 0.0
    %6538 = vmatprep.subr.mxu0 0.0
    %6539 = vmatpush1.msra.mxu0 0.0
    %6540 = vmatprep.subr.mxu0 0.0
    %6541 = vmatpush1.msra.mxu0 0.0
    %6542 = vmatprep.subr.mxu0 0.0
    %6543 = vmatpush1.msra.mxu0 0.0
    %6544 = vmatprep.subr.mxu0 0.0
    %6545 = vmatpush1.msra.mxu0 0.0
    %6546 = vmatprep.subr.mxu0 0.0
    %6547 = vmatpush1.msra.mxu0 0.0
    %6548 = vmatprep.subr.mxu0 0.0
    %6549 = vmatpush1.msra.mxu0 0.0
    %6550 = vmatprep.subr.mxu0 0.0
    %6551 = vmatpush1.msra.mxu0 0.0
    %6552 = vmatprep.subr.mxu0 0.0
    %6553 = vmatpush1.msra.mxu0 0.0
    %6554 = vmatprep.subr.mxu0 0.0
    %6555 = vmatpush1.msra.mxu0 0.0
    %6556 = vmatprep.subr.mxu0 0.0
    %6557 = vmatpush1.msra.mxu0 0.0
    %6558 = vmatprep.subr.mxu0 0.0
    %6559 = vmatpush1.msra.mxu0 0.0
    %6560 = vmatprep.subr.mxu0 0.0
    %6561 = vmatpush1.msra.mxu0 0.0
    %6562 = vmatprep.subr.mxu0 0.0
    %6563 = vmatpush1.msra.mxu0 0.0
    %6564 = vmatprep.subr.mxu0 0.0
    %6565 = vmatpush1.msra.mxu0 0.0
    %6566 = vmatprep.subr.mxu0 0.0
    %6567 = vmatpush1.msra.mxu0 0.0
    %6568 = vmatprep.subr.mxu0 0.0
    %6569 = vmatpush1.msra.mxu0 0.0
    %6570 = vmatprep.subr.mxu0 0.0
    %6571 = vmatpush1.msra.mxu0 0.0
    %6572 = vmatprep.subr.mxu0 0.0
    %6573 = vmatpush1.msra.mxu0 0.0
    %6574 = vmatprep.subr.mxu0 0.0
    %6575 = vmatpush1.msra.mxu0 0.0
    %6576 = vmatprep.mubr.f32.mxu0 0.0
    %v6577 = vand.u32 %v6236, 4294901760
    %v6578 = vsub.f32 %v6236, %v6577
    %6579 = vmatmul.mubr.f32.gmra.mrb[0].mxu0 %v6578
    %v6580 = vpop.f32.mrb[0].mxu0
    %v6581 = vpop.f32.mrb[0].mxu0
    %v6582 = vadd.f32 %v6478, %v6581
    %6583 = vdwg.mxu0
    %v6584 = vand.u32 %v578, 4294901760
    %6585 = vmatprep.subr.mxu0 %v6584
    %v6586 = vand.u32 %v577, 4294901760
    %6587 = vmatpush1.msra.mxu0 %v6586
    %v6588 = vand.u32 %v580, 4294901760
    %6589 = vmatprep.subr.mxu0 %v6588
    %v6590 = vand.u32 %v579, 4294901760
    %6591 = vmatpush1.msra.mxu0 %v6590
    %v6592 = vand.u32 %v582, 4294901760
    %6593 = vmatprep.subr.mxu0 %v6592
    %v6594 = vand.u32 %v581, 4294901760
    %6595 = vmatpush1.msra.mxu0 %v6594
    %v6596 = vand.u32 %v584, 4294901760
    %6597 = vmatprep.subr.mxu0 %v6596
    %v6598 = vand.u32 %v583, 4294901760
    %6599 = vmatpush1.msra.mxu0 %v6598
    %v6600 = vand.u32 %v586, 4294901760
    %6601 = vmatprep.subr.mxu0 %v6600
    %v6602 = vand.u32 %v585, 4294901760
    %6603 = vmatpush1.msra.mxu0 %v6602
    %v6604 = vand.u32 %v588, 4294901760
    %6605 = vmatprep.subr.mxu0 %v6604
    %v6606 = vand.u32 %v587, 4294901760
    %6607 = vmatpush1.msra.mxu0 %v6606
    %v6608 = vand.u32 %v590, 4294901760
    %6609 = vmatprep.subr.mxu0 %v6608
    %v6610 = vand.u32 %v589, 4294901760
    %6611 = vmatpush1.msra.mxu0 %v6610
    %v6612 = vand.u32 %v592, 4294901760
    %6613 = vmatprep.subr.mxu0 %v6612
    %v6614 = vand.u32 %v591, 4294901760
    %6615 = vmatpush1.msra.mxu0 %v6614
    %6616 = vmatprep.subr.mxu0 0.0
    %6617 = vmatpush1.msra.mxu0 0.0
    %6618 = vmatprep.subr.mxu0 0.0
    %6619 = vmatpush1.msra.mxu0 0.0
    %6620 = vmatprep.subr.mxu0 0.0
    %6621 = vmatpush1.msra.mxu0 0.0
    %6622 = vmatprep.subr.mxu0 0.0
    %6623 = vmatpush1.msra.mxu0 0.0
    %6624 = vmatprep.subr.mxu0 0.0
    %6625 = vmatpush1.msra.mxu0 0.0
    %6626 = vmatprep.subr.mxu0 0.0
    %6627 = vmatpush1.msra.mxu0 0.0
    %6628 = vmatprep.subr.mxu0 0.0
    %6629 = vmatpush1.msra.mxu0 0.0
    %6630 = vmatprep.subr.mxu0 0.0
    %6631 = vmatpush1.msra.mxu0 0.0
    %6632 = vmatprep.subr.mxu0 0.0
    %6633 = vmatpush1.msra.mxu0 0.0
    %6634 = vmatprep.subr.mxu0 0.0
    %6635 = vmatpush1.msra.mxu0 0.0
    %6636 = vmatprep.subr.mxu0 0.0
    %6637 = vmatpush1.msra.mxu0 0.0
    %6638 = vmatprep.subr.mxu0 0.0
    %6639 = vmatpush1.msra.mxu0 0.0
    %6640 = vmatprep.subr.mxu0 0.0
    %6641 = vmatpush1.msra.mxu0 0.0
    %6642 = vmatprep.subr.mxu0 0.0
    %6643 = vmatpush1.msra.mxu0 0.0
    %6644 = vmatprep.subr.mxu0 0.0
    %6645 = vmatpush1.msra.mxu0 0.0
    %6646 = vmatprep.subr.mxu0 0.0
    %6647 = vmatpush1.msra.mxu0 0.0
    %6648 = vmatprep.subr.mxu0 0.0
    %6649 = vmatpush1.msra.mxu0 0.0
    %6650 = vmatprep.subr.mxu0 0.0
    %6651 = vmatpush1.msra.mxu0 0.0
    %6652 = vmatprep.subr.mxu0 0.0
    %6653 = vmatpush1.msra.mxu0 0.0
    %6654 = vmatprep.subr.mxu0 0.0
    %6655 = vmatpush1.msra.mxu0 0.0
    %6656 = vmatprep.subr.mxu0 0.0
    %6657 = vmatpush1.msra.mxu0 0.0
    %6658 = vmatprep.subr.mxu0 0.0
    %6659 = vmatpush1.msra.mxu0 0.0
    %6660 = vmatprep.subr.mxu0 0.0
    %6661 = vmatpush1.msra.mxu0 0.0
    %6662 = vmatprep.subr.mxu0 0.0
    %6663 = vmatpush1.msra.mxu0 0.0
    %6664 = vmatprep.mubr.f32.mxu0 0.0
    %v6665 = vand.u32 %v6236, 4294901760
    %v6666 = vsub.f32 %v6236, %v6665
    %v6667 = vand.u32 %v6666, 4294901760
    %6668 = vmatmul.mubr.f32.gmra.mrb[0].mxu0 %v6667
    %v6669 = vpop.f32.mrb[0].mxu0
    %v6670 = vpop.f32.mrb[0].mxu0
    %v6671 = vadd.f32 %v6582, %v6670
    %6672 = vdwg.mxu0
    %v6673 = vand.u32 %v578, 4294901760
    %v6674 = vsub.f32 %v578, %v6673
    %v6675 = vand.u32 %v6674, 4294901760
    %6676 = vmatprep.subr.mxu0 %v6675
    %v6677 = vand.u32 %v577, 4294901760
    %v6678 = vsub.f32 %v577, %v6677
    %v6679 = vand.u32 %v6678, 4294901760
    %6680 = vmatpush1.msra.mxu0 %v6679
    %v6681 = vand.u32 %v580, 4294901760
    %v6682 = vsub.f32 %v580, %v6681
    %v6683 = vand.u32 %v6682, 4294901760
    %6684 = vmatprep.subr.mxu0 %v6683
    %v6685 = vand.u32 %v579, 4294901760
    %v6686 = vsub.f32 %v579, %v6685
    %v6687 = vand.u32 %v6686, 4294901760
    %6688 = vmatpush1.msra.mxu0 %v6687
    %v6689 = vand.u32 %v582, 4294901760
    %v6690 = vsub.f32 %v582, %v6689
    %v6691 = vand.u32 %v6690, 4294901760
    %6692 = vmatprep.subr.mxu0 %v6691
    %v6693 = vand.u32 %v581, 4294901760
    %v6694 = vsub.f32 %v581, %v6693
    %v6695 = vand.u32 %v6694, 4294901760
    %6696 = vmatpush1.msra.mxu0 %v6695
    %v6697 = vand.u32 %v584, 4294901760
    %v6698 = vsub.f32 %v584, %v6697
    %v6699 = vand.u32 %v6698, 4294901760
    %6700 = vmatprep.subr.mxu0 %v6699
    %v6701 = vand.u32 %v583, 4294901760
    %v6702 = vsub.f32 %v583, %v6701
    %v6703 = vand.u32 %v6702, 4294901760
    %6704 = vmatpush1.msra.mxu0 %v6703
    %v6705 = vand.u32 %v586, 4294901760
    %v6706 = vsub.f32 %v586, %v6705
    %v6707 = vand.u32 %v6706, 4294901760
    %6708 = vmatprep.subr.mxu0 %v6707
    %v6709 = vand.u32 %v585, 4294901760
    %v6710 = vsub.f32 %v585, %v6709
    %v6711 = vand.u32 %v6710, 4294901760
    %6712 = vmatpush1.msra.mxu0 %v6711
    %v6713 = vand.u32 %v588, 4294901760
    %v6714 = vsub.f32 %v588, %v6713
    %v6715 = vand.u32 %v6714, 4294901760
    %6716 = vmatprep.subr.mxu0 %v6715
    %v6717 = vand.u32 %v587, 4294901760
    %v6718 = vsub.f32 %v587, %v6717
    %v6719 = vand.u32 %v6718, 4294901760
    %6720 = vmatpush1.msra.mxu0 %v6719
    %v6721 = vand.u32 %v590, 4294901760
    %v6722 = vsub.f32 %v590, %v6721
    %v6723 = vand.u32 %v6722, 4294901760
    %6724 = vmatprep.subr.mxu0 %v6723
    %v6725 = vand.u32 %v589, 4294901760
    %v6726 = vsub.f32 %v589, %v6725
    %v6727 = vand.u32 %v6726, 4294901760
    %6728 = vmatpush1.msra.mxu0 %v6727
    %v6729 = vand.u32 %v592, 4294901760
    %v6730 = vsub.f32 %v592, %v6729
    %v6731 = vand.u32 %v6730, 4294901760
    %6732 = vmatprep.subr.mxu0 %v6731
    %v6733 = vand.u32 %v591, 4294901760
    %v6734 = vsub.f32 %v591, %v6733
    %v6735 = vand.u32 %v6734, 4294901760
    %6736 = vmatpush1.msra.mxu0 %v6735
    %6737 = vmatprep.subr.mxu0 0.0
    %6738 = vmatpush1.msra.mxu0 0.0
    %6739 = vmatprep.subr.mxu0 0.0
    %6740 = vmatpush1.msra.mxu0 0.0
    %6741 = vmatprep.subr.mxu0 0.0
    %6742 = vmatpush1.msra.mxu0 0.0
    %6743 = vmatprep.subr.mxu0 0.0
    %6744 = vmatpush1.msra.mxu0 0.0
    %6745 = vmatprep.subr.mxu0 0.0
    %6746 = vmatpush1.msra.mxu0 0.0
    %6747 = vmatprep.subr.mxu0 0.0
    %6748 = vmatpush1.msra.mxu0 0.0
    %6749 = vmatprep.subr.mxu0 0.0
    %6750 = vmatpush1.msra.mxu0 0.0
    %6751 = vmatprep.subr.mxu0 0.0
    %6752 = vmatpush1.msra.mxu0 0.0
    %6753 = vmatprep.subr.mxu0 0.0
    %6754 = vmatpush1.msra.mxu0 0.0
    %6755 = vmatprep.subr.mxu0 0.0
    %6756 = vmatpush1.msra.mxu0 0.0
    %6757 = vmatprep.subr.mxu0 0.0
    %6758 = vmatpush1.msra.mxu0 0.0
    %6759 = vmatprep.subr.mxu0 0.0
    %6760 = vmatpush1.msra.mxu0 0.0
    %6761 = vmatprep.subr.mxu0 0.0
    %6762 = vmatpush1.msra.mxu0 0.0
    %6763 = vmatprep.subr.mxu0 0.0
    %6764 = vmatpush1.msra.mxu0 0.0
    %6765 = vmatprep.subr.mxu0 0.0
    %6766 = vmatpush1.msra.mxu0 0.0
    %6767 = vmatprep.subr.mxu0 0.0
    %6768 = vmatpush1.msra.mxu0 0.0
    %6769 = vmatprep.subr.mxu0 0.0
    %6770 = vmatpush1.msra.mxu0 0.0
    %6771 = vmatprep.subr.mxu0 0.0
    %6772 = vmatpush1.msra.mxu0 0.0
    %6773 = vmatprep.subr.mxu0 0.0
    %6774 = vmatpush1.msra.mxu0 0.0
    %6775 = vmatprep.subr.mxu0 0.0
    %6776 = vmatpush1.msra.mxu0 0.0
    %6777 = vmatprep.subr.mxu0 0.0
    %6778 = vmatpush1.msra.mxu0 0.0
    %6779 = vmatprep.subr.mxu0 0.0
    %6780 = vmatpush1.msra.mxu0 0.0
    %6781 = vmatprep.subr.mxu0 0.0
    %6782 = vmatpush1.msra.mxu0 0.0
    %6783 = vmatprep.subr.mxu0 0.0
    %6784 = vmatpush1.msra.mxu0 0.0
    %6785 = vmatprep.mubr.f32.mxu0 0.0
    %v6786 = vand.u32 %v6236, 4294901760
    %6787 = vmatmul.mubr.f32.gmra.mrb[0].mxu0 %v6786
    %v6788 = vpop.f32.mrb[0].mxu0
    %v6789 = vpop.f32.mrb[0].mxu0
    %v6790 = vadd.f32 %v6671, %v6789
    %6791 = vdwg.mxu0
    %v6792 = vand.u32 %v578, 4294901760
    %6793 = vmatprep.subr.mxu0 %v6792
    %v6794 = vand.u32 %v577, 4294901760
    %6795 = vmatpush1.msra.mxu0 %v6794
    %v6796 = vand.u32 %v580, 4294901760
    %6797 = vmatprep.subr.mxu0 %v6796
    %v6798 = vand.u32 %v579, 4294901760
    %6799 = vmatpush1.msra.mxu0 %v6798
    %v6800 = vand.u32 %v582, 4294901760
    %6801 = vmatprep.subr.mxu0 %v6800
    %v6802 = vand.u32 %v581, 4294901760
    %6803 = vmatpush1.msra.mxu0 %v6802
    %v6804 = vand.u32 %v584, 4294901760
    %6805 = vmatprep.subr.mxu0 %v6804
    %v6806 = vand.u32 %v583, 4294901760
    %6807 = vmatpush1.msra.mxu0 %v6806
    %v6808 = vand.u32 %v586, 4294901760
    %6809 = vmatprep.subr.mxu0 %v6808
    %v6810 = vand.u32 %v585, 4294901760
    %6811 = vmatpush1.msra.mxu0 %v6810
    %v6812 = vand.u32 %v588, 4294901760
    %6813 = vmatprep.subr.mxu0 %v6812
    %v6814 = vand.u32 %v587, 4294901760
    %6815 = vmatpush1.msra.mxu0 %v6814
    %v6816 = vand.u32 %v590, 4294901760
    %6817 = vmatprep.subr.mxu0 %v6816
    %v6818 = vand.u32 %v589, 4294901760
    %6819 = vmatpush1.msra.mxu0 %v6818
    %v6820 = vand.u32 %v592, 4294901760
    %6821 = vmatprep.subr.mxu0 %v6820
    %v6822 = vand.u32 %v591, 4294901760
    %6823 = vmatpush1.msra.mxu0 %v6822
    %6824 = vmatprep.subr.mxu0 0.0
    %6825 = vmatpush1.msra.mxu0 0.0
    %6826 = vmatprep.subr.mxu0 0.0
    %6827 = vmatpush1.msra.mxu0 0.0
    %6828 = vmatprep.subr.mxu0 0.0
    %6829 = vmatpush1.msra.mxu0 0.0
    %6830 = vmatprep.subr.mxu0 0.0
    %6831 = vmatpush1.msra.mxu0 0.0
    %6832 = vmatprep.subr.mxu0 0.0
    %6833 = vmatpush1.msra.mxu0 0.0
    %6834 = vmatprep.subr.mxu0 0.0
    %6835 = vmatpush1.msra.mxu0 0.0
    %6836 = vmatprep.subr.mxu0 0.0
    %6837 = vmatpush1.msra.mxu0 0.0
    %6838 = vmatprep.subr.mxu0 0.0
    %6839 = vmatpush1.msra.mxu0 0.0
    %6840 = vmatprep.subr.mxu0 0.0
    %6841 = vmatpush1.msra.mxu0 0.0
    %6842 = vmatprep.subr.mxu0 0.0
    %6843 = vmatpush1.msra.mxu0 0.0
    %6844 = vmatprep.subr.mxu0 0.0
    %6845 = vmatpush1.msra.mxu0 0.0
    %6846 = vmatprep.subr.mxu0 0.0
    %6847 = vmatpush1.msra.mxu0 0.0
    %6848 = vmatprep.subr.mxu0 0.0
    %6849 = vmatpush1.msra.mxu0 0.0
    %6850 = vmatprep.subr.mxu0 0.0
    %6851 = vmatpush1.msra.mxu0 0.0
    %6852 = vmatprep.subr.mxu0 0.0
    %6853 = vmatpush1.msra.mxu0 0.0
    %6854 = vmatprep.subr.mxu0 0.0
    %6855 = vmatpush1.msra.mxu0 0.0
    %6856 = vmatprep.subr.mxu0 0.0
    %6857 = vmatpush1.msra.mxu0 0.0
    %6858 = vmatprep.subr.mxu0 0.0
    %6859 = vmatpush1.msra.mxu0 0.0
    %6860 = vmatprep.subr.mxu0 0.0
    %6861 = vmatpush1.msra.mxu0 0.0
    %6862 = vmatprep.subr.mxu0 0.0
    %6863 = vmatpush1.msra.mxu0 0.0
    %6864 = vmatprep.subr.mxu0 0.0
    %6865 = vmatpush1.msra.mxu0 0.0
    %6866 = vmatprep.subr.mxu0 0.0
    %6867 = vmatpush1.msra.mxu0 0.0
    %6868 = vmatprep.subr.mxu0 0.0
    %6869 = vmatpush1.msra.mxu0 0.0
    %6870 = vmatprep.subr.mxu0 0.0
    %6871 = vmatpush1.msra.mxu0 0.0
    %6872 = vmatprep.mubr.f32.mxu0 0.0
    %v6873 = vand.u32 %v6236, 4294901760
    %6874 = vmatmul.mubr.f32.gmra.mrb[0].mxu0 %v6873
    %v6875 = vpop.f32.mrb[0].mxu0
    %v6876 = vpop.f32.mrb[0].mxu0
    %v6877 = vadd.f32 %v6790, %v6876
    %6878 = vdwg.mxu0
    %v6879 = vadd.f32 %v6877, %v1958
    %v6880 = vtanh.pop %v6879
    %v6881 = vmul.f32 %v6880, 0.5
    %v6882 = vadd.f32 %v6881, 0.5
    %v6883 = vmul.f32 %v6882, %v6215
    %6885 = vrot.lane.b32.xlu0 %v6880, 32
    %v6886 = vpop.permute.xlu0 %6885
    %v6888 = vmul.f32 %v6882, %v6886
    %6890 = vrot.lane.b32.xlu0 %v6888, 32
    %v6891 = vpop.permute.xlu0 %6890
    %v6893 = vadd.f32 %v6883, %v6891
    %v6894 = vtanh.pop %v6893
    %6896 = vrot.lane.b32.xlu0 %v6894, 32
    %v6897 = vpop.permute.xlu0 %6896
    %v6899 = vmul.f32 %v6882, %v6897
    %6901 = vrot.lane.b32.xlu0 %v6899, 64
    %v6902 = vpop.permute.xlu0 %6901
    %6904 = vst.msk [vmem:[#allocation3 + $0xe] sm:$0x3] %vm1989, %v6902
    %6905 = vst.msk [vmem:[#allocation7] sm:$0x3] %vm1989, %v6229
    %6907 = vrot.lane.b32.xlu0 %v6194, 96
    %v6908 = vpop.permute.xlu0 %6907
    %6910 = vst.msk [vmem:[#allocation8] sm:$0x3] %vm1989, %v6908
    %s6911 = scalar_lea.vmem [#allocation7], 2
    %6912 = vst.msk [vmem:[%s6911] sm:$0x3] %vm1989, %v6902
    %6914 = vrot.lane.b32.xlu0 %v6893, 96
    %v6915 = vpop.permute.xlu0 %6914
    %s6917 = scalar_lea.vmem [#allocation8], 2
    %6918 = vst.msk [vmem:[%s6917] sm:$0x3] %vm1989, %v6915
    %v6919 = vld [vmem:[#allocation3] sm:$0xff]
    %v6920 = vld [vmem:[#allocation3 + $0x8] sm:$0xff]
    %v6921 = vld [vmem:[%s4] sm:$0xff]
    %v6922 = vld [vmem:[%s4 + $0x8] sm:$0xff]
    %v6923 = vld [vmem:[%s4 + $0x10] sm:$0xff]
    %v6924 = vld [vmem:[%s4 + $0x18] sm:$0xff]
    %v6925 = vld [vmem:[%s5] sm:$0x1]
    %v6927 = vlaneseq
    %v6928 = vshrl.u32 %v6927, 7
    %v6929 = vsub.s32 0, %v6928
    %v6930 = vrot.slane %v6925, %v6929
    %v6933 = vsel %vm604, %v6919, 0
    %v6936 = vsel %vm604, %v6920, 0
    %6938 = vmatprep.subr.mxu0 0.0
    %v6939 = vand.u32 %v6921, 4294901760
    %6940 = vmatpush1.msra.mxu0 %v6939
    %6941 = vmatprep.subr.mxu0 0.0
    %v6942 = vand.u32 %v6922, 4294901760
    %6943 = vmatpush1.msra.mxu0 %v6942
    %6944 = vmatprep.subr.mxu0 0.0
    %v6945 = vand.u32 %v6923, 4294901760
    %6946 = vmatpush1.msra.mxu0 %v6945
    %6947 = vmatprep.subr.mxu0 0.0
    %v6948 = vand.u32 %v6924, 4294901760
    %6949 = vmatpush1.msra.mxu0 %v6948
    %6950 = vmatprep.subr.mxu0 0.0
    %6951 = vmatpush1.msra.mxu0 0.0
    %6952 = vmatprep.subr.mxu0 0.0
    %6953 = vmatpush1.msra.mxu0 0.0
    %6954 = vmatprep.subr.mxu0 0.0
    %6955 = vmatpush1.msra.mxu0 0.0
    %6956 = vmatprep.subr.mxu0 0.0
    %6957 = vmatpush1.msra.mxu0 0.0
    %6958 = vmatprep.subr.mxu0 0.0
    %6959 = vmatpush1.msra.mxu0 0.0
    %6960 = vmatprep.subr.mxu0 0.0
    %6961 = vmatpush1.msra.mxu0 0.0
    %6962 = vmatprep.subr.mxu0 0.0
    %6963 = vmatpush1.msra.mxu0 0.0
    %6964 = vmatprep.subr.mxu0 0.0
    %6965 = vmatpush1.msra.mxu0 0.0
    %6966 = vmatprep.subr.mxu0 0.0
    %6967 = vmatpush1.msra.mxu0 0.0
    %6968 = vmatprep.subr.mxu0 0.0
    %6969 = vmatpush1.msra.mxu0 0.0
    %6970 = vmatprep.subr.mxu0 0.0
    %6971 = vmatpush1.msra.mxu0 0.0
    %6972 = vmatprep.subr.mxu0 0.0
    %6973 = vmatpush1.msra.mxu0 0.0
    %6974 = vmatprep.subr.mxu0 0.0
    %6975 = vmatpush1.msra.mxu0 0.0
    %6976 = vmatprep.subr.mxu0 0.0
    %6977 = vmatpush1.msra.mxu0 0.0
    %6978 = vmatprep.subr.mxu0 0.0
    %6979 = vmatpush1.msra.mxu0 0.0
    %6980 = vmatprep.subr.mxu0 0.0
    %6981 = vmatpush1.msra.mxu0 0.0
    %6982 = vmatprep.subr.mxu0 0.0
    %6983 = vmatpush1.msra.mxu0 0.0
    %6984 = vmatprep.subr.mxu0 0.0
    %6985 = vmatpush1.msra.mxu0 0.0
    %6986 = vmatprep.subr.mxu0 0.0
    %6987 = vmatpush1.msra.mxu0 0.0
    %6988 = vmatprep.subr.mxu0 0.0
    %6989 = vmatpush1.msra.mxu0 0.0
    %6990 = vmatprep.subr.mxu0 0.0
    %6991 = vmatpush1.msra.mxu0 0.0
    %6992 = vmatprep.subr.mxu0 0.0
    %6993 = vmatpush1.msra.mxu0 0.0
    %6994 = vmatprep.subr.mxu0 0.0
    %6995 = vmatpush1.msra.mxu0 0.0
    %6996 = vmatprep.subr.mxu0 0.0
    %6997 = vmatpush1.msra.mxu0 0.0
    %6998 = vmatprep.subr.mxu0 0.0
    %6999 = vmatpush1.msra.mxu0 0.0
    %7000 = vmatprep.subr.mxu0 0.0
    %7001 = vmatpush1.msra.mxu0 0.0
    %7002 = vmatprep.subr.mxu0 0.0
    %7003 = vmatpush1.msra.mxu0 0.0
    %7004 = vmatprep.subr.mxu0 0.0
    %7005 = vmatpush1.msra.mxu0 0.0
    %7006 = vmatprep.mubr.f32.mxu0 0.0
    %v7007 = vand.u32 %v6933, 4294901760
    %v7008 = vsub.f32 %v6933, %v7007
    %v7009 = vand.u32 %v7008, 4294901760
    %v7010 = vsub.f32 %v7008, %v7009
    %v7011 = vand.u32 %v7010, 4294901760
    %7012 = vmatmul.mubr.f32.gmra.mrb[0].mxu0 %v7011
    %v7013 = vpop.f32.mrb[0].mxu0
    %v7014 = vadd.f32 %v6930, %v7013
    %v7015 = vpop.f32.mrb[0].mxu0
    %7016 = vmatprep.mubr.f32.mxu0 0.0
    %v7017 = vand.u32 %v6936, 4294901760
    %v7018 = vsub.f32 %v6936, %v7017
    %v7019 = vand.u32 %v7018, 4294901760
    %v7020 = vsub.f32 %v7018, %v7019
    %v7021 = vand.u32 %v7020, 4294901760
    %7022 = vmatmul.mubr.f32.gmra.mrb[0].mxu0 %v7021
    %v7023 = vpop.f32.mrb[0].mxu0
    %v7024 = vadd.f32 %v6930, %v7023
    %v7025 = vpop.f32.mrb[0].mxu0
    %7026 = vdwg.mxu0
    %7027 = vmatprep.subr.mxu0 0.0
    %v7028 = vand.u32 %v6921, 4294901760
    %v7029 = vsub.f32 %v6921, %v7028
    %v7030 = vand.u32 %v7029, 4294901760
    %v7031 = vsub.f32 %v7029, %v7030
    %v7032 = vand.u32 %v7031, 4294901760
    %7033 = vmatpush1.msra.mxu0 %v7032
    %7034 = vmatprep.subr.mxu0 0.0
    %v7035 = vand.u32 %v6922, 4294901760
    %v7036 = vsub.f32 %v6922, %v7035
    %v7037 = vand.u32 %v7036, 4294901760
    %v7038 = vsub.f32 %v7036, %v7037
    %v7039 = vand.u32 %v7038, 4294901760
    %7040 = vmatpush1.msra.mxu0 %v7039
    %7041 = vmatprep.subr.mxu0 0.0
    %v7042 = vand.u32 %v6923, 4294901760
    %v7043 = vsub.f32 %v6923, %v7042
    %v7044 = vand.u32 %v7043, 4294901760
    %v7045 = vsub.f32 %v7043, %v7044
    %v7046 = vand.u32 %v7045, 4294901760
    %7047 = vmatpush1.msra.mxu0 %v7046
    %7048 = vmatprep.subr.mxu0 0.0
    %v7049 = vand.u32 %v6924, 4294901760
    %v7050 = vsub.f32 %v6924, %v7049
    %v7051 = vand.u32 %v7050, 4294901760
    %v7052 = vsub.f32 %v7050, %v7051
    %v7053 = vand.u32 %v7052, 4294901760
    %7054 = vmatpush1.msra.mxu0 %v7053
    %7055 = vmatprep.subr.mxu0 0.0
    %7056 = vmatpush1.msra.mxu0 0.0
    %7057 = vmatprep.subr.mxu0 0.0
    %7058 = vmatpush1.msra.mxu0 0.0
    %7059 = vmatprep.subr.mxu0 0.0
    %7060 = vmatpush1.msra.mxu0 0.0
    %7061 = vmatprep.subr.mxu0 0.0
    %7062 = vmatpush1.msra.mxu0 0.0
    %7063 = vmatprep.subr.mxu0 0.0
    %7064 = vmatpush1.msra.mxu0 0.0
    %7065 = vmatprep.subr.mxu0 0.0
    %7066 = vmatpush1.msra.mxu0 0.0
    %7067 = vmatprep.subr.mxu0 0.0
    %7068 = vmatpush1.msra.mxu0 0.0
    %7069 = vmatprep.subr.mxu0 0.0
    %7070 = vmatpush1.msra.mxu0 0.0
    %7071 = vmatprep.subr.mxu0 0.0
    %7072 = vmatpush1.msra.mxu0 0.0
    %7073 = vmatprep.subr.mxu0 0.0
    %7074 = vmatpush1.msra.mxu0 0.0
    %7075 = vmatprep.subr.mxu0 0.0
    %7076 = vmatpush1.msra.mxu0 0.0
    %7077 = vmatprep.subr.mxu0 0.0
    %7078 = vmatpush1.msra.mxu0 0.0
    %7079 = vmatprep.subr.mxu0 0.0
    %7080 = vmatpush1.msra.mxu0 0.0
    %7081 = vmatprep.subr.mxu0 0.0
    %7082 = vmatpush1.msra.mxu0 0.0
    %7083 = vmatprep.subr.mxu0 0.0
    %7084 = vmatpush1.msra.mxu0 0.0
    %7085 = vmatprep.subr.mxu0 0.0
    %7086 = vmatpush1.msra.mxu0 0.0
    %7087 = vmatprep.subr.mxu0 0.0
    %7088 = vmatpush1.msra.mxu0 0.0
    %7089 = vmatprep.subr.mxu0 0.0
    %7090 = vmatpush1.msra.mxu0 0.0
    %7091 = vmatprep.subr.mxu0 0.0
    %7092 = vmatpush1.msra.mxu0 0.0
    %7093 = vmatprep.subr.mxu0 0.0
    %7094 = vmatpush1.msra.mxu0 0.0
    %7095 = vmatprep.subr.mxu0 0.0
    %7096 = vmatpush1.msra.mxu0 0.0
    %7097 = vmatprep.subr.mxu0 0.0
    %7098 = vmatpush1.msra.mxu0 0.0
    %7099 = vmatprep.subr.mxu0 0.0
    %7100 = vmatpush1.msra.mxu0 0.0
    %7101 = vmatprep.subr.mxu0 0.0
    %7102 = vmatpush1.msra.mxu0 0.0
    %7103 = vmatprep.subr.mxu0 0.0
    %7104 = vmatpush1.msra.mxu0 0.0
    %7105 = vmatprep.subr.mxu0 0.0
    %7106 = vmatpush1.msra.mxu0 0.0
    %7107 = vmatprep.subr.mxu0 0.0
    %7108 = vmatpush1.msra.mxu0 0.0
    %7109 = vmatprep.subr.mxu0 0.0
    %7110 = vmatpush1.msra.mxu0 0.0
    %7111 = vmatprep.mubr.f32.mxu0 0.0
    %v7112 = vand.u32 %v6933, 4294901760
    %7113 = vmatmul.mubr.f32.gmra.mrb[0].mxu0 %v7112
    %v7114 = vpop.f32.mrb[0].mxu0
    %v7115 = vadd.f32 %v7014, %v7114
    %v7116 = vpop.f32.mrb[0].mxu0
    %7117 = vmatprep.mubr.f32.mxu0 0.0
    %v7118 = vand.u32 %v6936, 4294901760
    %7119 = vmatmul.mubr.f32.gmra.mrb[0].mxu0 %v7118
    %v7120 = vpop.f32.mrb[0].mxu0
    %v7121 = vadd.f32 %v7024, %v7120
    %v7122 = vpop.f32.mrb[0].mxu0
    %7123 = vdwg.mxu0
    %7124 = vmatprep.subr.mxu0 0.0
    %v7125 = vand.u32 %v6921, 4294901760
    %v7126 = vsub.f32 %v6921, %v7125
    %7127 = vmatpush1.msra.mxu0 %v7126
    %7128 = vmatprep.subr.mxu0 0.0
    %v7129 = vand.u32 %v6922, 4294901760
    %v7130 = vsub.f32 %v6922, %v7129
    %7131 = vmatpush1.msra.mxu0 %v7130
    %7132 = vmatprep.subr.mxu0 0.0
    %v7133 = vand.u32 %v6923, 4294901760
    %v7134 = vsub.f32 %v6923, %v7133
    %7135 = vmatpush1.msra.mxu0 %v7134
    %7136 = vmatprep.subr.mxu0 0.0
    %v7137 = vand.u32 %v6924, 4294901760
    %v7138 = vsub.f32 %v6924, %v7137
    %7139 = vmatpush1.msra.mxu0 %v7138
    %7140 = vmatprep.subr.mxu0 0.0
    %7141 = vmatpush1.msra.mxu0 0.0
    %7142 = vmatprep.subr.mxu0 0.0
    %7143 = vmatpush1.msra.mxu0 0.0
    %7144 = vmatprep.subr.mxu0 0.0
    %7145 = vmatpush1.msra.mxu0 0.0
    %7146 = vmatprep.subr.mxu0 0.0
    %7147 = vmatpush1.msra.mxu0 0.0
    %7148 = vmatprep.subr.mxu0 0.0
    %7149 = vmatpush1.msra.mxu0 0.0
    %7150 = vmatprep.subr.mxu0 0.0
    %7151 = vmatpush1.msra.mxu0 0.0
    %7152 = vmatprep.subr.mxu0 0.0
    %7153 = vmatpush1.msra.mxu0 0.0
    %7154 = vmatprep.subr.mxu0 0.0
    %7155 = vmatpush1.msra.mxu0 0.0
    %7156 = vmatprep.subr.mxu0 0.0
    %7157 = vmatpush1.msra.mxu0 0.0
    %7158 = vmatprep.subr.mxu0 0.0
    %7159 = vmatpush1.msra.mxu0 0.0
    %7160 = vmatprep.subr.mxu0 0.0
    %7161 = vmatpush1.msra.mxu0 0.0
    %7162 = vmatprep.subr.mxu0 0.0
    %7163 = vmatpush1.msra.mxu0 0.0
    %7164 = vmatprep.subr.mxu0 0.0
    %7165 = vmatpush1.msra.mxu0 0.0
    %7166 = vmatprep.subr.mxu0 0.0
    %7167 = vmatpush1.msra.mxu0 0.0
    %7168 = vmatprep.subr.mxu0 0.0
    %7169 = vmatpush1.msra.mxu0 0.0
    %7170 = vmatprep.subr.mxu0 0.0
    %7171 = vmatpush1.msra.mxu0 0.0
    %7172 = vmatprep.subr.mxu0 0.0
    %7173 = vmatpush1.msra.mxu0 0.0
    %7174 = vmatprep.subr.mxu0 0.0
    %7175 = vmatpush1.msra.mxu0 0.0
    %7176 = vmatprep.subr.mxu0 0.0
    %7177 = vmatpush1.msra.mxu0 0.0
    %7178 = vmatprep.subr.mxu0 0.0
    %7179 = vmatpush1.msra.mxu0 0.0
    %7180 = vmatprep.subr.mxu0 0.0
    %7181 = vmatpush1.msra.mxu0 0.0
    %7182 = vmatprep.subr.mxu0 0.0
    %7183 = vmatpush1.msra.mxu0 0.0
    %7184 = vmatprep.subr.mxu0 0.0
    %7185 = vmatpush1.msra.mxu0 0.0
    %7186 = vmatprep.subr.mxu0 0.0
    %7187 = vmatpush1.msra.mxu0 0.0
    %7188 = vmatprep.subr.mxu0 0.0
    %7189 = vmatpush1.msra.mxu0 0.0
    %7190 = vmatprep.subr.mxu0 0.0
    %7191 = vmatpush1.msra.mxu0 0.0
    %7192 = vmatprep.subr.mxu0 0.0
    %7193 = vmatpush1.msra.mxu0 0.0
    %7194 = vmatprep.subr.mxu0 0.0
    %7195 = vmatpush1.msra.mxu0 0.0
    %7196 = vmatprep.mubr.f32.mxu0 0.0
    %v7197 = vand.u32 %v6933, 4294901760
    %v7198 = vsub.f32 %v6933, %v7197
    %7199 = vmatmul.mubr.f32.gmra.mrb[0].mxu0 %v7198
    %v7200 = vpop.f32.mrb[0].mxu0
    %v7201 = vadd.f32 %v7115, %v7200
    %v7202 = vpop.f32.mrb[0].mxu0
    %7203 = vmatprep.mubr.f32.mxu0 0.0
    %v7204 = vand.u32 %v6936, 4294901760
    %v7205 = vsub.f32 %v6936, %v7204
    %7206 = vmatmul.mubr.f32.gmra.mrb[0].mxu0 %v7205
    %v7207 = vpop.f32.mrb[0].mxu0
    %v7208 = vadd.f32 %v7121, %v7207
    %v7209 = vpop.f32.mrb[0].mxu0
    %7210 = vdwg.mxu0
    %7211 = vmatprep.subr.mxu0 0.0
    %v7212 = vand.u32 %v6921, 4294901760
    %7213 = vmatpush1.msra.mxu0 %v7212
    %7214 = vmatprep.subr.mxu0 0.0
    %v7215 = vand.u32 %v6922, 4294901760
    %7216 = vmatpush1.msra.mxu0 %v7215
    %7217 = vmatprep.subr.mxu0 0.0
    %v7218 = vand.u32 %v6923, 4294901760
    %7219 = vmatpush1.msra.mxu0 %v7218
    %7220 = vmatprep.subr.mxu0 0.0
    %v7221 = vand.u32 %v6924, 4294901760
    %7222 = vmatpush1.msra.mxu0 %v7221
    %7223 = vmatprep.subr.mxu0 0.0
    %7224 = vmatpush1.msra.mxu0 0.0
    %7225 = vmatprep.subr.mxu0 0.0
    %7226 = vmatpush1.msra.mxu0 0.0
    %7227 = vmatprep.subr.mxu0 0.0
    %7228 = vmatpush1.msra.mxu0 0.0
    %7229 = vmatprep.subr.mxu0 0.0
    %7230 = vmatpush1.msra.mxu0 0.0
    %7231 = vmatprep.subr.mxu0 0.0
    %7232 = vmatpush1.msra.mxu0 0.0
    %7233 = vmatprep.subr.mxu0 0.0
    %7234 = vmatpush1.msra.mxu0 0.0
    %7235 = vmatprep.subr.mxu0 0.0
    %7236 = vmatpush1.msra.mxu0 0.0
    %7237 = vmatprep.subr.mxu0 0.0
    %7238 = vmatpush1.msra.mxu0 0.0
    %7239 = vmatprep.subr.mxu0 0.0
    %7240 = vmatpush1.msra.mxu0 0.0
    %7241 = vmatprep.subr.mxu0 0.0
    %7242 = vmatpush1.msra.mxu0 0.0
    %7243 = vmatprep.subr.mxu0 0.0
    %7244 = vmatpush1.msra.mxu0 0.0
    %7245 = vmatprep.subr.mxu0 0.0
    %7246 = vmatpush1.msra.mxu0 0.0
    %7247 = vmatprep.subr.mxu0 0.0
    %7248 = vmatpush1.msra.mxu0 0.0
    %7249 = vmatprep.subr.mxu0 0.0
    %7250 = vmatpush1.msra.mxu0 0.0
    %7251 = vmatprep.subr.mxu0 0.0
    %7252 = vmatpush1.msra.mxu0 0.0
    %7253 = vmatprep.subr.mxu0 0.0
    %7254 = vmatpush1.msra.mxu0 0.0
    %7255 = vmatprep.subr.mxu0 0.0
    %7256 = vmatpush1.msra.mxu0 0.0
    %7257 = vmatprep.subr.mxu0 0.0
    %7258 = vmatpush1.msra.mxu0 0.0
    %7259 = vmatprep.subr.mxu0 0.0
    %7260 = vmatpush1.msra.mxu0 0.0
    %7261 = vmatprep.subr.mxu0 0.0
    %7262 = vmatpush1.msra.mxu0 0.0
    %7263 = vmatprep.subr.mxu0 0.0
    %7264 = vmatpush1.msra.mxu0 0.0
    %7265 = vmatprep.subr.mxu0 0.0
    %7266 = vmatpush1.msra.mxu0 0.0
    %7267 = vmatprep.subr.mxu0 0.0
    %7268 = vmatpush1.msra.mxu0 0.0
    %7269 = vmatprep.subr.mxu0 0.0
    %7270 = vmatpush1.msra.mxu0 0.0
    %7271 = vmatprep.subr.mxu0 0.0
    %7272 = vmatpush1.msra.mxu0 0.0
    %7273 = vmatprep.subr.mxu0 0.0
    %7274 = vmatpush1.msra.mxu0 0.0
    %7275 = vmatprep.subr.mxu0 0.0
    %7276 = vmatpush1.msra.mxu0 0.0
    %7277 = vmatprep.subr.mxu0 0.0
    %7278 = vmatpush1.msra.mxu0 0.0
    %7279 = vmatprep.mubr.f32.mxu0 0.0
    %v7280 = vand.u32 %v6933, 4294901760
    %v7281 = vsub.f32 %v6933, %v7280
    %v7282 = vand.u32 %v7281, 4294901760
    %7283 = vmatmul.mubr.f32.gmra.mrb[0].mxu0 %v7282
    %v7284 = vpop.f32.mrb[0].mxu0
    %v7285 = vadd.f32 %v7201, %v7284
    %v7286 = vpop.f32.mrb[0].mxu0
    %7287 = vmatprep.mubr.f32.mxu0 0.0
    %v7288 = vand.u32 %v6936, 4294901760
    %v7289 = vsub.f32 %v6936, %v7288
    %v7290 = vand.u32 %v7289, 4294901760
    %7291 = vmatmul.mubr.f32.gmra.mrb[0].mxu0 %v7290
    %v7292 = vpop.f32.mrb[0].mxu0
    %v7293 = vadd.f32 %v7208, %v7292
    %v7294 = vpop.f32.mrb[0].mxu0
    %7295 = vdwg.mxu0
    %7296 = vmatprep.subr.mxu0 0.0
    %v7297 = vand.u32 %v6921, 4294901760
    %v7298 = vsub.f32 %v6921, %v7297
    %v7299 = vand.u32 %v7298, 4294901760
    %7300 = vmatpush1.msra.mxu0 %v7299
    %7301 = vmatprep.subr.mxu0 0.0
    %v7302 = vand.u32 %v6922, 4294901760
    %v7303 = vsub.f32 %v6922, %v7302
    %v7304 = vand.u32 %v7303, 4294901760
    %7305 = vmatpush1.msra.mxu0 %v7304
    %7306 = vmatprep.subr.mxu0 0.0
    %v7307 = vand.u32 %v6923, 4294901760
    %v7308 = vsub.f32 %v6923, %v7307
    %v7309 = vand.u32 %v7308, 4294901760
    %7310 = vmatpush1.msra.mxu0 %v7309
    %7311 = vmatprep.subr.mxu0 0.0
    %v7312 = vand.u32 %v6924, 4294901760
    %v7313 = vsub.f32 %v6924, %v7312
    %v7314 = vand.u32 %v7313, 4294901760
    %7315 = vmatpush1.msra.mxu0 %v7314
    %7316 = vmatprep.subr.mxu0 0.0
    %7317 = vmatpush1.msra.mxu0 0.0
    %7318 = vmatprep.subr.mxu0 0.0
    %7319 = vmatpush1.msra.mxu0 0.0
    %7320 = vmatprep.subr.mxu0 0.0
    %7321 = vmatpush1.msra.mxu0 0.0
    %7322 = vmatprep.subr.mxu0 0.0
    %7323 = vmatpush1.msra.mxu0 0.0
    %7324 = vmatprep.subr.mxu0 0.0
    %7325 = vmatpush1.msra.mxu0 0.0
    %7326 = vmatprep.subr.mxu0 0.0
    %7327 = vmatpush1.msra.mxu0 0.0
    %7328 = vmatprep.subr.mxu0 0.0
    %7329 = vmatpush1.msra.mxu0 0.0
    %7330 = vmatprep.subr.mxu0 0.0
    %7331 = vmatpush1.msra.mxu0 0.0
    %7332 = vmatprep.subr.mxu0 0.0
    %7333 = vmatpush1.msra.mxu0 0.0
    %7334 = vmatprep.subr.mxu0 0.0
    %7335 = vmatpush1.msra.mxu0 0.0
    %7336 = vmatprep.subr.mxu0 0.0
    %7337 = vmatpush1.msra.mxu0 0.0
    %7338 = vmatprep.subr.mxu0 0.0
    %7339 = vmatpush1.msra.mxu0 0.0
    %7340 = vmatprep.subr.mxu0 0.0
    %7341 = vmatpush1.msra.mxu0 0.0
    %7342 = vmatprep.subr.mxu0 0.0
    %7343 = vmatpush1.msra.mxu0 0.0
    %7344 = vmatprep.subr.mxu0 0.0
    %7345 = vmatpush1.msra.mxu0 0.0
    %7346 = vmatprep.subr.mxu0 0.0
    %7347 = vmatpush1.msra.mxu0 0.0
    %7348 = vmatprep.subr.mxu0 0.0
    %7349 = vmatpush1.msra.mxu0 0.0
    %7350 = vmatprep.subr.mxu0 0.0
    %7351 = vmatpush1.msra.mxu0 0.0
    %7352 = vmatprep.subr.mxu0 0.0
    %7353 = vmatpush1.msra.mxu0 0.0
    %7354 = vmatprep.subr.mxu0 0.0
    %7355 = vmatpush1.msra.mxu0 0.0
    %7356 = vmatprep.subr.mxu0 0.0
    %7357 = vmatpush1.msra.mxu0 0.0
    %7358 = vmatprep.subr.mxu0 0.0
    %7359 = vmatpush1.msra.mxu0 0.0
    %7360 = vmatprep.subr.mxu0 0.0
    %7361 = vmatpush1.msra.mxu0 0.0
    %7362 = vmatprep.subr.mxu0 0.0
    %7363 = vmatpush1.msra.mxu0 0.0
    %7364 = vmatprep.subr.mxu0 0.0
    %7365 = vmatpush1.msra.mxu0 0.0
    %7366 = vmatprep.subr.mxu0 0.0
    %7367 = vmatpush1.msra.mxu0 0.0
    %7368 = vmatprep.subr.mxu0 0.0
    %7369 = vmatpush1.msra.mxu0 0.0
    %7370 = vmatprep.subr.mxu0 0.0
    %7371 = vmatpush1.msra.mxu0 0.0
    %7372 = vmatprep.mubr.f32.mxu0 0.0
    %v7373 = vand.u32 %v6933, 4294901760
    %7374 = vmatmul.mubr.f32.gmra.mrb[0].mxu0 %v7373
    %v7375 = vpop.f32.mrb[0].mxu0
    %v7376 = vadd.f32 %v7285, %v7375
    %v7377 = vpop.f32.mrb[0].mxu0
    %7378 = vmatprep.mubr.f32.mxu0 0.0
    %v7379 = vand.u32 %v6936, 4294901760
    %7380 = vmatmul.mubr.f32.gmra.mrb[0].mxu0 %v7379
    %v7381 = vpop.f32.mrb[0].mxu0
    %v7382 = vadd.f32 %v7293, %v7381
    %v7383 = vpop.f32.mrb[0].mxu0
    %7384 = vdwg.mxu0
    %7385 = vmatprep.subr.mxu0 0.0
    %v7386 = vand.u32 %v6921, 4294901760
    %7387 = vmatpush1.msra.mxu0 %v7386
    %7388 = vmatprep.subr.mxu0 0.0
    %v7389 = vand.u32 %v6922, 4294901760
    %7390 = vmatpush1.msra.mxu0 %v7389
    %7391 = vmatprep.subr.mxu0 0.0
    %v7392 = vand.u32 %v6923, 4294901760
    %7393 = vmatpush1.msra.mxu0 %v7392
    %7394 = vmatprep.subr.mxu0 0.0
    %v7395 = vand.u32 %v6924, 4294901760
    %7396 = vmatpush1.msra.mxu0 %v7395
    %7397 = vmatprep.subr.mxu0 0.0
    %7398 = vmatpush1.msra.mxu0 0.0
    %7399 = vmatprep.subr.mxu0 0.0
    %7400 = vmatpush1.msra.mxu0 0.0
    %7401 = vmatprep.subr.mxu0 0.0
    %7402 = vmatpush1.msra.mxu0 0.0
    %7403 = vmatprep.subr.mxu0 0.0
    %7404 = vmatpush1.msra.mxu0 0.0
    %7405 = vmatprep.subr.mxu0 0.0
    %7406 = vmatpush1.msra.mxu0 0.0
    %7407 = vmatprep.subr.mxu0 0.0
    %7408 = vmatpush1.msra.mxu0 0.0
    %7409 = vmatprep.subr.mxu0 0.0
    %7410 = vmatpush1.msra.mxu0 0.0
    %7411 = vmatprep.subr.mxu0 0.0
    %7412 = vmatpush1.msra.mxu0 0.0
    %7413 = vmatprep.subr.mxu0 0.0
    %7414 = vmatpush1.msra.mxu0 0.0
    %7415 = vmatprep.subr.mxu0 0.0
    %7416 = vmatpush1.msra.mxu0 0.0
    %7417 = vmatprep.subr.mxu0 0.0
    %7418 = vmatpush1.msra.mxu0 0.0
    %7419 = vmatprep.subr.mxu0 0.0
    %7420 = vmatpush1.msra.mxu0 0.0
    %7421 = vmatprep.subr.mxu0 0.0
    %7422 = vmatpush1.msra.mxu0 0.0
    %7423 = vmatprep.subr.mxu0 0.0
    %7424 = vmatpush1.msra.mxu0 0.0
    %7425 = vmatprep.subr.mxu0 0.0
    %7426 = vmatpush1.msra.mxu0 0.0
    %7427 = vmatprep.subr.mxu0 0.0
    %7428 = vmatpush1.msra.mxu0 0.0
    %7429 = vmatprep.subr.mxu0 0.0
    %7430 = vmatpush1.msra.mxu0 0.0
    %7431 = vmatprep.subr.mxu0 0.0
    %7432 = vmatpush1.msra.mxu0 0.0
    %7433 = vmatprep.subr.mxu0 0.0
    %7434 = vmatpush1.msra.mxu0 0.0
    %7435 = vmatprep.subr.mxu0 0.0
    %7436 = vmatpush1.msra.mxu0 0.0
    %7437 = vmatprep.subr.mxu0 0.0
    %7438 = vmatpush1.msra.mxu0 0.0
    %7439 = vmatprep.subr.mxu0 0.0
    %7440 = vmatpush1.msra.mxu0 0.0
    %7441 = vmatprep.subr.mxu0 0.0
    %7442 = vmatpush1.msra.mxu0 0.0
    %7443 = vmatprep.subr.mxu0 0.0
    %7444 = vmatpush1.msra.mxu0 0.0
    %7445 = vmatprep.subr.mxu0 0.0
    %7446 = vmatpush1.msra.mxu0 0.0
    %7447 = vmatprep.subr.mxu0 0.0
    %7448 = vmatpush1.msra.mxu0 0.0
    %7449 = vmatprep.subr.mxu0 0.0
    %7450 = vmatpush1.msra.mxu0 0.0
    %7451 = vmatprep.subr.mxu0 0.0
    %7452 = vmatpush1.msra.mxu0 0.0
    %7453 = vmatprep.mubr.f32.mxu0 0.0
    %v7454 = vand.u32 %v6933, 4294901760
    %7455 = vmatmul.mubr.f32.gmra.mrb[0].mxu0 %v7454
    %v7456 = vpop.f32.mrb[0].mxu0
    %v7457 = vadd.f32 %v7376, %v7456
    %v7458 = vpop.f32.mrb[0].mxu0
    %7459 = vmatprep.mubr.f32.mxu0 0.0
    %v7460 = vand.u32 %v6936, 4294901760
    %7461 = vmatmul.mubr.f32.gmra.mrb[0].mxu0 %v7460
    %v7462 = vpop.f32.mrb[0].mxu0
    %v7463 = vadd.f32 %v7382, %v7462
    %v7464 = vpop.f32.mrb[0].mxu0
    %7465 = vdwg.mxu0
    %7466 = vst.msk [vmem:[%s8] sm:$0xff] %vm66, %v7457
    %7467 = vst.msk [vmem:[%s8 + $0x8] sm:$0xff] %vm66, %v7463
    // Predicated region
    $region38: #{decoder_forward.1} parent=1 // pred_check
      _
    $region39: #{decoder_forward.1} parent=1 // pred_check_branch
      %7469 = sbr.rel (0) target = $region41
    $region40: #{decoder_forward.1} parent=1 // pred_region
      _
    $region41: #{decoder_forward.1} parent=1 // pred_fallthru
      _
    // Predicated region
    $region42: #{decoder_forward.1} parent=1 // pred_check
      _
    $region43: #{decoder_forward.1} parent=1 // pred_check_branch
      %7471 = sbr.rel (0) target = $region45
    $region44: #{decoder_forward.1} parent=1 // pred_region
      %s7473 = ssub.s32 64, 64
      %7474 = vsyncadd [#allocation6], %s7473
      %s7475 = sshll.u32 [#allocation7], 4
      %s7476 = int_to_ptr.vmem [resolvable:$true] %s7475
      %7481 = dma.vmem_to_hbm [thread:$0]  %s7476, 64, %s9, [#allocation6], 32, 32, 2
    $region45: #{decoder_forward.1} parent=1 // pred_fallthru
      _
    // Predicated region
    $region46: #{decoder_forward.1} parent=1 // pred_check
      _
    $region47: #{decoder_forward.1} parent=1 // pred_check_branch
      %7483 = sbr.rel (0) target = $region49
    $region48: #{decoder_forward.1} parent=1 // pred_region
      %s7485 = ssub.s32 64, 64
      %7486 = vsyncadd [#allocation9], %s7485
      %s7487 = sshll.u32 [#allocation8], 4
      %s7488 = int_to_ptr.vmem [resolvable:$true] %s7487
      %7493 = dma.vmem_to_hbm [thread:$0]  %s7488, 64, %s10, [#allocation9], 32, 32, 2
    $region49: #{decoder_forward.1} parent=1 // pred_fallthru
      _
    // Predicated region
    $region50: #{decoder_forward.1} parent=1 // pred_check
      _
    $region51: #{decoder_forward.1} parent=1 // pred_check_branch
      %7495 = sbr.rel (0) target = $region53
    $region52: #{decoder_forward.1} parent=1 // pred_region
      _
    $region53: #{decoder_forward.1} parent=1 // pred_fallthru
      _
    // Predicated region
    $region54: #{decoder_forward.1} parent=1 // pred_check
      _
    $region55: #{decoder_forward.1} parent=1 // pred_check_branch
      %7497 = sbr.rel (0) target = $region57
    $region56: #{decoder_forward.1} parent=1 // pred_region
      %7498 = dma.done [#allocation6], 64
    $region57: #{decoder_forward.1} parent=1 // pred_fallthru
      _
    // Predicated region
    $region58: #{decoder_forward.1} parent=1 // pred_check
      _
    $region59: #{decoder_forward.1} parent=1 // pred_check_branch
      %7500 = sbr.rel (0) target = $region61
    $region60: #{decoder_forward.1} parent=1 // pred_region
      %7501 = dma.done [#allocation9], 64
    $region61: #{decoder_forward.1} parent=1 // pred_fallthru
      _
    %7502 = vsyncpa [#allocation5], 1
    %7503 = vsyncpa [#allocation6], 1
    %7504 = vsyncpa [#allocation9], 1

</llo_original>
